<compile_context>
chip_gen: v7x
topology: tpu7x:2x2x1
jax: 0.10.0
libtpu: 0.0.40
codegen_flags: <defaults>
</compile_context>

<pallas_src>
import jax
import jax.numpy as jnp
from jax.experimental import pallas as pl
from jax.experimental.pallas import tpu as pltpu

EPS = 1e-5


# --------------------------------------------------------------------------
# Kernel (generated per hidden-layer count)
# --------------------------------------------------------------------------
def _make_mlp_kernel(n_hidden):
    """relu(h @ w_i' + b_i') chain -> lane-dense scalar head."""

    def kernel(x_ref, *refs):
        o_ref = refs[-1]
        p = refs[:-1]                       # (w1,b1, w2,b2, ..., wf_row, bf)

        h = x_ref[...]                                          # (TB, d_in)
        for i in range(n_hidden):
            w_ref, b_ref = p[2 * i], p[2 * i + 1]
            h = jnp.dot(h.astype(w_ref.dtype), w_ref[...],
                        preferred_element_type=jnp.float32) + b_ref[...]
            h = jnp.maximum(h, 0.0)                             # (TB, h_i) f32

        # final Linear(h_last -> 1): VPU multiply + XLU lane reduce; the batch
        # dim lands on lanes of the (1, TB) output block -> unmasked stores.
        wf_ref, bf_ref = p[2 * n_hidden], p[2 * n_hidden + 1]
        score = jnp.sum(h * wf_ref[...], axis=-1)               # (TB,)
        o_ref[...] = score[None, :] + bf_ref[...]               # (1, TB)

    return kernel


# --------------------------------------------------------------------------
# Parameter folding (eval-mode BN -> following Linear, exact, trace time)
# --------------------------------------------------------------------------
def fold_params(params, compute_dtype=jnp.bfloat16):
    """Returns (list[(w_i', b_i')], wf_row', bf')."""
    folded = []
    prev_s = prev_t = None
    for lyr in params["hidden"]:
        w, b = lyr["w"], lyr["b"]
        if prev_s is not None:                 # fold previous layer's BN in
            b = b + prev_t @ w
            w = prev_s.reshape(-1, 1) * w
        s = lyr["g"] * jax.lax.rsqrt(lyr["v"] + EPS)   # (1, h_i)
        t = lyr["be"] - lyr["m"] * s                   # (1, h_i)
        folded.append((w.astype(compute_dtype), b.astype(jnp.float32)))
        prev_s, prev_t = s, t

    wf = prev_s.reshape(-1, 1) * params["wf"]          # (h_last, 1)
    bf = params["bf"] + prev_t @ params["wf"]          # (1, 1)
    return folded, wf.T.astype(jnp.float32), bf.astype(jnp.float32)


# --------------------------------------------------------------------------
# Wrapper
# --------------------------------------------------------------------------
def score_predictor_forward(x, params, *, batch_tile=512,
                            compute_dtype=jnp.bfloat16):
    """x: (N, embedding_dim) f32.  Returns (N, 1) f32 scores."""
    assert batch_tile % 128 == 0, "keep the batch tile MXU/lane aligned"
    n, d_in = x.shape

    hidden, wf_row, bf = fold_params(params, compute_dtype)
    n_hidden = len(hidden)

    # pad the tail tile instead of requiring n % batch_tile == 0
    n_pad = int(batch_tile * pl.cdiv(n, batch_tile))
    x_p = x if n_pad == n else jnp.pad(x, ((0, n_pad - n), (0, 0)))
    x_c = x_p.astype(compute_dtype)

    grid = (n_pad // batch_tile,)

    def const2d(shape):
        # small parameter block, constant block index -> stays resident in VMEM
        return pl.BlockSpec(shape, lambda i: (0, 0))

    in_specs = [pl.BlockSpec((batch_tile, d_in), lambda i: (i, 0))]   # x tile
    args = [x_c]
    for w, b in hidden:
        in_specs += [const2d(w.shape), const2d(b.shape)]
        args += [w, b]
    in_specs += [const2d(wf_row.shape), const2d(bf.shape)]
    args += [wf_row, bf]

    out_spec = pl.BlockSpec((1, batch_tile), lambda i: (0, i))        # lane-dense

    dims = [d_in] + [w.shape[1] for w, _ in hidden]
    flops_per_row = 2 * sum(a * b for a, b in zip(dims[:-1], dims[1:])) + 2 * dims[-1]
    param_bytes = sum(int(a.size) * a.dtype.itemsize for a in args[1:])
    cost = pl.CostEstimate(
        flops=n_pad * flops_per_row,
        transcendentals=0,
        bytes_accessed=n_pad * d_in * x_c.dtype.itemsize + param_bytes + n_pad * 4,
    )

    out = pl.pallas_call(
        _make_mlp_kernel(n_hidden),
        out_shape=jax.ShapeDtypeStruct((1, n_pad), jnp.float32),
        grid_spec=pltpu.PrefetchScalarGridSpec(
            num_scalar_prefetch=0,
            grid=grid,
            in_specs=in_specs,
            out_specs=out_spec,
        ),
        compiler_params=pltpu.CompilerParams(
            dimension_semantics=("parallel",)),
        cost_estimate=cost,
    )(*args)

    return out[0, :n, None]                                           # (N, 1)


# --------------------------------------------------------------------------
# Parameter init + pure-JAX references
# --------------------------------------------------------------------------
def init_params(key, embedding_dim, hidden_dims):
    """Deterministic synthetic parameters (PyTorch-like uniform fan-in init)."""
    layers = []
    fan_in = embedding_dim
    for h in hidden_dims:
        key, kw, kb, kg, kbe, km, kv = jax.random.split(key, 7)
        bound = 1.0 / jnp.sqrt(float(fan_in))
        layers.append(dict(
            w=jax.random.uniform(kw, (fan_in, h), jnp.float32, -bound, bound),
            b=jax.random.uniform(kb, (1, h), jnp.float32, -bound, bound),
            g=1.0 + 0.1 * jax.random.normal(kg, (1, h), jnp.float32),
            be=0.1 * jax.random.normal(kbe, (1, h), jnp.float32),
            m=0.05 * jax.random.normal(km, (1, h), jnp.float32),
            v=1.0 + 0.1 * jnp.abs(jax.random.normal(kv, (1, h), jnp.float32)),
        ))
        fan_in = h
    key, kw, kb = jax.random.split(key, 3)
    bound = 1.0 / jnp.sqrt(float(fan_in))
    wf = jax.random.uniform(kw, (fan_in, 1), jnp.float32, -bound, bound)
    bf = jax.random.uniform(kb, (1, 1), jnp.float32, -bound, bound)
    return dict(hidden=layers, wf=wf, bf=bf)


def reference_forward(x, params):
    """Pure-JAX reference of the un-fused eval-mode ScorePredictor (f32)."""
    h = x
    for lyr in params["hidden"]:
        h = jnp.maximum(h @ lyr["w"] + lyr["b"], 0.0)
        h = lyr["g"] * (h - lyr["m"]) * jax.lax.rsqrt(lyr["v"] + EPS) + lyr["be"]
        # Dropout(0.2) == identity in eval mode.
    return h @ params["wf"] + params["bf"]


def reference_forward_folded(x, folded):
    """Pure-JAX reference of exactly the folded/cast math the kernel runs."""
    hidden, wf_row, bf = folded
    h = x
    for w, b in hidden:
        h = jnp.dot(h.astype(w.dtype), w, preferred_element_type=jnp.float32) + b
        h = jnp.maximum(h, 0.0)
    return jnp.sum(h * wf_row, axis=-1, keepdims=True) + bf


# --------------------------------------------------------------------------
if __name__ == "__main__":
    embedding_dim = 32
    hidden_dims = (64, 32)
    batch = 1000          # deliberately NOT a multiple of batch_tile (tests padding)
    batch_tile = 512      # -> 2 parallel grid steps (keeps both v7x TCs busy)

    key = jax.random.PRNGKey(0)
    kx, kp, kx3, kp3 = jax.random.split(key, 4)
    x = jax.random.normal(kx, (batch, embedding_dim), jnp.float32)
    params = init_params(kp, embedding_dim, hidden_dims)

    ref_f32 = reference_forward(x, params)

    # (0) BN-fold algebra is exact (pure JAX, f32, no Pallas involved).
    fold_f32 = reference_forward_folded(x, fold_params(params, jnp.float32))
    assert jnp.allclose(fold_f32, ref_f32, atol=1e-4, rtol=1e-4)

    # (1) f32 kernel path matches the un-fused eval-mode reference.
    out_f32 = score_predictor_forward(x, params, batch_tile=batch_tile,
                                      compute_dtype=jnp.float32)
    out_f32 = jax.block_until_ready(out_f32)
    assert out_f32.shape == (batch, 1)
    assert jnp.allclose(out_f32, ref_f32, atol=1e-3, rtol=1e-3)

    # (2) default bf16 path matches an identically folded/cast JAX reference...
    out_bf16 = score_predictor_forward(x, params, batch_tile=batch_tile)
    out_bf16 = jax.block_until_ready(out_bf16)
    ref_bf16 = reference_forward_folded(x, fold_params(params, jnp.bfloat16))
    assert out_bf16.shape == (batch, 1)
    assert jnp.allclose(out_bf16, ref_bf16, atol=2e-3, rtol=2e-3)
    # ... and its bf16 drift from the full-f32 semantics stays small.
    assert jnp.allclose(out_bf16, ref_f32, atol=1e-1, rtol=1e-1)

    # (3) generality: 3 hidden layers (the module takes hidden_dims as a list).
    x3 = jax.random.normal(kx3, (300, embedding_dim), jnp.float32)
    params3 = init_params(kp3, embedding_dim, (64, 48, 32))
    out3 = score_predictor_forward(x3, params3, batch_tile=128,
                                   compute_dtype=jnp.float32)
    out3 = jax.block_until_ready(out3)
    assert out3.shape == (300, 1)
    assert jnp.allclose(out3, reference_forward(x3, params3), atol=1e-3, rtol=1e-3)

    print("KERNEL_OK")
</pallas_src>

<mosaic_0001>
module attributes {stable_mosaic.version = 11 : i64} {
  func.func @kernel(%arg0: i32, %arg1: memref<512x32xf32, #tpu.memory_space<vmem>>, %arg2: memref<32x64xf32, #tpu.memory_space<vmem>>, %arg3: memref<1x64xf32, #tpu.memory_space<vmem>>, %arg4: memref<64x32xf32, #tpu.memory_space<vmem>>, %arg5: memref<1x32xf32, #tpu.memory_space<vmem>>, %arg6: memref<1x32xf32, #tpu.memory_space<vmem>>, %arg7: memref<1x1xf32, #tpu.memory_space<vmem>>, %arg8: memref<1x512xf32, #tpu.memory_space<vmem>>) attributes {dimension_semantics = [#tpu.dimension_semantics<parallel>], iteration_bounds = array<i64: 2>, scalar_prefetch = 0 : i64, scratch_operands = 0 : i64, tpu.core_type = #tpu.core_type<tc>, window_params = [{transform_indices = @transform_0, window_bounds = array<i64: 512, 32>}, {pipeline_mode = #tpu.pipeline_mode<synchronous>, transform_indices = @transform_1, window_bounds = array<i64: 32, 64>}, {pipeline_mode = #tpu.pipeline_mode<synchronous>, transform_indices = @transform_2, window_bounds = array<i64: 1, 64>}, {pipeline_mode = #tpu.pipeline_mode<synchronous>, transform_indices = @transform_3, window_bounds = array<i64: 64, 32>}, {pipeline_mode = #tpu.pipeline_mode<synchronous>, transform_indices = @transform_4, window_bounds = array<i64: 1, 32>}, {pipeline_mode = #tpu.pipeline_mode<synchronous>, transform_indices = @transform_5, window_bounds = array<i64: 1, 32>}, {pipeline_mode = #tpu.pipeline_mode<synchronous>, transform_indices = @transform_6, window_bounds = array<i64: 1, 1>}, {transform_indices = @transform_7, window_bounds = array<i64: 1, 512>}]} {
    %c0 = arith.constant 0 : index
    %c0_0 = arith.constant 0 : index
    %0 = vector.load %arg1[%c0, %c0_0] : memref<512x32xf32, #tpu.memory_space<vmem>>, vector<512x32xf32>
    %c0_1 = arith.constant 0 : index
    %c0_2 = arith.constant 0 : index
    %1 = vector.load %arg2[%c0_1, %c0_2] : memref<32x64xf32, #tpu.memory_space<vmem>>, vector<32x64xf32>
    %cst = arith.constant dense<0.000000e+00> : vector<512x64xf32>
    %2 = tpu.matmul %0, %1, %cst {dimension_numbers = #tpu.dot_dimension_numbers<[1], [0], [0], [1], [0, 0, 1, 1], [], []>} : vector<512x32xf32>, vector<32x64xf32>, vector<512x64xf32> -> vector<512x64xf32>
    %c0_3 = arith.constant 0 : index
    %c0_4 = arith.constant 0 : index
    %3 = vector.load %arg3[%c0_3, %c0_4] : memref<1x64xf32, #tpu.memory_space<vmem>>, vector<1x64xf32>
    %4 = vector.broadcast %3 : vector<1x64xf32> to vector<512x64xf32>
    %5 = arith.addf %2, %4 : vector<512x64xf32>
    %cst_5 = arith.constant 0.000000e+00 : f32
    %6 = vector.broadcast %cst_5 : f32 to vector<512x64xf32>
    %7 = arith.maximumf %5, %6 : vector<512x64xf32>
    %c0_6 = arith.constant 0 : index
    %c0_7 = arith.constant 0 : index
    %8 = vector.load %arg4[%c0_6, %c0_7] : memref<64x32xf32, #tpu.memory_space<vmem>>, vector<64x32xf32>
    %cst_8 = arith.constant dense<0.000000e+00> : vector<512x32xf32>
    %9 = tpu.matmul %7, %8, %cst_8 {dimension_numbers = #tpu.dot_dimension_numbers<[1], [0], [0], [1], [0, 0, 1, 1], [], []>} : vector<512x64xf32>, vector<64x32xf32>, vector<512x32xf32> -> vector<512x32xf32>
    %c0_9 = arith.constant 0 : index
    %c0_10 = arith.constant 0 : index
    %10 = vector.load %arg5[%c0_9, %c0_10] : memref<1x32xf32, #tpu.memory_space<vmem>>, vector<1x32xf32>
    %11 = vector.broadcast %10 : vector<1x32xf32> to vector<512x32xf32>
    %12 = arith.addf %9, %11 : vector<512x32xf32>
    %cst_11 = arith.constant 0.000000e+00 : f32
    %13 = vector.broadcast %cst_11 : f32 to vector<512x32xf32>
    %14 = arith.maximumf %12, %13 : vector<512x32xf32>
    %c0_12 = arith.constant 0 : index
    %c0_13 = arith.constant 0 : index
    %15 = vector.load %arg6[%c0_12, %c0_13] : memref<1x32xf32, #tpu.memory_space<vmem>>, vector<1x32xf32>
    %16 = vector.broadcast %15 : vector<1x32xf32> to vector<512x32xf32>
    %17 = arith.mulf %14, %16 : vector<512x32xf32>
    %cst_14 = arith.constant dense<0.000000e+00> : vector<512xf32>
    %18 = vector.multi_reduction <add>, %17, %cst_14 [1] : vector<512x32xf32> to vector<512xf32>
    %19 = vector.shape_cast %18 : vector<512xf32> to vector<1x512xf32>
    %c0_15 = arith.constant 0 : index
    %c0_16 = arith.constant 0 : index
    %20 = vector.load %arg7[%c0_15, %c0_16] : memref<1x1xf32, #tpu.memory_space<vmem>>, vector<1x1xf32>
    %21 = vector.broadcast %20 : vector<1x1xf32> to vector<1x512xf32>
    %22 = arith.addf %19, %21 : vector<1x512xf32>
    %c0_17 = arith.constant 0 : index
    %c0_18 = arith.constant 0 : index
    %23 = vector.load %arg8[%c0_17, %c0_18] : memref<1x512xf32, #tpu.memory_space<vmem>>, vector<1x512xf32>
    tpu.vector_store %arg8[%c0_17, %c0_18], %22 {strides = array<i32>} : memref<1x512xf32, #tpu.memory_space<vmem>>, vector<1x512xf32>,
    return
  }
  func.func @transform_0(%arg0: i32) -> (i32, i32) {
    %c0_i32 = arith.constant 0 : i32
    %c0_i32_0 = arith.constant 0 : i32
    return %arg0, %c0_i32 : i32, i32
  }
  func.func @transform_1(%arg0: i32) -> (i32, i32) {
    %c0_i32 = arith.constant 0 : i32
    %c0_i32_0 = arith.constant 0 : i32
    %c0_i32_1 = arith.constant 0 : i32
    return %c0_i32, %c0_i32_0 : i32, i32
  }
  func.func @transform_2(%arg0: i32) -> (i32, i32) {
    %c0_i32 = arith.constant 0 : i32
    %c0_i32_0 = arith.constant 0 : i32
    %c0_i32_1 = arith.constant 0 : i32
    return %c0_i32, %c0_i32_0 : i32, i32
  }
  func.func @transform_3(%arg0: i32) -> (i32, i32) {
    %c0_i32 = arith.constant 0 : i32
    %c0_i32_0 = arith.constant 0 : i32
    %c0_i32_1 = arith.constant 0 : i32
    return %c0_i32, %c0_i32_0 : i32, i32
  }
  func.func @transform_4(%arg0: i32) -> (i32, i32) {
    %c0_i32 = arith.constant 0 : i32
    %c0_i32_0 = arith.constant 0 : i32
    %c0_i32_1 = arith.constant 0 : i32
    return %c0_i32, %c0_i32_0 : i32, i32
  }
  func.func @transform_5(%arg0: i32) -> (i32, i32) {
    %c0_i32 = arith.constant 0 : i32
    %c0_i32_0 = arith.constant 0 : i32
    %c0_i32_1 = arith.constant 0 : i32
    return %c0_i32, %c0_i32_0 : i32, i32
  }
  func.func @transform_6(%arg0: i32) -> (i32, i32) {
    %c0_i32 = arith.constant 0 : i32
    %c0_i32_0 = arith.constant 0 : i32
    %c0_i32_1 = arith.constant 0 : i32
    return %c0_i32, %c0_i32_0 : i32, i32
  }
  func.func @transform_7(%arg0: i32) -> (i32, i32) {
    %c0_i32 = arith.constant 0 : i32
    %c0_i32_0 = arith.constant 0 : i32
    return %c0_i32, %arg0 : i32, i32
  }
}

</mosaic_0001>

<llo_original>
// kernel: tpu_custom_call.1
$region0: #{tpu_custom_call.1}
  #allocation0 [shape = 'u32[]', space=smem, size = 0x4, offset = 0x4, fixed_abs, tag = 'smem constant byte address 0x4 - core index']
  #allocation1 [shape = 'u32[144,128]{1,0:T(1,128)}', space=vmem, size = 0x12000, scoped, tag = 'internal scratch']
  #allocation2 [shape = 'f32[1,1]{1,0:T(1,128)S(1)}', space=vmem, size = 0x200, scoped, tag = 'scoped memory for tpu_custom_call.1']
  %s0 = inlined_call_operand.vmem [shape: f32[1024,32], index: 0, kind: input, shape index: {}]
  %s1 = inlined_call_operand.vmem [shape: f32[32,64], index: 1, kind: input, shape index: {}]
  %s2 = inlined_call_operand.vmem [shape: f32[1,64], index: 2, kind: input, shape index: {}]
  %s3 = inlined_call_operand.vmem [shape: f32[64,32], index: 3, kind: input, shape index: {}]
  %s4 = inlined_call_operand.vmem [shape: f32[1,32], index: 4, kind: input, shape index: {}]
  %s5 = inlined_call_operand.vmem [shape: f32[1,32], index: 5, kind: input, shape index: {}]
  %s6 = inlined_call_operand.<no memory space> [shape: f32[1,1], index: 6, kind: input, shape index: {}]
  %s7 = inlined_call_operand.hbm [shape: f32[1,1024], index: 7, kind: output, shape index: {}]
  %s8 = sld [smem:[#allocation0]]
  $region61: #{tpu_custom_call.1} parent=0
    _
  %s10 = ssub.s32 1, %s8
  %s11 = scalar_select 0, %s10, %s8
  %v12 = vstv %s6
  %13 = vst [vmem:[#allocation2] sm:$0x1] %v12
  $region1: #{tpu_custom_call.1} parent=0
    #allocation3 [shape = 'u8[4096]{0}', space=vmem, size = 0x1000, scoped, tag = 'output window, operand 0']
    #allocation4 [shape = 's32[2]{0}', space=sflag, size = 0x8, scoped, tag = 'scoped memory for tpu_custom_call.1']
    %14 = vsyncpa [#allocation4], 0
    %s15 = scalar_lea.sflag [#allocation4], 1
    %16 = vsyncpa %s15, 0
    loop: start=0, step=1, limit=4
    $region2: #{tpu_custom_call.1} parent=1 // loop_pre_header
      _
    $region3: #{tpu_custom_call.1} parent=1 // loop_header
      %s18 = sphi 0, %s22
      %p19 = scmp.ge.s32.totalorder %s18, 4
      %s28 = sphi 0, %s30
      %s31 = sphi 0, %s28
      %s32 = sphi 0, %s31
      %s48 = sphi 0, %s32
      %s52 = sphi 0, %s52
      %s54 = sphi 0, %s52
      %s55 = sphi 0, %s54
      %s69 = sphi 0, %s55
      %s73 = sphi 0, %s73
      %s75 = sphi 0, %s73
      %s76 = sphi 0, %s75
      %s90 = sphi 0, %s76
      %s94 = sphi 0, %s94
      %s96 = sphi 0, %s94
      %s97 = sphi 0, %s96
      %s111 = sphi 0, %s97
      %s115 = sphi 0, %s115
      %s117 = sphi 0, %s115
      %s118 = sphi 0, %s117
      %s132 = sphi 0, %s118
      %s136 = sphi 0, %s136
      %s138 = sphi 0, %s136
      %s139 = sphi 0, %s138
      %s153 = sphi 0, %s139
      %s157 = sphi 0, %s157
      %s159 = sphi 0, %s157
      %s160 = sphi 0, %s159
      %s174 = sphi 0, %s160
      %s180 = sphi 0, %s182
      %s183 = sphi 0, %s180
      %s184 = sphi 0, %s183
      %s200 = sphi 0, %s184
    $region4: #{tpu_custom_call.1} parent=1 // loop_header_branch
      %21 = sbr.rel (%p19) target = $region8
    $region5: #{tpu_custom_call.1} parent=1 // loop_body
      %s23 = ssub.s32 %s18, 1
      %s24 = ssub.s32 %s18, 2
      %s25 = sadd.s32 %s18, 1
      %s26 = ssub.s32 %s18, %s25
      %p27 = scmp.eq.s32.totalorder %s26, 0
      %s29 = sadd.s32 %s28, 1
      %s30 = scalar_select %p27, %s28, %s29
      %p33 = pneg %p27
      %p34 = scmp.eq.s32.totalorder %s18, 1
      %p35 = por %p33, %p34
      %p36 = scmp.ne.s32.totalorder %s28, %s31
      %p37 = scmp.eq.s32.totalorder %s18, 0
      %p38 = por %p36, %p37
      %p39 = scmp.ne.s32.totalorder %s28, %s31
      %p40 = scmp.eq.s32.totalorder %s23, 1
      %p41 = por %p39, %p40
      %p42 = scmp.ne.s32.totalorder %s31, %s32
      %p43 = scmp.eq.s32.totalorder %s23, 0
      %p44 = por %p42, %p43
      %p45 = scmp.ne.s32.totalorder %s31, %s32
      %p46 = scmp.eq.s32.totalorder %s24, 1
      %p47 = por %p45, %p46
      %p49 = scmp.ne.s32.totalorder %s32, %s48
      %p50 = scmp.eq.s32.totalorder %s24, 0
      %p51 = por %p49, %p50
      %s53 = sadd.s32 %s52, 1
      %p56 = scmp.eq.s32.totalorder %s18, 1
      %p57 = scmp.ne.s32.totalorder %s52, %s54
      %p58 = scmp.eq.s32.totalorder %s18, 0
      %p59 = por %p57, %p58
      %p60 = scmp.ne.s32.totalorder %s52, %s54
      %p61 = scmp.eq.s32.totalorder %s23, 1
      %p62 = por %p60, %p61
      %p63 = scmp.ne.s32.totalorder %s54, %s55
      %p64 = scmp.eq.s32.totalorder %s23, 0
      %p65 = por %p63, %p64
      %p66 = scmp.ne.s32.totalorder %s54, %s55
      %p67 = scmp.eq.s32.totalorder %s24, 1
      %p68 = por %p66, %p67
      %p70 = scmp.ne.s32.totalorder %s55, %s69
      %p71 = scmp.eq.s32.totalorder %s24, 0
      %p72 = por %p70, %p71
      %s74 = sadd.s32 %s73, 1
      %p77 = scmp.eq.s32.totalorder %s18, 1
      %p78 = scmp.ne.s32.totalorder %s73, %s75
      %p79 = scmp.eq.s32.totalorder %s18, 0
      %p80 = por %p78, %p79
      %p81 = scmp.ne.s32.totalorder %s73, %s75
      %p82 = scmp.eq.s32.totalorder %s23, 1
      %p83 = por %p81, %p82
      %p84 = scmp.ne.s32.totalorder %s75, %s76
      %p85 = scmp.eq.s32.totalorder %s23, 0
      %p86 = por %p84, %p85
      %p87 = scmp.ne.s32.totalorder %s75, %s76
      %p88 = scmp.eq.s32.totalorder %s24, 1
      %p89 = por %p87, %p88
      %p91 = scmp.ne.s32.totalorder %s76, %s90
      %p92 = scmp.eq.s32.totalorder %s24, 0
      %p93 = por %p91, %p92
      %s95 = sadd.s32 %s94, 1
      %p98 = scmp.eq.s32.totalorder %s18, 1
      %p99 = scmp.ne.s32.totalorder %s94, %s96
      %p100 = scmp.eq.s32.totalorder %s18, 0
      %p101 = por %p99, %p100
      %p102 = scmp.ne.s32.totalorder %s94, %s96
      %p103 = scmp.eq.s32.totalorder %s23, 1
      %p104 = por %p102, %p103
      %p105 = scmp.ne.s32.totalorder %s96, %s97
      %p106 = scmp.eq.s32.totalorder %s23, 0
      %p107 = por %p105, %p106
      %p108 = scmp.ne.s32.totalorder %s96, %s97
      %p109 = scmp.eq.s32.totalorder %s24, 1
      %p110 = por %p108, %p109
      %p112 = scmp.ne.s32.totalorder %s97, %s111
      %p113 = scmp.eq.s32.totalorder %s24, 0
      %p114 = por %p112, %p113
      %s116 = sadd.s32 %s115, 1
      %p119 = scmp.eq.s32.totalorder %s18, 1
      %p120 = scmp.ne.s32.totalorder %s115, %s117
      %p121 = scmp.eq.s32.totalorder %s18, 0
      %p122 = por %p120, %p121
      %p123 = scmp.ne.s32.totalorder %s115, %s117
      %p124 = scmp.eq.s32.totalorder %s23, 1
      %p125 = por %p123, %p124
      %p126 = scmp.ne.s32.totalorder %s117, %s118
      %p127 = scmp.eq.s32.totalorder %s23, 0
      %p128 = por %p126, %p127
      %p129 = scmp.ne.s32.totalorder %s117, %s118
      %p130 = scmp.eq.s32.totalorder %s24, 1
      %p131 = por %p129, %p130
      %p133 = scmp.ne.s32.totalorder %s118, %s132
      %p134 = scmp.eq.s32.totalorder %s24, 0
      %p135 = por %p133, %p134
      %s137 = sadd.s32 %s136, 1
      %p140 = scmp.eq.s32.totalorder %s18, 1
      %p141 = scmp.ne.s32.totalorder %s136, %s138
      %p142 = scmp.eq.s32.totalorder %s18, 0
      %p143 = por %p141, %p142
      %p144 = scmp.ne.s32.totalorder %s136, %s138
      %p145 = scmp.eq.s32.totalorder %s23, 1
      %p146 = por %p144, %p145
      %p147 = scmp.ne.s32.totalorder %s138, %s139
      %p148 = scmp.eq.s32.totalorder %s23, 0
      %p149 = por %p147, %p148
      %p150 = scmp.ne.s32.totalorder %s138, %s139
      %p151 = scmp.eq.s32.totalorder %s24, 1
      %p152 = por %p150, %p151
      %p154 = scmp.ne.s32.totalorder %s139, %s153
      %p155 = scmp.eq.s32.totalorder %s24, 0
      %p156 = por %p154, %p155
      %s158 = sadd.s32 %s157, 1
      %p161 = scmp.eq.s32.totalorder %s18, 1
      %p162 = scmp.ne.s32.totalorder %s157, %s159
      %p163 = scmp.eq.s32.totalorder %s18, 0
      %p164 = por %p162, %p163
      %p165 = scmp.ne.s32.totalorder %s157, %s159
      %p166 = scmp.eq.s32.totalorder %s23, 1
      %p167 = por %p165, %p166
      %p168 = scmp.ne.s32.totalorder %s159, %s160
      %p169 = scmp.eq.s32.totalorder %s23, 0
      %p170 = por %p168, %p169
      %p171 = scmp.ne.s32.totalorder %s159, %s160
      %p172 = scmp.eq.s32.totalorder %s24, 1
      %p173 = por %p171, %p172
      %p175 = scmp.ne.s32.totalorder %s160, %s174
      %p176 = scmp.eq.s32.totalorder %s24, 0
      %p177 = por %p175, %p176
      %s178 = ssub.s32 %s18, %s25
      %p179 = scmp.eq.s32.totalorder %s178, 0
      %s181 = sadd.s32 %s180, 1
      %s182 = scalar_select %p179, %s180, %s181
      %p185 = pneg %p179
      %p186 = scmp.eq.s32.totalorder %s18, 1
      %p187 = por %p185, %p186
      %p188 = scmp.ne.s32.totalorder %s180, %s183
      %p189 = scmp.eq.s32.totalorder %s18, 0
      %p190 = por %p188, %p189
      %p191 = scmp.ne.s32.totalorder %s180, %s183
      %p192 = scmp.eq.s32.totalorder %s23, 1
      %p193 = por %p191, %p192
      %p194 = scmp.ne.s32.totalorder %s183, %s184
      %p195 = scmp.eq.s32.totalorder %s23, 0
      %p196 = por %p194, %p195
      %p197 = scmp.ne.s32.totalorder %s183, %s184
      %p198 = scmp.eq.s32.totalorder %s24, 1
      %p199 = por %p197, %p198
      %p201 = scmp.ne.s32.totalorder %s184, %s200
      %p202 = scmp.eq.s32.totalorder %s24, 0
      %p203 = por %p201, %p202
      %p204 = scmp.le.s32.totalorder 1, %s18
      %p205 = scmp.lt.s32.totalorder %s18, 3
      %p206 = pnand %p204, %p205
      %p207 = pneg %p206
      // Predicated region
      $region9: #{tpu_custom_call.1} parent=5 // pred_check
        _
      $region10: #{tpu_custom_call.1} parent=5 // pred_check_branch
        %209 = sbr.rel (%p206) target = $region12
      $region11: #{tpu_custom_call.1} parent=5 // pred_region
        %s210 = ssub.s32 %s18, 1
        // Predicated region
        $region13: #{tpu_custom_call.1} parent=11 // pred_check
          %p211 = pneg %p65
        $region14: #{tpu_custom_call.1} parent=11 // pred_check_branch
          %213 = sbr.rel (%p211) target = $region16
        $region15: #{tpu_custom_call.1} parent=11 // pred_region
          _
        $region16: #{tpu_custom_call.1} parent=11 // pred_fallthru
          _
        // Predicated region
        $region17: #{tpu_custom_call.1} parent=11 // pred_check
          %p214 = pneg %p86
        $region18: #{tpu_custom_call.1} parent=11 // pred_check_branch
          %216 = sbr.rel (%p214) target = $region20
        $region19: #{tpu_custom_call.1} parent=11 // pred_region
          _
        $region20: #{tpu_custom_call.1} parent=11 // pred_fallthru
          _
        // Predicated region
        $region21: #{tpu_custom_call.1} parent=11 // pred_check
          %p217 = pneg %p107
        $region22: #{tpu_custom_call.1} parent=11 // pred_check_branch
          %219 = sbr.rel (%p217) target = $region24
        $region23: #{tpu_custom_call.1} parent=11 // pred_region
          _
        $region24: #{tpu_custom_call.1} parent=11 // pred_fallthru
          _
        // Predicated region
        $region25: #{tpu_custom_call.1} parent=11 // pred_check
          %p220 = pneg %p128
        $region26: #{tpu_custom_call.1} parent=11 // pred_check_branch
          %222 = sbr.rel (%p220) target = $region28
        $region27: #{tpu_custom_call.1} parent=11 // pred_region
          _
        $region28: #{tpu_custom_call.1} parent=11 // pred_fallthru
          _
        // Predicated region
        $region29: #{tpu_custom_call.1} parent=11 // pred_check
          %p223 = pneg %p149
        $region30: #{tpu_custom_call.1} parent=11 // pred_check_branch
          %225 = sbr.rel (%p223) target = $region32
        $region31: #{tpu_custom_call.1} parent=11 // pred_region
          _
        $region32: #{tpu_custom_call.1} parent=11 // pred_fallthru
          _
        // Predicated region
        $region33: #{tpu_custom_call.1} parent=11 // pred_check
          %p226 = pneg %p170
        $region34: #{tpu_custom_call.1} parent=11 // pred_check_branch
          %228 = sbr.rel (%p226) target = $region36
        $region35: #{tpu_custom_call.1} parent=11 // pred_region
          _
        $region36: #{tpu_custom_call.1} parent=11 // pred_fallthru
          _
      $region12: #{tpu_custom_call.1} parent=5 // pred_fallthru
        _
      %p229 = scmp.lt.s32.totalorder %s18, 2
      // Predicated region
      $region37: #{tpu_custom_call.1} parent=5 // pred_check
        %p230 = pneg %p229
      $region38: #{tpu_custom_call.1} parent=5 // pred_check_branch
        %232 = sbr.rel (%p230) target = $region40
      $region39: #{tpu_custom_call.1} parent=5 // pred_region
        // Predicated region
        $region41: #{tpu_custom_call.1} parent=39 // pred_check
          %p233 = pneg %p38
        $region42: #{tpu_custom_call.1} parent=39 // pred_check_branch
          %235 = sbr.rel (%p233) target = $region44
        $region43: #{tpu_custom_call.1} parent=39 // pred_region
          %s236 = smul.u32 64, %s18
          %p237 = scmp.lt.s32.totalorder %s236, 127
          %s238 = scalar_select %p237, %s236, 127
          %s239 = smul.addr %s238, 8
          %s240 = scalar_lea.vmem %s0, %s239
          %s241 = smul.u32 64, %s18
        $region44: #{tpu_custom_call.1} parent=39 // pred_fallthru
          _
      $region40: #{tpu_custom_call.1} parent=5 // pred_fallthru
        _
      %p242 = scmp.le.s32.totalorder 1, %s18
      %p243 = scmp.lt.s32.totalorder %s18, 3
      %p244 = pnand %p242, %p243
      %p245 = pneg %p244
      // Predicated region
      $region45: #{tpu_custom_call.1} parent=5 // pred_check
        _
      $region46: #{tpu_custom_call.1} parent=5 // pred_check_branch
        %247 = sbr.rel (%p244) target = $region48
      $region47: #{tpu_custom_call.1} parent=5 // pred_region
        %s248 = ssub.s32 %s18, 1
        %s249 = smul.u32 64, %s23
        %p250 = scmp.lt.s32.totalorder %s249, 127
        %s251 = scalar_select %p250, %s249, 127
        %s252 = smul.addr %s251, 8
        %s253 = scalar_lea.vmem %s0, %s252
        %p254 = pneg %p44
        %p255 = pneg %p41
        %p256 = pneg %p65
        %p257 = pneg %p62
        %p258 = pneg %p86
        %p259 = pneg %p83
        %p260 = pneg %p107
        %p261 = pneg %p104
        %p262 = pneg %p128
        %p263 = pneg %p125
        %p264 = pneg %p149
        %p265 = pneg %p146
        %p266 = pneg %p170
        %p267 = pneg %p167
        %p268 = pneg %p196
        %p269 = pneg %p193
        %s270 = sand.u32 %s183, 1
        %s271 = scalar_lea.sflag [#allocation4], %s270
        %s272 = sand.u32 %s183, 1
        %s273 = smul.addr %s272, 4
        %s274 = scalar_lea.vmem [#allocation3], %s273
        %s275 = smul.u32 64, %s23
        %p276 = scmp.lt.s32.totalorder %s275, 127
        %s277 = scalar_select %p276, %s275, 127
        %s278 = smul.addr %s277, 8
        %s279 = scalar_lea.vmem %s0, %s278
        %s280 = smul.u32 64, %s23
        %s281 = smul.u32 4, %s23
        %v282 = vld [vmem:[%s279] sm:$0xff]
        %v283 = vld [vmem:[%s279 + $0x8] sm:$0xff]
        %v284 = vld [vmem:[%s279 + $0x10] sm:$0xff]
        %v285 = vld [vmem:[%s279 + $0x18] sm:$0xff]
        %v286 = vld [vmem:[%s279 + $0x20] sm:$0xff]
        %v287 = vld [vmem:[%s279 + $0x28] sm:$0xff]
        %v288 = vld [vmem:[%s279 + $0x30] sm:$0xff]
        %v289 = vld [vmem:[%s279 + $0x38] sm:$0xff]
        %v290 = vld [vmem:[%s279 + $0x40] sm:$0xff]
        %v291 = vld [vmem:[%s279 + $0x48] sm:$0xff]
        %v292 = vld [vmem:[%s279 + $0x50] sm:$0xff]
        %v293 = vld [vmem:[%s279 + $0x58] sm:$0xff]
        %v294 = vld [vmem:[%s279 + $0x60] sm:$0xff]
        %v295 = vld [vmem:[%s279 + $0x68] sm:$0xff]
        %v296 = vld [vmem:[%s279 + $0x70] sm:$0xff]
        %v297 = vld [vmem:[%s279 + $0x78] sm:$0xff]
        %v298 = vld [vmem:[%s279 + $0x80] sm:$0xff]
        %v299 = vld [vmem:[%s279 + $0x88] sm:$0xff]
        %v300 = vld [vmem:[%s279 + $0x90] sm:$0xff]
        %v301 = vld [vmem:[%s279 + $0x98] sm:$0xff]
        %v302 = vld [vmem:[%s279 + $0xa0] sm:$0xff]
        %v303 = vld [vmem:[%s279 + $0xa8] sm:$0xff]
        %v304 = vld [vmem:[%s279 + $0xb0] sm:$0xff]
        %v305 = vld [vmem:[%s279 + $0xb8] sm:$0xff]
        %v306 = vld [vmem:[%s279 + $0xc0] sm:$0xff]
        %v307 = vld [vmem:[%s279 + $0xc8] sm:$0xff]
        %v308 = vld [vmem:[%s279 + $0xd0] sm:$0xff]
        %v309 = vld [vmem:[%s279 + $0xd8] sm:$0xff]
        %v310 = vld [vmem:[%s279 + $0xe0] sm:$0xff]
        %v311 = vld [vmem:[%s279 + $0xe8] sm:$0xff]
        %v312 = vld [vmem:[%s279 + $0xf0] sm:$0xff]
        %v313 = vld [vmem:[%s279 + $0xf8] sm:$0xff]
        %v314 = vld [vmem:[%s279 + $0x100] sm:$0xff]
        %v315 = vld [vmem:[%s279 + $0x108] sm:$0xff]
        %v316 = vld [vmem:[%s279 + $0x110] sm:$0xff]
        %v317 = vld [vmem:[%s279 + $0x118] sm:$0xff]
        %v318 = vld [vmem:[%s279 + $0x120] sm:$0xff]
        %v319 = vld [vmem:[%s279 + $0x128] sm:$0xff]
        %v320 = vld [vmem:[%s279 + $0x130] sm:$0xff]
        %v321 = vld [vmem:[%s279 + $0x138] sm:$0xff]
        %v322 = vld [vmem:[%s279 + $0x140] sm:$0xff]
        %v323 = vld [vmem:[%s279 + $0x148] sm:$0xff]
        %v324 = vld [vmem:[%s279 + $0x150] sm:$0xff]
        %v325 = vld [vmem:[%s279 + $0x158] sm:$0xff]
        %v326 = vld [vmem:[%s279 + $0x160] sm:$0xff]
        %v327 = vld [vmem:[%s279 + $0x168] sm:$0xff]
        %v328 = vld [vmem:[%s279 + $0x170] sm:$0xff]
        %v329 = vld [vmem:[%s279 + $0x178] sm:$0xff]
        %v330 = vld [vmem:[%s279 + $0x180] sm:$0xff]
        %v331 = vld [vmem:[%s279 + $0x188] sm:$0xff]
        %v332 = vld [vmem:[%s279 + $0x190] sm:$0xff]
        %v333 = vld [vmem:[%s279 + $0x198] sm:$0xff]
        %v334 = vld [vmem:[%s279 + $0x1a0] sm:$0xff]
        %v335 = vld [vmem:[%s279 + $0x1a8] sm:$0xff]
        %v336 = vld [vmem:[%s279 + $0x1b0] sm:$0xff]
        %v337 = vld [vmem:[%s279 + $0x1b8] sm:$0xff]
        %v338 = vld [vmem:[%s279 + $0x1c0] sm:$0xff]
        %v339 = vld [vmem:[%s279 + $0x1c8] sm:$0xff]
        %v340 = vld [vmem:[%s279 + $0x1d0] sm:$0xff]
        %v341 = vld [vmem:[%s279 + $0x1d8] sm:$0xff]
        %v342 = vld [vmem:[%s279 + $0x1e0] sm:$0xff]
        %v343 = vld [vmem:[%s279 + $0x1e8] sm:$0xff]
        %v344 = vld [vmem:[%s279 + $0x1f0] sm:$0xff]
        %v345 = vld [vmem:[%s279 + $0x1f8] sm:$0xff]
        %v346 = vld [vmem:[%s1] sm:$0xff]
        %v347 = vld [vmem:[%s1 + $0x8] sm:$0xff]
        %v348 = vld [vmem:[%s1 + $0x10] sm:$0xff]
        %v349 = vld [vmem:[%s1 + $0x18] sm:$0xff]
        %v350 = vld [vmem:[%s2] sm:$0x1]
        %v352 = vlaneseq
        %v353 = vshrl.u32 %v352, 7
        %v354 = vsub.s32 0, %v353
        %v355 = vrot.slane %v350, %v354
        %vm357 = vcmask 261120
        %v359 = vsel %vm357, %v282, 0
        %v362 = vsel %vm357, %v283, 0
        %v365 = vsel %vm357, %v284, 0
        %v368 = vsel %vm357, %v285, 0
        %v371 = vsel %vm357, %v286, 0
        %v374 = vsel %vm357, %v287, 0
        %v377 = vsel %vm357, %v288, 0
        %v380 = vsel %vm357, %v289, 0
        %v383 = vsel %vm357, %v290, 0
        %v386 = vsel %vm357, %v291, 0
        %v389 = vsel %vm357, %v292, 0
        %v392 = vsel %vm357, %v293, 0
        %v395 = vsel %vm357, %v294, 0
        %v398 = vsel %vm357, %v295, 0
        %v401 = vsel %vm357, %v296, 0
        %v404 = vsel %vm357, %v297, 0
        %v407 = vsel %vm357, %v298, 0
        %v410 = vsel %vm357, %v299, 0
        %v413 = vsel %vm357, %v300, 0
        %v416 = vsel %vm357, %v301, 0
        %v419 = vsel %vm357, %v302, 0
        %v422 = vsel %vm357, %v303, 0
        %v425 = vsel %vm357, %v304, 0
        %v428 = vsel %vm357, %v305, 0
        %v431 = vsel %vm357, %v306, 0
        %v434 = vsel %vm357, %v307, 0
        %v437 = vsel %vm357, %v308, 0
        %v440 = vsel %vm357, %v309, 0
        %v443 = vsel %vm357, %v310, 0
        %v446 = vsel %vm357, %v311, 0
        %v449 = vsel %vm357, %v312, 0
        %v452 = vsel %vm357, %v313, 0
        %v455 = vsel %vm357, %v314, 0
        %v458 = vsel %vm357, %v315, 0
        %v461 = vsel %vm357, %v316, 0
        %v464 = vsel %vm357, %v317, 0
        %v467 = vsel %vm357, %v318, 0
        %v470 = vsel %vm357, %v319, 0
        %v473 = vsel %vm357, %v320, 0
        %v476 = vsel %vm357, %v321, 0
        %v479 = vsel %vm357, %v322, 0
        %v482 = vsel %vm357, %v323, 0
        %v485 = vsel %vm357, %v324, 0
        %v488 = vsel %vm357, %v325, 0
        %v491 = vsel %vm357, %v326, 0
        %v494 = vsel %vm357, %v327, 0
        %v497 = vsel %vm357, %v328, 0
        %v500 = vsel %vm357, %v329, 0
        %v503 = vsel %vm357, %v330, 0
        %v506 = vsel %vm357, %v331, 0
        %v509 = vsel %vm357, %v332, 0
        %v512 = vsel %vm357, %v333, 0
        %v515 = vsel %vm357, %v334, 0
        %v518 = vsel %vm357, %v335, 0
        %v521 = vsel %vm357, %v336, 0
        %v524 = vsel %vm357, %v337, 0
        %v527 = vsel %vm357, %v338, 0
        %v530 = vsel %vm357, %v339, 0
        %v533 = vsel %vm357, %v340, 0
        %v536 = vsel %vm357, %v341, 0
        %v539 = vsel %vm357, %v342, 0
        %v542 = vsel %vm357, %v343, 0
        %v545 = vsel %vm357, %v344, 0
        %v548 = vsel %vm357, %v345, 0
        %550 = vmatprep.subr.mxu0 0.0
        %551 = vmatpush1.msra.mxu0 %v346
        %552 = vmatprep.subr.mxu0 0.0
        %553 = vmatpush1.msra.mxu0 %v347
        %554 = vmatprep.subr.mxu0 0.0
        %555 = vmatpush1.msra.mxu0 %v348
        %556 = vmatprep.subr.mxu0 0.0
        %557 = vmatpush1.msra.mxu0 %v349
        %558 = vmatprep.subr.mxu0 0.0
        %559 = vmatpush1.msra.mxu0 0.0
        %560 = vmatprep.subr.mxu0 0.0
        %561 = vmatpush1.msra.mxu0 0.0
        %562 = vmatprep.subr.mxu0 0.0
        %563 = vmatpush1.msra.mxu0 0.0
        %564 = vmatprep.subr.mxu0 0.0
        %565 = vmatpush1.msra.mxu0 0.0
        %566 = vmatprep.subr.mxu0 0.0
        %567 = vmatpush1.msra.mxu0 0.0
        %568 = vmatprep.subr.mxu0 0.0
        %569 = vmatpush1.msra.mxu0 0.0
        %570 = vmatprep.subr.mxu0 0.0
        %571 = vmatpush1.msra.mxu0 0.0
        %572 = vmatprep.subr.mxu0 0.0
        %573 = vmatpush1.msra.mxu0 0.0
        %574 = vmatprep.subr.mxu0 0.0
        %575 = vmatpush1.msra.mxu0 0.0
        %576 = vmatprep.subr.mxu0 0.0
        %577 = vmatpush1.msra.mxu0 0.0
        %578 = vmatprep.subr.mxu0 0.0
        %579 = vmatpush1.msra.mxu0 0.0
        %580 = vmatprep.subr.mxu0 0.0
        %581 = vmatpush1.msra.mxu0 0.0
        %582 = vmatprep.subr.mxu0 0.0
        %583 = vmatpush1.msra.mxu0 0.0
        %584 = vmatprep.subr.mxu0 0.0
        %585 = vmatpush1.msra.mxu0 0.0
        %586 = vmatprep.subr.mxu0 0.0
        %587 = vmatpush1.msra.mxu0 0.0
        %588 = vmatprep.subr.mxu0 0.0
        %589 = vmatpush1.msra.mxu0 0.0
        %590 = vmatprep.subr.mxu0 0.0
        %591 = vmatpush1.msra.mxu0 0.0
        %592 = vmatprep.subr.mxu0 0.0
        %593 = vmatpush1.msra.mxu0 0.0
        %594 = vmatprep.subr.mxu0 0.0
        %595 = vmatpush1.msra.mxu0 0.0
        %596 = vmatprep.subr.mxu0 0.0
        %597 = vmatpush1.msra.mxu0 0.0
        %598 = vmatprep.subr.mxu0 0.0
        %599 = vmatpush1.msra.mxu0 0.0
        %600 = vmatprep.subr.mxu0 0.0
        %601 = vmatpush1.msra.mxu0 0.0
        %602 = vmatprep.subr.mxu0 0.0
        %603 = vmatpush1.msra.mxu0 0.0
        %604 = vmatprep.subr.mxu0 0.0
        %605 = vmatpush1.msra.mxu0 0.0
        %606 = vmatprep.subr.mxu0 0.0
        %607 = vmatpush1.msra.mxu0 0.0
        %608 = vmatprep.subr.mxu0 0.0
        %609 = vmatpush1.msra.mxu0 0.0
        %610 = vmatprep.subr.mxu0 0.0
        %611 = vmatpush1.msra.mxu0 0.0
        %612 = vmatprep.subr.mxu0 0.0
        %613 = vmatpush1.msra.mxu0 0.0
        %614 = vmatprep.mubr.f32.mxu0 0.0
        %615 = vmatmul.mubr.f32.gmra.mrb[0].mxu0 %v359
        %v616 = vpop.f32.mrb[0].mxu0
        %v617 = vadd.f32 %v355, %v616
        %v618 = vpop.f32.mrb[0].mxu0
        %619 = vmatprep.mubr.f32.mxu0 0.0
        %620 = vmatmul.mubr.f32.gmra.mrb[0].mxu0 %v362
        %v621 = vpop.f32.mrb[0].mxu0
        %v622 = vadd.f32 %v355, %v621
        %v623 = vpop.f32.mrb[0].mxu0
        %624 = vmatprep.mubr.f32.mxu0 0.0
        %625 = vmatmul.mubr.f32.gmra.mrb[0].mxu0 %v365
        %v626 = vpop.f32.mrb[0].mxu0
        %v627 = vadd.f32 %v355, %v626
        %v628 = vpop.f32.mrb[0].mxu0
        %629 = vmatprep.mubr.f32.mxu0 0.0
        %630 = vmatmul.mubr.f32.gmra.mrb[0].mxu0 %v368
        %v631 = vpop.f32.mrb[0].mxu0
        %v632 = vadd.f32 %v355, %v631
        %v633 = vpop.f32.mrb[0].mxu0
        %634 = vmatprep.mubr.f32.mxu0 0.0
        %635 = vmatmul.mubr.f32.gmra.mrb[0].mxu0 %v371
        %v636 = vpop.f32.mrb[0].mxu0
        %v637 = vadd.f32 %v355, %v636
        %v638 = vpop.f32.mrb[0].mxu0
        %639 = vmatprep.mubr.f32.mxu0 0.0
        %640 = vmatmul.mubr.f32.gmra.mrb[0].mxu0 %v374
        %v641 = vpop.f32.mrb[0].mxu0
        %v642 = vadd.f32 %v355, %v641
        %v643 = vpop.f32.mrb[0].mxu0
        %644 = vmatprep.mubr.f32.mxu0 0.0
        %645 = vmatmul.mubr.f32.gmra.mrb[0].mxu0 %v377
        %v646 = vpop.f32.mrb[0].mxu0
        %v647 = vadd.f32 %v355, %v646
        %v648 = vpop.f32.mrb[0].mxu0
        %649 = vmatprep.mubr.f32.mxu0 0.0
        %650 = vmatmul.mubr.f32.gmra.mrb[0].mxu0 %v380
        %v651 = vpop.f32.mrb[0].mxu0
        %v652 = vadd.f32 %v355, %v651
        %v653 = vpop.f32.mrb[0].mxu0
        %654 = vmatprep.mubr.f32.mxu0 0.0
        %655 = vmatmul.mubr.f32.gmra.mrb[0].mxu0 %v383
        %v656 = vpop.f32.mrb[0].mxu0
        %v657 = vadd.f32 %v355, %v656
        %v658 = vpop.f32.mrb[0].mxu0
        %659 = vmatprep.mubr.f32.mxu0 0.0
        %660 = vmatmul.mubr.f32.gmra.mrb[0].mxu0 %v386
        %v661 = vpop.f32.mrb[0].mxu0
        %v662 = vadd.f32 %v355, %v661
        %v663 = vpop.f32.mrb[0].mxu0
        %664 = vmatprep.mubr.f32.mxu0 0.0
        %665 = vmatmul.mubr.f32.gmra.mrb[0].mxu0 %v389
        %v666 = vpop.f32.mrb[0].mxu0
        %v667 = vadd.f32 %v355, %v666
        %v668 = vpop.f32.mrb[0].mxu0
        %669 = vmatprep.mubr.f32.mxu0 0.0
        %670 = vmatmul.mubr.f32.gmra.mrb[0].mxu0 %v392
        %v671 = vpop.f32.mrb[0].mxu0
        %v672 = vadd.f32 %v355, %v671
        %v673 = vpop.f32.mrb[0].mxu0
        %674 = vmatprep.mubr.f32.mxu0 0.0
        %675 = vmatmul.mubr.f32.gmra.mrb[0].mxu0 %v395
        %v676 = vpop.f32.mrb[0].mxu0
        %v677 = vadd.f32 %v355, %v676
        %v678 = vpop.f32.mrb[0].mxu0
        %679 = vmatprep.mubr.f32.mxu0 0.0
        %680 = vmatmul.mubr.f32.gmra.mrb[0].mxu0 %v398
        %v681 = vpop.f32.mrb[0].mxu0
        %v682 = vadd.f32 %v355, %v681
        %v683 = vpop.f32.mrb[0].mxu0
        %684 = vmatprep.mubr.f32.mxu0 0.0
        %685 = vmatmul.mubr.f32.gmra.mrb[0].mxu0 %v401
        %v686 = vpop.f32.mrb[0].mxu0
        %v687 = vadd.f32 %v355, %v686
        %v688 = vpop.f32.mrb[0].mxu0
        %689 = vmatprep.mubr.f32.mxu0 0.0
        %690 = vmatmul.mubr.f32.gmra.mrb[0].mxu0 %v404
        %v691 = vpop.f32.mrb[0].mxu0
        %v692 = vadd.f32 %v355, %v691
        %v693 = vpop.f32.mrb[0].mxu0
        %694 = vmatprep.mubr.f32.mxu0 0.0
        %695 = vmatmul.mubr.f32.gmra.mrb[0].mxu0 %v407
        %v696 = vpop.f32.mrb[0].mxu0
        %v697 = vadd.f32 %v355, %v696
        %v698 = vpop.f32.mrb[0].mxu0
        %699 = vmatprep.mubr.f32.mxu0 0.0
        %700 = vmatmul.mubr.f32.gmra.mrb[0].mxu0 %v410
        %v701 = vpop.f32.mrb[0].mxu0
        %v702 = vadd.f32 %v355, %v701
        %v703 = vpop.f32.mrb[0].mxu0
        %704 = vmatprep.mubr.f32.mxu0 0.0
        %705 = vmatmul.mubr.f32.gmra.mrb[0].mxu0 %v413
        %v706 = vpop.f32.mrb[0].mxu0
        %v707 = vadd.f32 %v355, %v706
        %v708 = vpop.f32.mrb[0].mxu0
        %709 = vmatprep.mubr.f32.mxu0 0.0
        %710 = vmatmul.mubr.f32.gmra.mrb[0].mxu0 %v416
        %v711 = vpop.f32.mrb[0].mxu0
        %v712 = vadd.f32 %v355, %v711
        %v713 = vpop.f32.mrb[0].mxu0
        %714 = vmatprep.mubr.f32.mxu0 0.0
        %715 = vmatmul.mubr.f32.gmra.mrb[0].mxu0 %v419
        %v716 = vpop.f32.mrb[0].mxu0
        %v717 = vadd.f32 %v355, %v716
        %v718 = vpop.f32.mrb[0].mxu0
        %719 = vmatprep.mubr.f32.mxu0 0.0
        %720 = vmatmul.mubr.f32.gmra.mrb[0].mxu0 %v422
        %v721 = vpop.f32.mrb[0].mxu0
        %v722 = vadd.f32 %v355, %v721
        %v723 = vpop.f32.mrb[0].mxu0
        %724 = vmatprep.mubr.f32.mxu0 0.0
        %725 = vmatmul.mubr.f32.gmra.mrb[0].mxu0 %v425
        %v726 = vpop.f32.mrb[0].mxu0
        %v727 = vadd.f32 %v355, %v726
        %v728 = vpop.f32.mrb[0].mxu0
        %729 = vmatprep.mubr.f32.mxu0 0.0
        %730 = vmatmul.mubr.f32.gmra.mrb[0].mxu0 %v428
        %v731 = vpop.f32.mrb[0].mxu0
        %v732 = vadd.f32 %v355, %v731
        %v733 = vpop.f32.mrb[0].mxu0
        %734 = vmatprep.mubr.f32.mxu0 0.0
        %735 = vmatmul.mubr.f32.gmra.mrb[0].mxu0 %v431
        %v736 = vpop.f32.mrb[0].mxu0
        %v737 = vadd.f32 %v355, %v736
        %v738 = vpop.f32.mrb[0].mxu0
        %739 = vmatprep.mubr.f32.mxu0 0.0
        %740 = vmatmul.mubr.f32.gmra.mrb[0].mxu0 %v434
        %v741 = vpop.f32.mrb[0].mxu0
        %v742 = vadd.f32 %v355, %v741
        %v743 = vpop.f32.mrb[0].mxu0
        %744 = vmatprep.mubr.f32.mxu0 0.0
        %745 = vmatmul.mubr.f32.gmra.mrb[0].mxu0 %v437
        %v746 = vpop.f32.mrb[0].mxu0
        %v747 = vadd.f32 %v355, %v746
        %v748 = vpop.f32.mrb[0].mxu0
        %749 = vmatprep.mubr.f32.mxu0 0.0
        %750 = vmatmul.mubr.f32.gmra.mrb[0].mxu0 %v440
        %v751 = vpop.f32.mrb[0].mxu0
        %v752 = vadd.f32 %v355, %v751
        %v753 = vpop.f32.mrb[0].mxu0
        %754 = vmatprep.mubr.f32.mxu0 0.0
        %755 = vmatmul.mubr.f32.gmra.mrb[0].mxu0 %v443
        %v756 = vpop.f32.mrb[0].mxu0
        %v757 = vadd.f32 %v355, %v756
        %v758 = vpop.f32.mrb[0].mxu0
        %759 = vmatprep.mubr.f32.mxu0 0.0
        %760 = vmatmul.mubr.f32.gmra.mrb[0].mxu0 %v446
        %v761 = vpop.f32.mrb[0].mxu0
        %v762 = vadd.f32 %v355, %v761
        %v763 = vpop.f32.mrb[0].mxu0
        %764 = vmatprep.mubr.f32.mxu0 0.0
        %765 = vmatmul.mubr.f32.gmra.mrb[0].mxu0 %v449
        %v766 = vpop.f32.mrb[0].mxu0
        %v767 = vadd.f32 %v355, %v766
        %v768 = vpop.f32.mrb[0].mxu0
        %769 = vmatprep.mubr.f32.mxu0 0.0
        %770 = vmatmul.mubr.f32.gmra.mrb[0].mxu0 %v452
        %v771 = vpop.f32.mrb[0].mxu0
        %v772 = vadd.f32 %v355, %v771
        %v773 = vpop.f32.mrb[0].mxu0
        %774 = vmatprep.mubr.f32.mxu0 0.0
        %775 = vmatmul.mubr.f32.gmra.mrb[0].mxu0 %v455
        %v776 = vpop.f32.mrb[0].mxu0
        %v777 = vadd.f32 %v355, %v776
        %v778 = vpop.f32.mrb[0].mxu0
        %779 = vmatprep.mubr.f32.mxu0 0.0
        %780 = vmatmul.mubr.f32.gmra.mrb[0].mxu0 %v458
        %v781 = vpop.f32.mrb[0].mxu0
        %v782 = vadd.f32 %v355, %v781
        %v783 = vpop.f32.mrb[0].mxu0
        %784 = vmatprep.mubr.f32.mxu0 0.0
        %785 = vmatmul.mubr.f32.gmra.mrb[0].mxu0 %v461
        %v786 = vpop.f32.mrb[0].mxu0
        %v787 = vadd.f32 %v355, %v786
        %v788 = vpop.f32.mrb[0].mxu0
        %789 = vmatprep.mubr.f32.mxu0 0.0
        %790 = vmatmul.mubr.f32.gmra.mrb[0].mxu0 %v464
        %v791 = vpop.f32.mrb[0].mxu0
        %v792 = vadd.f32 %v355, %v791
        %v793 = vpop.f32.mrb[0].mxu0
        %794 = vmatprep.mubr.f32.mxu0 0.0
        %795 = vmatmul.mubr.f32.gmra.mrb[0].mxu0 %v467
        %v796 = vpop.f32.mrb[0].mxu0
        %v797 = vadd.f32 %v355, %v796
        %v798 = vpop.f32.mrb[0].mxu0
        %799 = vmatprep.mubr.f32.mxu0 0.0
        %800 = vmatmul.mubr.f32.gmra.mrb[0].mxu0 %v470
        %v801 = vpop.f32.mrb[0].mxu0
        %v802 = vadd.f32 %v355, %v801
        %v803 = vpop.f32.mrb[0].mxu0
        %804 = vmatprep.mubr.f32.mxu0 0.0
        %805 = vmatmul.mubr.f32.gmra.mrb[0].mxu0 %v473
        %v806 = vpop.f32.mrb[0].mxu0
        %v807 = vadd.f32 %v355, %v806
        %v808 = vpop.f32.mrb[0].mxu0
        %809 = vmatprep.mubr.f32.mxu0 0.0
        %810 = vmatmul.mubr.f32.gmra.mrb[0].mxu0 %v476
        %v811 = vpop.f32.mrb[0].mxu0
        %v812 = vadd.f32 %v355, %v811
        %v813 = vpop.f32.mrb[0].mxu0
        %814 = vmatprep.mubr.f32.mxu0 0.0
        %815 = vmatmul.mubr.f32.gmra.mrb[0].mxu0 %v479
        %v816 = vpop.f32.mrb[0].mxu0
        %v817 = vadd.f32 %v355, %v816
        %v818 = vpop.f32.mrb[0].mxu0
        %819 = vmatprep.mubr.f32.mxu0 0.0
        %820 = vmatmul.mubr.f32.gmra.mrb[0].mxu0 %v482
        %v821 = vpop.f32.mrb[0].mxu0
        %v822 = vadd.f32 %v355, %v821
        %v823 = vpop.f32.mrb[0].mxu0
        %824 = vmatprep.mubr.f32.mxu0 0.0
        %825 = vmatmul.mubr.f32.gmra.mrb[0].mxu0 %v485
        %v826 = vpop.f32.mrb[0].mxu0
        %v827 = vadd.f32 %v355, %v826
        %v828 = vpop.f32.mrb[0].mxu0
        %829 = vmatprep.mubr.f32.mxu0 0.0
        %830 = vmatmul.mubr.f32.gmra.mrb[0].mxu0 %v488
        %v831 = vpop.f32.mrb[0].mxu0
        %v832 = vadd.f32 %v355, %v831
        %v833 = vpop.f32.mrb[0].mxu0
        %834 = vmatprep.mubr.f32.mxu0 0.0
        %835 = vmatmul.mubr.f32.gmra.mrb[0].mxu0 %v491
        %v836 = vpop.f32.mrb[0].mxu0
        %v837 = vadd.f32 %v355, %v836
        %v838 = vpop.f32.mrb[0].mxu0
        %839 = vmatprep.mubr.f32.mxu0 0.0
        %840 = vmatmul.mubr.f32.gmra.mrb[0].mxu0 %v494
        %v841 = vpop.f32.mrb[0].mxu0
        %v842 = vadd.f32 %v355, %v841
        %v843 = vpop.f32.mrb[0].mxu0
        %844 = vmatprep.mubr.f32.mxu0 0.0
        %845 = vmatmul.mubr.f32.gmra.mrb[0].mxu0 %v497
        %v846 = vpop.f32.mrb[0].mxu0
        %v847 = vadd.f32 %v355, %v846
        %v848 = vpop.f32.mrb[0].mxu0
        %849 = vmatprep.mubr.f32.mxu0 0.0
        %850 = vmatmul.mubr.f32.gmra.mrb[0].mxu0 %v500
        %v851 = vpop.f32.mrb[0].mxu0
        %v852 = vadd.f32 %v355, %v851
        %v853 = vpop.f32.mrb[0].mxu0
        %854 = vmatprep.mubr.f32.mxu0 0.0
        %855 = vmatmul.mubr.f32.gmra.mrb[0].mxu0 %v503
        %v856 = vpop.f32.mrb[0].mxu0
        %v857 = vadd.f32 %v355, %v856
        %v858 = vpop.f32.mrb[0].mxu0
        %859 = vmatprep.mubr.f32.mxu0 0.0
        %860 = vmatmul.mubr.f32.gmra.mrb[0].mxu0 %v506
        %v861 = vpop.f32.mrb[0].mxu0
        %v862 = vadd.f32 %v355, %v861
        %v863 = vpop.f32.mrb[0].mxu0
        %864 = vmatprep.mubr.f32.mxu0 0.0
        %865 = vmatmul.mubr.f32.gmra.mrb[0].mxu0 %v509
        %v866 = vpop.f32.mrb[0].mxu0
        %v867 = vadd.f32 %v355, %v866
        %v868 = vpop.f32.mrb[0].mxu0
        %869 = vmatprep.mubr.f32.mxu0 0.0
        %870 = vmatmul.mubr.f32.gmra.mrb[0].mxu0 %v512
        %v871 = vpop.f32.mrb[0].mxu0
        %v872 = vadd.f32 %v355, %v871
        %v873 = vpop.f32.mrb[0].mxu0
        %874 = vmatprep.mubr.f32.mxu0 0.0
        %875 = vmatmul.mubr.f32.gmra.mrb[0].mxu0 %v515
        %v876 = vpop.f32.mrb[0].mxu0
        %v877 = vadd.f32 %v355, %v876
        %v878 = vpop.f32.mrb[0].mxu0
        %879 = vmatprep.mubr.f32.mxu0 0.0
        %880 = vmatmul.mubr.f32.gmra.mrb[0].mxu0 %v518
        %v881 = vpop.f32.mrb[0].mxu0
        %v882 = vadd.f32 %v355, %v881
        %v883 = vpop.f32.mrb[0].mxu0
        %884 = vmatprep.mubr.f32.mxu0 0.0
        %885 = vmatmul.mubr.f32.gmra.mrb[0].mxu0 %v521
        %v886 = vpop.f32.mrb[0].mxu0
        %v887 = vadd.f32 %v355, %v886
        %v888 = vpop.f32.mrb[0].mxu0
        %889 = vmatprep.mubr.f32.mxu0 0.0
        %890 = vmatmul.mubr.f32.gmra.mrb[0].mxu0 %v524
        %v891 = vpop.f32.mrb[0].mxu0
        %v892 = vadd.f32 %v355, %v891
        %v893 = vpop.f32.mrb[0].mxu0
        %894 = vmatprep.mubr.f32.mxu0 0.0
        %895 = vmatmul.mubr.f32.gmra.mrb[0].mxu0 %v527
        %v896 = vpop.f32.mrb[0].mxu0
        %v897 = vadd.f32 %v355, %v896
        %v898 = vpop.f32.mrb[0].mxu0
        %899 = vmatprep.mubr.f32.mxu0 0.0
        %900 = vmatmul.mubr.f32.gmra.mrb[0].mxu0 %v530
        %v901 = vpop.f32.mrb[0].mxu0
        %v902 = vadd.f32 %v355, %v901
        %v903 = vpop.f32.mrb[0].mxu0
        %904 = vmatprep.mubr.f32.mxu0 0.0
        %905 = vmatmul.mubr.f32.gmra.mrb[0].mxu0 %v533
        %v906 = vpop.f32.mrb[0].mxu0
        %v907 = vadd.f32 %v355, %v906
        %v908 = vpop.f32.mrb[0].mxu0
        %909 = vmatprep.mubr.f32.mxu0 0.0
        %910 = vmatmul.mubr.f32.gmra.mrb[0].mxu0 %v536
        %v911 = vpop.f32.mrb[0].mxu0
        %v912 = vadd.f32 %v355, %v911
        %v913 = vpop.f32.mrb[0].mxu0
        %914 = vmatprep.mubr.f32.mxu0 0.0
        %915 = vmatmul.mubr.f32.gmra.mrb[0].mxu0 %v539
        %v916 = vpop.f32.mrb[0].mxu0
        %v917 = vadd.f32 %v355, %v916
        %v918 = vpop.f32.mrb[0].mxu0
        %919 = vmatprep.mubr.f32.mxu0 0.0
        %920 = vmatmul.mubr.f32.gmra.mrb[0].mxu0 %v542
        %v921 = vpop.f32.mrb[0].mxu0
        %v922 = vadd.f32 %v355, %v921
        %v923 = vpop.f32.mrb[0].mxu0
        %924 = vmatprep.mubr.f32.mxu0 0.0
        %925 = vmatmul.mubr.f32.gmra.mrb[0].mxu0 %v545
        %v926 = vpop.f32.mrb[0].mxu0
        %v927 = vadd.f32 %v355, %v926
        %v928 = vpop.f32.mrb[0].mxu0
        %929 = vmatprep.mubr.f32.mxu0 0.0
        %930 = vmatmul.mubr.f32.gmra.mrb[0].mxu0 %v548
        %v931 = vpop.f32.mrb[0].mxu0
        %v932 = vadd.f32 %v355, %v931
        %v933 = vpop.f32.mrb[0].mxu0
        %934 = vdwg.mxu0
        %v935 = vmax.f32 %v617, 0.0
        %v936 = vmax.f32 %v622, 0.0
        %v937 = vmax.f32 %v627, 0.0
        %v938 = vmax.f32 %v632, 0.0
        %v939 = vmax.f32 %v637, 0.0
        %v940 = vmax.f32 %v642, 0.0
        %v941 = vmax.f32 %v647, 0.0
        %v942 = vmax.f32 %v652, 0.0
        %v943 = vmax.f32 %v657, 0.0
        %v944 = vmax.f32 %v662, 0.0
        %v945 = vmax.f32 %v667, 0.0
        %v946 = vmax.f32 %v672, 0.0
        %v947 = vmax.f32 %v677, 0.0
        %v948 = vmax.f32 %v682, 0.0
        %v949 = vmax.f32 %v687, 0.0
        %v950 = vmax.f32 %v692, 0.0
        %v951 = vmax.f32 %v697, 0.0
        %v952 = vmax.f32 %v702, 0.0
        %v953 = vmax.f32 %v707, 0.0
        %v954 = vmax.f32 %v712, 0.0
        %v955 = vmax.f32 %v717, 0.0
        %v956 = vmax.f32 %v722, 0.0
        %v957 = vmax.f32 %v727, 0.0
        %v958 = vmax.f32 %v732, 0.0
        %v959 = vmax.f32 %v737, 0.0
        %v960 = vmax.f32 %v742, 0.0
        %v961 = vmax.f32 %v747, 0.0
        %v962 = vmax.f32 %v752, 0.0
        %v963 = vmax.f32 %v757, 0.0
        %v964 = vmax.f32 %v762, 0.0
        %v965 = vmax.f32 %v767, 0.0
        %v966 = vmax.f32 %v772, 0.0
        %v967 = vmax.f32 %v777, 0.0
        %v968 = vmax.f32 %v782, 0.0
        %v969 = vmax.f32 %v787, 0.0
        %v970 = vmax.f32 %v792, 0.0
        %v971 = vmax.f32 %v797, 0.0
        %v972 = vmax.f32 %v802, 0.0
        %v973 = vmax.f32 %v807, 0.0
        %v974 = vmax.f32 %v812, 0.0
        %v975 = vmax.f32 %v817, 0.0
        %v976 = vmax.f32 %v822, 0.0
        %v977 = vmax.f32 %v827, 0.0
        %v978 = vmax.f32 %v832, 0.0
        %v979 = vmax.f32 %v837, 0.0
        %v980 = vmax.f32 %v842, 0.0
        %v981 = vmax.f32 %v847, 0.0
        %v982 = vmax.f32 %v852, 0.0
        %v983 = vmax.f32 %v857, 0.0
        %v984 = vmax.f32 %v862, 0.0
        %v985 = vmax.f32 %v867, 0.0
        %v986 = vmax.f32 %v872, 0.0
        %v987 = vmax.f32 %v877, 0.0
        %v988 = vmax.f32 %v882, 0.0
        %v989 = vmax.f32 %v887, 0.0
        %v990 = vmax.f32 %v892, 0.0
        %v991 = vmax.f32 %v897, 0.0
        %v992 = vmax.f32 %v902, 0.0
        %v993 = vmax.f32 %v907, 0.0
        %v994 = vmax.f32 %v912, 0.0
        %v995 = vmax.f32 %v917, 0.0
        %v996 = vmax.f32 %v922, 0.0
        %v997 = vmax.f32 %v927, 0.0
        %v998 = vmax.f32 %v932, 0.0
        %v999 = vld [vmem:[%s3] sm:$0xff]
        %v1000 = vld [vmem:[%s3 + $0x8] sm:$0xff]
        %v1001 = vld [vmem:[%s3 + $0x10] sm:$0xff]
        %v1002 = vld [vmem:[%s3 + $0x18] sm:$0xff]
        %v1003 = vld [vmem:[%s3 + $0x20] sm:$0xff]
        %v1004 = vld [vmem:[%s3 + $0x28] sm:$0xff]
        %v1005 = vld [vmem:[%s3 + $0x30] sm:$0xff]
        %v1006 = vld [vmem:[%s3 + $0x38] sm:$0xff]
        %v1007 = vld [vmem:[%s4] sm:$0x1]
        %v1009 = vlaneseq
        %v1010 = vshrl.u32 %v1009, 7
        %v1011 = vsub.s32 0, %v1010
        %v1012 = vrot.slane %v1007, %v1011
        %vm1014 = vcmask 523264
        %v1016 = vsel %vm1014, %v935, 0
        %v1019 = vsel %vm1014, %v936, 0
        %v1022 = vsel %vm1014, %v937, 0
        %v1025 = vsel %vm1014, %v938, 0
        %v1028 = vsel %vm1014, %v939, 0
        %v1031 = vsel %vm1014, %v940, 0
        %v1034 = vsel %vm1014, %v941, 0
        %v1037 = vsel %vm1014, %v942, 0
        %v1040 = vsel %vm1014, %v943, 0
        %v1043 = vsel %vm1014, %v944, 0
        %v1046 = vsel %vm1014, %v945, 0
        %v1049 = vsel %vm1014, %v946, 0
        %v1052 = vsel %vm1014, %v947, 0
        %v1055 = vsel %vm1014, %v948, 0
        %v1058 = vsel %vm1014, %v949, 0
        %v1061 = vsel %vm1014, %v950, 0
        %v1064 = vsel %vm1014, %v951, 0
        %v1067 = vsel %vm1014, %v952, 0
        %v1070 = vsel %vm1014, %v953, 0
        %v1073 = vsel %vm1014, %v954, 0
        %v1076 = vsel %vm1014, %v955, 0
        %v1079 = vsel %vm1014, %v956, 0
        %v1082 = vsel %vm1014, %v957, 0
        %v1085 = vsel %vm1014, %v958, 0
        %v1088 = vsel %vm1014, %v959, 0
        %v1091 = vsel %vm1014, %v960, 0
        %v1094 = vsel %vm1014, %v961, 0
        %v1097 = vsel %vm1014, %v962, 0
        %v1100 = vsel %vm1014, %v963, 0
        %v1103 = vsel %vm1014, %v964, 0
        %v1106 = vsel %vm1014, %v965, 0
        %v1109 = vsel %vm1014, %v966, 0
        %v1112 = vsel %vm1014, %v967, 0
        %v1115 = vsel %vm1014, %v968, 0
        %v1118 = vsel %vm1014, %v969, 0
        %v1121 = vsel %vm1014, %v970, 0
        %v1124 = vsel %vm1014, %v971, 0
        %v1127 = vsel %vm1014, %v972, 0
        %v1130 = vsel %vm1014, %v973, 0
        %v1133 = vsel %vm1014, %v974, 0
        %v1136 = vsel %vm1014, %v975, 0
        %v1139 = vsel %vm1014, %v976, 0
        %v1142 = vsel %vm1014, %v977, 0
        %v1145 = vsel %vm1014, %v978, 0
        %v1148 = vsel %vm1014, %v979, 0
        %v1151 = vsel %vm1014, %v980, 0
        %v1154 = vsel %vm1014, %v981, 0
        %v1157 = vsel %vm1014, %v982, 0
        %v1160 = vsel %vm1014, %v983, 0
        %v1163 = vsel %vm1014, %v984, 0
        %v1166 = vsel %vm1014, %v985, 0
        %v1169 = vsel %vm1014, %v986, 0
        %v1172 = vsel %vm1014, %v987, 0
        %v1175 = vsel %vm1014, %v988, 0
        %v1178 = vsel %vm1014, %v989, 0
        %v1181 = vsel %vm1014, %v990, 0
        %v1184 = vsel %vm1014, %v991, 0
        %v1187 = vsel %vm1014, %v992, 0
        %v1190 = vsel %vm1014, %v993, 0
        %v1193 = vsel %vm1014, %v994, 0
        %v1196 = vsel %vm1014, %v995, 0
        %v1199 = vsel %vm1014, %v996, 0
        %v1202 = vsel %vm1014, %v997, 0
        %v1205 = vsel %vm1014, %v998, 0
        %1207 = vmatprep.subr.mxu0 0.0
        %1208 = vmatpush1.msra.mxu0 %v999
        %1209 = vmatprep.subr.mxu0 0.0
        %1210 = vmatpush1.msra.mxu0 %v1000
        %1211 = vmatprep.subr.mxu0 0.0
        %1212 = vmatpush1.msra.mxu0 %v1001
        %1213 = vmatprep.subr.mxu0 0.0
        %1214 = vmatpush1.msra.mxu0 %v1002
        %1215 = vmatprep.subr.mxu0 0.0
        %1216 = vmatpush1.msra.mxu0 %v1003
        %1217 = vmatprep.subr.mxu0 0.0
        %1218 = vmatpush1.msra.mxu0 %v1004
        %1219 = vmatprep.subr.mxu0 0.0
        %1220 = vmatpush1.msra.mxu0 %v1005
        %1221 = vmatprep.subr.mxu0 0.0
        %1222 = vmatpush1.msra.mxu0 %v1006
        %1223 = vmatprep.subr.mxu0 0.0
        %1224 = vmatpush1.msra.mxu0 0.0
        %1225 = vmatprep.subr.mxu0 0.0
        %1226 = vmatpush1.msra.mxu0 0.0
        %1227 = vmatprep.subr.mxu0 0.0
        %1228 = vmatpush1.msra.mxu0 0.0
        %1229 = vmatprep.subr.mxu0 0.0
        %1230 = vmatpush1.msra.mxu0 0.0
        %1231 = vmatprep.subr.mxu0 0.0
        %1232 = vmatpush1.msra.mxu0 0.0
        %1233 = vmatprep.subr.mxu0 0.0
        %1234 = vmatpush1.msra.mxu0 0.0
        %1235 = vmatprep.subr.mxu0 0.0
        %1236 = vmatpush1.msra.mxu0 0.0
        %1237 = vmatprep.subr.mxu0 0.0
        %1238 = vmatpush1.msra.mxu0 0.0
        %1239 = vmatprep.subr.mxu0 0.0
        %1240 = vmatpush1.msra.mxu0 0.0
        %1241 = vmatprep.subr.mxu0 0.0
        %1242 = vmatpush1.msra.mxu0 0.0
        %1243 = vmatprep.subr.mxu0 0.0
        %1244 = vmatpush1.msra.mxu0 0.0
        %1245 = vmatprep.subr.mxu0 0.0
        %1246 = vmatpush1.msra.mxu0 0.0
        %1247 = vmatprep.subr.mxu0 0.0
        %1248 = vmatpush1.msra.mxu0 0.0
        %1249 = vmatprep.subr.mxu0 0.0
        %1250 = vmatpush1.msra.mxu0 0.0
        %1251 = vmatprep.subr.mxu0 0.0
        %1252 = vmatpush1.msra.mxu0 0.0
        %1253 = vmatprep.subr.mxu0 0.0
        %1254 = vmatpush1.msra.mxu0 0.0
        %1255 = vmatprep.subr.mxu0 0.0
        %1256 = vmatpush1.msra.mxu0 0.0
        %1257 = vmatprep.subr.mxu0 0.0
        %1258 = vmatpush1.msra.mxu0 0.0
        %1259 = vmatprep.subr.mxu0 0.0
        %1260 = vmatpush1.msra.mxu0 0.0
        %1261 = vmatprep.subr.mxu0 0.0
        %1262 = vmatpush1.msra.mxu0 0.0
        %1263 = vmatprep.subr.mxu0 0.0
        %1264 = vmatpush1.msra.mxu0 0.0
        %1265 = vmatprep.subr.mxu0 0.0
        %1266 = vmatpush1.msra.mxu0 0.0
        %1267 = vmatprep.subr.mxu0 0.0
        %1268 = vmatpush1.msra.mxu0 0.0
        %1269 = vmatprep.subr.mxu0 0.0
        %1270 = vmatpush1.msra.mxu0 0.0
        %1271 = vmatprep.mubr.f32.mxu0 0.0
        %1272 = vmatmul.mubr.f32.gmra.mrb[0].mxu0 %v1016
        %v1273 = vpop.f32.mrb[0].mxu0
        %v1274 = vadd.f32 %v1012, %v1273
        %v1275 = vpop.f32.mrb[0].mxu0
        %1276 = vmatprep.mubr.f32.mxu0 0.0
        %1277 = vmatmul.mubr.f32.gmra.mrb[0].mxu0 %v1019
        %v1278 = vpop.f32.mrb[0].mxu0
        %v1279 = vadd.f32 %v1012, %v1278
        %v1280 = vpop.f32.mrb[0].mxu0
        %1281 = vmatprep.mubr.f32.mxu0 0.0
        %1282 = vmatmul.mubr.f32.gmra.mrb[0].mxu0 %v1022
        %v1283 = vpop.f32.mrb[0].mxu0
        %v1284 = vadd.f32 %v1012, %v1283
        %v1285 = vpop.f32.mrb[0].mxu0
        %1286 = vmatprep.mubr.f32.mxu0 0.0
        %1287 = vmatmul.mubr.f32.gmra.mrb[0].mxu0 %v1025
        %v1288 = vpop.f32.mrb[0].mxu0
        %v1289 = vadd.f32 %v1012, %v1288
        %v1290 = vpop.f32.mrb[0].mxu0
        %1291 = vmatprep.mubr.f32.mxu0 0.0
        %1292 = vmatmul.mubr.f32.gmra.mrb[0].mxu0 %v1028
        %v1293 = vpop.f32.mrb[0].mxu0
        %v1294 = vadd.f32 %v1012, %v1293
        %v1295 = vpop.f32.mrb[0].mxu0
        %1296 = vmatprep.mubr.f32.mxu0 0.0
        %1297 = vmatmul.mubr.f32.gmra.mrb[0].mxu0 %v1031
        %v1298 = vpop.f32.mrb[0].mxu0
        %v1299 = vadd.f32 %v1012, %v1298
        %v1300 = vpop.f32.mrb[0].mxu0
        %1301 = vmatprep.mubr.f32.mxu0 0.0
        %1302 = vmatmul.mubr.f32.gmra.mrb[0].mxu0 %v1034
        %v1303 = vpop.f32.mrb[0].mxu0
        %v1304 = vadd.f32 %v1012, %v1303
        %v1305 = vpop.f32.mrb[0].mxu0
        %1306 = vmatprep.mubr.f32.mxu0 0.0
        %1307 = vmatmul.mubr.f32.gmra.mrb[0].mxu0 %v1037
        %v1308 = vpop.f32.mrb[0].mxu0
        %v1309 = vadd.f32 %v1012, %v1308
        %v1310 = vpop.f32.mrb[0].mxu0
        %1311 = vmatprep.mubr.f32.mxu0 0.0
        %1312 = vmatmul.mubr.f32.gmra.mrb[0].mxu0 %v1040
        %v1313 = vpop.f32.mrb[0].mxu0
        %v1314 = vadd.f32 %v1012, %v1313
        %v1315 = vpop.f32.mrb[0].mxu0
        %1316 = vmatprep.mubr.f32.mxu0 0.0
        %1317 = vmatmul.mubr.f32.gmra.mrb[0].mxu0 %v1043
        %v1318 = vpop.f32.mrb[0].mxu0
        %v1319 = vadd.f32 %v1012, %v1318
        %v1320 = vpop.f32.mrb[0].mxu0
        %1321 = vmatprep.mubr.f32.mxu0 0.0
        %1322 = vmatmul.mubr.f32.gmra.mrb[0].mxu0 %v1046
        %v1323 = vpop.f32.mrb[0].mxu0
        %v1324 = vadd.f32 %v1012, %v1323
        %v1325 = vpop.f32.mrb[0].mxu0
        %1326 = vmatprep.mubr.f32.mxu0 0.0
        %1327 = vmatmul.mubr.f32.gmra.mrb[0].mxu0 %v1049
        %v1328 = vpop.f32.mrb[0].mxu0
        %v1329 = vadd.f32 %v1012, %v1328
        %v1330 = vpop.f32.mrb[0].mxu0
        %1331 = vmatprep.mubr.f32.mxu0 0.0
        %1332 = vmatmul.mubr.f32.gmra.mrb[0].mxu0 %v1052
        %v1333 = vpop.f32.mrb[0].mxu0
        %v1334 = vadd.f32 %v1012, %v1333
        %v1335 = vpop.f32.mrb[0].mxu0
        %1336 = vmatprep.mubr.f32.mxu0 0.0
        %1337 = vmatmul.mubr.f32.gmra.mrb[0].mxu0 %v1055
        %v1338 = vpop.f32.mrb[0].mxu0
        %v1339 = vadd.f32 %v1012, %v1338
        %v1340 = vpop.f32.mrb[0].mxu0
        %1341 = vmatprep.mubr.f32.mxu0 0.0
        %1342 = vmatmul.mubr.f32.gmra.mrb[0].mxu0 %v1058
        %v1343 = vpop.f32.mrb[0].mxu0
        %v1344 = vadd.f32 %v1012, %v1343
        %v1345 = vpop.f32.mrb[0].mxu0
        %1346 = vmatprep.mubr.f32.mxu0 0.0
        %1347 = vmatmul.mubr.f32.gmra.mrb[0].mxu0 %v1061
        %v1348 = vpop.f32.mrb[0].mxu0
        %v1349 = vadd.f32 %v1012, %v1348
        %v1350 = vpop.f32.mrb[0].mxu0
        %1351 = vmatprep.mubr.f32.mxu0 0.0
        %1352 = vmatmul.mubr.f32.gmra.mrb[0].mxu0 %v1064
        %v1353 = vpop.f32.mrb[0].mxu0
        %v1354 = vadd.f32 %v1012, %v1353
        %v1355 = vpop.f32.mrb[0].mxu0
        %1356 = vmatprep.mubr.f32.mxu0 0.0
        %1357 = vmatmul.mubr.f32.gmra.mrb[0].mxu0 %v1067
        %v1358 = vpop.f32.mrb[0].mxu0
        %v1359 = vadd.f32 %v1012, %v1358
        %v1360 = vpop.f32.mrb[0].mxu0
        %1361 = vmatprep.mubr.f32.mxu0 0.0
        %1362 = vmatmul.mubr.f32.gmra.mrb[0].mxu0 %v1070
        %v1363 = vpop.f32.mrb[0].mxu0
        %v1364 = vadd.f32 %v1012, %v1363
        %v1365 = vpop.f32.mrb[0].mxu0
        %1366 = vmatprep.mubr.f32.mxu0 0.0
        %1367 = vmatmul.mubr.f32.gmra.mrb[0].mxu0 %v1073
        %v1368 = vpop.f32.mrb[0].mxu0
        %v1369 = vadd.f32 %v1012, %v1368
        %v1370 = vpop.f32.mrb[0].mxu0
        %1371 = vmatprep.mubr.f32.mxu0 0.0
        %1372 = vmatmul.mubr.f32.gmra.mrb[0].mxu0 %v1076
        %v1373 = vpop.f32.mrb[0].mxu0
        %v1374 = vadd.f32 %v1012, %v1373
        %v1375 = vpop.f32.mrb[0].mxu0
        %1376 = vmatprep.mubr.f32.mxu0 0.0
        %1377 = vmatmul.mubr.f32.gmra.mrb[0].mxu0 %v1079
        %v1378 = vpop.f32.mrb[0].mxu0
        %v1379 = vadd.f32 %v1012, %v1378
        %v1380 = vpop.f32.mrb[0].mxu0
        %1381 = vmatprep.mubr.f32.mxu0 0.0
        %1382 = vmatmul.mubr.f32.gmra.mrb[0].mxu0 %v1082
        %v1383 = vpop.f32.mrb[0].mxu0
        %v1384 = vadd.f32 %v1012, %v1383
        %v1385 = vpop.f32.mrb[0].mxu0
        %1386 = vmatprep.mubr.f32.mxu0 0.0
        %1387 = vmatmul.mubr.f32.gmra.mrb[0].mxu0 %v1085
        %v1388 = vpop.f32.mrb[0].mxu0
        %v1389 = vadd.f32 %v1012, %v1388
        %v1390 = vpop.f32.mrb[0].mxu0
        %1391 = vmatprep.mubr.f32.mxu0 0.0
        %1392 = vmatmul.mubr.f32.gmra.mrb[0].mxu0 %v1088
        %v1393 = vpop.f32.mrb[0].mxu0
        %v1394 = vadd.f32 %v1012, %v1393
        %v1395 = vpop.f32.mrb[0].mxu0
        %1396 = vmatprep.mubr.f32.mxu0 0.0
        %1397 = vmatmul.mubr.f32.gmra.mrb[0].mxu0 %v1091
        %v1398 = vpop.f32.mrb[0].mxu0
        %v1399 = vadd.f32 %v1012, %v1398
        %v1400 = vpop.f32.mrb[0].mxu0
        %1401 = vmatprep.mubr.f32.mxu0 0.0
        %1402 = vmatmul.mubr.f32.gmra.mrb[0].mxu0 %v1094
        %v1403 = vpop.f32.mrb[0].mxu0
        %v1404 = vadd.f32 %v1012, %v1403
        %v1405 = vpop.f32.mrb[0].mxu0
        %1406 = vmatprep.mubr.f32.mxu0 0.0
        %1407 = vmatmul.mubr.f32.gmra.mrb[0].mxu0 %v1097
        %v1408 = vpop.f32.mrb[0].mxu0
        %v1409 = vadd.f32 %v1012, %v1408
        %v1410 = vpop.f32.mrb[0].mxu0
        %1411 = vmatprep.mubr.f32.mxu0 0.0
        %1412 = vmatmul.mubr.f32.gmra.mrb[0].mxu0 %v1100
        %v1413 = vpop.f32.mrb[0].mxu0
        %v1414 = vadd.f32 %v1012, %v1413
        %v1415 = vpop.f32.mrb[0].mxu0
        %1416 = vmatprep.mubr.f32.mxu0 0.0
        %1417 = vmatmul.mubr.f32.gmra.mrb[0].mxu0 %v1103
        %v1418 = vpop.f32.mrb[0].mxu0
        %v1419 = vadd.f32 %v1012, %v1418
        %v1420 = vpop.f32.mrb[0].mxu0
        %1421 = vmatprep.mubr.f32.mxu0 0.0
        %1422 = vmatmul.mubr.f32.gmra.mrb[0].mxu0 %v1106
        %v1423 = vpop.f32.mrb[0].mxu0
        %v1424 = vadd.f32 %v1012, %v1423
        %v1425 = vpop.f32.mrb[0].mxu0
        %1426 = vmatprep.mubr.f32.mxu0 0.0
        %1427 = vmatmul.mubr.f32.gmra.mrb[0].mxu0 %v1109
        %v1428 = vpop.f32.mrb[0].mxu0
        %v1429 = vadd.f32 %v1012, %v1428
        %v1430 = vpop.f32.mrb[0].mxu0
        %1431 = vmatprep.mubr.f32.mxu0 0.0
        %1432 = vmatmul.mubr.f32.gmra.mrb[0].mxu0 %v1112
        %v1433 = vpop.f32.mrb[0].mxu0
        %v1434 = vadd.f32 %v1012, %v1433
        %v1435 = vpop.f32.mrb[0].mxu0
        %1436 = vmatprep.mubr.f32.mxu0 0.0
        %1437 = vmatmul.mubr.f32.gmra.mrb[0].mxu0 %v1115
        %v1438 = vpop.f32.mrb[0].mxu0
        %v1439 = vadd.f32 %v1012, %v1438
        %v1440 = vpop.f32.mrb[0].mxu0
        %1441 = vmatprep.mubr.f32.mxu0 0.0
        %1442 = vmatmul.mubr.f32.gmra.mrb[0].mxu0 %v1118
        %v1443 = vpop.f32.mrb[0].mxu0
        %v1444 = vadd.f32 %v1012, %v1443
        %v1445 = vpop.f32.mrb[0].mxu0
        %1446 = vmatprep.mubr.f32.mxu0 0.0
        %1447 = vmatmul.mubr.f32.gmra.mrb[0].mxu0 %v1121
        %v1448 = vpop.f32.mrb[0].mxu0
        %v1449 = vadd.f32 %v1012, %v1448
        %v1450 = vpop.f32.mrb[0].mxu0
        %1451 = vmatprep.mubr.f32.mxu0 0.0
        %1452 = vmatmul.mubr.f32.gmra.mrb[0].mxu0 %v1124
        %v1453 = vpop.f32.mrb[0].mxu0
        %v1454 = vadd.f32 %v1012, %v1453
        %v1455 = vpop.f32.mrb[0].mxu0
        %1456 = vmatprep.mubr.f32.mxu0 0.0
        %1457 = vmatmul.mubr.f32.gmra.mrb[0].mxu0 %v1127
        %v1458 = vpop.f32.mrb[0].mxu0
        %v1459 = vadd.f32 %v1012, %v1458
        %v1460 = vpop.f32.mrb[0].mxu0
        %1461 = vmatprep.mubr.f32.mxu0 0.0
        %1462 = vmatmul.mubr.f32.gmra.mrb[0].mxu0 %v1130
        %v1463 = vpop.f32.mrb[0].mxu0
        %v1464 = vadd.f32 %v1012, %v1463
        %v1465 = vpop.f32.mrb[0].mxu0
        %1466 = vmatprep.mubr.f32.mxu0 0.0
        %1467 = vmatmul.mubr.f32.gmra.mrb[0].mxu0 %v1133
        %v1468 = vpop.f32.mrb[0].mxu0
        %v1469 = vadd.f32 %v1012, %v1468
        %v1470 = vpop.f32.mrb[0].mxu0
        %1471 = vmatprep.mubr.f32.mxu0 0.0
        %1472 = vmatmul.mubr.f32.gmra.mrb[0].mxu0 %v1136
        %v1473 = vpop.f32.mrb[0].mxu0
        %v1474 = vadd.f32 %v1012, %v1473
        %v1475 = vpop.f32.mrb[0].mxu0
        %1476 = vmatprep.mubr.f32.mxu0 0.0
        %1477 = vmatmul.mubr.f32.gmra.mrb[0].mxu0 %v1139
        %v1478 = vpop.f32.mrb[0].mxu0
        %v1479 = vadd.f32 %v1012, %v1478
        %v1480 = vpop.f32.mrb[0].mxu0
        %1481 = vmatprep.mubr.f32.mxu0 0.0
        %1482 = vmatmul.mubr.f32.gmra.mrb[0].mxu0 %v1142
        %v1483 = vpop.f32.mrb[0].mxu0
        %v1484 = vadd.f32 %v1012, %v1483
        %v1485 = vpop.f32.mrb[0].mxu0
        %1486 = vmatprep.mubr.f32.mxu0 0.0
        %1487 = vmatmul.mubr.f32.gmra.mrb[0].mxu0 %v1145
        %v1488 = vpop.f32.mrb[0].mxu0
        %v1489 = vadd.f32 %v1012, %v1488
        %v1490 = vpop.f32.mrb[0].mxu0
        %1491 = vmatprep.mubr.f32.mxu0 0.0
        %1492 = vmatmul.mubr.f32.gmra.mrb[0].mxu0 %v1148
        %v1493 = vpop.f32.mrb[0].mxu0
        %v1494 = vadd.f32 %v1012, %v1493
        %v1495 = vpop.f32.mrb[0].mxu0
        %1496 = vmatprep.mubr.f32.mxu0 0.0
        %1497 = vmatmul.mubr.f32.gmra.mrb[0].mxu0 %v1151
        %v1498 = vpop.f32.mrb[0].mxu0
        %v1499 = vadd.f32 %v1012, %v1498
        %v1500 = vpop.f32.mrb[0].mxu0
        %1501 = vmatprep.mubr.f32.mxu0 0.0
        %1502 = vmatmul.mubr.f32.gmra.mrb[0].mxu0 %v1154
        %v1503 = vpop.f32.mrb[0].mxu0
        %v1504 = vadd.f32 %v1012, %v1503
        %v1505 = vpop.f32.mrb[0].mxu0
        %1506 = vmatprep.mubr.f32.mxu0 0.0
        %1507 = vmatmul.mubr.f32.gmra.mrb[0].mxu0 %v1157
        %v1508 = vpop.f32.mrb[0].mxu0
        %v1509 = vadd.f32 %v1012, %v1508
        %v1510 = vpop.f32.mrb[0].mxu0
        %1511 = vmatprep.mubr.f32.mxu0 0.0
        %1512 = vmatmul.mubr.f32.gmra.mrb[0].mxu0 %v1160
        %v1513 = vpop.f32.mrb[0].mxu0
        %v1514 = vadd.f32 %v1012, %v1513
        %v1515 = vpop.f32.mrb[0].mxu0
        %1516 = vmatprep.mubr.f32.mxu0 0.0
        %1517 = vmatmul.mubr.f32.gmra.mrb[0].mxu0 %v1163
        %v1518 = vpop.f32.mrb[0].mxu0
        %v1519 = vadd.f32 %v1012, %v1518
        %v1520 = vpop.f32.mrb[0].mxu0
        %1521 = vmatprep.mubr.f32.mxu0 0.0
        %1522 = vmatmul.mubr.f32.gmra.mrb[0].mxu0 %v1166
        %v1523 = vpop.f32.mrb[0].mxu0
        %v1524 = vadd.f32 %v1012, %v1523
        %v1525 = vpop.f32.mrb[0].mxu0
        %1526 = vmatprep.mubr.f32.mxu0 0.0
        %1527 = vmatmul.mubr.f32.gmra.mrb[0].mxu0 %v1169
        %v1528 = vpop.f32.mrb[0].mxu0
        %v1529 = vadd.f32 %v1012, %v1528
        %v1530 = vpop.f32.mrb[0].mxu0
        %1531 = vmatprep.mubr.f32.mxu0 0.0
        %1532 = vmatmul.mubr.f32.gmra.mrb[0].mxu0 %v1172
        %v1533 = vpop.f32.mrb[0].mxu0
        %v1534 = vadd.f32 %v1012, %v1533
        %v1535 = vpop.f32.mrb[0].mxu0
        %1536 = vmatprep.mubr.f32.mxu0 0.0
        %1537 = vmatmul.mubr.f32.gmra.mrb[0].mxu0 %v1175
        %v1538 = vpop.f32.mrb[0].mxu0
        %v1539 = vadd.f32 %v1012, %v1538
        %v1540 = vpop.f32.mrb[0].mxu0
        %1541 = vmatprep.mubr.f32.mxu0 0.0
        %1542 = vmatmul.mubr.f32.gmra.mrb[0].mxu0 %v1178
        %v1543 = vpop.f32.mrb[0].mxu0
        %v1544 = vadd.f32 %v1012, %v1543
        %v1545 = vpop.f32.mrb[0].mxu0
        %1546 = vmatprep.mubr.f32.mxu0 0.0
        %1547 = vmatmul.mubr.f32.gmra.mrb[0].mxu0 %v1181
        %v1548 = vpop.f32.mrb[0].mxu0
        %v1549 = vadd.f32 %v1012, %v1548
        %v1550 = vpop.f32.mrb[0].mxu0
        %1551 = vmatprep.mubr.f32.mxu0 0.0
        %1552 = vmatmul.mubr.f32.gmra.mrb[0].mxu0 %v1184
        %v1553 = vpop.f32.mrb[0].mxu0
        %v1554 = vadd.f32 %v1012, %v1553
        %v1555 = vpop.f32.mrb[0].mxu0
        %1556 = vmatprep.mubr.f32.mxu0 0.0
        %1557 = vmatmul.mubr.f32.gmra.mrb[0].mxu0 %v1187
        %v1558 = vpop.f32.mrb[0].mxu0
        %v1559 = vadd.f32 %v1012, %v1558
        %v1560 = vpop.f32.mrb[0].mxu0
        %1561 = vmatprep.mubr.f32.mxu0 0.0
        %1562 = vmatmul.mubr.f32.gmra.mrb[0].mxu0 %v1190
        %v1563 = vpop.f32.mrb[0].mxu0
        %v1564 = vadd.f32 %v1012, %v1563
        %v1565 = vpop.f32.mrb[0].mxu0
        %1566 = vmatprep.mubr.f32.mxu0 0.0
        %1567 = vmatmul.mubr.f32.gmra.mrb[0].mxu0 %v1193
        %v1568 = vpop.f32.mrb[0].mxu0
        %v1569 = vadd.f32 %v1012, %v1568
        %v1570 = vpop.f32.mrb[0].mxu0
        %1571 = vmatprep.mubr.f32.mxu0 0.0
        %1572 = vmatmul.mubr.f32.gmra.mrb[0].mxu0 %v1196
        %v1573 = vpop.f32.mrb[0].mxu0
        %v1574 = vadd.f32 %v1012, %v1573
        %v1575 = vpop.f32.mrb[0].mxu0
        %1576 = vmatprep.mubr.f32.mxu0 0.0
        %1577 = vmatmul.mubr.f32.gmra.mrb[0].mxu0 %v1199
        %v1578 = vpop.f32.mrb[0].mxu0
        %v1579 = vadd.f32 %v1012, %v1578
        %v1580 = vpop.f32.mrb[0].mxu0
        %1581 = vmatprep.mubr.f32.mxu0 0.0
        %1582 = vmatmul.mubr.f32.gmra.mrb[0].mxu0 %v1202
        %v1583 = vpop.f32.mrb[0].mxu0
        %v1584 = vadd.f32 %v1012, %v1583
        %v1585 = vpop.f32.mrb[0].mxu0
        %1586 = vmatprep.mubr.f32.mxu0 0.0
        %1587 = vmatmul.mubr.f32.gmra.mrb[0].mxu0 %v1205
        %v1588 = vpop.f32.mrb[0].mxu0
        %v1589 = vadd.f32 %v1012, %v1588
        %v1590 = vpop.f32.mrb[0].mxu0
        %1591 = vdwg.mxu0
        %v1592 = vmax.f32 %v1274, 0.0
        %v1593 = vmax.f32 %v1279, 0.0
        %v1594 = vmax.f32 %v1284, 0.0
        %v1595 = vmax.f32 %v1289, 0.0
        %v1596 = vmax.f32 %v1294, 0.0
        %v1597 = vmax.f32 %v1299, 0.0
        %v1598 = vmax.f32 %v1304, 0.0
        %v1599 = vmax.f32 %v1309, 0.0
        %v1600 = vmax.f32 %v1314, 0.0
        %v1601 = vmax.f32 %v1319, 0.0
        %v1602 = vmax.f32 %v1324, 0.0
        %v1603 = vmax.f32 %v1329, 0.0
        %v1604 = vmax.f32 %v1334, 0.0
        %v1605 = vmax.f32 %v1339, 0.0
        %v1606 = vmax.f32 %v1344, 0.0
        %v1607 = vmax.f32 %v1349, 0.0
        %v1608 = vmax.f32 %v1354, 0.0
        %v1609 = vmax.f32 %v1359, 0.0
        %v1610 = vmax.f32 %v1364, 0.0
        %v1611 = vmax.f32 %v1369, 0.0
        %v1612 = vmax.f32 %v1374, 0.0
        %v1613 = vmax.f32 %v1379, 0.0
        %v1614 = vmax.f32 %v1384, 0.0
        %v1615 = vmax.f32 %v1389, 0.0
        %v1616 = vmax.f32 %v1394, 0.0
        %v1617 = vmax.f32 %v1399, 0.0
        %v1618 = vmax.f32 %v1404, 0.0
        %v1619 = vmax.f32 %v1409, 0.0
        %v1620 = vmax.f32 %v1414, 0.0
        %v1621 = vmax.f32 %v1419, 0.0
        %v1622 = vmax.f32 %v1424, 0.0
        %v1623 = vmax.f32 %v1429, 0.0
        %v1624 = vmax.f32 %v1434, 0.0
        %v1625 = vmax.f32 %v1439, 0.0
        %v1626 = vmax.f32 %v1444, 0.0
        %v1627 = vmax.f32 %v1449, 0.0
        %v1628 = vmax.f32 %v1454, 0.0
        %v1629 = vmax.f32 %v1459, 0.0
        %v1630 = vmax.f32 %v1464, 0.0
        %v1631 = vmax.f32 %v1469, 0.0
        %v1632 = vmax.f32 %v1474, 0.0
        %v1633 = vmax.f32 %v1479, 0.0
        %v1634 = vmax.f32 %v1484, 0.0
        %v1635 = vmax.f32 %v1489, 0.0
        %v1636 = vmax.f32 %v1494, 0.0
        %v1637 = vmax.f32 %v1499, 0.0
        %v1638 = vmax.f32 %v1504, 0.0
        %v1639 = vmax.f32 %v1509, 0.0
        %v1640 = vmax.f32 %v1514, 0.0
        %v1641 = vmax.f32 %v1519, 0.0
        %v1642 = vmax.f32 %v1524, 0.0
        %v1643 = vmax.f32 %v1529, 0.0
        %v1644 = vmax.f32 %v1534, 0.0
        %v1645 = vmax.f32 %v1539, 0.0
        %v1646 = vmax.f32 %v1544, 0.0
        %v1647 = vmax.f32 %v1549, 0.0
        %v1648 = vmax.f32 %v1554, 0.0
        %v1649 = vmax.f32 %v1559, 0.0
        %v1650 = vmax.f32 %v1564, 0.0
        %v1651 = vmax.f32 %v1569, 0.0
        %v1652 = vmax.f32 %v1574, 0.0
        %v1653 = vmax.f32 %v1579, 0.0
        %v1654 = vmax.f32 %v1584, 0.0
        %v1655 = vmax.f32 %v1589, 0.0
        %v1656 = vld [vmem:[%s5] sm:$0x1]
        %v1658 = vlaneseq
        %v1659 = vshrl.u32 %v1658, 7
        %v1660 = vsub.s32 0, %v1659
        %v1661 = vrot.slane %v1656, %v1660
        %v1663 = vmul.f32 %v1592, %v1661
        %v1664 = vmul.f32 %v1593, %v1661
        %v1665 = vmul.f32 %v1594, %v1661
        %v1666 = vmul.f32 %v1595, %v1661
        %v1667 = vmul.f32 %v1596, %v1661
        %v1668 = vmul.f32 %v1597, %v1661
        %v1669 = vmul.f32 %v1598, %v1661
        %v1670 = vmul.f32 %v1599, %v1661
        %v1671 = vmul.f32 %v1600, %v1661
        %v1672 = vmul.f32 %v1601, %v1661
        %v1673 = vmul.f32 %v1602, %v1661
        %v1674 = vmul.f32 %v1603, %v1661
        %v1675 = vmul.f32 %v1604, %v1661
        %v1676 = vmul.f32 %v1605, %v1661
        %v1677 = vmul.f32 %v1606, %v1661
        %v1678 = vmul.f32 %v1607, %v1661
        %v1679 = vmul.f32 %v1608, %v1661
        %v1680 = vmul.f32 %v1609, %v1661
        %v1681 = vmul.f32 %v1610, %v1661
        %v1682 = vmul.f32 %v1611, %v1661
        %v1683 = vmul.f32 %v1612, %v1661
        %v1684 = vmul.f32 %v1613, %v1661
        %v1685 = vmul.f32 %v1614, %v1661
        %v1686 = vmul.f32 %v1615, %v1661
        %v1687 = vmul.f32 %v1616, %v1661
        %v1688 = vmul.f32 %v1617, %v1661
        %v1689 = vmul.f32 %v1618, %v1661
        %v1690 = vmul.f32 %v1619, %v1661
        %v1691 = vmul.f32 %v1620, %v1661
        %v1692 = vmul.f32 %v1621, %v1661
        %v1693 = vmul.f32 %v1622, %v1661
        %v1694 = vmul.f32 %v1623, %v1661
        %v1695 = vmul.f32 %v1624, %v1661
        %v1696 = vmul.f32 %v1625, %v1661
        %v1697 = vmul.f32 %v1626, %v1661
        %v1698 = vmul.f32 %v1627, %v1661
        %v1699 = vmul.f32 %v1628, %v1661
        %v1700 = vmul.f32 %v1629, %v1661
        %v1701 = vmul.f32 %v1630, %v1661
        %v1702 = vmul.f32 %v1631, %v1661
        %v1703 = vmul.f32 %v1632, %v1661
        %v1704 = vmul.f32 %v1633, %v1661
        %v1705 = vmul.f32 %v1634, %v1661
        %v1706 = vmul.f32 %v1635, %v1661
        %v1707 = vmul.f32 %v1636, %v1661
        %v1708 = vmul.f32 %v1637, %v1661
        %v1709 = vmul.f32 %v1638, %v1661
        %v1710 = vmul.f32 %v1639, %v1661
        %v1711 = vmul.f32 %v1640, %v1661
        %v1712 = vmul.f32 %v1641, %v1661
        %v1713 = vmul.f32 %v1642, %v1661
        %v1714 = vmul.f32 %v1643, %v1661
        %v1715 = vmul.f32 %v1644, %v1661
        %v1716 = vmul.f32 %v1645, %v1661
        %v1717 = vmul.f32 %v1646, %v1661
        %v1718 = vmul.f32 %v1647, %v1661
        %v1719 = vmul.f32 %v1648, %v1661
        %v1720 = vmul.f32 %v1649, %v1661
        %v1721 = vmul.f32 %v1650, %v1661
        %v1722 = vmul.f32 %v1651, %v1661
        %v1723 = vmul.f32 %v1652, %v1661
        %v1724 = vmul.f32 %v1653, %v1661
        %v1725 = vmul.f32 %v1654, %v1661
        %v1726 = vmul.f32 %v1655, %v1661
        %v1727 = vsel %vm357, %v1663, 0.0
        %1728 = vadd.xlane.f32.xlu0 %v1727
        %v1729 = vpop.xlane.xlu0 %1728
        %v1730 = vsel %vm357, %v1664, 0.0
        %1731 = vadd.xlane.f32.xlu0 %v1730
        %v1732 = vpop.xlane.xlu0 %1731
        %v1733 = vsel %vm357, %v1665, 0.0
        %1734 = vadd.xlane.f32.xlu0 %v1733
        %v1735 = vpop.xlane.xlu0 %1734
        %v1736 = vsel %vm357, %v1666, 0.0
        %1737 = vadd.xlane.f32.xlu0 %v1736
        %v1738 = vpop.xlane.xlu0 %1737
        %v1739 = vsel %vm357, %v1667, 0.0
        %1740 = vadd.xlane.f32.xlu0 %v1739
        %v1741 = vpop.xlane.xlu0 %1740
        %v1742 = vsel %vm357, %v1668, 0.0
        %1743 = vadd.xlane.f32.xlu0 %v1742
        %v1744 = vpop.xlane.xlu0 %1743
        %v1745 = vsel %vm357, %v1669, 0.0
        %1746 = vadd.xlane.f32.xlu0 %v1745
        %v1747 = vpop.xlane.xlu0 %1746
        %v1748 = vsel %vm357, %v1670, 0.0
        %1749 = vadd.xlane.f32.xlu0 %v1748
        %v1750 = vpop.xlane.xlu0 %1749
        %v1751 = vsel %vm357, %v1671, 0.0
        %1752 = vadd.xlane.f32.xlu0 %v1751
        %v1753 = vpop.xlane.xlu0 %1752
        %v1754 = vsel %vm357, %v1672, 0.0
        %1755 = vadd.xlane.f32.xlu0 %v1754
        %v1756 = vpop.xlane.xlu0 %1755
        %v1757 = vsel %vm357, %v1673, 0.0
        %1758 = vadd.xlane.f32.xlu0 %v1757
        %v1759 = vpop.xlane.xlu0 %1758
        %v1760 = vsel %vm357, %v1674, 0.0
        %1761 = vadd.xlane.f32.xlu0 %v1760
        %v1762 = vpop.xlane.xlu0 %1761
        %v1763 = vsel %vm357, %v1675, 0.0
        %1764 = vadd.xlane.f32.xlu0 %v1763
        %v1765 = vpop.xlane.xlu0 %1764
        %v1766 = vsel %vm357, %v1676, 0.0
        %1767 = vadd.xlane.f32.xlu0 %v1766
        %v1768 = vpop.xlane.xlu0 %1767
        %v1769 = vsel %vm357, %v1677, 0.0
        %1770 = vadd.xlane.f32.xlu0 %v1769
        %v1771 = vpop.xlane.xlu0 %1770
        %v1772 = vsel %vm357, %v1678, 0.0
        %1773 = vadd.xlane.f32.xlu0 %v1772
        %v1774 = vpop.xlane.xlu0 %1773
        %v1775 = vsel %vm357, %v1679, 0.0
        %1776 = vadd.xlane.f32.xlu0 %v1775
        %v1777 = vpop.xlane.xlu0 %1776
        %v1778 = vsel %vm357, %v1680, 0.0
        %1779 = vadd.xlane.f32.xlu0 %v1778
        %v1780 = vpop.xlane.xlu0 %1779
        %v1781 = vsel %vm357, %v1681, 0.0
        %1782 = vadd.xlane.f32.xlu0 %v1781
        %v1783 = vpop.xlane.xlu0 %1782
        %v1784 = vsel %vm357, %v1682, 0.0
        %1785 = vadd.xlane.f32.xlu0 %v1784
        %v1786 = vpop.xlane.xlu0 %1785
        %v1787 = vsel %vm357, %v1683, 0.0
        %1788 = vadd.xlane.f32.xlu0 %v1787
        %v1789 = vpop.xlane.xlu0 %1788
        %v1790 = vsel %vm357, %v1684, 0.0
        %1791 = vadd.xlane.f32.xlu0 %v1790
        %v1792 = vpop.xlane.xlu0 %1791
        %v1793 = vsel %vm357, %v1685, 0.0
        %1794 = vadd.xlane.f32.xlu0 %v1793
        %v1795 = vpop.xlane.xlu0 %1794
        %v1796 = vsel %vm357, %v1686, 0.0
        %1797 = vadd.xlane.f32.xlu0 %v1796
        %v1798 = vpop.xlane.xlu0 %1797
        %v1799 = vsel %vm357, %v1687, 0.0
        %1800 = vadd.xlane.f32.xlu0 %v1799
        %v1801 = vpop.xlane.xlu0 %1800
        %v1802 = vsel %vm357, %v1688, 0.0
        %1803 = vadd.xlane.f32.xlu0 %v1802
        %v1804 = vpop.xlane.xlu0 %1803
        %v1805 = vsel %vm357, %v1689, 0.0
        %1806 = vadd.xlane.f32.xlu0 %v1805
        %v1807 = vpop.xlane.xlu0 %1806
        %v1808 = vsel %vm357, %v1690, 0.0
        %1809 = vadd.xlane.f32.xlu0 %v1808
        %v1810 = vpop.xlane.xlu0 %1809
        %v1811 = vsel %vm357, %v1691, 0.0
        %1812 = vadd.xlane.f32.xlu0 %v1811
        %v1813 = vpop.xlane.xlu0 %1812
        %v1814 = vsel %vm357, %v1692, 0.0
        %1815 = vadd.xlane.f32.xlu0 %v1814
        %v1816 = vpop.xlane.xlu0 %1815
        %v1817 = vsel %vm357, %v1693, 0.0
        %1818 = vadd.xlane.f32.xlu0 %v1817
        %v1819 = vpop.xlane.xlu0 %1818
        %v1820 = vsel %vm357, %v1694, 0.0
        %1821 = vadd.xlane.f32.xlu0 %v1820
        %v1822 = vpop.xlane.xlu0 %1821
        %v1823 = vsel %vm357, %v1695, 0.0
        %1824 = vadd.xlane.f32.xlu0 %v1823
        %v1825 = vpop.xlane.xlu0 %1824
        %v1826 = vsel %vm357, %v1696, 0.0
        %1827 = vadd.xlane.f32.xlu0 %v1826
        %v1828 = vpop.xlane.xlu0 %1827
        %v1829 = vsel %vm357, %v1697, 0.0
        %1830 = vadd.xlane.f32.xlu0 %v1829
        %v1831 = vpop.xlane.xlu0 %1830
        %v1832 = vsel %vm357, %v1698, 0.0
        %1833 = vadd.xlane.f32.xlu0 %v1832
        %v1834 = vpop.xlane.xlu0 %1833
        %v1835 = vsel %vm357, %v1699, 0.0
        %1836 = vadd.xlane.f32.xlu0 %v1835
        %v1837 = vpop.xlane.xlu0 %1836
        %v1838 = vsel %vm357, %v1700, 0.0
        %1839 = vadd.xlane.f32.xlu0 %v1838
        %v1840 = vpop.xlane.xlu0 %1839
        %v1841 = vsel %vm357, %v1701, 0.0
        %1842 = vadd.xlane.f32.xlu0 %v1841
        %v1843 = vpop.xlane.xlu0 %1842
        %v1844 = vsel %vm357, %v1702, 0.0
        %1845 = vadd.xlane.f32.xlu0 %v1844
        %v1846 = vpop.xlane.xlu0 %1845
        %v1847 = vsel %vm357, %v1703, 0.0
        %1848 = vadd.xlane.f32.xlu0 %v1847
        %v1849 = vpop.xlane.xlu0 %1848
        %v1850 = vsel %vm357, %v1704, 0.0
        %1851 = vadd.xlane.f32.xlu0 %v1850
        %v1852 = vpop.xlane.xlu0 %1851
        %v1853 = vsel %vm357, %v1705, 0.0
        %1854 = vadd.xlane.f32.xlu0 %v1853
        %v1855 = vpop.xlane.xlu0 %1854
        %v1856 = vsel %vm357, %v1706, 0.0
        %1857 = vadd.xlane.f32.xlu0 %v1856
        %v1858 = vpop.xlane.xlu0 %1857
        %v1859 = vsel %vm357, %v1707, 0.0
        %1860 = vadd.xlane.f32.xlu0 %v1859
        %v1861 = vpop.xlane.xlu0 %1860
        %v1862 = vsel %vm357, %v1708, 0.0
        %1863 = vadd.xlane.f32.xlu0 %v1862
        %v1864 = vpop.xlane.xlu0 %1863
        %v1865 = vsel %vm357, %v1709, 0.0
        %1866 = vadd.xlane.f32.xlu0 %v1865
        %v1867 = vpop.xlane.xlu0 %1866
        %v1868 = vsel %vm357, %v1710, 0.0
        %1869 = vadd.xlane.f32.xlu0 %v1868
        %v1870 = vpop.xlane.xlu0 %1869
        %v1871 = vsel %vm357, %v1711, 0.0
        %1872 = vadd.xlane.f32.xlu0 %v1871
        %v1873 = vpop.xlane.xlu0 %1872
        %v1874 = vsel %vm357, %v1712, 0.0
        %1875 = vadd.xlane.f32.xlu0 %v1874
        %v1876 = vpop.xlane.xlu0 %1875
        %v1877 = vsel %vm357, %v1713, 0.0
        %1878 = vadd.xlane.f32.xlu0 %v1877
        %v1879 = vpop.xlane.xlu0 %1878
        %v1880 = vsel %vm357, %v1714, 0.0
        %1881 = vadd.xlane.f32.xlu0 %v1880
        %v1882 = vpop.xlane.xlu0 %1881
        %v1883 = vsel %vm357, %v1715, 0.0
        %1884 = vadd.xlane.f32.xlu0 %v1883
        %v1885 = vpop.xlane.xlu0 %1884
        %v1886 = vsel %vm357, %v1716, 0.0
        %1887 = vadd.xlane.f32.xlu0 %v1886
        %v1888 = vpop.xlane.xlu0 %1887
        %v1889 = vsel %vm357, %v1717, 0.0
        %1890 = vadd.xlane.f32.xlu0 %v1889
        %v1891 = vpop.xlane.xlu0 %1890
        %v1892 = vsel %vm357, %v1718, 0.0
        %1893 = vadd.xlane.f32.xlu0 %v1892
        %v1894 = vpop.xlane.xlu0 %1893
        %v1895 = vsel %vm357, %v1719, 0.0
        %1896 = vadd.xlane.f32.xlu0 %v1895
        %v1897 = vpop.xlane.xlu0 %1896
        %v1898 = vsel %vm357, %v1720, 0.0
        %1899 = vadd.xlane.f32.xlu0 %v1898
        %v1900 = vpop.xlane.xlu0 %1899
        %v1901 = vsel %vm357, %v1721, 0.0
        %1902 = vadd.xlane.f32.xlu0 %v1901
        %v1903 = vpop.xlane.xlu0 %1902
        %v1904 = vsel %vm357, %v1722, 0.0
        %1905 = vadd.xlane.f32.xlu0 %v1904
        %v1906 = vpop.xlane.xlu0 %1905
        %v1907 = vsel %vm357, %v1723, 0.0
        %1908 = vadd.xlane.f32.xlu0 %v1907
        %v1909 = vpop.xlane.xlu0 %1908
        %v1910 = vsel %vm357, %v1724, 0.0
        %1911 = vadd.xlane.f32.xlu0 %v1910
        %v1912 = vpop.xlane.xlu0 %1911
        %v1913 = vsel %vm357, %v1725, 0.0
        %1914 = vadd.xlane.f32.xlu0 %v1913
        %v1915 = vpop.xlane.xlu0 %1914
        %v1916 = vsel %vm357, %v1726, 0.0
        %1917 = vadd.xlane.f32.xlu0 %v1916
        %v1918 = vpop.xlane.xlu0 %1917
        %v1919 = vld [vmem:[#allocation2] sm:$0x1]
        %1921 = vset.pattern.permute.xlu0 0
        %1922 = vperm.xlu0 %1921, %v1919
        %v1923 = vpop.permute.xlu0 %1922
        %v1925 = vlaneseq
        %v1926 = vshrl.u32 %v1925, 7
        %v1927 = vsub.s32 0, %v1926
        %v1928 = vrot.slane %v1923, %v1927
        %v1929 = vadd.f32 %v1729, %v1928
        %v1930 = vadd.f32 %v1732, %v1928
        %v1931 = vadd.f32 %v1735, %v1928
        %v1932 = vadd.f32 %v1738, %v1928
        %v1933 = vadd.f32 %v1741, %v1928
        %v1934 = vadd.f32 %v1744, %v1928
        %v1935 = vadd.f32 %v1747, %v1928
        %v1936 = vadd.f32 %v1750, %v1928
        %v1937 = vadd.f32 %v1753, %v1928
        %v1938 = vadd.f32 %v1756, %v1928
        %v1939 = vadd.f32 %v1759, %v1928
        %v1940 = vadd.f32 %v1762, %v1928
        %v1941 = vadd.f32 %v1765, %v1928
        %v1942 = vadd.f32 %v1768, %v1928
        %v1943 = vadd.f32 %v1771, %v1928
        %v1944 = vadd.f32 %v1774, %v1928
        %v1945 = vadd.f32 %v1777, %v1928
        %v1946 = vadd.f32 %v1780, %v1928
        %v1947 = vadd.f32 %v1783, %v1928
        %v1948 = vadd.f32 %v1786, %v1928
        %v1949 = vadd.f32 %v1789, %v1928
        %v1950 = vadd.f32 %v1792, %v1928
        %v1951 = vadd.f32 %v1795, %v1928
        %v1952 = vadd.f32 %v1798, %v1928
        %v1953 = vadd.f32 %v1801, %v1928
        %v1954 = vadd.f32 %v1804, %v1928
        %v1955 = vadd.f32 %v1807, %v1928
        %v1956 = vadd.f32 %v1810, %v1928
        %v1957 = vadd.f32 %v1813, %v1928
        %v1958 = vadd.f32 %v1816, %v1928
        %v1959 = vadd.f32 %v1819, %v1928
        %v1960 = vadd.f32 %v1822, %v1928
        %v1961 = vadd.f32 %v1825, %v1928
        %v1962 = vadd.f32 %v1828, %v1928
        %v1963 = vadd.f32 %v1831, %v1928
        %v1964 = vadd.f32 %v1834, %v1928
        %v1965 = vadd.f32 %v1837, %v1928
        %v1966 = vadd.f32 %v1840, %v1928
        %v1967 = vadd.f32 %v1843, %v1928
        %v1968 = vadd.f32 %v1846, %v1928
        %v1969 = vadd.f32 %v1849, %v1928
        %v1970 = vadd.f32 %v1852, %v1928
        %v1971 = vadd.f32 %v1855, %v1928
        %v1972 = vadd.f32 %v1858, %v1928
        %v1973 = vadd.f32 %v1861, %v1928
        %v1974 = vadd.f32 %v1864, %v1928
        %v1975 = vadd.f32 %v1867, %v1928
        %v1976 = vadd.f32 %v1870, %v1928
        %v1977 = vadd.f32 %v1873, %v1928
        %v1978 = vadd.f32 %v1876, %v1928
        %v1979 = vadd.f32 %v1879, %v1928
        %v1980 = vadd.f32 %v1882, %v1928
        %v1981 = vadd.f32 %v1885, %v1928
        %v1982 = vadd.f32 %v1888, %v1928
        %v1983 = vadd.f32 %v1891, %v1928
        %v1984 = vadd.f32 %v1894, %v1928
        %v1985 = vadd.f32 %v1897, %v1928
        %v1986 = vadd.f32 %v1900, %v1928
        %v1987 = vadd.f32 %v1903, %v1928
        %v1988 = vadd.f32 %v1906, %v1928
        %v1989 = vadd.f32 %v1909, %v1928
        %v1990 = vadd.f32 %v1912, %v1928
        %v1991 = vadd.f32 %v1915, %v1928
        %v1992 = vadd.f32 %v1918, %v1928
        %v2057 = vlaneseq
        %v2058 = vshrl.u32 %v2057, 7
        %v2059 = vsub.s32 0, %v2058
        %v2060 = vrot.slane %v1929, %v2059
        %v2061 = vlaneseq
        %v2062 = vshrl.u32 %v2061, 7
        %v2063 = vsub.s32 1, %v2062
        %v2064 = vrot.slane %v1929, %v2063
        %v2065 = vlaneseq
        %v2066 = vshrl.u32 %v2065, 7
        %v2067 = vsub.s32 2, %v2066
        %v2068 = vrot.slane %v1929, %v2067
        %v2069 = vlaneseq
        %v2070 = vshrl.u32 %v2069, 7
        %v2071 = vsub.s32 3, %v2070
        %v2072 = vrot.slane %v1929, %v2071
        %v2073 = vlaneseq
        %v2074 = vshrl.u32 %v2073, 7
        %v2075 = vsub.s32 4, %v2074
        %v2076 = vrot.slane %v1929, %v2075
        %v2077 = vlaneseq
        %v2078 = vshrl.u32 %v2077, 7
        %v2079 = vsub.s32 5, %v2078
        %v2080 = vrot.slane %v1929, %v2079
        %v2081 = vlaneseq
        %v2082 = vshrl.u32 %v2081, 7
        %v2083 = vsub.s32 6, %v2082
        %v2084 = vrot.slane %v1929, %v2083
        %v2085 = vlaneseq
        %v2086 = vshrl.u32 %v2085, 7
        %v2087 = vsub.s32 7, %v2086
        %v2088 = vrot.slane %v1929, %v2087
        %v2089 = vlaneseq
        %v2090 = vshrl.u32 %v2089, 7
        %v2091 = vsub.s32 0, %v2090
        %v2092 = vrot.slane %v1930, %v2091
        %v2093 = vlaneseq
        %v2094 = vshrl.u32 %v2093, 7
        %v2095 = vsub.s32 1, %v2094
        %v2096 = vrot.slane %v1930, %v2095
        %v2097 = vlaneseq
        %v2098 = vshrl.u32 %v2097, 7
        %v2099 = vsub.s32 2, %v2098
        %v2100 = vrot.slane %v1930, %v2099
        %v2101 = vlaneseq
        %v2102 = vshrl.u32 %v2101, 7
        %v2103 = vsub.s32 3, %v2102
        %v2104 = vrot.slane %v1930, %v2103
        %v2105 = vlaneseq
        %v2106 = vshrl.u32 %v2105, 7
        %v2107 = vsub.s32 4, %v2106
        %v2108 = vrot.slane %v1930, %v2107
        %v2109 = vlaneseq
        %v2110 = vshrl.u32 %v2109, 7
        %v2111 = vsub.s32 5, %v2110
        %v2112 = vrot.slane %v1930, %v2111
        %v2113 = vlaneseq
        %v2114 = vshrl.u32 %v2113, 7
        %v2115 = vsub.s32 6, %v2114
        %v2116 = vrot.slane %v1930, %v2115
        %v2117 = vlaneseq
        %v2118 = vshrl.u32 %v2117, 7
        %v2119 = vsub.s32 7, %v2118
        %v2120 = vrot.slane %v1930, %v2119
        %v2121 = vlaneseq
        %v2122 = vshrl.u32 %v2121, 7
        %v2123 = vsub.s32 0, %v2122
        %v2124 = vrot.slane %v1931, %v2123
        %v2125 = vlaneseq
        %v2126 = vshrl.u32 %v2125, 7
        %v2127 = vsub.s32 1, %v2126
        %v2128 = vrot.slane %v1931, %v2127
        %v2129 = vlaneseq
        %v2130 = vshrl.u32 %v2129, 7
        %v2131 = vsub.s32 2, %v2130
        %v2132 = vrot.slane %v1931, %v2131
        %v2133 = vlaneseq
        %v2134 = vshrl.u32 %v2133, 7
        %v2135 = vsub.s32 3, %v2134
        %v2136 = vrot.slane %v1931, %v2135
        %v2137 = vlaneseq
        %v2138 = vshrl.u32 %v2137, 7
        %v2139 = vsub.s32 4, %v2138
        %v2140 = vrot.slane %v1931, %v2139
        %v2141 = vlaneseq
        %v2142 = vshrl.u32 %v2141, 7
        %v2143 = vsub.s32 5, %v2142
        %v2144 = vrot.slane %v1931, %v2143
        %v2145 = vlaneseq
        %v2146 = vshrl.u32 %v2145, 7
        %v2147 = vsub.s32 6, %v2146
        %v2148 = vrot.slane %v1931, %v2147
        %v2149 = vlaneseq
        %v2150 = vshrl.u32 %v2149, 7
        %v2151 = vsub.s32 7, %v2150
        %v2152 = vrot.slane %v1931, %v2151
        %v2153 = vlaneseq
        %v2154 = vshrl.u32 %v2153, 7
        %v2155 = vsub.s32 0, %v2154
        %v2156 = vrot.slane %v1932, %v2155
        %v2157 = vlaneseq
        %v2158 = vshrl.u32 %v2157, 7
        %v2159 = vsub.s32 1, %v2158
        %v2160 = vrot.slane %v1932, %v2159
        %v2161 = vlaneseq
        %v2162 = vshrl.u32 %v2161, 7
        %v2163 = vsub.s32 2, %v2162
        %v2164 = vrot.slane %v1932, %v2163
        %v2165 = vlaneseq
        %v2166 = vshrl.u32 %v2165, 7
        %v2167 = vsub.s32 3, %v2166
        %v2168 = vrot.slane %v1932, %v2167
        %v2169 = vlaneseq
        %v2170 = vshrl.u32 %v2169, 7
        %v2171 = vsub.s32 4, %v2170
        %v2172 = vrot.slane %v1932, %v2171
        %v2173 = vlaneseq
        %v2174 = vshrl.u32 %v2173, 7
        %v2175 = vsub.s32 5, %v2174
        %v2176 = vrot.slane %v1932, %v2175
        %v2177 = vlaneseq
        %v2178 = vshrl.u32 %v2177, 7
        %v2179 = vsub.s32 6, %v2178
        %v2180 = vrot.slane %v1932, %v2179
        %v2181 = vlaneseq
        %v2182 = vshrl.u32 %v2181, 7
        %v2183 = vsub.s32 7, %v2182
        %v2184 = vrot.slane %v1932, %v2183
        %v2185 = vlaneseq
        %v2186 = vshrl.u32 %v2185, 7
        %v2187 = vsub.s32 0, %v2186
        %v2188 = vrot.slane %v1933, %v2187
        %v2189 = vlaneseq
        %v2190 = vshrl.u32 %v2189, 7
        %v2191 = vsub.s32 1, %v2190
        %v2192 = vrot.slane %v1933, %v2191
        %v2193 = vlaneseq
        %v2194 = vshrl.u32 %v2193, 7
        %v2195 = vsub.s32 2, %v2194
        %v2196 = vrot.slane %v1933, %v2195
        %v2197 = vlaneseq
        %v2198 = vshrl.u32 %v2197, 7
        %v2199 = vsub.s32 3, %v2198
        %v2200 = vrot.slane %v1933, %v2199
        %v2201 = vlaneseq
        %v2202 = vshrl.u32 %v2201, 7
        %v2203 = vsub.s32 4, %v2202
        %v2204 = vrot.slane %v1933, %v2203
        %v2205 = vlaneseq
        %v2206 = vshrl.u32 %v2205, 7
        %v2207 = vsub.s32 5, %v2206
        %v2208 = vrot.slane %v1933, %v2207
        %v2209 = vlaneseq
        %v2210 = vshrl.u32 %v2209, 7
        %v2211 = vsub.s32 6, %v2210
        %v2212 = vrot.slane %v1933, %v2211
        %v2213 = vlaneseq
        %v2214 = vshrl.u32 %v2213, 7
        %v2215 = vsub.s32 7, %v2214
        %v2216 = vrot.slane %v1933, %v2215
        %v2217 = vlaneseq
        %v2218 = vshrl.u32 %v2217, 7
        %v2219 = vsub.s32 0, %v2218
        %v2220 = vrot.slane %v1934, %v2219
        %v2221 = vlaneseq
        %v2222 = vshrl.u32 %v2221, 7
        %v2223 = vsub.s32 1, %v2222
        %v2224 = vrot.slane %v1934, %v2223
        %v2225 = vlaneseq
        %v2226 = vshrl.u32 %v2225, 7
        %v2227 = vsub.s32 2, %v2226
        %v2228 = vrot.slane %v1934, %v2227
        %v2229 = vlaneseq
        %v2230 = vshrl.u32 %v2229, 7
        %v2231 = vsub.s32 3, %v2230
        %v2232 = vrot.slane %v1934, %v2231
        %v2233 = vlaneseq
        %v2234 = vshrl.u32 %v2233, 7
        %v2235 = vsub.s32 4, %v2234
        %v2236 = vrot.slane %v1934, %v2235
        %v2237 = vlaneseq
        %v2238 = vshrl.u32 %v2237, 7
        %v2239 = vsub.s32 5, %v2238
        %v2240 = vrot.slane %v1934, %v2239
        %v2241 = vlaneseq
        %v2242 = vshrl.u32 %v2241, 7
        %v2243 = vsub.s32 6, %v2242
        %v2244 = vrot.slane %v1934, %v2243
        %v2245 = vlaneseq
        %v2246 = vshrl.u32 %v2245, 7
        %v2247 = vsub.s32 7, %v2246
        %v2248 = vrot.slane %v1934, %v2247
        %v2249 = vlaneseq
        %v2250 = vshrl.u32 %v2249, 7
        %v2251 = vsub.s32 0, %v2250
        %v2252 = vrot.slane %v1935, %v2251
        %v2253 = vlaneseq
        %v2254 = vshrl.u32 %v2253, 7
        %v2255 = vsub.s32 1, %v2254
        %v2256 = vrot.slane %v1935, %v2255
        %v2257 = vlaneseq
        %v2258 = vshrl.u32 %v2257, 7
        %v2259 = vsub.s32 2, %v2258
        %v2260 = vrot.slane %v1935, %v2259
        %v2261 = vlaneseq
        %v2262 = vshrl.u32 %v2261, 7
        %v2263 = vsub.s32 3, %v2262
        %v2264 = vrot.slane %v1935, %v2263
        %v2265 = vlaneseq
        %v2266 = vshrl.u32 %v2265, 7
        %v2267 = vsub.s32 4, %v2266
        %v2268 = vrot.slane %v1935, %v2267
        %v2269 = vlaneseq
        %v2270 = vshrl.u32 %v2269, 7
        %v2271 = vsub.s32 5, %v2270
        %v2272 = vrot.slane %v1935, %v2271
        %v2273 = vlaneseq
        %v2274 = vshrl.u32 %v2273, 7
        %v2275 = vsub.s32 6, %v2274
        %v2276 = vrot.slane %v1935, %v2275
        %v2277 = vlaneseq
        %v2278 = vshrl.u32 %v2277, 7
        %v2279 = vsub.s32 7, %v2278
        %v2280 = vrot.slane %v1935, %v2279
        %v2281 = vlaneseq
        %v2282 = vshrl.u32 %v2281, 7
        %v2283 = vsub.s32 0, %v2282
        %v2284 = vrot.slane %v1936, %v2283
        %v2285 = vlaneseq
        %v2286 = vshrl.u32 %v2285, 7
        %v2287 = vsub.s32 1, %v2286
        %v2288 = vrot.slane %v1936, %v2287
        %v2289 = vlaneseq
        %v2290 = vshrl.u32 %v2289, 7
        %v2291 = vsub.s32 2, %v2290
        %v2292 = vrot.slane %v1936, %v2291
        %v2293 = vlaneseq
        %v2294 = vshrl.u32 %v2293, 7
        %v2295 = vsub.s32 3, %v2294
        %v2296 = vrot.slane %v1936, %v2295
        %v2297 = vlaneseq
        %v2298 = vshrl.u32 %v2297, 7
        %v2299 = vsub.s32 4, %v2298
        %v2300 = vrot.slane %v1936, %v2299
        %v2301 = vlaneseq
        %v2302 = vshrl.u32 %v2301, 7
        %v2303 = vsub.s32 5, %v2302
        %v2304 = vrot.slane %v1936, %v2303
        %v2305 = vlaneseq
        %v2306 = vshrl.u32 %v2305, 7
        %v2307 = vsub.s32 6, %v2306
        %v2308 = vrot.slane %v1936, %v2307
        %v2309 = vlaneseq
        %v2310 = vshrl.u32 %v2309, 7
        %v2311 = vsub.s32 7, %v2310
        %v2312 = vrot.slane %v1936, %v2311
        %v2313 = vlaneseq
        %v2314 = vshrl.u32 %v2313, 7
        %v2315 = vsub.s32 0, %v2314
        %v2316 = vrot.slane %v1937, %v2315
        %v2317 = vlaneseq
        %v2318 = vshrl.u32 %v2317, 7
        %v2319 = vsub.s32 1, %v2318
        %v2320 = vrot.slane %v1937, %v2319
        %v2321 = vlaneseq
        %v2322 = vshrl.u32 %v2321, 7
        %v2323 = vsub.s32 2, %v2322
        %v2324 = vrot.slane %v1937, %v2323
        %v2325 = vlaneseq
        %v2326 = vshrl.u32 %v2325, 7
        %v2327 = vsub.s32 3, %v2326
        %v2328 = vrot.slane %v1937, %v2327
        %v2329 = vlaneseq
        %v2330 = vshrl.u32 %v2329, 7
        %v2331 = vsub.s32 4, %v2330
        %v2332 = vrot.slane %v1937, %v2331
        %v2333 = vlaneseq
        %v2334 = vshrl.u32 %v2333, 7
        %v2335 = vsub.s32 5, %v2334
        %v2336 = vrot.slane %v1937, %v2335
        %v2337 = vlaneseq
        %v2338 = vshrl.u32 %v2337, 7
        %v2339 = vsub.s32 6, %v2338
        %v2340 = vrot.slane %v1937, %v2339
        %v2341 = vlaneseq
        %v2342 = vshrl.u32 %v2341, 7
        %v2343 = vsub.s32 7, %v2342
        %v2344 = vrot.slane %v1937, %v2343
        %v2345 = vlaneseq
        %v2346 = vshrl.u32 %v2345, 7
        %v2347 = vsub.s32 0, %v2346
        %v2348 = vrot.slane %v1938, %v2347
        %v2349 = vlaneseq
        %v2350 = vshrl.u32 %v2349, 7
        %v2351 = vsub.s32 1, %v2350
        %v2352 = vrot.slane %v1938, %v2351
        %v2353 = vlaneseq
        %v2354 = vshrl.u32 %v2353, 7
        %v2355 = vsub.s32 2, %v2354
        %v2356 = vrot.slane %v1938, %v2355
        %v2357 = vlaneseq
        %v2358 = vshrl.u32 %v2357, 7
        %v2359 = vsub.s32 3, %v2358
        %v2360 = vrot.slane %v1938, %v2359
        %v2361 = vlaneseq
        %v2362 = vshrl.u32 %v2361, 7
        %v2363 = vsub.s32 4, %v2362
        %v2364 = vrot.slane %v1938, %v2363
        %v2365 = vlaneseq
        %v2366 = vshrl.u32 %v2365, 7
        %v2367 = vsub.s32 5, %v2366
        %v2368 = vrot.slane %v1938, %v2367
        %v2369 = vlaneseq
        %v2370 = vshrl.u32 %v2369, 7
        %v2371 = vsub.s32 6, %v2370
        %v2372 = vrot.slane %v1938, %v2371
        %v2373 = vlaneseq
        %v2374 = vshrl.u32 %v2373, 7
        %v2375 = vsub.s32 7, %v2374
        %v2376 = vrot.slane %v1938, %v2375
        %v2377 = vlaneseq
        %v2378 = vshrl.u32 %v2377, 7
        %v2379 = vsub.s32 0, %v2378
        %v2380 = vrot.slane %v1939, %v2379
        %v2381 = vlaneseq
        %v2382 = vshrl.u32 %v2381, 7
        %v2383 = vsub.s32 1, %v2382
        %v2384 = vrot.slane %v1939, %v2383
        %v2385 = vlaneseq
        %v2386 = vshrl.u32 %v2385, 7
        %v2387 = vsub.s32 2, %v2386
        %v2388 = vrot.slane %v1939, %v2387
        %v2389 = vlaneseq
        %v2390 = vshrl.u32 %v2389, 7
        %v2391 = vsub.s32 3, %v2390
        %v2392 = vrot.slane %v1939, %v2391
        %v2393 = vlaneseq
        %v2394 = vshrl.u32 %v2393, 7
        %v2395 = vsub.s32 4, %v2394
        %v2396 = vrot.slane %v1939, %v2395
        %v2397 = vlaneseq
        %v2398 = vshrl.u32 %v2397, 7
        %v2399 = vsub.s32 5, %v2398
        %v2400 = vrot.slane %v1939, %v2399
        %v2401 = vlaneseq
        %v2402 = vshrl.u32 %v2401, 7
        %v2403 = vsub.s32 6, %v2402
        %v2404 = vrot.slane %v1939, %v2403
        %v2405 = vlaneseq
        %v2406 = vshrl.u32 %v2405, 7
        %v2407 = vsub.s32 7, %v2406
        %v2408 = vrot.slane %v1939, %v2407
        %v2409 = vlaneseq
        %v2410 = vshrl.u32 %v2409, 7
        %v2411 = vsub.s32 0, %v2410
        %v2412 = vrot.slane %v1940, %v2411
        %v2413 = vlaneseq
        %v2414 = vshrl.u32 %v2413, 7
        %v2415 = vsub.s32 1, %v2414
        %v2416 = vrot.slane %v1940, %v2415
        %v2417 = vlaneseq
        %v2418 = vshrl.u32 %v2417, 7
        %v2419 = vsub.s32 2, %v2418
        %v2420 = vrot.slane %v1940, %v2419
        %v2421 = vlaneseq
        %v2422 = vshrl.u32 %v2421, 7
        %v2423 = vsub.s32 3, %v2422
        %v2424 = vrot.slane %v1940, %v2423
        %v2425 = vlaneseq
        %v2426 = vshrl.u32 %v2425, 7
        %v2427 = vsub.s32 4, %v2426
        %v2428 = vrot.slane %v1940, %v2427
        %v2429 = vlaneseq
        %v2430 = vshrl.u32 %v2429, 7
        %v2431 = vsub.s32 5, %v2430
        %v2432 = vrot.slane %v1940, %v2431
        %v2433 = vlaneseq
        %v2434 = vshrl.u32 %v2433, 7
        %v2435 = vsub.s32 6, %v2434
        %v2436 = vrot.slane %v1940, %v2435
        %v2437 = vlaneseq
        %v2438 = vshrl.u32 %v2437, 7
        %v2439 = vsub.s32 7, %v2438
        %v2440 = vrot.slane %v1940, %v2439
        %v2441 = vlaneseq
        %v2442 = vshrl.u32 %v2441, 7
        %v2443 = vsub.s32 0, %v2442
        %v2444 = vrot.slane %v1941, %v2443
        %v2445 = vlaneseq
        %v2446 = vshrl.u32 %v2445, 7
        %v2447 = vsub.s32 1, %v2446
        %v2448 = vrot.slane %v1941, %v2447
        %v2449 = vlaneseq
        %v2450 = vshrl.u32 %v2449, 7
        %v2451 = vsub.s32 2, %v2450
        %v2452 = vrot.slane %v1941, %v2451
        %v2453 = vlaneseq
        %v2454 = vshrl.u32 %v2453, 7
        %v2455 = vsub.s32 3, %v2454
        %v2456 = vrot.slane %v1941, %v2455
        %v2457 = vlaneseq
        %v2458 = vshrl.u32 %v2457, 7
        %v2459 = vsub.s32 4, %v2458
        %v2460 = vrot.slane %v1941, %v2459
        %v2461 = vlaneseq
        %v2462 = vshrl.u32 %v2461, 7
        %v2463 = vsub.s32 5, %v2462
        %v2464 = vrot.slane %v1941, %v2463
        %v2465 = vlaneseq
        %v2466 = vshrl.u32 %v2465, 7
        %v2467 = vsub.s32 6, %v2466
        %v2468 = vrot.slane %v1941, %v2467
        %v2469 = vlaneseq
        %v2470 = vshrl.u32 %v2469, 7
        %v2471 = vsub.s32 7, %v2470
        %v2472 = vrot.slane %v1941, %v2471
        %v2473 = vlaneseq
        %v2474 = vshrl.u32 %v2473, 7
        %v2475 = vsub.s32 0, %v2474
        %v2476 = vrot.slane %v1942, %v2475
        %v2477 = vlaneseq
        %v2478 = vshrl.u32 %v2477, 7
        %v2479 = vsub.s32 1, %v2478
        %v2480 = vrot.slane %v1942, %v2479
        %v2481 = vlaneseq
        %v2482 = vshrl.u32 %v2481, 7
        %v2483 = vsub.s32 2, %v2482
        %v2484 = vrot.slane %v1942, %v2483
        %v2485 = vlaneseq
        %v2486 = vshrl.u32 %v2485, 7
        %v2487 = vsub.s32 3, %v2486
        %v2488 = vrot.slane %v1942, %v2487
        %v2489 = vlaneseq
        %v2490 = vshrl.u32 %v2489, 7
        %v2491 = vsub.s32 4, %v2490
        %v2492 = vrot.slane %v1942, %v2491
        %v2493 = vlaneseq
        %v2494 = vshrl.u32 %v2493, 7
        %v2495 = vsub.s32 5, %v2494
        %v2496 = vrot.slane %v1942, %v2495
        %v2497 = vlaneseq
        %v2498 = vshrl.u32 %v2497, 7
        %v2499 = vsub.s32 6, %v2498
        %v2500 = vrot.slane %v1942, %v2499
        %v2501 = vlaneseq
        %v2502 = vshrl.u32 %v2501, 7
        %v2503 = vsub.s32 7, %v2502
        %v2504 = vrot.slane %v1942, %v2503
        %v2505 = vlaneseq
        %v2506 = vshrl.u32 %v2505, 7
        %v2507 = vsub.s32 0, %v2506
        %v2508 = vrot.slane %v1943, %v2507
        %v2509 = vlaneseq
        %v2510 = vshrl.u32 %v2509, 7
        %v2511 = vsub.s32 1, %v2510
        %v2512 = vrot.slane %v1943, %v2511
        %v2513 = vlaneseq
        %v2514 = vshrl.u32 %v2513, 7
        %v2515 = vsub.s32 2, %v2514
        %v2516 = vrot.slane %v1943, %v2515
        %v2517 = vlaneseq
        %v2518 = vshrl.u32 %v2517, 7
        %v2519 = vsub.s32 3, %v2518
        %v2520 = vrot.slane %v1943, %v2519
        %v2521 = vlaneseq
        %v2522 = vshrl.u32 %v2521, 7
        %v2523 = vsub.s32 4, %v2522
        %v2524 = vrot.slane %v1943, %v2523
        %v2525 = vlaneseq
        %v2526 = vshrl.u32 %v2525, 7
        %v2527 = vsub.s32 5, %v2526
        %v2528 = vrot.slane %v1943, %v2527
        %v2529 = vlaneseq
        %v2530 = vshrl.u32 %v2529, 7
        %v2531 = vsub.s32 6, %v2530
        %v2532 = vrot.slane %v1943, %v2531
        %v2533 = vlaneseq
        %v2534 = vshrl.u32 %v2533, 7
        %v2535 = vsub.s32 7, %v2534
        %v2536 = vrot.slane %v1943, %v2535
        %v2537 = vlaneseq
        %v2538 = vshrl.u32 %v2537, 7
        %v2539 = vsub.s32 0, %v2538
        %v2540 = vrot.slane %v1944, %v2539
        %v2541 = vlaneseq
        %v2542 = vshrl.u32 %v2541, 7
        %v2543 = vsub.s32 1, %v2542
        %v2544 = vrot.slane %v1944, %v2543
        %v2545 = vlaneseq
        %v2546 = vshrl.u32 %v2545, 7
        %v2547 = vsub.s32 2, %v2546
        %v2548 = vrot.slane %v1944, %v2547
        %v2549 = vlaneseq
        %v2550 = vshrl.u32 %v2549, 7
        %v2551 = vsub.s32 3, %v2550
        %v2552 = vrot.slane %v1944, %v2551
        %v2553 = vlaneseq
        %v2554 = vshrl.u32 %v2553, 7
        %v2555 = vsub.s32 4, %v2554
        %v2556 = vrot.slane %v1944, %v2555
        %v2557 = vlaneseq
        %v2558 = vshrl.u32 %v2557, 7
        %v2559 = vsub.s32 5, %v2558
        %v2560 = vrot.slane %v1944, %v2559
        %v2561 = vlaneseq
        %v2562 = vshrl.u32 %v2561, 7
        %v2563 = vsub.s32 6, %v2562
        %v2564 = vrot.slane %v1944, %v2563
        %v2565 = vlaneseq
        %v2566 = vshrl.u32 %v2565, 7
        %v2567 = vsub.s32 7, %v2566
        %v2568 = vrot.slane %v1944, %v2567
        %v2569 = vlaneseq
        %v2570 = vshrl.u32 %v2569, 7
        %v2571 = vsub.s32 0, %v2570
        %v2572 = vrot.slane %v1945, %v2571
        %v2573 = vlaneseq
        %v2574 = vshrl.u32 %v2573, 7
        %v2575 = vsub.s32 1, %v2574
        %v2576 = vrot.slane %v1945, %v2575
        %v2577 = vlaneseq
        %v2578 = vshrl.u32 %v2577, 7
        %v2579 = vsub.s32 2, %v2578
        %v2580 = vrot.slane %v1945, %v2579
        %v2581 = vlaneseq
        %v2582 = vshrl.u32 %v2581, 7
        %v2583 = vsub.s32 3, %v2582
        %v2584 = vrot.slane %v1945, %v2583
        %v2585 = vlaneseq
        %v2586 = vshrl.u32 %v2585, 7
        %v2587 = vsub.s32 4, %v2586
        %v2588 = vrot.slane %v1945, %v2587
        %v2589 = vlaneseq
        %v2590 = vshrl.u32 %v2589, 7
        %v2591 = vsub.s32 5, %v2590
        %v2592 = vrot.slane %v1945, %v2591
        %v2593 = vlaneseq
        %v2594 = vshrl.u32 %v2593, 7
        %v2595 = vsub.s32 6, %v2594
        %v2596 = vrot.slane %v1945, %v2595
        %v2597 = vlaneseq
        %v2598 = vshrl.u32 %v2597, 7
        %v2599 = vsub.s32 7, %v2598
        %v2600 = vrot.slane %v1945, %v2599
        %v2601 = vlaneseq
        %v2602 = vshrl.u32 %v2601, 7
        %v2603 = vsub.s32 0, %v2602
        %v2604 = vrot.slane %v1946, %v2603
        %v2605 = vlaneseq
        %v2606 = vshrl.u32 %v2605, 7
        %v2607 = vsub.s32 1, %v2606
        %v2608 = vrot.slane %v1946, %v2607
        %v2609 = vlaneseq
        %v2610 = vshrl.u32 %v2609, 7
        %v2611 = vsub.s32 2, %v2610
        %v2612 = vrot.slane %v1946, %v2611
        %v2613 = vlaneseq
        %v2614 = vshrl.u32 %v2613, 7
        %v2615 = vsub.s32 3, %v2614
        %v2616 = vrot.slane %v1946, %v2615
        %v2617 = vlaneseq
        %v2618 = vshrl.u32 %v2617, 7
        %v2619 = vsub.s32 4, %v2618
        %v2620 = vrot.slane %v1946, %v2619
        %v2621 = vlaneseq
        %v2622 = vshrl.u32 %v2621, 7
        %v2623 = vsub.s32 5, %v2622
        %v2624 = vrot.slane %v1946, %v2623
        %v2625 = vlaneseq
        %v2626 = vshrl.u32 %v2625, 7
        %v2627 = vsub.s32 6, %v2626
        %v2628 = vrot.slane %v1946, %v2627
        %v2629 = vlaneseq
        %v2630 = vshrl.u32 %v2629, 7
        %v2631 = vsub.s32 7, %v2630
        %v2632 = vrot.slane %v1946, %v2631
        %v2633 = vlaneseq
        %v2634 = vshrl.u32 %v2633, 7
        %v2635 = vsub.s32 0, %v2634
        %v2636 = vrot.slane %v1947, %v2635
        %v2637 = vlaneseq
        %v2638 = vshrl.u32 %v2637, 7
        %v2639 = vsub.s32 1, %v2638
        %v2640 = vrot.slane %v1947, %v2639
        %v2641 = vlaneseq
        %v2642 = vshrl.u32 %v2641, 7
        %v2643 = vsub.s32 2, %v2642
        %v2644 = vrot.slane %v1947, %v2643
        %v2645 = vlaneseq
        %v2646 = vshrl.u32 %v2645, 7
        %v2647 = vsub.s32 3, %v2646
        %v2648 = vrot.slane %v1947, %v2647
        %v2649 = vlaneseq
        %v2650 = vshrl.u32 %v2649, 7
        %v2651 = vsub.s32 4, %v2650
        %v2652 = vrot.slane %v1947, %v2651
        %v2653 = vlaneseq
        %v2654 = vshrl.u32 %v2653, 7
        %v2655 = vsub.s32 5, %v2654
        %v2656 = vrot.slane %v1947, %v2655
        %v2657 = vlaneseq
        %v2658 = vshrl.u32 %v2657, 7
        %v2659 = vsub.s32 6, %v2658
        %v2660 = vrot.slane %v1947, %v2659
        %v2661 = vlaneseq
        %v2662 = vshrl.u32 %v2661, 7
        %v2663 = vsub.s32 7, %v2662
        %v2664 = vrot.slane %v1947, %v2663
        %v2665 = vlaneseq
        %v2666 = vshrl.u32 %v2665, 7
        %v2667 = vsub.s32 0, %v2666
        %v2668 = vrot.slane %v1948, %v2667
        %v2669 = vlaneseq
        %v2670 = vshrl.u32 %v2669, 7
        %v2671 = vsub.s32 1, %v2670
        %v2672 = vrot.slane %v1948, %v2671
        %v2673 = vlaneseq
        %v2674 = vshrl.u32 %v2673, 7
        %v2675 = vsub.s32 2, %v2674
        %v2676 = vrot.slane %v1948, %v2675
        %v2677 = vlaneseq
        %v2678 = vshrl.u32 %v2677, 7
        %v2679 = vsub.s32 3, %v2678
        %v2680 = vrot.slane %v1948, %v2679
        %v2681 = vlaneseq
        %v2682 = vshrl.u32 %v2681, 7
        %v2683 = vsub.s32 4, %v2682
        %v2684 = vrot.slane %v1948, %v2683
        %v2685 = vlaneseq
        %v2686 = vshrl.u32 %v2685, 7
        %v2687 = vsub.s32 5, %v2686
        %v2688 = vrot.slane %v1948, %v2687
        %v2689 = vlaneseq
        %v2690 = vshrl.u32 %v2689, 7
        %v2691 = vsub.s32 6, %v2690
        %v2692 = vrot.slane %v1948, %v2691
        %v2693 = vlaneseq
        %v2694 = vshrl.u32 %v2693, 7
        %v2695 = vsub.s32 7, %v2694
        %v2696 = vrot.slane %v1948, %v2695
        %v2697 = vlaneseq
        %v2698 = vshrl.u32 %v2697, 7
        %v2699 = vsub.s32 0, %v2698
        %v2700 = vrot.slane %v1949, %v2699
        %v2701 = vlaneseq
        %v2702 = vshrl.u32 %v2701, 7
        %v2703 = vsub.s32 1, %v2702
        %v2704 = vrot.slane %v1949, %v2703
        %v2705 = vlaneseq
        %v2706 = vshrl.u32 %v2705, 7
        %v2707 = vsub.s32 2, %v2706
        %v2708 = vrot.slane %v1949, %v2707
        %v2709 = vlaneseq
        %v2710 = vshrl.u32 %v2709, 7
        %v2711 = vsub.s32 3, %v2710
        %v2712 = vrot.slane %v1949, %v2711
        %v2713 = vlaneseq
        %v2714 = vshrl.u32 %v2713, 7
        %v2715 = vsub.s32 4, %v2714
        %v2716 = vrot.slane %v1949, %v2715
        %v2717 = vlaneseq
        %v2718 = vshrl.u32 %v2717, 7
        %v2719 = vsub.s32 5, %v2718
        %v2720 = vrot.slane %v1949, %v2719
        %v2721 = vlaneseq
        %v2722 = vshrl.u32 %v2721, 7
        %v2723 = vsub.s32 6, %v2722
        %v2724 = vrot.slane %v1949, %v2723
        %v2725 = vlaneseq
        %v2726 = vshrl.u32 %v2725, 7
        %v2727 = vsub.s32 7, %v2726
        %v2728 = vrot.slane %v1949, %v2727
        %v2729 = vlaneseq
        %v2730 = vshrl.u32 %v2729, 7
        %v2731 = vsub.s32 0, %v2730
        %v2732 = vrot.slane %v1950, %v2731
        %v2733 = vlaneseq
        %v2734 = vshrl.u32 %v2733, 7
        %v2735 = vsub.s32 1, %v2734
        %v2736 = vrot.slane %v1950, %v2735
        %v2737 = vlaneseq
        %v2738 = vshrl.u32 %v2737, 7
        %v2739 = vsub.s32 2, %v2738
        %v2740 = vrot.slane %v1950, %v2739
        %v2741 = vlaneseq
        %v2742 = vshrl.u32 %v2741, 7
        %v2743 = vsub.s32 3, %v2742
        %v2744 = vrot.slane %v1950, %v2743
        %v2745 = vlaneseq
        %v2746 = vshrl.u32 %v2745, 7
        %v2747 = vsub.s32 4, %v2746
        %v2748 = vrot.slane %v1950, %v2747
        %v2749 = vlaneseq
        %v2750 = vshrl.u32 %v2749, 7
        %v2751 = vsub.s32 5, %v2750
        %v2752 = vrot.slane %v1950, %v2751
        %v2753 = vlaneseq
        %v2754 = vshrl.u32 %v2753, 7
        %v2755 = vsub.s32 6, %v2754
        %v2756 = vrot.slane %v1950, %v2755
        %v2757 = vlaneseq
        %v2758 = vshrl.u32 %v2757, 7
        %v2759 = vsub.s32 7, %v2758
        %v2760 = vrot.slane %v1950, %v2759
        %v2761 = vlaneseq
        %v2762 = vshrl.u32 %v2761, 7
        %v2763 = vsub.s32 0, %v2762
        %v2764 = vrot.slane %v1951, %v2763
        %v2765 = vlaneseq
        %v2766 = vshrl.u32 %v2765, 7
        %v2767 = vsub.s32 1, %v2766
        %v2768 = vrot.slane %v1951, %v2767
        %v2769 = vlaneseq
        %v2770 = vshrl.u32 %v2769, 7
        %v2771 = vsub.s32 2, %v2770
        %v2772 = vrot.slane %v1951, %v2771
        %v2773 = vlaneseq
        %v2774 = vshrl.u32 %v2773, 7
        %v2775 = vsub.s32 3, %v2774
        %v2776 = vrot.slane %v1951, %v2775
        %v2777 = vlaneseq
        %v2778 = vshrl.u32 %v2777, 7
        %v2779 = vsub.s32 4, %v2778
        %v2780 = vrot.slane %v1951, %v2779
        %v2781 = vlaneseq
        %v2782 = vshrl.u32 %v2781, 7
        %v2783 = vsub.s32 5, %v2782
        %v2784 = vrot.slane %v1951, %v2783
        %v2785 = vlaneseq
        %v2786 = vshrl.u32 %v2785, 7
        %v2787 = vsub.s32 6, %v2786
        %v2788 = vrot.slane %v1951, %v2787
        %v2789 = vlaneseq
        %v2790 = vshrl.u32 %v2789, 7
        %v2791 = vsub.s32 7, %v2790
        %v2792 = vrot.slane %v1951, %v2791
        %v2793 = vlaneseq
        %v2794 = vshrl.u32 %v2793, 7
        %v2795 = vsub.s32 0, %v2794
        %v2796 = vrot.slane %v1952, %v2795
        %v2797 = vlaneseq
        %v2798 = vshrl.u32 %v2797, 7
        %v2799 = vsub.s32 1, %v2798
        %v2800 = vrot.slane %v1952, %v2799
        %v2801 = vlaneseq
        %v2802 = vshrl.u32 %v2801, 7
        %v2803 = vsub.s32 2, %v2802
        %v2804 = vrot.slane %v1952, %v2803
        %v2805 = vlaneseq
        %v2806 = vshrl.u32 %v2805, 7
        %v2807 = vsub.s32 3, %v2806
        %v2808 = vrot.slane %v1952, %v2807
        %v2809 = vlaneseq
        %v2810 = vshrl.u32 %v2809, 7
        %v2811 = vsub.s32 4, %v2810
        %v2812 = vrot.slane %v1952, %v2811
        %v2813 = vlaneseq
        %v2814 = vshrl.u32 %v2813, 7
        %v2815 = vsub.s32 5, %v2814
        %v2816 = vrot.slane %v1952, %v2815
        %v2817 = vlaneseq
        %v2818 = vshrl.u32 %v2817, 7
        %v2819 = vsub.s32 6, %v2818
        %v2820 = vrot.slane %v1952, %v2819
        %v2821 = vlaneseq
        %v2822 = vshrl.u32 %v2821, 7
        %v2823 = vsub.s32 7, %v2822
        %v2824 = vrot.slane %v1952, %v2823
        %v2825 = vlaneseq
        %v2826 = vshrl.u32 %v2825, 7
        %v2827 = vsub.s32 0, %v2826
        %v2828 = vrot.slane %v1953, %v2827
        %v2829 = vlaneseq
        %v2830 = vshrl.u32 %v2829, 7
        %v2831 = vsub.s32 1, %v2830
        %v2832 = vrot.slane %v1953, %v2831
        %v2833 = vlaneseq
        %v2834 = vshrl.u32 %v2833, 7
        %v2835 = vsub.s32 2, %v2834
        %v2836 = vrot.slane %v1953, %v2835
        %v2837 = vlaneseq
        %v2838 = vshrl.u32 %v2837, 7
        %v2839 = vsub.s32 3, %v2838
        %v2840 = vrot.slane %v1953, %v2839
        %v2841 = vlaneseq
        %v2842 = vshrl.u32 %v2841, 7
        %v2843 = vsub.s32 4, %v2842
        %v2844 = vrot.slane %v1953, %v2843
        %v2845 = vlaneseq
        %v2846 = vshrl.u32 %v2845, 7
        %v2847 = vsub.s32 5, %v2846
        %v2848 = vrot.slane %v1953, %v2847
        %v2849 = vlaneseq
        %v2850 = vshrl.u32 %v2849, 7
        %v2851 = vsub.s32 6, %v2850
        %v2852 = vrot.slane %v1953, %v2851
        %v2853 = vlaneseq
        %v2854 = vshrl.u32 %v2853, 7
        %v2855 = vsub.s32 7, %v2854
        %v2856 = vrot.slane %v1953, %v2855
        %v2857 = vlaneseq
        %v2858 = vshrl.u32 %v2857, 7
        %v2859 = vsub.s32 0, %v2858
        %v2860 = vrot.slane %v1954, %v2859
        %v2861 = vlaneseq
        %v2862 = vshrl.u32 %v2861, 7
        %v2863 = vsub.s32 1, %v2862
        %v2864 = vrot.slane %v1954, %v2863
        %v2865 = vlaneseq
        %v2866 = vshrl.u32 %v2865, 7
        %v2867 = vsub.s32 2, %v2866
        %v2868 = vrot.slane %v1954, %v2867
        %v2869 = vlaneseq
        %v2870 = vshrl.u32 %v2869, 7
        %v2871 = vsub.s32 3, %v2870
        %v2872 = vrot.slane %v1954, %v2871
        %v2873 = vlaneseq
        %v2874 = vshrl.u32 %v2873, 7
        %v2875 = vsub.s32 4, %v2874
        %v2876 = vrot.slane %v1954, %v2875
        %v2877 = vlaneseq
        %v2878 = vshrl.u32 %v2877, 7
        %v2879 = vsub.s32 5, %v2878
        %v2880 = vrot.slane %v1954, %v2879
        %v2881 = vlaneseq
        %v2882 = vshrl.u32 %v2881, 7
        %v2883 = vsub.s32 6, %v2882
        %v2884 = vrot.slane %v1954, %v2883
        %v2885 = vlaneseq
        %v2886 = vshrl.u32 %v2885, 7
        %v2887 = vsub.s32 7, %v2886
        %v2888 = vrot.slane %v1954, %v2887
        %v2889 = vlaneseq
        %v2890 = vshrl.u32 %v2889, 7
        %v2891 = vsub.s32 0, %v2890
        %v2892 = vrot.slane %v1955, %v2891
        %v2893 = vlaneseq
        %v2894 = vshrl.u32 %v2893, 7
        %v2895 = vsub.s32 1, %v2894
        %v2896 = vrot.slane %v1955, %v2895
        %v2897 = vlaneseq
        %v2898 = vshrl.u32 %v2897, 7
        %v2899 = vsub.s32 2, %v2898
        %v2900 = vrot.slane %v1955, %v2899
        %v2901 = vlaneseq
        %v2902 = vshrl.u32 %v2901, 7
        %v2903 = vsub.s32 3, %v2902
        %v2904 = vrot.slane %v1955, %v2903
        %v2905 = vlaneseq
        %v2906 = vshrl.u32 %v2905, 7
        %v2907 = vsub.s32 4, %v2906
        %v2908 = vrot.slane %v1955, %v2907
        %v2909 = vlaneseq
        %v2910 = vshrl.u32 %v2909, 7
        %v2911 = vsub.s32 5, %v2910
        %v2912 = vrot.slane %v1955, %v2911
        %v2913 = vlaneseq
        %v2914 = vshrl.u32 %v2913, 7
        %v2915 = vsub.s32 6, %v2914
        %v2916 = vrot.slane %v1955, %v2915
        %v2917 = vlaneseq
        %v2918 = vshrl.u32 %v2917, 7
        %v2919 = vsub.s32 7, %v2918
        %v2920 = vrot.slane %v1955, %v2919
        %v2921 = vlaneseq
        %v2922 = vshrl.u32 %v2921, 7
        %v2923 = vsub.s32 0, %v2922
        %v2924 = vrot.slane %v1956, %v2923
        %v2925 = vlaneseq
        %v2926 = vshrl.u32 %v2925, 7
        %v2927 = vsub.s32 1, %v2926
        %v2928 = vrot.slane %v1956, %v2927
        %v2929 = vlaneseq
        %v2930 = vshrl.u32 %v2929, 7
        %v2931 = vsub.s32 2, %v2930
        %v2932 = vrot.slane %v1956, %v2931
        %v2933 = vlaneseq
        %v2934 = vshrl.u32 %v2933, 7
        %v2935 = vsub.s32 3, %v2934
        %v2936 = vrot.slane %v1956, %v2935
        %v2937 = vlaneseq
        %v2938 = vshrl.u32 %v2937, 7
        %v2939 = vsub.s32 4, %v2938
        %v2940 = vrot.slane %v1956, %v2939
        %v2941 = vlaneseq
        %v2942 = vshrl.u32 %v2941, 7
        %v2943 = vsub.s32 5, %v2942
        %v2944 = vrot.slane %v1956, %v2943
        %v2945 = vlaneseq
        %v2946 = vshrl.u32 %v2945, 7
        %v2947 = vsub.s32 6, %v2946
        %v2948 = vrot.slane %v1956, %v2947
        %v2949 = vlaneseq
        %v2950 = vshrl.u32 %v2949, 7
        %v2951 = vsub.s32 7, %v2950
        %v2952 = vrot.slane %v1956, %v2951
        %v2953 = vlaneseq
        %v2954 = vshrl.u32 %v2953, 7
        %v2955 = vsub.s32 0, %v2954
        %v2956 = vrot.slane %v1957, %v2955
        %v2957 = vlaneseq
        %v2958 = vshrl.u32 %v2957, 7
        %v2959 = vsub.s32 1, %v2958
        %v2960 = vrot.slane %v1957, %v2959
        %v2961 = vlaneseq
        %v2962 = vshrl.u32 %v2961, 7
        %v2963 = vsub.s32 2, %v2962
        %v2964 = vrot.slane %v1957, %v2963
        %v2965 = vlaneseq
        %v2966 = vshrl.u32 %v2965, 7
        %v2967 = vsub.s32 3, %v2966
        %v2968 = vrot.slane %v1957, %v2967
        %v2969 = vlaneseq
        %v2970 = vshrl.u32 %v2969, 7
        %v2971 = vsub.s32 4, %v2970
        %v2972 = vrot.slane %v1957, %v2971
        %v2973 = vlaneseq
        %v2974 = vshrl.u32 %v2973, 7
        %v2975 = vsub.s32 5, %v2974
        %v2976 = vrot.slane %v1957, %v2975
        %v2977 = vlaneseq
        %v2978 = vshrl.u32 %v2977, 7
        %v2979 = vsub.s32 6, %v2978
        %v2980 = vrot.slane %v1957, %v2979
        %v2981 = vlaneseq
        %v2982 = vshrl.u32 %v2981, 7
        %v2983 = vsub.s32 7, %v2982
        %v2984 = vrot.slane %v1957, %v2983
        %v2985 = vlaneseq
        %v2986 = vshrl.u32 %v2985, 7
        %v2987 = vsub.s32 0, %v2986
        %v2988 = vrot.slane %v1958, %v2987
        %v2989 = vlaneseq
        %v2990 = vshrl.u32 %v2989, 7
        %v2991 = vsub.s32 1, %v2990
        %v2992 = vrot.slane %v1958, %v2991
        %v2993 = vlaneseq
        %v2994 = vshrl.u32 %v2993, 7
        %v2995 = vsub.s32 2, %v2994
        %v2996 = vrot.slane %v1958, %v2995
        %v2997 = vlaneseq
        %v2998 = vshrl.u32 %v2997, 7
        %v2999 = vsub.s32 3, %v2998
        %v3000 = vrot.slane %v1958, %v2999
        %v3001 = vlaneseq
        %v3002 = vshrl.u32 %v3001, 7
        %v3003 = vsub.s32 4, %v3002
        %v3004 = vrot.slane %v1958, %v3003
        %v3005 = vlaneseq
        %v3006 = vshrl.u32 %v3005, 7
        %v3007 = vsub.s32 5, %v3006
        %v3008 = vrot.slane %v1958, %v3007
        %v3009 = vlaneseq
        %v3010 = vshrl.u32 %v3009, 7
        %v3011 = vsub.s32 6, %v3010
        %v3012 = vrot.slane %v1958, %v3011
        %v3013 = vlaneseq
        %v3014 = vshrl.u32 %v3013, 7
        %v3015 = vsub.s32 7, %v3014
        %v3016 = vrot.slane %v1958, %v3015
        %v3017 = vlaneseq
        %v3018 = vshrl.u32 %v3017, 7
        %v3019 = vsub.s32 0, %v3018
        %v3020 = vrot.slane %v1959, %v3019
        %v3021 = vlaneseq
        %v3022 = vshrl.u32 %v3021, 7
        %v3023 = vsub.s32 1, %v3022
        %v3024 = vrot.slane %v1959, %v3023
        %v3025 = vlaneseq
        %v3026 = vshrl.u32 %v3025, 7
        %v3027 = vsub.s32 2, %v3026
        %v3028 = vrot.slane %v1959, %v3027
        %v3029 = vlaneseq
        %v3030 = vshrl.u32 %v3029, 7
        %v3031 = vsub.s32 3, %v3030
        %v3032 = vrot.slane %v1959, %v3031
        %v3033 = vlaneseq
        %v3034 = vshrl.u32 %v3033, 7
        %v3035 = vsub.s32 4, %v3034
        %v3036 = vrot.slane %v1959, %v3035
        %v3037 = vlaneseq
        %v3038 = vshrl.u32 %v3037, 7
        %v3039 = vsub.s32 5, %v3038
        %v3040 = vrot.slane %v1959, %v3039
        %v3041 = vlaneseq
        %v3042 = vshrl.u32 %v3041, 7
        %v3043 = vsub.s32 6, %v3042
        %v3044 = vrot.slane %v1959, %v3043
        %v3045 = vlaneseq
        %v3046 = vshrl.u32 %v3045, 7
        %v3047 = vsub.s32 7, %v3046
        %v3048 = vrot.slane %v1959, %v3047
        %v3049 = vlaneseq
        %v3050 = vshrl.u32 %v3049, 7
        %v3051 = vsub.s32 0, %v3050
        %v3052 = vrot.slane %v1960, %v3051
        %v3053 = vlaneseq
        %v3054 = vshrl.u32 %v3053, 7
        %v3055 = vsub.s32 1, %v3054
        %v3056 = vrot.slane %v1960, %v3055
        %v3057 = vlaneseq
        %v3058 = vshrl.u32 %v3057, 7
        %v3059 = vsub.s32 2, %v3058
        %v3060 = vrot.slane %v1960, %v3059
        %v3061 = vlaneseq
        %v3062 = vshrl.u32 %v3061, 7
        %v3063 = vsub.s32 3, %v3062
        %v3064 = vrot.slane %v1960, %v3063
        %v3065 = vlaneseq
        %v3066 = vshrl.u32 %v3065, 7
        %v3067 = vsub.s32 4, %v3066
        %v3068 = vrot.slane %v1960, %v3067
        %v3069 = vlaneseq
        %v3070 = vshrl.u32 %v3069, 7
        %v3071 = vsub.s32 5, %v3070
        %v3072 = vrot.slane %v1960, %v3071
        %v3073 = vlaneseq
        %v3074 = vshrl.u32 %v3073, 7
        %v3075 = vsub.s32 6, %v3074
        %v3076 = vrot.slane %v1960, %v3075
        %v3077 = vlaneseq
        %v3078 = vshrl.u32 %v3077, 7
        %v3079 = vsub.s32 7, %v3078
        %v3080 = vrot.slane %v1960, %v3079
        %v3081 = vlaneseq
        %v3082 = vshrl.u32 %v3081, 7
        %v3083 = vsub.s32 0, %v3082
        %v3084 = vrot.slane %v1961, %v3083
        %v3085 = vlaneseq
        %v3086 = vshrl.u32 %v3085, 7
        %v3087 = vsub.s32 1, %v3086
        %v3088 = vrot.slane %v1961, %v3087
        %v3089 = vlaneseq
        %v3090 = vshrl.u32 %v3089, 7
        %v3091 = vsub.s32 2, %v3090
        %v3092 = vrot.slane %v1961, %v3091
        %v3093 = vlaneseq
        %v3094 = vshrl.u32 %v3093, 7
        %v3095 = vsub.s32 3, %v3094
        %v3096 = vrot.slane %v1961, %v3095
        %v3097 = vlaneseq
        %v3098 = vshrl.u32 %v3097, 7
        %v3099 = vsub.s32 4, %v3098
        %v3100 = vrot.slane %v1961, %v3099
        %v3101 = vlaneseq
        %v3102 = vshrl.u32 %v3101, 7
        %v3103 = vsub.s32 5, %v3102
        %v3104 = vrot.slane %v1961, %v3103
        %v3105 = vlaneseq
        %v3106 = vshrl.u32 %v3105, 7
        %v3107 = vsub.s32 6, %v3106
        %v3108 = vrot.slane %v1961, %v3107
        %v3109 = vlaneseq
        %v3110 = vshrl.u32 %v3109, 7
        %v3111 = vsub.s32 7, %v3110
        %v3112 = vrot.slane %v1961, %v3111
        %v3113 = vlaneseq
        %v3114 = vshrl.u32 %v3113, 7
        %v3115 = vsub.s32 0, %v3114
        %v3116 = vrot.slane %v1962, %v3115
        %v3117 = vlaneseq
        %v3118 = vshrl.u32 %v3117, 7
        %v3119 = vsub.s32 1, %v3118
        %v3120 = vrot.slane %v1962, %v3119
        %v3121 = vlaneseq
        %v3122 = vshrl.u32 %v3121, 7
        %v3123 = vsub.s32 2, %v3122
        %v3124 = vrot.slane %v1962, %v3123
        %v3125 = vlaneseq
        %v3126 = vshrl.u32 %v3125, 7
        %v3127 = vsub.s32 3, %v3126
        %v3128 = vrot.slane %v1962, %v3127
        %v3129 = vlaneseq
        %v3130 = vshrl.u32 %v3129, 7
        %v3131 = vsub.s32 4, %v3130
        %v3132 = vrot.slane %v1962, %v3131
        %v3133 = vlaneseq
        %v3134 = vshrl.u32 %v3133, 7
        %v3135 = vsub.s32 5, %v3134
        %v3136 = vrot.slane %v1962, %v3135
        %v3137 = vlaneseq
        %v3138 = vshrl.u32 %v3137, 7
        %v3139 = vsub.s32 6, %v3138
        %v3140 = vrot.slane %v1962, %v3139
        %v3141 = vlaneseq
        %v3142 = vshrl.u32 %v3141, 7
        %v3143 = vsub.s32 7, %v3142
        %v3144 = vrot.slane %v1962, %v3143
        %v3145 = vlaneseq
        %v3146 = vshrl.u32 %v3145, 7
        %v3147 = vsub.s32 0, %v3146
        %v3148 = vrot.slane %v1963, %v3147
        %v3149 = vlaneseq
        %v3150 = vshrl.u32 %v3149, 7
        %v3151 = vsub.s32 1, %v3150
        %v3152 = vrot.slane %v1963, %v3151
        %v3153 = vlaneseq
        %v3154 = vshrl.u32 %v3153, 7
        %v3155 = vsub.s32 2, %v3154
        %v3156 = vrot.slane %v1963, %v3155
        %v3157 = vlaneseq
        %v3158 = vshrl.u32 %v3157, 7
        %v3159 = vsub.s32 3, %v3158
        %v3160 = vrot.slane %v1963, %v3159
        %v3161 = vlaneseq
        %v3162 = vshrl.u32 %v3161, 7
        %v3163 = vsub.s32 4, %v3162
        %v3164 = vrot.slane %v1963, %v3163
        %v3165 = vlaneseq
        %v3166 = vshrl.u32 %v3165, 7
        %v3167 = vsub.s32 5, %v3166
        %v3168 = vrot.slane %v1963, %v3167
        %v3169 = vlaneseq
        %v3170 = vshrl.u32 %v3169, 7
        %v3171 = vsub.s32 6, %v3170
        %v3172 = vrot.slane %v1963, %v3171
        %v3173 = vlaneseq
        %v3174 = vshrl.u32 %v3173, 7
        %v3175 = vsub.s32 7, %v3174
        %v3176 = vrot.slane %v1963, %v3175
        %v3177 = vlaneseq
        %v3178 = vshrl.u32 %v3177, 7
        %v3179 = vsub.s32 0, %v3178
        %v3180 = vrot.slane %v1964, %v3179
        %v3181 = vlaneseq
        %v3182 = vshrl.u32 %v3181, 7
        %v3183 = vsub.s32 1, %v3182
        %v3184 = vrot.slane %v1964, %v3183
        %v3185 = vlaneseq
        %v3186 = vshrl.u32 %v3185, 7
        %v3187 = vsub.s32 2, %v3186
        %v3188 = vrot.slane %v1964, %v3187
        %v3189 = vlaneseq
        %v3190 = vshrl.u32 %v3189, 7
        %v3191 = vsub.s32 3, %v3190
        %v3192 = vrot.slane %v1964, %v3191
        %v3193 = vlaneseq
        %v3194 = vshrl.u32 %v3193, 7
        %v3195 = vsub.s32 4, %v3194
        %v3196 = vrot.slane %v1964, %v3195
        %v3197 = vlaneseq
        %v3198 = vshrl.u32 %v3197, 7
        %v3199 = vsub.s32 5, %v3198
        %v3200 = vrot.slane %v1964, %v3199
        %v3201 = vlaneseq
        %v3202 = vshrl.u32 %v3201, 7
        %v3203 = vsub.s32 6, %v3202
        %v3204 = vrot.slane %v1964, %v3203
        %v3205 = vlaneseq
        %v3206 = vshrl.u32 %v3205, 7
        %v3207 = vsub.s32 7, %v3206
        %v3208 = vrot.slane %v1964, %v3207
        %v3209 = vlaneseq
        %v3210 = vshrl.u32 %v3209, 7
        %v3211 = vsub.s32 0, %v3210
        %v3212 = vrot.slane %v1965, %v3211
        %v3213 = vlaneseq
        %v3214 = vshrl.u32 %v3213, 7
        %v3215 = vsub.s32 1, %v3214
        %v3216 = vrot.slane %v1965, %v3215
        %v3217 = vlaneseq
        %v3218 = vshrl.u32 %v3217, 7
        %v3219 = vsub.s32 2, %v3218
        %v3220 = vrot.slane %v1965, %v3219
        %v3221 = vlaneseq
        %v3222 = vshrl.u32 %v3221, 7
        %v3223 = vsub.s32 3, %v3222
        %v3224 = vrot.slane %v1965, %v3223
        %v3225 = vlaneseq
        %v3226 = vshrl.u32 %v3225, 7
        %v3227 = vsub.s32 4, %v3226
        %v3228 = vrot.slane %v1965, %v3227
        %v3229 = vlaneseq
        %v3230 = vshrl.u32 %v3229, 7
        %v3231 = vsub.s32 5, %v3230
        %v3232 = vrot.slane %v1965, %v3231
        %v3233 = vlaneseq
        %v3234 = vshrl.u32 %v3233, 7
        %v3235 = vsub.s32 6, %v3234
        %v3236 = vrot.slane %v1965, %v3235
        %v3237 = vlaneseq
        %v3238 = vshrl.u32 %v3237, 7
        %v3239 = vsub.s32 7, %v3238
        %v3240 = vrot.slane %v1965, %v3239
        %v3241 = vlaneseq
        %v3242 = vshrl.u32 %v3241, 7
        %v3243 = vsub.s32 0, %v3242
        %v3244 = vrot.slane %v1966, %v3243
        %v3245 = vlaneseq
        %v3246 = vshrl.u32 %v3245, 7
        %v3247 = vsub.s32 1, %v3246
        %v3248 = vrot.slane %v1966, %v3247
        %v3249 = vlaneseq
        %v3250 = vshrl.u32 %v3249, 7
        %v3251 = vsub.s32 2, %v3250
        %v3252 = vrot.slane %v1966, %v3251
        %v3253 = vlaneseq
        %v3254 = vshrl.u32 %v3253, 7
        %v3255 = vsub.s32 3, %v3254
        %v3256 = vrot.slane %v1966, %v3255
        %v3257 = vlaneseq
        %v3258 = vshrl.u32 %v3257, 7
        %v3259 = vsub.s32 4, %v3258
        %v3260 = vrot.slane %v1966, %v3259
        %v3261 = vlaneseq
        %v3262 = vshrl.u32 %v3261, 7
        %v3263 = vsub.s32 5, %v3262
        %v3264 = vrot.slane %v1966, %v3263
        %v3265 = vlaneseq
        %v3266 = vshrl.u32 %v3265, 7
        %v3267 = vsub.s32 6, %v3266
        %v3268 = vrot.slane %v1966, %v3267
        %v3269 = vlaneseq
        %v3270 = vshrl.u32 %v3269, 7
        %v3271 = vsub.s32 7, %v3270
        %v3272 = vrot.slane %v1966, %v3271
        %v3273 = vlaneseq
        %v3274 = vshrl.u32 %v3273, 7
        %v3275 = vsub.s32 0, %v3274
        %v3276 = vrot.slane %v1967, %v3275
        %v3277 = vlaneseq
        %v3278 = vshrl.u32 %v3277, 7
        %v3279 = vsub.s32 1, %v3278
        %v3280 = vrot.slane %v1967, %v3279
        %v3281 = vlaneseq
        %v3282 = vshrl.u32 %v3281, 7
        %v3283 = vsub.s32 2, %v3282
        %v3284 = vrot.slane %v1967, %v3283
        %v3285 = vlaneseq
        %v3286 = vshrl.u32 %v3285, 7
        %v3287 = vsub.s32 3, %v3286
        %v3288 = vrot.slane %v1967, %v3287
        %v3289 = vlaneseq
        %v3290 = vshrl.u32 %v3289, 7
        %v3291 = vsub.s32 4, %v3290
        %v3292 = vrot.slane %v1967, %v3291
        %v3293 = vlaneseq
        %v3294 = vshrl.u32 %v3293, 7
        %v3295 = vsub.s32 5, %v3294
        %v3296 = vrot.slane %v1967, %v3295
        %v3297 = vlaneseq
        %v3298 = vshrl.u32 %v3297, 7
        %v3299 = vsub.s32 6, %v3298
        %v3300 = vrot.slane %v1967, %v3299
        %v3301 = vlaneseq
        %v3302 = vshrl.u32 %v3301, 7
        %v3303 = vsub.s32 7, %v3302
        %v3304 = vrot.slane %v1967, %v3303
        %v3305 = vlaneseq
        %v3306 = vshrl.u32 %v3305, 7
        %v3307 = vsub.s32 0, %v3306
        %v3308 = vrot.slane %v1968, %v3307
        %v3309 = vlaneseq
        %v3310 = vshrl.u32 %v3309, 7
        %v3311 = vsub.s32 1, %v3310
        %v3312 = vrot.slane %v1968, %v3311
        %v3313 = vlaneseq
        %v3314 = vshrl.u32 %v3313, 7
        %v3315 = vsub.s32 2, %v3314
        %v3316 = vrot.slane %v1968, %v3315
        %v3317 = vlaneseq
        %v3318 = vshrl.u32 %v3317, 7
        %v3319 = vsub.s32 3, %v3318
        %v3320 = vrot.slane %v1968, %v3319
        %v3321 = vlaneseq
        %v3322 = vshrl.u32 %v3321, 7
        %v3323 = vsub.s32 4, %v3322
        %v3324 = vrot.slane %v1968, %v3323
        %v3325 = vlaneseq
        %v3326 = vshrl.u32 %v3325, 7
        %v3327 = vsub.s32 5, %v3326
        %v3328 = vrot.slane %v1968, %v3327
        %v3329 = vlaneseq
        %v3330 = vshrl.u32 %v3329, 7
        %v3331 = vsub.s32 6, %v3330
        %v3332 = vrot.slane %v1968, %v3331
        %v3333 = vlaneseq
        %v3334 = vshrl.u32 %v3333, 7
        %v3335 = vsub.s32 7, %v3334
        %v3336 = vrot.slane %v1968, %v3335
        %v3337 = vlaneseq
        %v3338 = vshrl.u32 %v3337, 7
        %v3339 = vsub.s32 0, %v3338
        %v3340 = vrot.slane %v1969, %v3339
        %v3341 = vlaneseq
        %v3342 = vshrl.u32 %v3341, 7
        %v3343 = vsub.s32 1, %v3342
        %v3344 = vrot.slane %v1969, %v3343
        %v3345 = vlaneseq
        %v3346 = vshrl.u32 %v3345, 7
        %v3347 = vsub.s32 2, %v3346
        %v3348 = vrot.slane %v1969, %v3347
        %v3349 = vlaneseq
        %v3350 = vshrl.u32 %v3349, 7
        %v3351 = vsub.s32 3, %v3350
        %v3352 = vrot.slane %v1969, %v3351
        %v3353 = vlaneseq
        %v3354 = vshrl.u32 %v3353, 7
        %v3355 = vsub.s32 4, %v3354
        %v3356 = vrot.slane %v1969, %v3355
        %v3357 = vlaneseq
        %v3358 = vshrl.u32 %v3357, 7
        %v3359 = vsub.s32 5, %v3358
        %v3360 = vrot.slane %v1969, %v3359
        %v3361 = vlaneseq
        %v3362 = vshrl.u32 %v3361, 7
        %v3363 = vsub.s32 6, %v3362
        %v3364 = vrot.slane %v1969, %v3363
        %v3365 = vlaneseq
        %v3366 = vshrl.u32 %v3365, 7
        %v3367 = vsub.s32 7, %v3366
        %v3368 = vrot.slane %v1969, %v3367
        %v3369 = vlaneseq
        %v3370 = vshrl.u32 %v3369, 7
        %v3371 = vsub.s32 0, %v3370
        %v3372 = vrot.slane %v1970, %v3371
        %v3373 = vlaneseq
        %v3374 = vshrl.u32 %v3373, 7
        %v3375 = vsub.s32 1, %v3374
        %v3376 = vrot.slane %v1970, %v3375
        %v3377 = vlaneseq
        %v3378 = vshrl.u32 %v3377, 7
        %v3379 = vsub.s32 2, %v3378
        %v3380 = vrot.slane %v1970, %v3379
        %v3381 = vlaneseq
        %v3382 = vshrl.u32 %v3381, 7
        %v3383 = vsub.s32 3, %v3382
        %v3384 = vrot.slane %v1970, %v3383
        %v3385 = vlaneseq
        %v3386 = vshrl.u32 %v3385, 7
        %v3387 = vsub.s32 4, %v3386
        %v3388 = vrot.slane %v1970, %v3387
        %v3389 = vlaneseq
        %v3390 = vshrl.u32 %v3389, 7
        %v3391 = vsub.s32 5, %v3390
        %v3392 = vrot.slane %v1970, %v3391
        %v3393 = vlaneseq
        %v3394 = vshrl.u32 %v3393, 7
        %v3395 = vsub.s32 6, %v3394
        %v3396 = vrot.slane %v1970, %v3395
        %v3397 = vlaneseq
        %v3398 = vshrl.u32 %v3397, 7
        %v3399 = vsub.s32 7, %v3398
        %v3400 = vrot.slane %v1970, %v3399
        %v3401 = vlaneseq
        %v3402 = vshrl.u32 %v3401, 7
        %v3403 = vsub.s32 0, %v3402
        %v3404 = vrot.slane %v1971, %v3403
        %v3405 = vlaneseq
        %v3406 = vshrl.u32 %v3405, 7
        %v3407 = vsub.s32 1, %v3406
        %v3408 = vrot.slane %v1971, %v3407
        %v3409 = vlaneseq
        %v3410 = vshrl.u32 %v3409, 7
        %v3411 = vsub.s32 2, %v3410
        %v3412 = vrot.slane %v1971, %v3411
        %v3413 = vlaneseq
        %v3414 = vshrl.u32 %v3413, 7
        %v3415 = vsub.s32 3, %v3414
        %v3416 = vrot.slane %v1971, %v3415
        %v3417 = vlaneseq
        %v3418 = vshrl.u32 %v3417, 7
        %v3419 = vsub.s32 4, %v3418
        %v3420 = vrot.slane %v1971, %v3419
        %v3421 = vlaneseq
        %v3422 = vshrl.u32 %v3421, 7
        %v3423 = vsub.s32 5, %v3422
        %v3424 = vrot.slane %v1971, %v3423
        %v3425 = vlaneseq
        %v3426 = vshrl.u32 %v3425, 7
        %v3427 = vsub.s32 6, %v3426
        %v3428 = vrot.slane %v1971, %v3427
        %v3429 = vlaneseq
        %v3430 = vshrl.u32 %v3429, 7
        %v3431 = vsub.s32 7, %v3430
        %v3432 = vrot.slane %v1971, %v3431
        %v3433 = vlaneseq
        %v3434 = vshrl.u32 %v3433, 7
        %v3435 = vsub.s32 0, %v3434
        %v3436 = vrot.slane %v1972, %v3435
        %v3437 = vlaneseq
        %v3438 = vshrl.u32 %v3437, 7
        %v3439 = vsub.s32 1, %v3438
        %v3440 = vrot.slane %v1972, %v3439
        %v3441 = vlaneseq
        %v3442 = vshrl.u32 %v3441, 7
        %v3443 = vsub.s32 2, %v3442
        %v3444 = vrot.slane %v1972, %v3443
        %v3445 = vlaneseq
        %v3446 = vshrl.u32 %v3445, 7
        %v3447 = vsub.s32 3, %v3446
        %v3448 = vrot.slane %v1972, %v3447
        %v3449 = vlaneseq
        %v3450 = vshrl.u32 %v3449, 7
        %v3451 = vsub.s32 4, %v3450
        %v3452 = vrot.slane %v1972, %v3451
        %v3453 = vlaneseq
        %v3454 = vshrl.u32 %v3453, 7
        %v3455 = vsub.s32 5, %v3454
        %v3456 = vrot.slane %v1972, %v3455
        %v3457 = vlaneseq
        %v3458 = vshrl.u32 %v3457, 7
        %v3459 = vsub.s32 6, %v3458
        %v3460 = vrot.slane %v1972, %v3459
        %v3461 = vlaneseq
        %v3462 = vshrl.u32 %v3461, 7
        %v3463 = vsub.s32 7, %v3462
        %v3464 = vrot.slane %v1972, %v3463
        %v3465 = vlaneseq
        %v3466 = vshrl.u32 %v3465, 7
        %v3467 = vsub.s32 0, %v3466
        %v3468 = vrot.slane %v1973, %v3467
        %v3469 = vlaneseq
        %v3470 = vshrl.u32 %v3469, 7
        %v3471 = vsub.s32 1, %v3470
        %v3472 = vrot.slane %v1973, %v3471
        %v3473 = vlaneseq
        %v3474 = vshrl.u32 %v3473, 7
        %v3475 = vsub.s32 2, %v3474
        %v3476 = vrot.slane %v1973, %v3475
        %v3477 = vlaneseq
        %v3478 = vshrl.u32 %v3477, 7
        %v3479 = vsub.s32 3, %v3478
        %v3480 = vrot.slane %v1973, %v3479
        %v3481 = vlaneseq
        %v3482 = vshrl.u32 %v3481, 7
        %v3483 = vsub.s32 4, %v3482
        %v3484 = vrot.slane %v1973, %v3483
        %v3485 = vlaneseq
        %v3486 = vshrl.u32 %v3485, 7
        %v3487 = vsub.s32 5, %v3486
        %v3488 = vrot.slane %v1973, %v3487
        %v3489 = vlaneseq
        %v3490 = vshrl.u32 %v3489, 7
        %v3491 = vsub.s32 6, %v3490
        %v3492 = vrot.slane %v1973, %v3491
        %v3493 = vlaneseq
        %v3494 = vshrl.u32 %v3493, 7
        %v3495 = vsub.s32 7, %v3494
        %v3496 = vrot.slane %v1973, %v3495
        %v3497 = vlaneseq
        %v3498 = vshrl.u32 %v3497, 7
        %v3499 = vsub.s32 0, %v3498
        %v3500 = vrot.slane %v1974, %v3499
        %v3501 = vlaneseq
        %v3502 = vshrl.u32 %v3501, 7
        %v3503 = vsub.s32 1, %v3502
        %v3504 = vrot.slane %v1974, %v3503
        %v3505 = vlaneseq
        %v3506 = vshrl.u32 %v3505, 7
        %v3507 = vsub.s32 2, %v3506
        %v3508 = vrot.slane %v1974, %v3507
        %v3509 = vlaneseq
        %v3510 = vshrl.u32 %v3509, 7
        %v3511 = vsub.s32 3, %v3510
        %v3512 = vrot.slane %v1974, %v3511
        %v3513 = vlaneseq
        %v3514 = vshrl.u32 %v3513, 7
        %v3515 = vsub.s32 4, %v3514
        %v3516 = vrot.slane %v1974, %v3515
        %v3517 = vlaneseq
        %v3518 = vshrl.u32 %v3517, 7
        %v3519 = vsub.s32 5, %v3518
        %v3520 = vrot.slane %v1974, %v3519
        %v3521 = vlaneseq
        %v3522 = vshrl.u32 %v3521, 7
        %v3523 = vsub.s32 6, %v3522
        %v3524 = vrot.slane %v1974, %v3523
        %v3525 = vlaneseq
        %v3526 = vshrl.u32 %v3525, 7
        %v3527 = vsub.s32 7, %v3526
        %v3528 = vrot.slane %v1974, %v3527
        %v3529 = vlaneseq
        %v3530 = vshrl.u32 %v3529, 7
        %v3531 = vsub.s32 0, %v3530
        %v3532 = vrot.slane %v1975, %v3531
        %v3533 = vlaneseq
        %v3534 = vshrl.u32 %v3533, 7
        %v3535 = vsub.s32 1, %v3534
        %v3536 = vrot.slane %v1975, %v3535
        %v3537 = vlaneseq
        %v3538 = vshrl.u32 %v3537, 7
        %v3539 = vsub.s32 2, %v3538
        %v3540 = vrot.slane %v1975, %v3539
        %v3541 = vlaneseq
        %v3542 = vshrl.u32 %v3541, 7
        %v3543 = vsub.s32 3, %v3542
        %v3544 = vrot.slane %v1975, %v3543
        %v3545 = vlaneseq
        %v3546 = vshrl.u32 %v3545, 7
        %v3547 = vsub.s32 4, %v3546
        %v3548 = vrot.slane %v1975, %v3547
        %v3549 = vlaneseq
        %v3550 = vshrl.u32 %v3549, 7
        %v3551 = vsub.s32 5, %v3550
        %v3552 = vrot.slane %v1975, %v3551
        %v3553 = vlaneseq
        %v3554 = vshrl.u32 %v3553, 7
        %v3555 = vsub.s32 6, %v3554
        %v3556 = vrot.slane %v1975, %v3555
        %v3557 = vlaneseq
        %v3558 = vshrl.u32 %v3557, 7
        %v3559 = vsub.s32 7, %v3558
        %v3560 = vrot.slane %v1975, %v3559
        %v3561 = vlaneseq
        %v3562 = vshrl.u32 %v3561, 7
        %v3563 = vsub.s32 0, %v3562
        %v3564 = vrot.slane %v1976, %v3563
        %v3565 = vlaneseq
        %v3566 = vshrl.u32 %v3565, 7
        %v3567 = vsub.s32 1, %v3566
        %v3568 = vrot.slane %v1976, %v3567
        %v3569 = vlaneseq
        %v3570 = vshrl.u32 %v3569, 7
        %v3571 = vsub.s32 2, %v3570
        %v3572 = vrot.slane %v1976, %v3571
        %v3573 = vlaneseq
        %v3574 = vshrl.u32 %v3573, 7
        %v3575 = vsub.s32 3, %v3574
        %v3576 = vrot.slane %v1976, %v3575
        %v3577 = vlaneseq
        %v3578 = vshrl.u32 %v3577, 7
        %v3579 = vsub.s32 4, %v3578
        %v3580 = vrot.slane %v1976, %v3579
        %v3581 = vlaneseq
        %v3582 = vshrl.u32 %v3581, 7
        %v3583 = vsub.s32 5, %v3582
        %v3584 = vrot.slane %v1976, %v3583
        %v3585 = vlaneseq
        %v3586 = vshrl.u32 %v3585, 7
        %v3587 = vsub.s32 6, %v3586
        %v3588 = vrot.slane %v1976, %v3587
        %v3589 = vlaneseq
        %v3590 = vshrl.u32 %v3589, 7
        %v3591 = vsub.s32 7, %v3590
        %v3592 = vrot.slane %v1976, %v3591
        %v3593 = vlaneseq
        %v3594 = vshrl.u32 %v3593, 7
        %v3595 = vsub.s32 0, %v3594
        %v3596 = vrot.slane %v1977, %v3595
        %v3597 = vlaneseq
        %v3598 = vshrl.u32 %v3597, 7
        %v3599 = vsub.s32 1, %v3598
        %v3600 = vrot.slane %v1977, %v3599
        %v3601 = vlaneseq
        %v3602 = vshrl.u32 %v3601, 7
        %v3603 = vsub.s32 2, %v3602
        %v3604 = vrot.slane %v1977, %v3603
        %v3605 = vlaneseq
        %v3606 = vshrl.u32 %v3605, 7
        %v3607 = vsub.s32 3, %v3606
        %v3608 = vrot.slane %v1977, %v3607
        %v3609 = vlaneseq
        %v3610 = vshrl.u32 %v3609, 7
        %v3611 = vsub.s32 4, %v3610
        %v3612 = vrot.slane %v1977, %v3611
        %v3613 = vlaneseq
        %v3614 = vshrl.u32 %v3613, 7
        %v3615 = vsub.s32 5, %v3614
        %v3616 = vrot.slane %v1977, %v3615
        %v3617 = vlaneseq
        %v3618 = vshrl.u32 %v3617, 7
        %v3619 = vsub.s32 6, %v3618
        %v3620 = vrot.slane %v1977, %v3619
        %v3621 = vlaneseq
        %v3622 = vshrl.u32 %v3621, 7
        %v3623 = vsub.s32 7, %v3622
        %v3624 = vrot.slane %v1977, %v3623
        %v3625 = vlaneseq
        %v3626 = vshrl.u32 %v3625, 7
        %v3627 = vsub.s32 0, %v3626
        %v3628 = vrot.slane %v1978, %v3627
        %v3629 = vlaneseq
        %v3630 = vshrl.u32 %v3629, 7
        %v3631 = vsub.s32 1, %v3630
        %v3632 = vrot.slane %v1978, %v3631
        %v3633 = vlaneseq
        %v3634 = vshrl.u32 %v3633, 7
        %v3635 = vsub.s32 2, %v3634
        %v3636 = vrot.slane %v1978, %v3635
        %v3637 = vlaneseq
        %v3638 = vshrl.u32 %v3637, 7
        %v3639 = vsub.s32 3, %v3638
        %v3640 = vrot.slane %v1978, %v3639
        %v3641 = vlaneseq
        %v3642 = vshrl.u32 %v3641, 7
        %v3643 = vsub.s32 4, %v3642
        %v3644 = vrot.slane %v1978, %v3643
        %v3645 = vlaneseq
        %v3646 = vshrl.u32 %v3645, 7
        %v3647 = vsub.s32 5, %v3646
        %v3648 = vrot.slane %v1978, %v3647
        %v3649 = vlaneseq
        %v3650 = vshrl.u32 %v3649, 7
        %v3651 = vsub.s32 6, %v3650
        %v3652 = vrot.slane %v1978, %v3651
        %v3653 = vlaneseq
        %v3654 = vshrl.u32 %v3653, 7
        %v3655 = vsub.s32 7, %v3654
        %v3656 = vrot.slane %v1978, %v3655
        %v3657 = vlaneseq
        %v3658 = vshrl.u32 %v3657, 7
        %v3659 = vsub.s32 0, %v3658
        %v3660 = vrot.slane %v1979, %v3659
        %v3661 = vlaneseq
        %v3662 = vshrl.u32 %v3661, 7
        %v3663 = vsub.s32 1, %v3662
        %v3664 = vrot.slane %v1979, %v3663
        %v3665 = vlaneseq
        %v3666 = vshrl.u32 %v3665, 7
        %v3667 = vsub.s32 2, %v3666
        %v3668 = vrot.slane %v1979, %v3667
        %v3669 = vlaneseq
        %v3670 = vshrl.u32 %v3669, 7
        %v3671 = vsub.s32 3, %v3670
        %v3672 = vrot.slane %v1979, %v3671
        %v3673 = vlaneseq
        %v3674 = vshrl.u32 %v3673, 7
        %v3675 = vsub.s32 4, %v3674
        %v3676 = vrot.slane %v1979, %v3675
        %v3677 = vlaneseq
        %v3678 = vshrl.u32 %v3677, 7
        %v3679 = vsub.s32 5, %v3678
        %v3680 = vrot.slane %v1979, %v3679
        %v3681 = vlaneseq
        %v3682 = vshrl.u32 %v3681, 7
        %v3683 = vsub.s32 6, %v3682
        %v3684 = vrot.slane %v1979, %v3683
        %v3685 = vlaneseq
        %v3686 = vshrl.u32 %v3685, 7
        %v3687 = vsub.s32 7, %v3686
        %v3688 = vrot.slane %v1979, %v3687
        %v3689 = vlaneseq
        %v3690 = vshrl.u32 %v3689, 7
        %v3691 = vsub.s32 0, %v3690
        %v3692 = vrot.slane %v1980, %v3691
        %v3693 = vlaneseq
        %v3694 = vshrl.u32 %v3693, 7
        %v3695 = vsub.s32 1, %v3694
        %v3696 = vrot.slane %v1980, %v3695
        %v3697 = vlaneseq
        %v3698 = vshrl.u32 %v3697, 7
        %v3699 = vsub.s32 2, %v3698
        %v3700 = vrot.slane %v1980, %v3699
        %v3701 = vlaneseq
        %v3702 = vshrl.u32 %v3701, 7
        %v3703 = vsub.s32 3, %v3702
        %v3704 = vrot.slane %v1980, %v3703
        %v3705 = vlaneseq
        %v3706 = vshrl.u32 %v3705, 7
        %v3707 = vsub.s32 4, %v3706
        %v3708 = vrot.slane %v1980, %v3707
        %v3709 = vlaneseq
        %v3710 = vshrl.u32 %v3709, 7
        %v3711 = vsub.s32 5, %v3710
        %v3712 = vrot.slane %v1980, %v3711
        %v3713 = vlaneseq
        %v3714 = vshrl.u32 %v3713, 7
        %v3715 = vsub.s32 6, %v3714
        %v3716 = vrot.slane %v1980, %v3715
        %v3717 = vlaneseq
        %v3718 = vshrl.u32 %v3717, 7
        %v3719 = vsub.s32 7, %v3718
        %v3720 = vrot.slane %v1980, %v3719
        %v3721 = vlaneseq
        %v3722 = vshrl.u32 %v3721, 7
        %v3723 = vsub.s32 0, %v3722
        %v3724 = vrot.slane %v1981, %v3723
        %v3725 = vlaneseq
        %v3726 = vshrl.u32 %v3725, 7
        %v3727 = vsub.s32 1, %v3726
        %v3728 = vrot.slane %v1981, %v3727
        %v3729 = vlaneseq
        %v3730 = vshrl.u32 %v3729, 7
        %v3731 = vsub.s32 2, %v3730
        %v3732 = vrot.slane %v1981, %v3731
        %v3733 = vlaneseq
        %v3734 = vshrl.u32 %v3733, 7
        %v3735 = vsub.s32 3, %v3734
        %v3736 = vrot.slane %v1981, %v3735
        %v3737 = vlaneseq
        %v3738 = vshrl.u32 %v3737, 7
        %v3739 = vsub.s32 4, %v3738
        %v3740 = vrot.slane %v1981, %v3739
        %v3741 = vlaneseq
        %v3742 = vshrl.u32 %v3741, 7
        %v3743 = vsub.s32 5, %v3742
        %v3744 = vrot.slane %v1981, %v3743
        %v3745 = vlaneseq
        %v3746 = vshrl.u32 %v3745, 7
        %v3747 = vsub.s32 6, %v3746
        %v3748 = vrot.slane %v1981, %v3747
        %v3749 = vlaneseq
        %v3750 = vshrl.u32 %v3749, 7
        %v3751 = vsub.s32 7, %v3750
        %v3752 = vrot.slane %v1981, %v3751
        %v3753 = vlaneseq
        %v3754 = vshrl.u32 %v3753, 7
        %v3755 = vsub.s32 0, %v3754
        %v3756 = vrot.slane %v1982, %v3755
        %v3757 = vlaneseq
        %v3758 = vshrl.u32 %v3757, 7
        %v3759 = vsub.s32 1, %v3758
        %v3760 = vrot.slane %v1982, %v3759
        %v3761 = vlaneseq
        %v3762 = vshrl.u32 %v3761, 7
        %v3763 = vsub.s32 2, %v3762
        %v3764 = vrot.slane %v1982, %v3763
        %v3765 = vlaneseq
        %v3766 = vshrl.u32 %v3765, 7
        %v3767 = vsub.s32 3, %v3766
        %v3768 = vrot.slane %v1982, %v3767
        %v3769 = vlaneseq
        %v3770 = vshrl.u32 %v3769, 7
        %v3771 = vsub.s32 4, %v3770
        %v3772 = vrot.slane %v1982, %v3771
        %v3773 = vlaneseq
        %v3774 = vshrl.u32 %v3773, 7
        %v3775 = vsub.s32 5, %v3774
        %v3776 = vrot.slane %v1982, %v3775
        %v3777 = vlaneseq
        %v3778 = vshrl.u32 %v3777, 7
        %v3779 = vsub.s32 6, %v3778
        %v3780 = vrot.slane %v1982, %v3779
        %v3781 = vlaneseq
        %v3782 = vshrl.u32 %v3781, 7
        %v3783 = vsub.s32 7, %v3782
        %v3784 = vrot.slane %v1982, %v3783
        %v3785 = vlaneseq
        %v3786 = vshrl.u32 %v3785, 7
        %v3787 = vsub.s32 0, %v3786
        %v3788 = vrot.slane %v1983, %v3787
        %v3789 = vlaneseq
        %v3790 = vshrl.u32 %v3789, 7
        %v3791 = vsub.s32 1, %v3790
        %v3792 = vrot.slane %v1983, %v3791
        %v3793 = vlaneseq
        %v3794 = vshrl.u32 %v3793, 7
        %v3795 = vsub.s32 2, %v3794
        %v3796 = vrot.slane %v1983, %v3795
        %v3797 = vlaneseq
        %v3798 = vshrl.u32 %v3797, 7
        %v3799 = vsub.s32 3, %v3798
        %v3800 = vrot.slane %v1983, %v3799
        %v3801 = vlaneseq
        %v3802 = vshrl.u32 %v3801, 7
        %v3803 = vsub.s32 4, %v3802
        %v3804 = vrot.slane %v1983, %v3803
        %v3805 = vlaneseq
        %v3806 = vshrl.u32 %v3805, 7
        %v3807 = vsub.s32 5, %v3806
        %v3808 = vrot.slane %v1983, %v3807
        %v3809 = vlaneseq
        %v3810 = vshrl.u32 %v3809, 7
        %v3811 = vsub.s32 6, %v3810
        %v3812 = vrot.slane %v1983, %v3811
        %v3813 = vlaneseq
        %v3814 = vshrl.u32 %v3813, 7
        %v3815 = vsub.s32 7, %v3814
        %v3816 = vrot.slane %v1983, %v3815
        %v3817 = vlaneseq
        %v3818 = vshrl.u32 %v3817, 7
        %v3819 = vsub.s32 0, %v3818
        %v3820 = vrot.slane %v1984, %v3819
        %v3821 = vlaneseq
        %v3822 = vshrl.u32 %v3821, 7
        %v3823 = vsub.s32 1, %v3822
        %v3824 = vrot.slane %v1984, %v3823
        %v3825 = vlaneseq
        %v3826 = vshrl.u32 %v3825, 7
        %v3827 = vsub.s32 2, %v3826
        %v3828 = vrot.slane %v1984, %v3827
        %v3829 = vlaneseq
        %v3830 = vshrl.u32 %v3829, 7
        %v3831 = vsub.s32 3, %v3830
        %v3832 = vrot.slane %v1984, %v3831
        %v3833 = vlaneseq
        %v3834 = vshrl.u32 %v3833, 7
        %v3835 = vsub.s32 4, %v3834
        %v3836 = vrot.slane %v1984, %v3835
        %v3837 = vlaneseq
        %v3838 = vshrl.u32 %v3837, 7
        %v3839 = vsub.s32 5, %v3838
        %v3840 = vrot.slane %v1984, %v3839
        %v3841 = vlaneseq
        %v3842 = vshrl.u32 %v3841, 7
        %v3843 = vsub.s32 6, %v3842
        %v3844 = vrot.slane %v1984, %v3843
        %v3845 = vlaneseq
        %v3846 = vshrl.u32 %v3845, 7
        %v3847 = vsub.s32 7, %v3846
        %v3848 = vrot.slane %v1984, %v3847
        %v3849 = vlaneseq
        %v3850 = vshrl.u32 %v3849, 7
        %v3851 = vsub.s32 0, %v3850
        %v3852 = vrot.slane %v1985, %v3851
        %v3853 = vlaneseq
        %v3854 = vshrl.u32 %v3853, 7
        %v3855 = vsub.s32 1, %v3854
        %v3856 = vrot.slane %v1985, %v3855
        %v3857 = vlaneseq
        %v3858 = vshrl.u32 %v3857, 7
        %v3859 = vsub.s32 2, %v3858
        %v3860 = vrot.slane %v1985, %v3859
        %v3861 = vlaneseq
        %v3862 = vshrl.u32 %v3861, 7
        %v3863 = vsub.s32 3, %v3862
        %v3864 = vrot.slane %v1985, %v3863
        %v3865 = vlaneseq
        %v3866 = vshrl.u32 %v3865, 7
        %v3867 = vsub.s32 4, %v3866
        %v3868 = vrot.slane %v1985, %v3867
        %v3869 = vlaneseq
        %v3870 = vshrl.u32 %v3869, 7
        %v3871 = vsub.s32 5, %v3870
        %v3872 = vrot.slane %v1985, %v3871
        %v3873 = vlaneseq
        %v3874 = vshrl.u32 %v3873, 7
        %v3875 = vsub.s32 6, %v3874
        %v3876 = vrot.slane %v1985, %v3875
        %v3877 = vlaneseq
        %v3878 = vshrl.u32 %v3877, 7
        %v3879 = vsub.s32 7, %v3878
        %v3880 = vrot.slane %v1985, %v3879
        %v3881 = vlaneseq
        %v3882 = vshrl.u32 %v3881, 7
        %v3883 = vsub.s32 0, %v3882
        %v3884 = vrot.slane %v1986, %v3883
        %v3885 = vlaneseq
        %v3886 = vshrl.u32 %v3885, 7
        %v3887 = vsub.s32 1, %v3886
        %v3888 = vrot.slane %v1986, %v3887
        %v3889 = vlaneseq
        %v3890 = vshrl.u32 %v3889, 7
        %v3891 = vsub.s32 2, %v3890
        %v3892 = vrot.slane %v1986, %v3891
        %v3893 = vlaneseq
        %v3894 = vshrl.u32 %v3893, 7
        %v3895 = vsub.s32 3, %v3894
        %v3896 = vrot.slane %v1986, %v3895
        %v3897 = vlaneseq
        %v3898 = vshrl.u32 %v3897, 7
        %v3899 = vsub.s32 4, %v3898
        %v3900 = vrot.slane %v1986, %v3899
        %v3901 = vlaneseq
        %v3902 = vshrl.u32 %v3901, 7
        %v3903 = vsub.s32 5, %v3902
        %v3904 = vrot.slane %v1986, %v3903
        %v3905 = vlaneseq
        %v3906 = vshrl.u32 %v3905, 7
        %v3907 = vsub.s32 6, %v3906
        %v3908 = vrot.slane %v1986, %v3907
        %v3909 = vlaneseq
        %v3910 = vshrl.u32 %v3909, 7
        %v3911 = vsub.s32 7, %v3910
        %v3912 = vrot.slane %v1986, %v3911
        %v3913 = vlaneseq
        %v3914 = vshrl.u32 %v3913, 7
        %v3915 = vsub.s32 0, %v3914
        %v3916 = vrot.slane %v1987, %v3915
        %v3917 = vlaneseq
        %v3918 = vshrl.u32 %v3917, 7
        %v3919 = vsub.s32 1, %v3918
        %v3920 = vrot.slane %v1987, %v3919
        %v3921 = vlaneseq
        %v3922 = vshrl.u32 %v3921, 7
        %v3923 = vsub.s32 2, %v3922
        %v3924 = vrot.slane %v1987, %v3923
        %v3925 = vlaneseq
        %v3926 = vshrl.u32 %v3925, 7
        %v3927 = vsub.s32 3, %v3926
        %v3928 = vrot.slane %v1987, %v3927
        %v3929 = vlaneseq
        %v3930 = vshrl.u32 %v3929, 7
        %v3931 = vsub.s32 4, %v3930
        %v3932 = vrot.slane %v1987, %v3931
        %v3933 = vlaneseq
        %v3934 = vshrl.u32 %v3933, 7
        %v3935 = vsub.s32 5, %v3934
        %v3936 = vrot.slane %v1987, %v3935
        %v3937 = vlaneseq
        %v3938 = vshrl.u32 %v3937, 7
        %v3939 = vsub.s32 6, %v3938
        %v3940 = vrot.slane %v1987, %v3939
        %v3941 = vlaneseq
        %v3942 = vshrl.u32 %v3941, 7
        %v3943 = vsub.s32 7, %v3942
        %v3944 = vrot.slane %v1987, %v3943
        %v3945 = vlaneseq
        %v3946 = vshrl.u32 %v3945, 7
        %v3947 = vsub.s32 0, %v3946
        %v3948 = vrot.slane %v1988, %v3947
        %v3949 = vlaneseq
        %v3950 = vshrl.u32 %v3949, 7
        %v3951 = vsub.s32 1, %v3950
        %v3952 = vrot.slane %v1988, %v3951
        %v3953 = vlaneseq
        %v3954 = vshrl.u32 %v3953, 7
        %v3955 = vsub.s32 2, %v3954
        %v3956 = vrot.slane %v1988, %v3955
        %v3957 = vlaneseq
        %v3958 = vshrl.u32 %v3957, 7
        %v3959 = vsub.s32 3, %v3958
        %v3960 = vrot.slane %v1988, %v3959
        %v3961 = vlaneseq
        %v3962 = vshrl.u32 %v3961, 7
        %v3963 = vsub.s32 4, %v3962
        %v3964 = vrot.slane %v1988, %v3963
        %v3965 = vlaneseq
        %v3966 = vshrl.u32 %v3965, 7
        %v3967 = vsub.s32 5, %v3966
        %v3968 = vrot.slane %v1988, %v3967
        %v3969 = vlaneseq
        %v3970 = vshrl.u32 %v3969, 7
        %v3971 = vsub.s32 6, %v3970
        %v3972 = vrot.slane %v1988, %v3971
        %v3973 = vlaneseq
        %v3974 = vshrl.u32 %v3973, 7
        %v3975 = vsub.s32 7, %v3974
        %v3976 = vrot.slane %v1988, %v3975
        %v3977 = vlaneseq
        %v3978 = vshrl.u32 %v3977, 7
        %v3979 = vsub.s32 0, %v3978
        %v3980 = vrot.slane %v1989, %v3979
        %v3981 = vlaneseq
        %v3982 = vshrl.u32 %v3981, 7
        %v3983 = vsub.s32 1, %v3982
        %v3984 = vrot.slane %v1989, %v3983
        %v3985 = vlaneseq
        %v3986 = vshrl.u32 %v3985, 7
        %v3987 = vsub.s32 2, %v3986
        %v3988 = vrot.slane %v1989, %v3987
        %v3989 = vlaneseq
        %v3990 = vshrl.u32 %v3989, 7
        %v3991 = vsub.s32 3, %v3990
        %v3992 = vrot.slane %v1989, %v3991
        %v3993 = vlaneseq
        %v3994 = vshrl.u32 %v3993, 7
        %v3995 = vsub.s32 4, %v3994
        %v3996 = vrot.slane %v1989, %v3995
        %v3997 = vlaneseq
        %v3998 = vshrl.u32 %v3997, 7
        %v3999 = vsub.s32 5, %v3998
        %v4000 = vrot.slane %v1989, %v3999
        %v4001 = vlaneseq
        %v4002 = vshrl.u32 %v4001, 7
        %v4003 = vsub.s32 6, %v4002
        %v4004 = vrot.slane %v1989, %v4003
        %v4005 = vlaneseq
        %v4006 = vshrl.u32 %v4005, 7
        %v4007 = vsub.s32 7, %v4006
        %v4008 = vrot.slane %v1989, %v4007
        %v4009 = vlaneseq
        %v4010 = vshrl.u32 %v4009, 7
        %v4011 = vsub.s32 0, %v4010
        %v4012 = vrot.slane %v1990, %v4011
        %v4013 = vlaneseq
        %v4014 = vshrl.u32 %v4013, 7
        %v4015 = vsub.s32 1, %v4014
        %v4016 = vrot.slane %v1990, %v4015
        %v4017 = vlaneseq
        %v4018 = vshrl.u32 %v4017, 7
        %v4019 = vsub.s32 2, %v4018
        %v4020 = vrot.slane %v1990, %v4019
        %v4021 = vlaneseq
        %v4022 = vshrl.u32 %v4021, 7
        %v4023 = vsub.s32 3, %v4022
        %v4024 = vrot.slane %v1990, %v4023
        %v4025 = vlaneseq
        %v4026 = vshrl.u32 %v4025, 7
        %v4027 = vsub.s32 4, %v4026
        %v4028 = vrot.slane %v1990, %v4027
        %v4029 = vlaneseq
        %v4030 = vshrl.u32 %v4029, 7
        %v4031 = vsub.s32 5, %v4030
        %v4032 = vrot.slane %v1990, %v4031
        %v4033 = vlaneseq
        %v4034 = vshrl.u32 %v4033, 7
        %v4035 = vsub.s32 6, %v4034
        %v4036 = vrot.slane %v1990, %v4035
        %v4037 = vlaneseq
        %v4038 = vshrl.u32 %v4037, 7
        %v4039 = vsub.s32 7, %v4038
        %v4040 = vrot.slane %v1990, %v4039
        %v4041 = vlaneseq
        %v4042 = vshrl.u32 %v4041, 7
        %v4043 = vsub.s32 0, %v4042
        %v4044 = vrot.slane %v1991, %v4043
        %v4045 = vlaneseq
        %v4046 = vshrl.u32 %v4045, 7
        %v4047 = vsub.s32 1, %v4046
        %v4048 = vrot.slane %v1991, %v4047
        %v4049 = vlaneseq
        %v4050 = vshrl.u32 %v4049, 7
        %v4051 = vsub.s32 2, %v4050
        %v4052 = vrot.slane %v1991, %v4051
        %v4053 = vlaneseq
        %v4054 = vshrl.u32 %v4053, 7
        %v4055 = vsub.s32 3, %v4054
        %v4056 = vrot.slane %v1991, %v4055
        %v4057 = vlaneseq
        %v4058 = vshrl.u32 %v4057, 7
        %v4059 = vsub.s32 4, %v4058
        %v4060 = vrot.slane %v1991, %v4059
        %v4061 = vlaneseq
        %v4062 = vshrl.u32 %v4061, 7
        %v4063 = vsub.s32 5, %v4062
        %v4064 = vrot.slane %v1991, %v4063
        %v4065 = vlaneseq
        %v4066 = vshrl.u32 %v4065, 7
        %v4067 = vsub.s32 6, %v4066
        %v4068 = vrot.slane %v1991, %v4067
        %v4069 = vlaneseq
        %v4070 = vshrl.u32 %v4069, 7
        %v4071 = vsub.s32 7, %v4070
        %v4072 = vrot.slane %v1991, %v4071
        %v4073 = vlaneseq
        %v4074 = vshrl.u32 %v4073, 7
        %v4075 = vsub.s32 0, %v4074
        %v4076 = vrot.slane %v1992, %v4075
        %v4077 = vlaneseq
        %v4078 = vshrl.u32 %v4077, 7
        %v4079 = vsub.s32 1, %v4078
        %v4080 = vrot.slane %v1992, %v4079
        %v4081 = vlaneseq
        %v4082 = vshrl.u32 %v4081, 7
        %v4083 = vsub.s32 2, %v4082
        %v4084 = vrot.slane %v1992, %v4083
        %v4085 = vlaneseq
        %v4086 = vshrl.u32 %v4085, 7
        %v4087 = vsub.s32 3, %v4086
        %v4088 = vrot.slane %v1992, %v4087
        %v4089 = vlaneseq
        %v4090 = vshrl.u32 %v4089, 7
        %v4091 = vsub.s32 4, %v4090
        %v4092 = vrot.slane %v1992, %v4091
        %v4093 = vlaneseq
        %v4094 = vshrl.u32 %v4093, 7
        %v4095 = vsub.s32 5, %v4094
        %v4096 = vrot.slane %v1992, %v4095
        %v4097 = vlaneseq
        %v4098 = vshrl.u32 %v4097, 7
        %v4099 = vsub.s32 6, %v4098
        %v4100 = vrot.slane %v1992, %v4099
        %v4101 = vlaneseq
        %v4102 = vshrl.u32 %v4101, 7
        %v4103 = vsub.s32 7, %v4102
        %v4104 = vrot.slane %v1992, %v4103
        %v4105 = vcombine.low %v2060, %v2064
        %v4106 = vcombine.low %v2068, %v2072
        %v4107 = vcombine.low %v2076, %v2080
        %v4108 = vcombine.low %v2084, %v2088
        %v4110 = vunpack.c.l.s4 1966171168
        %v4111 = vunpack.c.0.s8 %v4110
        %v4112 = vlaneseq
        %v4113 = vshrl.u32 %v4112, 7
        %v4114 = vsub.s32 %v4111, %v4113
        %v4115 = vrot.slane %v4105, %v4114
        %v4117 = vunpack.c.l.s4 1966171168
        %v4118 = vunpack.c.0.s8 %v4117
        %v4119 = vlaneseq
        %v4120 = vshrl.u32 %v4119, 7
        %v4121 = vsub.s32 %v4118, %v4120
        %v4122 = vrot.slane %v4106, %v4121
        %v4124 = vunpack.c.l.s4 1966171168
        %v4125 = vunpack.c.0.s8 %v4124
        %v4126 = vlaneseq
        %v4127 = vshrl.u32 %v4126, 7
        %v4128 = vsub.s32 %v4125, %v4127
        %v4129 = vrot.slane %v4107, %v4128
        %v4131 = vunpack.c.l.s4 1966171168
        %v4132 = vunpack.c.0.s8 %v4131
        %v4133 = vlaneseq
        %v4134 = vshrl.u32 %v4133, 7
        %v4135 = vsub.s32 %v4132, %v4134
        %v4136 = vrot.slane %v4108, %v4135
        %v4137 = vcombine.low %v4115, %v4122
        %v4138 = vcombine.low %v4129, %v4136
        %v4140 = vunpack.c.l.s4 1966171168
        %v4141 = vunpack.c.0.s8 %v4140
        %v4142 = vlaneseq
        %v4143 = vshrl.u32 %v4142, 7
        %v4144 = vsub.s32 %v4141, %v4143
        %v4145 = vrot.slane %v4137, %v4144
        %v4147 = vunpack.c.l.s4 1966171168
        %v4148 = vunpack.c.0.s8 %v4147
        %v4149 = vlaneseq
        %v4150 = vshrl.u32 %v4149, 7
        %v4151 = vsub.s32 %v4148, %v4150
        %v4152 = vrot.slane %v4138, %v4151
        %v4153 = vcombine.low %v4145, %v4152
        %v4154 = vcombine.low %v2092, %v2096
        %v4155 = vcombine.low %v2100, %v2104
        %v4156 = vcombine.low %v2108, %v2112
        %v4157 = vcombine.low %v2116, %v2120
        %v4159 = vunpack.c.l.s4 1966171168
        %v4160 = vunpack.c.0.s8 %v4159
        %v4161 = vlaneseq
        %v4162 = vshrl.u32 %v4161, 7
        %v4163 = vsub.s32 %v4160, %v4162
        %v4164 = vrot.slane %v4154, %v4163
        %v4166 = vunpack.c.l.s4 1966171168
        %v4167 = vunpack.c.0.s8 %v4166
        %v4168 = vlaneseq
        %v4169 = vshrl.u32 %v4168, 7
        %v4170 = vsub.s32 %v4167, %v4169
        %v4171 = vrot.slane %v4155, %v4170
        %v4173 = vunpack.c.l.s4 1966171168
        %v4174 = vunpack.c.0.s8 %v4173
        %v4175 = vlaneseq
        %v4176 = vshrl.u32 %v4175, 7
        %v4177 = vsub.s32 %v4174, %v4176
        %v4178 = vrot.slane %v4156, %v4177
        %v4180 = vunpack.c.l.s4 1966171168
        %v4181 = vunpack.c.0.s8 %v4180
        %v4182 = vlaneseq
        %v4183 = vshrl.u32 %v4182, 7
        %v4184 = vsub.s32 %v4181, %v4183
        %v4185 = vrot.slane %v4157, %v4184
        %v4186 = vcombine.low %v4164, %v4171
        %v4187 = vcombine.low %v4178, %v4185
        %v4189 = vunpack.c.l.s4 1966171168
        %v4190 = vunpack.c.0.s8 %v4189
        %v4191 = vlaneseq
        %v4192 = vshrl.u32 %v4191, 7
        %v4193 = vsub.s32 %v4190, %v4192
        %v4194 = vrot.slane %v4186, %v4193
        %v4196 = vunpack.c.l.s4 1966171168
        %v4197 = vunpack.c.0.s8 %v4196
        %v4198 = vlaneseq
        %v4199 = vshrl.u32 %v4198, 7
        %v4200 = vsub.s32 %v4197, %v4199
        %v4201 = vrot.slane %v4187, %v4200
        %v4202 = vcombine.low %v4194, %v4201
        %v4203 = vcombine.low %v2124, %v2128
        %v4204 = vcombine.low %v2132, %v2136
        %v4205 = vcombine.low %v2140, %v2144
        %v4206 = vcombine.low %v2148, %v2152
        %v4208 = vunpack.c.l.s4 1966171168
        %v4209 = vunpack.c.0.s8 %v4208
        %v4210 = vlaneseq
        %v4211 = vshrl.u32 %v4210, 7
        %v4212 = vsub.s32 %v4209, %v4211
        %v4213 = vrot.slane %v4203, %v4212
        %v4215 = vunpack.c.l.s4 1966171168
        %v4216 = vunpack.c.0.s8 %v4215
        %v4217 = vlaneseq
        %v4218 = vshrl.u32 %v4217, 7
        %v4219 = vsub.s32 %v4216, %v4218
        %v4220 = vrot.slane %v4204, %v4219
        %v4222 = vunpack.c.l.s4 1966171168
        %v4223 = vunpack.c.0.s8 %v4222
        %v4224 = vlaneseq
        %v4225 = vshrl.u32 %v4224, 7
        %v4226 = vsub.s32 %v4223, %v4225
        %v4227 = vrot.slane %v4205, %v4226
        %v4229 = vunpack.c.l.s4 1966171168
        %v4230 = vunpack.c.0.s8 %v4229
        %v4231 = vlaneseq
        %v4232 = vshrl.u32 %v4231, 7
        %v4233 = vsub.s32 %v4230, %v4232
        %v4234 = vrot.slane %v4206, %v4233
        %v4235 = vcombine.low %v4213, %v4220
        %v4236 = vcombine.low %v4227, %v4234
        %v4238 = vunpack.c.l.s4 1966171168
        %v4239 = vunpack.c.0.s8 %v4238
        %v4240 = vlaneseq
        %v4241 = vshrl.u32 %v4240, 7
        %v4242 = vsub.s32 %v4239, %v4241
        %v4243 = vrot.slane %v4235, %v4242
        %v4245 = vunpack.c.l.s4 1966171168
        %v4246 = vunpack.c.0.s8 %v4245
        %v4247 = vlaneseq
        %v4248 = vshrl.u32 %v4247, 7
        %v4249 = vsub.s32 %v4246, %v4248
        %v4250 = vrot.slane %v4236, %v4249
        %v4251 = vcombine.low %v4243, %v4250
        %v4252 = vcombine.low %v2156, %v2160
        %v4253 = vcombine.low %v2164, %v2168
        %v4254 = vcombine.low %v2172, %v2176
        %v4255 = vcombine.low %v2180, %v2184
        %v4257 = vunpack.c.l.s4 1966171168
        %v4258 = vunpack.c.0.s8 %v4257
        %v4259 = vlaneseq
        %v4260 = vshrl.u32 %v4259, 7
        %v4261 = vsub.s32 %v4258, %v4260
        %v4262 = vrot.slane %v4252, %v4261
        %v4264 = vunpack.c.l.s4 1966171168
        %v4265 = vunpack.c.0.s8 %v4264
        %v4266 = vlaneseq
        %v4267 = vshrl.u32 %v4266, 7
        %v4268 = vsub.s32 %v4265, %v4267
        %v4269 = vrot.slane %v4253, %v4268
        %v4271 = vunpack.c.l.s4 1966171168
        %v4272 = vunpack.c.0.s8 %v4271
        %v4273 = vlaneseq
        %v4274 = vshrl.u32 %v4273, 7
        %v4275 = vsub.s32 %v4272, %v4274
        %v4276 = vrot.slane %v4254, %v4275
        %v4278 = vunpack.c.l.s4 1966171168
        %v4279 = vunpack.c.0.s8 %v4278
        %v4280 = vlaneseq
        %v4281 = vshrl.u32 %v4280, 7
        %v4282 = vsub.s32 %v4279, %v4281
        %v4283 = vrot.slane %v4255, %v4282
        %v4284 = vcombine.low %v4262, %v4269
        %v4285 = vcombine.low %v4276, %v4283
        %v4287 = vunpack.c.l.s4 1966171168
        %v4288 = vunpack.c.0.s8 %v4287
        %v4289 = vlaneseq
        %v4290 = vshrl.u32 %v4289, 7
        %v4291 = vsub.s32 %v4288, %v4290
        %v4292 = vrot.slane %v4284, %v4291
        %v4294 = vunpack.c.l.s4 1966171168
        %v4295 = vunpack.c.0.s8 %v4294
        %v4296 = vlaneseq
        %v4297 = vshrl.u32 %v4296, 7
        %v4298 = vsub.s32 %v4295, %v4297
        %v4299 = vrot.slane %v4285, %v4298
        %v4300 = vcombine.low %v4292, %v4299
        %v4301 = vcombine.low %v2188, %v2192
        %v4302 = vcombine.low %v2196, %v2200
        %v4303 = vcombine.low %v2204, %v2208
        %v4304 = vcombine.low %v2212, %v2216
        %v4306 = vunpack.c.l.s4 1966171168
        %v4307 = vunpack.c.0.s8 %v4306
        %v4308 = vlaneseq
        %v4309 = vshrl.u32 %v4308, 7
        %v4310 = vsub.s32 %v4307, %v4309
        %v4311 = vrot.slane %v4301, %v4310
        %v4313 = vunpack.c.l.s4 1966171168
        %v4314 = vunpack.c.0.s8 %v4313
        %v4315 = vlaneseq
        %v4316 = vshrl.u32 %v4315, 7
        %v4317 = vsub.s32 %v4314, %v4316
        %v4318 = vrot.slane %v4302, %v4317
        %v4320 = vunpack.c.l.s4 1966171168
        %v4321 = vunpack.c.0.s8 %v4320
        %v4322 = vlaneseq
        %v4323 = vshrl.u32 %v4322, 7
        %v4324 = vsub.s32 %v4321, %v4323
        %v4325 = vrot.slane %v4303, %v4324
        %v4327 = vunpack.c.l.s4 1966171168
        %v4328 = vunpack.c.0.s8 %v4327
        %v4329 = vlaneseq
        %v4330 = vshrl.u32 %v4329, 7
        %v4331 = vsub.s32 %v4328, %v4330
        %v4332 = vrot.slane %v4304, %v4331
        %v4333 = vcombine.low %v4311, %v4318
        %v4334 = vcombine.low %v4325, %v4332
        %v4336 = vunpack.c.l.s4 1966171168
        %v4337 = vunpack.c.0.s8 %v4336
        %v4338 = vlaneseq
        %v4339 = vshrl.u32 %v4338, 7
        %v4340 = vsub.s32 %v4337, %v4339
        %v4341 = vrot.slane %v4333, %v4340
        %v4343 = vunpack.c.l.s4 1966171168
        %v4344 = vunpack.c.0.s8 %v4343
        %v4345 = vlaneseq
        %v4346 = vshrl.u32 %v4345, 7
        %v4347 = vsub.s32 %v4344, %v4346
        %v4348 = vrot.slane %v4334, %v4347
        %v4349 = vcombine.low %v4341, %v4348
        %v4350 = vcombine.low %v2220, %v2224
        %v4351 = vcombine.low %v2228, %v2232
        %v4352 = vcombine.low %v2236, %v2240
        %v4353 = vcombine.low %v2244, %v2248
        %v4355 = vunpack.c.l.s4 1966171168
        %v4356 = vunpack.c.0.s8 %v4355
        %v4357 = vlaneseq
        %v4358 = vshrl.u32 %v4357, 7
        %v4359 = vsub.s32 %v4356, %v4358
        %v4360 = vrot.slane %v4350, %v4359
        %v4362 = vunpack.c.l.s4 1966171168
        %v4363 = vunpack.c.0.s8 %v4362
        %v4364 = vlaneseq
        %v4365 = vshrl.u32 %v4364, 7
        %v4366 = vsub.s32 %v4363, %v4365
        %v4367 = vrot.slane %v4351, %v4366
        %v4369 = vunpack.c.l.s4 1966171168
        %v4370 = vunpack.c.0.s8 %v4369
        %v4371 = vlaneseq
        %v4372 = vshrl.u32 %v4371, 7
        %v4373 = vsub.s32 %v4370, %v4372
        %v4374 = vrot.slane %v4352, %v4373
        %v4376 = vunpack.c.l.s4 1966171168
        %v4377 = vunpack.c.0.s8 %v4376
        %v4378 = vlaneseq
        %v4379 = vshrl.u32 %v4378, 7
        %v4380 = vsub.s32 %v4377, %v4379
        %v4381 = vrot.slane %v4353, %v4380
        %v4382 = vcombine.low %v4360, %v4367
        %v4383 = vcombine.low %v4374, %v4381
        %v4385 = vunpack.c.l.s4 1966171168
        %v4386 = vunpack.c.0.s8 %v4385
        %v4387 = vlaneseq
        %v4388 = vshrl.u32 %v4387, 7
        %v4389 = vsub.s32 %v4386, %v4388
        %v4390 = vrot.slane %v4382, %v4389
        %v4392 = vunpack.c.l.s4 1966171168
        %v4393 = vunpack.c.0.s8 %v4392
        %v4394 = vlaneseq
        %v4395 = vshrl.u32 %v4394, 7
        %v4396 = vsub.s32 %v4393, %v4395
        %v4397 = vrot.slane %v4383, %v4396
        %v4398 = vcombine.low %v4390, %v4397
        %v4399 = vcombine.low %v2252, %v2256
        %v4400 = vcombine.low %v2260, %v2264
        %v4401 = vcombine.low %v2268, %v2272
        %v4402 = vcombine.low %v2276, %v2280
        %v4404 = vunpack.c.l.s4 1966171168
        %v4405 = vunpack.c.0.s8 %v4404
        %v4406 = vlaneseq
        %v4407 = vshrl.u32 %v4406, 7
        %v4408 = vsub.s32 %v4405, %v4407
        %v4409 = vrot.slane %v4399, %v4408
        %v4411 = vunpack.c.l.s4 1966171168
        %v4412 = vunpack.c.0.s8 %v4411
        %v4413 = vlaneseq
        %v4414 = vshrl.u32 %v4413, 7
        %v4415 = vsub.s32 %v4412, %v4414
        %v4416 = vrot.slane %v4400, %v4415
        %v4418 = vunpack.c.l.s4 1966171168
        %v4419 = vunpack.c.0.s8 %v4418
        %v4420 = vlaneseq
        %v4421 = vshrl.u32 %v4420, 7
        %v4422 = vsub.s32 %v4419, %v4421
        %v4423 = vrot.slane %v4401, %v4422
        %v4425 = vunpack.c.l.s4 1966171168
        %v4426 = vunpack.c.0.s8 %v4425
        %v4427 = vlaneseq
        %v4428 = vshrl.u32 %v4427, 7
        %v4429 = vsub.s32 %v4426, %v4428
        %v4430 = vrot.slane %v4402, %v4429
        %v4431 = vcombine.low %v4409, %v4416
        %v4432 = vcombine.low %v4423, %v4430
        %v4434 = vunpack.c.l.s4 1966171168
        %v4435 = vunpack.c.0.s8 %v4434
        %v4436 = vlaneseq
        %v4437 = vshrl.u32 %v4436, 7
        %v4438 = vsub.s32 %v4435, %v4437
        %v4439 = vrot.slane %v4431, %v4438
        %v4441 = vunpack.c.l.s4 1966171168
        %v4442 = vunpack.c.0.s8 %v4441
        %v4443 = vlaneseq
        %v4444 = vshrl.u32 %v4443, 7
        %v4445 = vsub.s32 %v4442, %v4444
        %v4446 = vrot.slane %v4432, %v4445
        %v4447 = vcombine.low %v4439, %v4446
        %v4448 = vcombine.low %v2284, %v2288
        %v4449 = vcombine.low %v2292, %v2296
        %v4450 = vcombine.low %v2300, %v2304
        %v4451 = vcombine.low %v2308, %v2312
        %v4453 = vunpack.c.l.s4 1966171168
        %v4454 = vunpack.c.0.s8 %v4453
        %v4455 = vlaneseq
        %v4456 = vshrl.u32 %v4455, 7
        %v4457 = vsub.s32 %v4454, %v4456
        %v4458 = vrot.slane %v4448, %v4457
        %v4460 = vunpack.c.l.s4 1966171168
        %v4461 = vunpack.c.0.s8 %v4460
        %v4462 = vlaneseq
        %v4463 = vshrl.u32 %v4462, 7
        %v4464 = vsub.s32 %v4461, %v4463
        %v4465 = vrot.slane %v4449, %v4464
        %v4467 = vunpack.c.l.s4 1966171168
        %v4468 = vunpack.c.0.s8 %v4467
        %v4469 = vlaneseq
        %v4470 = vshrl.u32 %v4469, 7
        %v4471 = vsub.s32 %v4468, %v4470
        %v4472 = vrot.slane %v4450, %v4471
        %v4474 = vunpack.c.l.s4 1966171168
        %v4475 = vunpack.c.0.s8 %v4474
        %v4476 = vlaneseq
        %v4477 = vshrl.u32 %v4476, 7
        %v4478 = vsub.s32 %v4475, %v4477
        %v4479 = vrot.slane %v4451, %v4478
        %v4480 = vcombine.low %v4458, %v4465
        %v4481 = vcombine.low %v4472, %v4479
        %v4483 = vunpack.c.l.s4 1966171168
        %v4484 = vunpack.c.0.s8 %v4483
        %v4485 = vlaneseq
        %v4486 = vshrl.u32 %v4485, 7
        %v4487 = vsub.s32 %v4484, %v4486
        %v4488 = vrot.slane %v4480, %v4487
        %v4490 = vunpack.c.l.s4 1966171168
        %v4491 = vunpack.c.0.s8 %v4490
        %v4492 = vlaneseq
        %v4493 = vshrl.u32 %v4492, 7
        %v4494 = vsub.s32 %v4491, %v4493
        %v4495 = vrot.slane %v4481, %v4494
        %v4496 = vcombine.low %v4488, %v4495
        %v4497 = vcombine.low %v2316, %v2320
        %v4498 = vcombine.low %v2324, %v2328
        %v4499 = vcombine.low %v2332, %v2336
        %v4500 = vcombine.low %v2340, %v2344
        %v4502 = vunpack.c.l.s4 1966171168
        %v4503 = vunpack.c.0.s8 %v4502
        %v4504 = vlaneseq
        %v4505 = vshrl.u32 %v4504, 7
        %v4506 = vsub.s32 %v4503, %v4505
        %v4507 = vrot.slane %v4497, %v4506
        %v4509 = vunpack.c.l.s4 1966171168
        %v4510 = vunpack.c.0.s8 %v4509
        %v4511 = vlaneseq
        %v4512 = vshrl.u32 %v4511, 7
        %v4513 = vsub.s32 %v4510, %v4512
        %v4514 = vrot.slane %v4498, %v4513
        %v4516 = vunpack.c.l.s4 1966171168
        %v4517 = vunpack.c.0.s8 %v4516
        %v4518 = vlaneseq
        %v4519 = vshrl.u32 %v4518, 7
        %v4520 = vsub.s32 %v4517, %v4519
        %v4521 = vrot.slane %v4499, %v4520
        %v4523 = vunpack.c.l.s4 1966171168
        %v4524 = vunpack.c.0.s8 %v4523
        %v4525 = vlaneseq
        %v4526 = vshrl.u32 %v4525, 7
        %v4527 = vsub.s32 %v4524, %v4526
        %v4528 = vrot.slane %v4500, %v4527
        %v4529 = vcombine.low %v4507, %v4514
        %v4530 = vcombine.low %v4521, %v4528
        %v4532 = vunpack.c.l.s4 1966171168
        %v4533 = vunpack.c.0.s8 %v4532
        %v4534 = vlaneseq
        %v4535 = vshrl.u32 %v4534, 7
        %v4536 = vsub.s32 %v4533, %v4535
        %v4537 = vrot.slane %v4529, %v4536
        %v4539 = vunpack.c.l.s4 1966171168
        %v4540 = vunpack.c.0.s8 %v4539
        %v4541 = vlaneseq
        %v4542 = vshrl.u32 %v4541, 7
        %v4543 = vsub.s32 %v4540, %v4542
        %v4544 = vrot.slane %v4530, %v4543
        %v4545 = vcombine.low %v4537, %v4544
        %v4546 = vcombine.low %v2348, %v2352
        %v4547 = vcombine.low %v2356, %v2360
        %v4548 = vcombine.low %v2364, %v2368
        %v4549 = vcombine.low %v2372, %v2376
        %v4551 = vunpack.c.l.s4 1966171168
        %v4552 = vunpack.c.0.s8 %v4551
        %v4553 = vlaneseq
        %v4554 = vshrl.u32 %v4553, 7
        %v4555 = vsub.s32 %v4552, %v4554
        %v4556 = vrot.slane %v4546, %v4555
        %v4558 = vunpack.c.l.s4 1966171168
        %v4559 = vunpack.c.0.s8 %v4558
        %v4560 = vlaneseq
        %v4561 = vshrl.u32 %v4560, 7
        %v4562 = vsub.s32 %v4559, %v4561
        %v4563 = vrot.slane %v4547, %v4562
        %v4565 = vunpack.c.l.s4 1966171168
        %v4566 = vunpack.c.0.s8 %v4565
        %v4567 = vlaneseq
        %v4568 = vshrl.u32 %v4567, 7
        %v4569 = vsub.s32 %v4566, %v4568
        %v4570 = vrot.slane %v4548, %v4569
        %v4572 = vunpack.c.l.s4 1966171168
        %v4573 = vunpack.c.0.s8 %v4572
        %v4574 = vlaneseq
        %v4575 = vshrl.u32 %v4574, 7
        %v4576 = vsub.s32 %v4573, %v4575
        %v4577 = vrot.slane %v4549, %v4576
        %v4578 = vcombine.low %v4556, %v4563
        %v4579 = vcombine.low %v4570, %v4577
        %v4581 = vunpack.c.l.s4 1966171168
        %v4582 = vunpack.c.0.s8 %v4581
        %v4583 = vlaneseq
        %v4584 = vshrl.u32 %v4583, 7
        %v4585 = vsub.s32 %v4582, %v4584
        %v4586 = vrot.slane %v4578, %v4585
        %v4588 = vunpack.c.l.s4 1966171168
        %v4589 = vunpack.c.0.s8 %v4588
        %v4590 = vlaneseq
        %v4591 = vshrl.u32 %v4590, 7
        %v4592 = vsub.s32 %v4589, %v4591
        %v4593 = vrot.slane %v4579, %v4592
        %v4594 = vcombine.low %v4586, %v4593
        %v4595 = vcombine.low %v2380, %v2384
        %v4596 = vcombine.low %v2388, %v2392
        %v4597 = vcombine.low %v2396, %v2400
        %v4598 = vcombine.low %v2404, %v2408
        %v4600 = vunpack.c.l.s4 1966171168
        %v4601 = vunpack.c.0.s8 %v4600
        %v4602 = vlaneseq
        %v4603 = vshrl.u32 %v4602, 7
        %v4604 = vsub.s32 %v4601, %v4603
        %v4605 = vrot.slane %v4595, %v4604
        %v4607 = vunpack.c.l.s4 1966171168
        %v4608 = vunpack.c.0.s8 %v4607
        %v4609 = vlaneseq
        %v4610 = vshrl.u32 %v4609, 7
        %v4611 = vsub.s32 %v4608, %v4610
        %v4612 = vrot.slane %v4596, %v4611
        %v4614 = vunpack.c.l.s4 1966171168
        %v4615 = vunpack.c.0.s8 %v4614
        %v4616 = vlaneseq
        %v4617 = vshrl.u32 %v4616, 7
        %v4618 = vsub.s32 %v4615, %v4617
        %v4619 = vrot.slane %v4597, %v4618
        %v4621 = vunpack.c.l.s4 1966171168
        %v4622 = vunpack.c.0.s8 %v4621
        %v4623 = vlaneseq
        %v4624 = vshrl.u32 %v4623, 7
        %v4625 = vsub.s32 %v4622, %v4624
        %v4626 = vrot.slane %v4598, %v4625
        %v4627 = vcombine.low %v4605, %v4612
        %v4628 = vcombine.low %v4619, %v4626
        %v4630 = vunpack.c.l.s4 1966171168
        %v4631 = vunpack.c.0.s8 %v4630
        %v4632 = vlaneseq
        %v4633 = vshrl.u32 %v4632, 7
        %v4634 = vsub.s32 %v4631, %v4633
        %v4635 = vrot.slane %v4627, %v4634
        %v4637 = vunpack.c.l.s4 1966171168
        %v4638 = vunpack.c.0.s8 %v4637
        %v4639 = vlaneseq
        %v4640 = vshrl.u32 %v4639, 7
        %v4641 = vsub.s32 %v4638, %v4640
        %v4642 = vrot.slane %v4628, %v4641
        %v4643 = vcombine.low %v4635, %v4642
        %v4644 = vcombine.low %v2412, %v2416
        %v4645 = vcombine.low %v2420, %v2424
        %v4646 = vcombine.low %v2428, %v2432
        %v4647 = vcombine.low %v2436, %v2440
        %v4649 = vunpack.c.l.s4 1966171168
        %v4650 = vunpack.c.0.s8 %v4649
        %v4651 = vlaneseq
        %v4652 = vshrl.u32 %v4651, 7
        %v4653 = vsub.s32 %v4650, %v4652
        %v4654 = vrot.slane %v4644, %v4653
        %v4656 = vunpack.c.l.s4 1966171168
        %v4657 = vunpack.c.0.s8 %v4656
        %v4658 = vlaneseq
        %v4659 = vshrl.u32 %v4658, 7
        %v4660 = vsub.s32 %v4657, %v4659
        %v4661 = vrot.slane %v4645, %v4660
        %v4663 = vunpack.c.l.s4 1966171168
        %v4664 = vunpack.c.0.s8 %v4663
        %v4665 = vlaneseq
        %v4666 = vshrl.u32 %v4665, 7
        %v4667 = vsub.s32 %v4664, %v4666
        %v4668 = vrot.slane %v4646, %v4667
        %v4670 = vunpack.c.l.s4 1966171168
        %v4671 = vunpack.c.0.s8 %v4670
        %v4672 = vlaneseq
        %v4673 = vshrl.u32 %v4672, 7
        %v4674 = vsub.s32 %v4671, %v4673
        %v4675 = vrot.slane %v4647, %v4674
        %v4676 = vcombine.low %v4654, %v4661
        %v4677 = vcombine.low %v4668, %v4675
        %v4679 = vunpack.c.l.s4 1966171168
        %v4680 = vunpack.c.0.s8 %v4679
        %v4681 = vlaneseq
        %v4682 = vshrl.u32 %v4681, 7
        %v4683 = vsub.s32 %v4680, %v4682
        %v4684 = vrot.slane %v4676, %v4683
        %v4686 = vunpack.c.l.s4 1966171168
        %v4687 = vunpack.c.0.s8 %v4686
        %v4688 = vlaneseq
        %v4689 = vshrl.u32 %v4688, 7
        %v4690 = vsub.s32 %v4687, %v4689
        %v4691 = vrot.slane %v4677, %v4690
        %v4692 = vcombine.low %v4684, %v4691
        %v4693 = vcombine.low %v2444, %v2448
        %v4694 = vcombine.low %v2452, %v2456
        %v4695 = vcombine.low %v2460, %v2464
        %v4696 = vcombine.low %v2468, %v2472
        %v4698 = vunpack.c.l.s4 1966171168
        %v4699 = vunpack.c.0.s8 %v4698
        %v4700 = vlaneseq
        %v4701 = vshrl.u32 %v4700, 7
        %v4702 = vsub.s32 %v4699, %v4701
        %v4703 = vrot.slane %v4693, %v4702
        %v4705 = vunpack.c.l.s4 1966171168
        %v4706 = vunpack.c.0.s8 %v4705
        %v4707 = vlaneseq
        %v4708 = vshrl.u32 %v4707, 7
        %v4709 = vsub.s32 %v4706, %v4708
        %v4710 = vrot.slane %v4694, %v4709
        %v4712 = vunpack.c.l.s4 1966171168
        %v4713 = vunpack.c.0.s8 %v4712
        %v4714 = vlaneseq
        %v4715 = vshrl.u32 %v4714, 7
        %v4716 = vsub.s32 %v4713, %v4715
        %v4717 = vrot.slane %v4695, %v4716
        %v4719 = vunpack.c.l.s4 1966171168
        %v4720 = vunpack.c.0.s8 %v4719
        %v4721 = vlaneseq
        %v4722 = vshrl.u32 %v4721, 7
        %v4723 = vsub.s32 %v4720, %v4722
        %v4724 = vrot.slane %v4696, %v4723
        %v4725 = vcombine.low %v4703, %v4710
        %v4726 = vcombine.low %v4717, %v4724
        %v4728 = vunpack.c.l.s4 1966171168
        %v4729 = vunpack.c.0.s8 %v4728
        %v4730 = vlaneseq
        %v4731 = vshrl.u32 %v4730, 7
        %v4732 = vsub.s32 %v4729, %v4731
        %v4733 = vrot.slane %v4725, %v4732
        %v4735 = vunpack.c.l.s4 1966171168
        %v4736 = vunpack.c.0.s8 %v4735
        %v4737 = vlaneseq
        %v4738 = vshrl.u32 %v4737, 7
        %v4739 = vsub.s32 %v4736, %v4738
        %v4740 = vrot.slane %v4726, %v4739
        %v4741 = vcombine.low %v4733, %v4740
        %v4742 = vcombine.low %v2476, %v2480
        %v4743 = vcombine.low %v2484, %v2488
        %v4744 = vcombine.low %v2492, %v2496
        %v4745 = vcombine.low %v2500, %v2504
        %v4747 = vunpack.c.l.s4 1966171168
        %v4748 = vunpack.c.0.s8 %v4747
        %v4749 = vlaneseq
        %v4750 = vshrl.u32 %v4749, 7
        %v4751 = vsub.s32 %v4748, %v4750
        %v4752 = vrot.slane %v4742, %v4751
        %v4754 = vunpack.c.l.s4 1966171168
        %v4755 = vunpack.c.0.s8 %v4754
        %v4756 = vlaneseq
        %v4757 = vshrl.u32 %v4756, 7
        %v4758 = vsub.s32 %v4755, %v4757
        %v4759 = vrot.slane %v4743, %v4758
        %v4761 = vunpack.c.l.s4 1966171168
        %v4762 = vunpack.c.0.s8 %v4761
        %v4763 = vlaneseq
        %v4764 = vshrl.u32 %v4763, 7
        %v4765 = vsub.s32 %v4762, %v4764
        %v4766 = vrot.slane %v4744, %v4765
        %v4768 = vunpack.c.l.s4 1966171168
        %v4769 = vunpack.c.0.s8 %v4768
        %v4770 = vlaneseq
        %v4771 = vshrl.u32 %v4770, 7
        %v4772 = vsub.s32 %v4769, %v4771
        %v4773 = vrot.slane %v4745, %v4772
        %v4774 = vcombine.low %v4752, %v4759
        %v4775 = vcombine.low %v4766, %v4773
        %v4777 = vunpack.c.l.s4 1966171168
        %v4778 = vunpack.c.0.s8 %v4777
        %v4779 = vlaneseq
        %v4780 = vshrl.u32 %v4779, 7
        %v4781 = vsub.s32 %v4778, %v4780
        %v4782 = vrot.slane %v4774, %v4781
        %v4784 = vunpack.c.l.s4 1966171168
        %v4785 = vunpack.c.0.s8 %v4784
        %v4786 = vlaneseq
        %v4787 = vshrl.u32 %v4786, 7
        %v4788 = vsub.s32 %v4785, %v4787
        %v4789 = vrot.slane %v4775, %v4788
        %v4790 = vcombine.low %v4782, %v4789
        %v4791 = vcombine.low %v2508, %v2512
        %v4792 = vcombine.low %v2516, %v2520
        %v4793 = vcombine.low %v2524, %v2528
        %v4794 = vcombine.low %v2532, %v2536
        %v4796 = vunpack.c.l.s4 1966171168
        %v4797 = vunpack.c.0.s8 %v4796
        %v4798 = vlaneseq
        %v4799 = vshrl.u32 %v4798, 7
        %v4800 = vsub.s32 %v4797, %v4799
        %v4801 = vrot.slane %v4791, %v4800
        %v4803 = vunpack.c.l.s4 1966171168
        %v4804 = vunpack.c.0.s8 %v4803
        %v4805 = vlaneseq
        %v4806 = vshrl.u32 %v4805, 7
        %v4807 = vsub.s32 %v4804, %v4806
        %v4808 = vrot.slane %v4792, %v4807
        %v4810 = vunpack.c.l.s4 1966171168
        %v4811 = vunpack.c.0.s8 %v4810
        %v4812 = vlaneseq
        %v4813 = vshrl.u32 %v4812, 7
        %v4814 = vsub.s32 %v4811, %v4813
        %v4815 = vrot.slane %v4793, %v4814
        %v4817 = vunpack.c.l.s4 1966171168
        %v4818 = vunpack.c.0.s8 %v4817
        %v4819 = vlaneseq
        %v4820 = vshrl.u32 %v4819, 7
        %v4821 = vsub.s32 %v4818, %v4820
        %v4822 = vrot.slane %v4794, %v4821
        %v4823 = vcombine.low %v4801, %v4808
        %v4824 = vcombine.low %v4815, %v4822
        %v4826 = vunpack.c.l.s4 1966171168
        %v4827 = vunpack.c.0.s8 %v4826
        %v4828 = vlaneseq
        %v4829 = vshrl.u32 %v4828, 7
        %v4830 = vsub.s32 %v4827, %v4829
        %v4831 = vrot.slane %v4823, %v4830
        %v4833 = vunpack.c.l.s4 1966171168
        %v4834 = vunpack.c.0.s8 %v4833
        %v4835 = vlaneseq
        %v4836 = vshrl.u32 %v4835, 7
        %v4837 = vsub.s32 %v4834, %v4836
        %v4838 = vrot.slane %v4824, %v4837
        %v4839 = vcombine.low %v4831, %v4838
        %v4840 = vcombine.low %v2540, %v2544
        %v4841 = vcombine.low %v2548, %v2552
        %v4842 = vcombine.low %v2556, %v2560
        %v4843 = vcombine.low %v2564, %v2568
        %v4845 = vunpack.c.l.s4 1966171168
        %v4846 = vunpack.c.0.s8 %v4845
        %v4847 = vlaneseq
        %v4848 = vshrl.u32 %v4847, 7
        %v4849 = vsub.s32 %v4846, %v4848
        %v4850 = vrot.slane %v4840, %v4849
        %v4852 = vunpack.c.l.s4 1966171168
        %v4853 = vunpack.c.0.s8 %v4852
        %v4854 = vlaneseq
        %v4855 = vshrl.u32 %v4854, 7
        %v4856 = vsub.s32 %v4853, %v4855
        %v4857 = vrot.slane %v4841, %v4856
        %v4859 = vunpack.c.l.s4 1966171168
        %v4860 = vunpack.c.0.s8 %v4859
        %v4861 = vlaneseq
        %v4862 = vshrl.u32 %v4861, 7
        %v4863 = vsub.s32 %v4860, %v4862
        %v4864 = vrot.slane %v4842, %v4863
        %v4866 = vunpack.c.l.s4 1966171168
        %v4867 = vunpack.c.0.s8 %v4866
        %v4868 = vlaneseq
        %v4869 = vshrl.u32 %v4868, 7
        %v4870 = vsub.s32 %v4867, %v4869
        %v4871 = vrot.slane %v4843, %v4870
        %v4872 = vcombine.low %v4850, %v4857
        %v4873 = vcombine.low %v4864, %v4871
        %v4875 = vunpack.c.l.s4 1966171168
        %v4876 = vunpack.c.0.s8 %v4875
        %v4877 = vlaneseq
        %v4878 = vshrl.u32 %v4877, 7
        %v4879 = vsub.s32 %v4876, %v4878
        %v4880 = vrot.slane %v4872, %v4879
        %v4882 = vunpack.c.l.s4 1966171168
        %v4883 = vunpack.c.0.s8 %v4882
        %v4884 = vlaneseq
        %v4885 = vshrl.u32 %v4884, 7
        %v4886 = vsub.s32 %v4883, %v4885
        %v4887 = vrot.slane %v4873, %v4886
        %v4888 = vcombine.low %v4880, %v4887
        %v4889 = vcombine.low %v2572, %v2576
        %v4890 = vcombine.low %v2580, %v2584
        %v4891 = vcombine.low %v2588, %v2592
        %v4892 = vcombine.low %v2596, %v2600
        %v4894 = vunpack.c.l.s4 1966171168
        %v4895 = vunpack.c.0.s8 %v4894
        %v4896 = vlaneseq
        %v4897 = vshrl.u32 %v4896, 7
        %v4898 = vsub.s32 %v4895, %v4897
        %v4899 = vrot.slane %v4889, %v4898
        %v4901 = vunpack.c.l.s4 1966171168
        %v4902 = vunpack.c.0.s8 %v4901
        %v4903 = vlaneseq
        %v4904 = vshrl.u32 %v4903, 7
        %v4905 = vsub.s32 %v4902, %v4904
        %v4906 = vrot.slane %v4890, %v4905
        %v4908 = vunpack.c.l.s4 1966171168
        %v4909 = vunpack.c.0.s8 %v4908
        %v4910 = vlaneseq
        %v4911 = vshrl.u32 %v4910, 7
        %v4912 = vsub.s32 %v4909, %v4911
        %v4913 = vrot.slane %v4891, %v4912
        %v4915 = vunpack.c.l.s4 1966171168
        %v4916 = vunpack.c.0.s8 %v4915
        %v4917 = vlaneseq
        %v4918 = vshrl.u32 %v4917, 7
        %v4919 = vsub.s32 %v4916, %v4918
        %v4920 = vrot.slane %v4892, %v4919
        %v4921 = vcombine.low %v4899, %v4906
        %v4922 = vcombine.low %v4913, %v4920
        %v4924 = vunpack.c.l.s4 1966171168
        %v4925 = vunpack.c.0.s8 %v4924
        %v4926 = vlaneseq
        %v4927 = vshrl.u32 %v4926, 7
        %v4928 = vsub.s32 %v4925, %v4927
        %v4929 = vrot.slane %v4921, %v4928
        %v4931 = vunpack.c.l.s4 1966171168
        %v4932 = vunpack.c.0.s8 %v4931
        %v4933 = vlaneseq
        %v4934 = vshrl.u32 %v4933, 7
        %v4935 = vsub.s32 %v4932, %v4934
        %v4936 = vrot.slane %v4922, %v4935
        %v4937 = vcombine.low %v4929, %v4936
        %v4938 = vcombine.low %v2604, %v2608
        %v4939 = vcombine.low %v2612, %v2616
        %v4940 = vcombine.low %v2620, %v2624
        %v4941 = vcombine.low %v2628, %v2632
        %v4943 = vunpack.c.l.s4 1966171168
        %v4944 = vunpack.c.0.s8 %v4943
        %v4945 = vlaneseq
        %v4946 = vshrl.u32 %v4945, 7
        %v4947 = vsub.s32 %v4944, %v4946
        %v4948 = vrot.slane %v4938, %v4947
        %v4950 = vunpack.c.l.s4 1966171168
        %v4951 = vunpack.c.0.s8 %v4950
        %v4952 = vlaneseq
        %v4953 = vshrl.u32 %v4952, 7
        %v4954 = vsub.s32 %v4951, %v4953
        %v4955 = vrot.slane %v4939, %v4954
        %v4957 = vunpack.c.l.s4 1966171168
        %v4958 = vunpack.c.0.s8 %v4957
        %v4959 = vlaneseq
        %v4960 = vshrl.u32 %v4959, 7
        %v4961 = vsub.s32 %v4958, %v4960
        %v4962 = vrot.slane %v4940, %v4961
        %v4964 = vunpack.c.l.s4 1966171168
        %v4965 = vunpack.c.0.s8 %v4964
        %v4966 = vlaneseq
        %v4967 = vshrl.u32 %v4966, 7
        %v4968 = vsub.s32 %v4965, %v4967
        %v4969 = vrot.slane %v4941, %v4968
        %v4970 = vcombine.low %v4948, %v4955
        %v4971 = vcombine.low %v4962, %v4969
        %v4973 = vunpack.c.l.s4 1966171168
        %v4974 = vunpack.c.0.s8 %v4973
        %v4975 = vlaneseq
        %v4976 = vshrl.u32 %v4975, 7
        %v4977 = vsub.s32 %v4974, %v4976
        %v4978 = vrot.slane %v4970, %v4977
        %v4980 = vunpack.c.l.s4 1966171168
        %v4981 = vunpack.c.0.s8 %v4980
        %v4982 = vlaneseq
        %v4983 = vshrl.u32 %v4982, 7
        %v4984 = vsub.s32 %v4981, %v4983
        %v4985 = vrot.slane %v4971, %v4984
        %v4986 = vcombine.low %v4978, %v4985
        %v4987 = vcombine.low %v2636, %v2640
        %v4988 = vcombine.low %v2644, %v2648
        %v4989 = vcombine.low %v2652, %v2656
        %v4990 = vcombine.low %v2660, %v2664
        %v4992 = vunpack.c.l.s4 1966171168
        %v4993 = vunpack.c.0.s8 %v4992
        %v4994 = vlaneseq
        %v4995 = vshrl.u32 %v4994, 7
        %v4996 = vsub.s32 %v4993, %v4995
        %v4997 = vrot.slane %v4987, %v4996
        %v4999 = vunpack.c.l.s4 1966171168
        %v5000 = vunpack.c.0.s8 %v4999
        %v5001 = vlaneseq
        %v5002 = vshrl.u32 %v5001, 7
        %v5003 = vsub.s32 %v5000, %v5002
        %v5004 = vrot.slane %v4988, %v5003
        %v5006 = vunpack.c.l.s4 1966171168
        %v5007 = vunpack.c.0.s8 %v5006
        %v5008 = vlaneseq
        %v5009 = vshrl.u32 %v5008, 7
        %v5010 = vsub.s32 %v5007, %v5009
        %v5011 = vrot.slane %v4989, %v5010
        %v5013 = vunpack.c.l.s4 1966171168
        %v5014 = vunpack.c.0.s8 %v5013
        %v5015 = vlaneseq
        %v5016 = vshrl.u32 %v5015, 7
        %v5017 = vsub.s32 %v5014, %v5016
        %v5018 = vrot.slane %v4990, %v5017
        %v5019 = vcombine.low %v4997, %v5004
        %v5020 = vcombine.low %v5011, %v5018
        %v5022 = vunpack.c.l.s4 1966171168
        %v5023 = vunpack.c.0.s8 %v5022
        %v5024 = vlaneseq
        %v5025 = vshrl.u32 %v5024, 7
        %v5026 = vsub.s32 %v5023, %v5025
        %v5027 = vrot.slane %v5019, %v5026
        %v5029 = vunpack.c.l.s4 1966171168
        %v5030 = vunpack.c.0.s8 %v5029
        %v5031 = vlaneseq
        %v5032 = vshrl.u32 %v5031, 7
        %v5033 = vsub.s32 %v5030, %v5032
        %v5034 = vrot.slane %v5020, %v5033
        %v5035 = vcombine.low %v5027, %v5034
        %v5036 = vcombine.low %v2668, %v2672
        %v5037 = vcombine.low %v2676, %v2680
        %v5038 = vcombine.low %v2684, %v2688
        %v5039 = vcombine.low %v2692, %v2696
        %v5041 = vunpack.c.l.s4 1966171168
        %v5042 = vunpack.c.0.s8 %v5041
        %v5043 = vlaneseq
        %v5044 = vshrl.u32 %v5043, 7
        %v5045 = vsub.s32 %v5042, %v5044
        %v5046 = vrot.slane %v5036, %v5045
        %v5048 = vunpack.c.l.s4 1966171168
        %v5049 = vunpack.c.0.s8 %v5048
        %v5050 = vlaneseq
        %v5051 = vshrl.u32 %v5050, 7
        %v5052 = vsub.s32 %v5049, %v5051
        %v5053 = vrot.slane %v5037, %v5052
        %v5055 = vunpack.c.l.s4 1966171168
        %v5056 = vunpack.c.0.s8 %v5055
        %v5057 = vlaneseq
        %v5058 = vshrl.u32 %v5057, 7
        %v5059 = vsub.s32 %v5056, %v5058
        %v5060 = vrot.slane %v5038, %v5059
        %v5062 = vunpack.c.l.s4 1966171168
        %v5063 = vunpack.c.0.s8 %v5062
        %v5064 = vlaneseq
        %v5065 = vshrl.u32 %v5064, 7
        %v5066 = vsub.s32 %v5063, %v5065
        %v5067 = vrot.slane %v5039, %v5066
        %v5068 = vcombine.low %v5046, %v5053
        %v5069 = vcombine.low %v5060, %v5067
        %v5071 = vunpack.c.l.s4 1966171168
        %v5072 = vunpack.c.0.s8 %v5071
        %v5073 = vlaneseq
        %v5074 = vshrl.u32 %v5073, 7
        %v5075 = vsub.s32 %v5072, %v5074
        %v5076 = vrot.slane %v5068, %v5075
        %v5078 = vunpack.c.l.s4 1966171168
        %v5079 = vunpack.c.0.s8 %v5078
        %v5080 = vlaneseq
        %v5081 = vshrl.u32 %v5080, 7
        %v5082 = vsub.s32 %v5079, %v5081
        %v5083 = vrot.slane %v5069, %v5082
        %v5084 = vcombine.low %v5076, %v5083
        %v5085 = vcombine.low %v2700, %v2704
        %v5086 = vcombine.low %v2708, %v2712
        %v5087 = vcombine.low %v2716, %v2720
        %v5088 = vcombine.low %v2724, %v2728
        %v5090 = vunpack.c.l.s4 1966171168
        %v5091 = vunpack.c.0.s8 %v5090
        %v5092 = vlaneseq
        %v5093 = vshrl.u32 %v5092, 7
        %v5094 = vsub.s32 %v5091, %v5093
        %v5095 = vrot.slane %v5085, %v5094
        %v5097 = vunpack.c.l.s4 1966171168
        %v5098 = vunpack.c.0.s8 %v5097
        %v5099 = vlaneseq
        %v5100 = vshrl.u32 %v5099, 7
        %v5101 = vsub.s32 %v5098, %v5100
        %v5102 = vrot.slane %v5086, %v5101
        %v5104 = vunpack.c.l.s4 1966171168
        %v5105 = vunpack.c.0.s8 %v5104
        %v5106 = vlaneseq
        %v5107 = vshrl.u32 %v5106, 7
        %v5108 = vsub.s32 %v5105, %v5107
        %v5109 = vrot.slane %v5087, %v5108
        %v5111 = vunpack.c.l.s4 1966171168
        %v5112 = vunpack.c.0.s8 %v5111
        %v5113 = vlaneseq
        %v5114 = vshrl.u32 %v5113, 7
        %v5115 = vsub.s32 %v5112, %v5114
        %v5116 = vrot.slane %v5088, %v5115
        %v5117 = vcombine.low %v5095, %v5102
        %v5118 = vcombine.low %v5109, %v5116
        %v5120 = vunpack.c.l.s4 1966171168
        %v5121 = vunpack.c.0.s8 %v5120
        %v5122 = vlaneseq
        %v5123 = vshrl.u32 %v5122, 7
        %v5124 = vsub.s32 %v5121, %v5123
        %v5125 = vrot.slane %v5117, %v5124
        %v5127 = vunpack.c.l.s4 1966171168
        %v5128 = vunpack.c.0.s8 %v5127
        %v5129 = vlaneseq
        %v5130 = vshrl.u32 %v5129, 7
        %v5131 = vsub.s32 %v5128, %v5130
        %v5132 = vrot.slane %v5118, %v5131
        %v5133 = vcombine.low %v5125, %v5132
        %v5134 = vcombine.low %v2732, %v2736
        %v5135 = vcombine.low %v2740, %v2744
        %v5136 = vcombine.low %v2748, %v2752
        %v5137 = vcombine.low %v2756, %v2760
        %v5139 = vunpack.c.l.s4 1966171168
        %v5140 = vunpack.c.0.s8 %v5139
        %v5141 = vlaneseq
        %v5142 = vshrl.u32 %v5141, 7
        %v5143 = vsub.s32 %v5140, %v5142
        %v5144 = vrot.slane %v5134, %v5143
        %v5146 = vunpack.c.l.s4 1966171168
        %v5147 = vunpack.c.0.s8 %v5146
        %v5148 = vlaneseq
        %v5149 = vshrl.u32 %v5148, 7
        %v5150 = vsub.s32 %v5147, %v5149
        %v5151 = vrot.slane %v5135, %v5150
        %v5153 = vunpack.c.l.s4 1966171168
        %v5154 = vunpack.c.0.s8 %v5153
        %v5155 = vlaneseq
        %v5156 = vshrl.u32 %v5155, 7
        %v5157 = vsub.s32 %v5154, %v5156
        %v5158 = vrot.slane %v5136, %v5157
        %v5160 = vunpack.c.l.s4 1966171168
        %v5161 = vunpack.c.0.s8 %v5160
        %v5162 = vlaneseq
        %v5163 = vshrl.u32 %v5162, 7
        %v5164 = vsub.s32 %v5161, %v5163
        %v5165 = vrot.slane %v5137, %v5164
        %v5166 = vcombine.low %v5144, %v5151
        %v5167 = vcombine.low %v5158, %v5165
        %v5169 = vunpack.c.l.s4 1966171168
        %v5170 = vunpack.c.0.s8 %v5169
        %v5171 = vlaneseq
        %v5172 = vshrl.u32 %v5171, 7
        %v5173 = vsub.s32 %v5170, %v5172
        %v5174 = vrot.slane %v5166, %v5173
        %v5176 = vunpack.c.l.s4 1966171168
        %v5177 = vunpack.c.0.s8 %v5176
        %v5178 = vlaneseq
        %v5179 = vshrl.u32 %v5178, 7
        %v5180 = vsub.s32 %v5177, %v5179
        %v5181 = vrot.slane %v5167, %v5180
        %v5182 = vcombine.low %v5174, %v5181
        %v5183 = vcombine.low %v2764, %v2768
        %v5184 = vcombine.low %v2772, %v2776
        %v5185 = vcombine.low %v2780, %v2784
        %v5186 = vcombine.low %v2788, %v2792
        %v5188 = vunpack.c.l.s4 1966171168
        %v5189 = vunpack.c.0.s8 %v5188
        %v5190 = vlaneseq
        %v5191 = vshrl.u32 %v5190, 7
        %v5192 = vsub.s32 %v5189, %v5191
        %v5193 = vrot.slane %v5183, %v5192
        %v5195 = vunpack.c.l.s4 1966171168
        %v5196 = vunpack.c.0.s8 %v5195
        %v5197 = vlaneseq
        %v5198 = vshrl.u32 %v5197, 7
        %v5199 = vsub.s32 %v5196, %v5198
        %v5200 = vrot.slane %v5184, %v5199
        %v5202 = vunpack.c.l.s4 1966171168
        %v5203 = vunpack.c.0.s8 %v5202
        %v5204 = vlaneseq
        %v5205 = vshrl.u32 %v5204, 7
        %v5206 = vsub.s32 %v5203, %v5205
        %v5207 = vrot.slane %v5185, %v5206
        %v5209 = vunpack.c.l.s4 1966171168
        %v5210 = vunpack.c.0.s8 %v5209
        %v5211 = vlaneseq
        %v5212 = vshrl.u32 %v5211, 7
        %v5213 = vsub.s32 %v5210, %v5212
        %v5214 = vrot.slane %v5186, %v5213
        %v5215 = vcombine.low %v5193, %v5200
        %v5216 = vcombine.low %v5207, %v5214
        %v5218 = vunpack.c.l.s4 1966171168
        %v5219 = vunpack.c.0.s8 %v5218
        %v5220 = vlaneseq
        %v5221 = vshrl.u32 %v5220, 7
        %v5222 = vsub.s32 %v5219, %v5221
        %v5223 = vrot.slane %v5215, %v5222
        %v5225 = vunpack.c.l.s4 1966171168
        %v5226 = vunpack.c.0.s8 %v5225
        %v5227 = vlaneseq
        %v5228 = vshrl.u32 %v5227, 7
        %v5229 = vsub.s32 %v5226, %v5228
        %v5230 = vrot.slane %v5216, %v5229
        %v5231 = vcombine.low %v5223, %v5230
        %v5232 = vcombine.low %v2796, %v2800
        %v5233 = vcombine.low %v2804, %v2808
        %v5234 = vcombine.low %v2812, %v2816
        %v5235 = vcombine.low %v2820, %v2824
        %v5237 = vunpack.c.l.s4 1966171168
        %v5238 = vunpack.c.0.s8 %v5237
        %v5239 = vlaneseq
        %v5240 = vshrl.u32 %v5239, 7
        %v5241 = vsub.s32 %v5238, %v5240
        %v5242 = vrot.slane %v5232, %v5241
        %v5244 = vunpack.c.l.s4 1966171168
        %v5245 = vunpack.c.0.s8 %v5244
        %v5246 = vlaneseq
        %v5247 = vshrl.u32 %v5246, 7
        %v5248 = vsub.s32 %v5245, %v5247
        %v5249 = vrot.slane %v5233, %v5248
        %v5251 = vunpack.c.l.s4 1966171168
        %v5252 = vunpack.c.0.s8 %v5251
        %v5253 = vlaneseq
        %v5254 = vshrl.u32 %v5253, 7
        %v5255 = vsub.s32 %v5252, %v5254
        %v5256 = vrot.slane %v5234, %v5255
        %v5258 = vunpack.c.l.s4 1966171168
        %v5259 = vunpack.c.0.s8 %v5258
        %v5260 = vlaneseq
        %v5261 = vshrl.u32 %v5260, 7
        %v5262 = vsub.s32 %v5259, %v5261
        %v5263 = vrot.slane %v5235, %v5262
        %v5264 = vcombine.low %v5242, %v5249
        %v5265 = vcombine.low %v5256, %v5263
        %v5267 = vunpack.c.l.s4 1966171168
        %v5268 = vunpack.c.0.s8 %v5267
        %v5269 = vlaneseq
        %v5270 = vshrl.u32 %v5269, 7
        %v5271 = vsub.s32 %v5268, %v5270
        %v5272 = vrot.slane %v5264, %v5271
        %v5274 = vunpack.c.l.s4 1966171168
        %v5275 = vunpack.c.0.s8 %v5274
        %v5276 = vlaneseq
        %v5277 = vshrl.u32 %v5276, 7
        %v5278 = vsub.s32 %v5275, %v5277
        %v5279 = vrot.slane %v5265, %v5278
        %v5280 = vcombine.low %v5272, %v5279
        %v5281 = vcombine.low %v2828, %v2832
        %v5282 = vcombine.low %v2836, %v2840
        %v5283 = vcombine.low %v2844, %v2848
        %v5284 = vcombine.low %v2852, %v2856
        %v5286 = vunpack.c.l.s4 1966171168
        %v5287 = vunpack.c.0.s8 %v5286
        %v5288 = vlaneseq
        %v5289 = vshrl.u32 %v5288, 7
        %v5290 = vsub.s32 %v5287, %v5289
        %v5291 = vrot.slane %v5281, %v5290
        %v5293 = vunpack.c.l.s4 1966171168
        %v5294 = vunpack.c.0.s8 %v5293
        %v5295 = vlaneseq
        %v5296 = vshrl.u32 %v5295, 7
        %v5297 = vsub.s32 %v5294, %v5296
        %v5298 = vrot.slane %v5282, %v5297
        %v5300 = vunpack.c.l.s4 1966171168
        %v5301 = vunpack.c.0.s8 %v5300
        %v5302 = vlaneseq
        %v5303 = vshrl.u32 %v5302, 7
        %v5304 = vsub.s32 %v5301, %v5303
        %v5305 = vrot.slane %v5283, %v5304
        %v5307 = vunpack.c.l.s4 1966171168
        %v5308 = vunpack.c.0.s8 %v5307
        %v5309 = vlaneseq
        %v5310 = vshrl.u32 %v5309, 7
        %v5311 = vsub.s32 %v5308, %v5310
        %v5312 = vrot.slane %v5284, %v5311
        %v5313 = vcombine.low %v5291, %v5298
        %v5314 = vcombine.low %v5305, %v5312
        %v5316 = vunpack.c.l.s4 1966171168
        %v5317 = vunpack.c.0.s8 %v5316
        %v5318 = vlaneseq
        %v5319 = vshrl.u32 %v5318, 7
        %v5320 = vsub.s32 %v5317, %v5319
        %v5321 = vrot.slane %v5313, %v5320
        %v5323 = vunpack.c.l.s4 1966171168
        %v5324 = vunpack.c.0.s8 %v5323
        %v5325 = vlaneseq
        %v5326 = vshrl.u32 %v5325, 7
        %v5327 = vsub.s32 %v5324, %v5326
        %v5328 = vrot.slane %v5314, %v5327
        %v5329 = vcombine.low %v5321, %v5328
        %v5330 = vcombine.low %v2860, %v2864
        %v5331 = vcombine.low %v2868, %v2872
        %v5332 = vcombine.low %v2876, %v2880
        %v5333 = vcombine.low %v2884, %v2888
        %v5335 = vunpack.c.l.s4 1966171168
        %v5336 = vunpack.c.0.s8 %v5335
        %v5337 = vlaneseq
        %v5338 = vshrl.u32 %v5337, 7
        %v5339 = vsub.s32 %v5336, %v5338
        %v5340 = vrot.slane %v5330, %v5339
        %v5342 = vunpack.c.l.s4 1966171168
        %v5343 = vunpack.c.0.s8 %v5342
        %v5344 = vlaneseq
        %v5345 = vshrl.u32 %v5344, 7
        %v5346 = vsub.s32 %v5343, %v5345
        %v5347 = vrot.slane %v5331, %v5346
        %v5349 = vunpack.c.l.s4 1966171168
        %v5350 = vunpack.c.0.s8 %v5349
        %v5351 = vlaneseq
        %v5352 = vshrl.u32 %v5351, 7
        %v5353 = vsub.s32 %v5350, %v5352
        %v5354 = vrot.slane %v5332, %v5353
        %v5356 = vunpack.c.l.s4 1966171168
        %v5357 = vunpack.c.0.s8 %v5356
        %v5358 = vlaneseq
        %v5359 = vshrl.u32 %v5358, 7
        %v5360 = vsub.s32 %v5357, %v5359
        %v5361 = vrot.slane %v5333, %v5360
        %v5362 = vcombine.low %v5340, %v5347
        %v5363 = vcombine.low %v5354, %v5361
        %v5365 = vunpack.c.l.s4 1966171168
        %v5366 = vunpack.c.0.s8 %v5365
        %v5367 = vlaneseq
        %v5368 = vshrl.u32 %v5367, 7
        %v5369 = vsub.s32 %v5366, %v5368
        %v5370 = vrot.slane %v5362, %v5369
        %v5372 = vunpack.c.l.s4 1966171168
        %v5373 = vunpack.c.0.s8 %v5372
        %v5374 = vlaneseq
        %v5375 = vshrl.u32 %v5374, 7
        %v5376 = vsub.s32 %v5373, %v5375
        %v5377 = vrot.slane %v5363, %v5376
        %v5378 = vcombine.low %v5370, %v5377
        %v5379 = vcombine.low %v2892, %v2896
        %v5380 = vcombine.low %v2900, %v2904
        %v5381 = vcombine.low %v2908, %v2912
        %v5382 = vcombine.low %v2916, %v2920
        %v5384 = vunpack.c.l.s4 1966171168
        %v5385 = vunpack.c.0.s8 %v5384
        %v5386 = vlaneseq
        %v5387 = vshrl.u32 %v5386, 7
        %v5388 = vsub.s32 %v5385, %v5387
        %v5389 = vrot.slane %v5379, %v5388
        %v5391 = vunpack.c.l.s4 1966171168
        %v5392 = vunpack.c.0.s8 %v5391
        %v5393 = vlaneseq
        %v5394 = vshrl.u32 %v5393, 7
        %v5395 = vsub.s32 %v5392, %v5394
        %v5396 = vrot.slane %v5380, %v5395
        %v5398 = vunpack.c.l.s4 1966171168
        %v5399 = vunpack.c.0.s8 %v5398
        %v5400 = vlaneseq
        %v5401 = vshrl.u32 %v5400, 7
        %v5402 = vsub.s32 %v5399, %v5401
        %v5403 = vrot.slane %v5381, %v5402
        %v5405 = vunpack.c.l.s4 1966171168
        %v5406 = vunpack.c.0.s8 %v5405
        %v5407 = vlaneseq
        %v5408 = vshrl.u32 %v5407, 7
        %v5409 = vsub.s32 %v5406, %v5408
        %v5410 = vrot.slane %v5382, %v5409
        %v5411 = vcombine.low %v5389, %v5396
        %v5412 = vcombine.low %v5403, %v5410
        %v5414 = vunpack.c.l.s4 1966171168
        %v5415 = vunpack.c.0.s8 %v5414
        %v5416 = vlaneseq
        %v5417 = vshrl.u32 %v5416, 7
        %v5418 = vsub.s32 %v5415, %v5417
        %v5419 = vrot.slane %v5411, %v5418
        %v5421 = vunpack.c.l.s4 1966171168
        %v5422 = vunpack.c.0.s8 %v5421
        %v5423 = vlaneseq
        %v5424 = vshrl.u32 %v5423, 7
        %v5425 = vsub.s32 %v5422, %v5424
        %v5426 = vrot.slane %v5412, %v5425
        %v5427 = vcombine.low %v5419, %v5426
        %v5428 = vcombine.low %v2924, %v2928
        %v5429 = vcombine.low %v2932, %v2936
        %v5430 = vcombine.low %v2940, %v2944
        %v5431 = vcombine.low %v2948, %v2952
        %v5433 = vunpack.c.l.s4 1966171168
        %v5434 = vunpack.c.0.s8 %v5433
        %v5435 = vlaneseq
        %v5436 = vshrl.u32 %v5435, 7
        %v5437 = vsub.s32 %v5434, %v5436
        %v5438 = vrot.slane %v5428, %v5437
        %v5440 = vunpack.c.l.s4 1966171168
        %v5441 = vunpack.c.0.s8 %v5440
        %v5442 = vlaneseq
        %v5443 = vshrl.u32 %v5442, 7
        %v5444 = vsub.s32 %v5441, %v5443
        %v5445 = vrot.slane %v5429, %v5444
        %v5447 = vunpack.c.l.s4 1966171168
        %v5448 = vunpack.c.0.s8 %v5447
        %v5449 = vlaneseq
        %v5450 = vshrl.u32 %v5449, 7
        %v5451 = vsub.s32 %v5448, %v5450
        %v5452 = vrot.slane %v5430, %v5451
        %v5454 = vunpack.c.l.s4 1966171168
        %v5455 = vunpack.c.0.s8 %v5454
        %v5456 = vlaneseq
        %v5457 = vshrl.u32 %v5456, 7
        %v5458 = vsub.s32 %v5455, %v5457
        %v5459 = vrot.slane %v5431, %v5458
        %v5460 = vcombine.low %v5438, %v5445
        %v5461 = vcombine.low %v5452, %v5459
        %v5463 = vunpack.c.l.s4 1966171168
        %v5464 = vunpack.c.0.s8 %v5463
        %v5465 = vlaneseq
        %v5466 = vshrl.u32 %v5465, 7
        %v5467 = vsub.s32 %v5464, %v5466
        %v5468 = vrot.slane %v5460, %v5467
        %v5470 = vunpack.c.l.s4 1966171168
        %v5471 = vunpack.c.0.s8 %v5470
        %v5472 = vlaneseq
        %v5473 = vshrl.u32 %v5472, 7
        %v5474 = vsub.s32 %v5471, %v5473
        %v5475 = vrot.slane %v5461, %v5474
        %v5476 = vcombine.low %v5468, %v5475
        %v5477 = vcombine.low %v2956, %v2960
        %v5478 = vcombine.low %v2964, %v2968
        %v5479 = vcombine.low %v2972, %v2976
        %v5480 = vcombine.low %v2980, %v2984
        %v5482 = vunpack.c.l.s4 1966171168
        %v5483 = vunpack.c.0.s8 %v5482
        %v5484 = vlaneseq
        %v5485 = vshrl.u32 %v5484, 7
        %v5486 = vsub.s32 %v5483, %v5485
        %v5487 = vrot.slane %v5477, %v5486
        %v5489 = vunpack.c.l.s4 1966171168
        %v5490 = vunpack.c.0.s8 %v5489
        %v5491 = vlaneseq
        %v5492 = vshrl.u32 %v5491, 7
        %v5493 = vsub.s32 %v5490, %v5492
        %v5494 = vrot.slane %v5478, %v5493
        %v5496 = vunpack.c.l.s4 1966171168
        %v5497 = vunpack.c.0.s8 %v5496
        %v5498 = vlaneseq
        %v5499 = vshrl.u32 %v5498, 7
        %v5500 = vsub.s32 %v5497, %v5499
        %v5501 = vrot.slane %v5479, %v5500
        %v5503 = vunpack.c.l.s4 1966171168
        %v5504 = vunpack.c.0.s8 %v5503
        %v5505 = vlaneseq
        %v5506 = vshrl.u32 %v5505, 7
        %v5507 = vsub.s32 %v5504, %v5506
        %v5508 = vrot.slane %v5480, %v5507
        %v5509 = vcombine.low %v5487, %v5494
        %v5510 = vcombine.low %v5501, %v5508
        %v5512 = vunpack.c.l.s4 1966171168
        %v5513 = vunpack.c.0.s8 %v5512
        %v5514 = vlaneseq
        %v5515 = vshrl.u32 %v5514, 7
        %v5516 = vsub.s32 %v5513, %v5515
        %v5517 = vrot.slane %v5509, %v5516
        %v5519 = vunpack.c.l.s4 1966171168
        %v5520 = vunpack.c.0.s8 %v5519
        %v5521 = vlaneseq
        %v5522 = vshrl.u32 %v5521, 7
        %v5523 = vsub.s32 %v5520, %v5522
        %v5524 = vrot.slane %v5510, %v5523
        %v5525 = vcombine.low %v5517, %v5524
        %v5526 = vcombine.low %v2988, %v2992
        %v5527 = vcombine.low %v2996, %v3000
        %v5528 = vcombine.low %v3004, %v3008
        %v5529 = vcombine.low %v3012, %v3016
        %v5531 = vunpack.c.l.s4 1966171168
        %v5532 = vunpack.c.0.s8 %v5531
        %v5533 = vlaneseq
        %v5534 = vshrl.u32 %v5533, 7
        %v5535 = vsub.s32 %v5532, %v5534
        %v5536 = vrot.slane %v5526, %v5535
        %v5538 = vunpack.c.l.s4 1966171168
        %v5539 = vunpack.c.0.s8 %v5538
        %v5540 = vlaneseq
        %v5541 = vshrl.u32 %v5540, 7
        %v5542 = vsub.s32 %v5539, %v5541
        %v5543 = vrot.slane %v5527, %v5542
        %v5545 = vunpack.c.l.s4 1966171168
        %v5546 = vunpack.c.0.s8 %v5545
        %v5547 = vlaneseq
        %v5548 = vshrl.u32 %v5547, 7
        %v5549 = vsub.s32 %v5546, %v5548
        %v5550 = vrot.slane %v5528, %v5549
        %v5552 = vunpack.c.l.s4 1966171168
        %v5553 = vunpack.c.0.s8 %v5552
        %v5554 = vlaneseq
        %v5555 = vshrl.u32 %v5554, 7
        %v5556 = vsub.s32 %v5553, %v5555
        %v5557 = vrot.slane %v5529, %v5556
        %v5558 = vcombine.low %v5536, %v5543
        %v5559 = vcombine.low %v5550, %v5557
        %v5561 = vunpack.c.l.s4 1966171168
        %v5562 = vunpack.c.0.s8 %v5561
        %v5563 = vlaneseq
        %v5564 = vshrl.u32 %v5563, 7
        %v5565 = vsub.s32 %v5562, %v5564
        %v5566 = vrot.slane %v5558, %v5565
        %v5568 = vunpack.c.l.s4 1966171168
        %v5569 = vunpack.c.0.s8 %v5568
        %v5570 = vlaneseq
        %v5571 = vshrl.u32 %v5570, 7
        %v5572 = vsub.s32 %v5569, %v5571
        %v5573 = vrot.slane %v5559, %v5572
        %v5574 = vcombine.low %v5566, %v5573
        %v5575 = vcombine.low %v3020, %v3024
        %v5576 = vcombine.low %v3028, %v3032
        %v5577 = vcombine.low %v3036, %v3040
        %v5578 = vcombine.low %v3044, %v3048
        %v5580 = vunpack.c.l.s4 1966171168
        %v5581 = vunpack.c.0.s8 %v5580
        %v5582 = vlaneseq
        %v5583 = vshrl.u32 %v5582, 7
        %v5584 = vsub.s32 %v5581, %v5583
        %v5585 = vrot.slane %v5575, %v5584
        %v5587 = vunpack.c.l.s4 1966171168
        %v5588 = vunpack.c.0.s8 %v5587
        %v5589 = vlaneseq
        %v5590 = vshrl.u32 %v5589, 7
        %v5591 = vsub.s32 %v5588, %v5590
        %v5592 = vrot.slane %v5576, %v5591
        %v5594 = vunpack.c.l.s4 1966171168
        %v5595 = vunpack.c.0.s8 %v5594
        %v5596 = vlaneseq
        %v5597 = vshrl.u32 %v5596, 7
        %v5598 = vsub.s32 %v5595, %v5597
        %v5599 = vrot.slane %v5577, %v5598
        %v5601 = vunpack.c.l.s4 1966171168
        %v5602 = vunpack.c.0.s8 %v5601
        %v5603 = vlaneseq
        %v5604 = vshrl.u32 %v5603, 7
        %v5605 = vsub.s32 %v5602, %v5604
        %v5606 = vrot.slane %v5578, %v5605
        %v5607 = vcombine.low %v5585, %v5592
        %v5608 = vcombine.low %v5599, %v5606
        %v5610 = vunpack.c.l.s4 1966171168
        %v5611 = vunpack.c.0.s8 %v5610
        %v5612 = vlaneseq
        %v5613 = vshrl.u32 %v5612, 7
        %v5614 = vsub.s32 %v5611, %v5613
        %v5615 = vrot.slane %v5607, %v5614
        %v5617 = vunpack.c.l.s4 1966171168
        %v5618 = vunpack.c.0.s8 %v5617
        %v5619 = vlaneseq
        %v5620 = vshrl.u32 %v5619, 7
        %v5621 = vsub.s32 %v5618, %v5620
        %v5622 = vrot.slane %v5608, %v5621
        %v5623 = vcombine.low %v5615, %v5622
        %v5624 = vcombine.low %v3052, %v3056
        %v5625 = vcombine.low %v3060, %v3064
        %v5626 = vcombine.low %v3068, %v3072
        %v5627 = vcombine.low %v3076, %v3080
        %v5629 = vunpack.c.l.s4 1966171168
        %v5630 = vunpack.c.0.s8 %v5629
        %v5631 = vlaneseq
        %v5632 = vshrl.u32 %v5631, 7
        %v5633 = vsub.s32 %v5630, %v5632
        %v5634 = vrot.slane %v5624, %v5633
        %v5636 = vunpack.c.l.s4 1966171168
        %v5637 = vunpack.c.0.s8 %v5636
        %v5638 = vlaneseq
        %v5639 = vshrl.u32 %v5638, 7
        %v5640 = vsub.s32 %v5637, %v5639
        %v5641 = vrot.slane %v5625, %v5640
        %v5643 = vunpack.c.l.s4 1966171168
        %v5644 = vunpack.c.0.s8 %v5643
        %v5645 = vlaneseq
        %v5646 = vshrl.u32 %v5645, 7
        %v5647 = vsub.s32 %v5644, %v5646
        %v5648 = vrot.slane %v5626, %v5647
        %v5650 = vunpack.c.l.s4 1966171168
        %v5651 = vunpack.c.0.s8 %v5650
        %v5652 = vlaneseq
        %v5653 = vshrl.u32 %v5652, 7
        %v5654 = vsub.s32 %v5651, %v5653
        %v5655 = vrot.slane %v5627, %v5654
        %v5656 = vcombine.low %v5634, %v5641
        %v5657 = vcombine.low %v5648, %v5655
        %v5659 = vunpack.c.l.s4 1966171168
        %v5660 = vunpack.c.0.s8 %v5659
        %v5661 = vlaneseq
        %v5662 = vshrl.u32 %v5661, 7
        %v5663 = vsub.s32 %v5660, %v5662
        %v5664 = vrot.slane %v5656, %v5663
        %v5666 = vunpack.c.l.s4 1966171168
        %v5667 = vunpack.c.0.s8 %v5666
        %v5668 = vlaneseq
        %v5669 = vshrl.u32 %v5668, 7
        %v5670 = vsub.s32 %v5667, %v5669
        %v5671 = vrot.slane %v5657, %v5670
        %v5672 = vcombine.low %v5664, %v5671
        %v5673 = vcombine.low %v3084, %v3088
        %v5674 = vcombine.low %v3092, %v3096
        %v5675 = vcombine.low %v3100, %v3104
        %v5676 = vcombine.low %v3108, %v3112
        %v5678 = vunpack.c.l.s4 1966171168
        %v5679 = vunpack.c.0.s8 %v5678
        %v5680 = vlaneseq
        %v5681 = vshrl.u32 %v5680, 7
        %v5682 = vsub.s32 %v5679, %v5681
        %v5683 = vrot.slane %v5673, %v5682
        %v5685 = vunpack.c.l.s4 1966171168
        %v5686 = vunpack.c.0.s8 %v5685
        %v5687 = vlaneseq
        %v5688 = vshrl.u32 %v5687, 7
        %v5689 = vsub.s32 %v5686, %v5688
        %v5690 = vrot.slane %v5674, %v5689
        %v5692 = vunpack.c.l.s4 1966171168
        %v5693 = vunpack.c.0.s8 %v5692
        %v5694 = vlaneseq
        %v5695 = vshrl.u32 %v5694, 7
        %v5696 = vsub.s32 %v5693, %v5695
        %v5697 = vrot.slane %v5675, %v5696
        %v5699 = vunpack.c.l.s4 1966171168
        %v5700 = vunpack.c.0.s8 %v5699
        %v5701 = vlaneseq
        %v5702 = vshrl.u32 %v5701, 7
        %v5703 = vsub.s32 %v5700, %v5702
        %v5704 = vrot.slane %v5676, %v5703
        %v5705 = vcombine.low %v5683, %v5690
        %v5706 = vcombine.low %v5697, %v5704
        %v5708 = vunpack.c.l.s4 1966171168
        %v5709 = vunpack.c.0.s8 %v5708
        %v5710 = vlaneseq
        %v5711 = vshrl.u32 %v5710, 7
        %v5712 = vsub.s32 %v5709, %v5711
        %v5713 = vrot.slane %v5705, %v5712
        %v5715 = vunpack.c.l.s4 1966171168
        %v5716 = vunpack.c.0.s8 %v5715
        %v5717 = vlaneseq
        %v5718 = vshrl.u32 %v5717, 7
        %v5719 = vsub.s32 %v5716, %v5718
        %v5720 = vrot.slane %v5706, %v5719
        %v5721 = vcombine.low %v5713, %v5720
        %v5722 = vcombine.low %v3116, %v3120
        %v5723 = vcombine.low %v3124, %v3128
        %v5724 = vcombine.low %v3132, %v3136
        %v5725 = vcombine.low %v3140, %v3144
        %v5727 = vunpack.c.l.s4 1966171168
        %v5728 = vunpack.c.0.s8 %v5727
        %v5729 = vlaneseq
        %v5730 = vshrl.u32 %v5729, 7
        %v5731 = vsub.s32 %v5728, %v5730
        %v5732 = vrot.slane %v5722, %v5731
        %v5734 = vunpack.c.l.s4 1966171168
        %v5735 = vunpack.c.0.s8 %v5734
        %v5736 = vlaneseq
        %v5737 = vshrl.u32 %v5736, 7
        %v5738 = vsub.s32 %v5735, %v5737
        %v5739 = vrot.slane %v5723, %v5738
        %v5741 = vunpack.c.l.s4 1966171168
        %v5742 = vunpack.c.0.s8 %v5741
        %v5743 = vlaneseq
        %v5744 = vshrl.u32 %v5743, 7
        %v5745 = vsub.s32 %v5742, %v5744
        %v5746 = vrot.slane %v5724, %v5745
        %v5748 = vunpack.c.l.s4 1966171168
        %v5749 = vunpack.c.0.s8 %v5748
        %v5750 = vlaneseq
        %v5751 = vshrl.u32 %v5750, 7
        %v5752 = vsub.s32 %v5749, %v5751
        %v5753 = vrot.slane %v5725, %v5752
        %v5754 = vcombine.low %v5732, %v5739
        %v5755 = vcombine.low %v5746, %v5753
        %v5757 = vunpack.c.l.s4 1966171168
        %v5758 = vunpack.c.0.s8 %v5757
        %v5759 = vlaneseq
        %v5760 = vshrl.u32 %v5759, 7
        %v5761 = vsub.s32 %v5758, %v5760
        %v5762 = vrot.slane %v5754, %v5761
        %v5764 = vunpack.c.l.s4 1966171168
        %v5765 = vunpack.c.0.s8 %v5764
        %v5766 = vlaneseq
        %v5767 = vshrl.u32 %v5766, 7
        %v5768 = vsub.s32 %v5765, %v5767
        %v5769 = vrot.slane %v5755, %v5768
        %v5770 = vcombine.low %v5762, %v5769
        %v5771 = vcombine.low %v3148, %v3152
        %v5772 = vcombine.low %v3156, %v3160
        %v5773 = vcombine.low %v3164, %v3168
        %v5774 = vcombine.low %v3172, %v3176
        %v5776 = vunpack.c.l.s4 1966171168
        %v5777 = vunpack.c.0.s8 %v5776
        %v5778 = vlaneseq
        %v5779 = vshrl.u32 %v5778, 7
        %v5780 = vsub.s32 %v5777, %v5779
        %v5781 = vrot.slane %v5771, %v5780
        %v5783 = vunpack.c.l.s4 1966171168
        %v5784 = vunpack.c.0.s8 %v5783
        %v5785 = vlaneseq
        %v5786 = vshrl.u32 %v5785, 7
        %v5787 = vsub.s32 %v5784, %v5786
        %v5788 = vrot.slane %v5772, %v5787
        %v5790 = vunpack.c.l.s4 1966171168
        %v5791 = vunpack.c.0.s8 %v5790
        %v5792 = vlaneseq
        %v5793 = vshrl.u32 %v5792, 7
        %v5794 = vsub.s32 %v5791, %v5793
        %v5795 = vrot.slane %v5773, %v5794
        %v5797 = vunpack.c.l.s4 1966171168
        %v5798 = vunpack.c.0.s8 %v5797
        %v5799 = vlaneseq
        %v5800 = vshrl.u32 %v5799, 7
        %v5801 = vsub.s32 %v5798, %v5800
        %v5802 = vrot.slane %v5774, %v5801
        %v5803 = vcombine.low %v5781, %v5788
        %v5804 = vcombine.low %v5795, %v5802
        %v5806 = vunpack.c.l.s4 1966171168
        %v5807 = vunpack.c.0.s8 %v5806
        %v5808 = vlaneseq
        %v5809 = vshrl.u32 %v5808, 7
        %v5810 = vsub.s32 %v5807, %v5809
        %v5811 = vrot.slane %v5803, %v5810
        %v5813 = vunpack.c.l.s4 1966171168
        %v5814 = vunpack.c.0.s8 %v5813
        %v5815 = vlaneseq
        %v5816 = vshrl.u32 %v5815, 7
        %v5817 = vsub.s32 %v5814, %v5816
        %v5818 = vrot.slane %v5804, %v5817
        %v5819 = vcombine.low %v5811, %v5818
        %v5820 = vcombine.low %v3180, %v3184
        %v5821 = vcombine.low %v3188, %v3192
        %v5822 = vcombine.low %v3196, %v3200
        %v5823 = vcombine.low %v3204, %v3208
        %v5825 = vunpack.c.l.s4 1966171168
        %v5826 = vunpack.c.0.s8 %v5825
        %v5827 = vlaneseq
        %v5828 = vshrl.u32 %v5827, 7
        %v5829 = vsub.s32 %v5826, %v5828
        %v5830 = vrot.slane %v5820, %v5829
        %v5832 = vunpack.c.l.s4 1966171168
        %v5833 = vunpack.c.0.s8 %v5832
        %v5834 = vlaneseq
        %v5835 = vshrl.u32 %v5834, 7
        %v5836 = vsub.s32 %v5833, %v5835
        %v5837 = vrot.slane %v5821, %v5836
        %v5839 = vunpack.c.l.s4 1966171168
        %v5840 = vunpack.c.0.s8 %v5839
        %v5841 = vlaneseq
        %v5842 = vshrl.u32 %v5841, 7
        %v5843 = vsub.s32 %v5840, %v5842
        %v5844 = vrot.slane %v5822, %v5843
        %v5846 = vunpack.c.l.s4 1966171168
        %v5847 = vunpack.c.0.s8 %v5846
        %v5848 = vlaneseq
        %v5849 = vshrl.u32 %v5848, 7
        %v5850 = vsub.s32 %v5847, %v5849
        %v5851 = vrot.slane %v5823, %v5850
        %v5852 = vcombine.low %v5830, %v5837
        %v5853 = vcombine.low %v5844, %v5851
        %v5855 = vunpack.c.l.s4 1966171168
        %v5856 = vunpack.c.0.s8 %v5855
        %v5857 = vlaneseq
        %v5858 = vshrl.u32 %v5857, 7
        %v5859 = vsub.s32 %v5856, %v5858
        %v5860 = vrot.slane %v5852, %v5859
        %v5862 = vunpack.c.l.s4 1966171168
        %v5863 = vunpack.c.0.s8 %v5862
        %v5864 = vlaneseq
        %v5865 = vshrl.u32 %v5864, 7
        %v5866 = vsub.s32 %v5863, %v5865
        %v5867 = vrot.slane %v5853, %v5866
        %v5868 = vcombine.low %v5860, %v5867
        %v5869 = vcombine.low %v3212, %v3216
        %v5870 = vcombine.low %v3220, %v3224
        %v5871 = vcombine.low %v3228, %v3232
        %v5872 = vcombine.low %v3236, %v3240
        %v5874 = vunpack.c.l.s4 1966171168
        %v5875 = vunpack.c.0.s8 %v5874
        %v5876 = vlaneseq
        %v5877 = vshrl.u32 %v5876, 7
        %v5878 = vsub.s32 %v5875, %v5877
        %v5879 = vrot.slane %v5869, %v5878
        %v5881 = vunpack.c.l.s4 1966171168
        %v5882 = vunpack.c.0.s8 %v5881
        %v5883 = vlaneseq
        %v5884 = vshrl.u32 %v5883, 7
        %v5885 = vsub.s32 %v5882, %v5884
        %v5886 = vrot.slane %v5870, %v5885
        %v5888 = vunpack.c.l.s4 1966171168
        %v5889 = vunpack.c.0.s8 %v5888
        %v5890 = vlaneseq
        %v5891 = vshrl.u32 %v5890, 7
        %v5892 = vsub.s32 %v5889, %v5891
        %v5893 = vrot.slane %v5871, %v5892
        %v5895 = vunpack.c.l.s4 1966171168
        %v5896 = vunpack.c.0.s8 %v5895
        %v5897 = vlaneseq
        %v5898 = vshrl.u32 %v5897, 7
        %v5899 = vsub.s32 %v5896, %v5898
        %v5900 = vrot.slane %v5872, %v5899
        %v5901 = vcombine.low %v5879, %v5886
        %v5902 = vcombine.low %v5893, %v5900
        %v5904 = vunpack.c.l.s4 1966171168
        %v5905 = vunpack.c.0.s8 %v5904
        %v5906 = vlaneseq
        %v5907 = vshrl.u32 %v5906, 7
        %v5908 = vsub.s32 %v5905, %v5907
        %v5909 = vrot.slane %v5901, %v5908
        %v5911 = vunpack.c.l.s4 1966171168
        %v5912 = vunpack.c.0.s8 %v5911
        %v5913 = vlaneseq
        %v5914 = vshrl.u32 %v5913, 7
        %v5915 = vsub.s32 %v5912, %v5914
        %v5916 = vrot.slane %v5902, %v5915
        %v5917 = vcombine.low %v5909, %v5916
        %v5918 = vcombine.low %v3244, %v3248
        %v5919 = vcombine.low %v3252, %v3256
        %v5920 = vcombine.low %v3260, %v3264
        %v5921 = vcombine.low %v3268, %v3272
        %v5923 = vunpack.c.l.s4 1966171168
        %v5924 = vunpack.c.0.s8 %v5923
        %v5925 = vlaneseq
        %v5926 = vshrl.u32 %v5925, 7
        %v5927 = vsub.s32 %v5924, %v5926
        %v5928 = vrot.slane %v5918, %v5927
        %v5930 = vunpack.c.l.s4 1966171168
        %v5931 = vunpack.c.0.s8 %v5930
        %v5932 = vlaneseq
        %v5933 = vshrl.u32 %v5932, 7
        %v5934 = vsub.s32 %v5931, %v5933
        %v5935 = vrot.slane %v5919, %v5934
        %v5937 = vunpack.c.l.s4 1966171168
        %v5938 = vunpack.c.0.s8 %v5937
        %v5939 = vlaneseq
        %v5940 = vshrl.u32 %v5939, 7
        %v5941 = vsub.s32 %v5938, %v5940
        %v5942 = vrot.slane %v5920, %v5941
        %v5944 = vunpack.c.l.s4 1966171168
        %v5945 = vunpack.c.0.s8 %v5944
        %v5946 = vlaneseq
        %v5947 = vshrl.u32 %v5946, 7
        %v5948 = vsub.s32 %v5945, %v5947
        %v5949 = vrot.slane %v5921, %v5948
        %v5950 = vcombine.low %v5928, %v5935
        %v5951 = vcombine.low %v5942, %v5949
        %v5953 = vunpack.c.l.s4 1966171168
        %v5954 = vunpack.c.0.s8 %v5953
        %v5955 = vlaneseq
        %v5956 = vshrl.u32 %v5955, 7
        %v5957 = vsub.s32 %v5954, %v5956
        %v5958 = vrot.slane %v5950, %v5957
        %v5960 = vunpack.c.l.s4 1966171168
        %v5961 = vunpack.c.0.s8 %v5960
        %v5962 = vlaneseq
        %v5963 = vshrl.u32 %v5962, 7
        %v5964 = vsub.s32 %v5961, %v5963
        %v5965 = vrot.slane %v5951, %v5964
        %v5966 = vcombine.low %v5958, %v5965
        %v5967 = vcombine.low %v3276, %v3280
        %v5968 = vcombine.low %v3284, %v3288
        %v5969 = vcombine.low %v3292, %v3296
        %v5970 = vcombine.low %v3300, %v3304
        %v5972 = vunpack.c.l.s4 1966171168
        %v5973 = vunpack.c.0.s8 %v5972
        %v5974 = vlaneseq
        %v5975 = vshrl.u32 %v5974, 7
        %v5976 = vsub.s32 %v5973, %v5975
        %v5977 = vrot.slane %v5967, %v5976
        %v5979 = vunpack.c.l.s4 1966171168
        %v5980 = vunpack.c.0.s8 %v5979
        %v5981 = vlaneseq
        %v5982 = vshrl.u32 %v5981, 7
        %v5983 = vsub.s32 %v5980, %v5982
        %v5984 = vrot.slane %v5968, %v5983
        %v5986 = vunpack.c.l.s4 1966171168
        %v5987 = vunpack.c.0.s8 %v5986
        %v5988 = vlaneseq
        %v5989 = vshrl.u32 %v5988, 7
        %v5990 = vsub.s32 %v5987, %v5989
        %v5991 = vrot.slane %v5969, %v5990
        %v5993 = vunpack.c.l.s4 1966171168
        %v5994 = vunpack.c.0.s8 %v5993
        %v5995 = vlaneseq
        %v5996 = vshrl.u32 %v5995, 7
        %v5997 = vsub.s32 %v5994, %v5996
        %v5998 = vrot.slane %v5970, %v5997
        %v5999 = vcombine.low %v5977, %v5984
        %v6000 = vcombine.low %v5991, %v5998
        %v6002 = vunpack.c.l.s4 1966171168
        %v6003 = vunpack.c.0.s8 %v6002
        %v6004 = vlaneseq
        %v6005 = vshrl.u32 %v6004, 7
        %v6006 = vsub.s32 %v6003, %v6005
        %v6007 = vrot.slane %v5999, %v6006
        %v6009 = vunpack.c.l.s4 1966171168
        %v6010 = vunpack.c.0.s8 %v6009
        %v6011 = vlaneseq
        %v6012 = vshrl.u32 %v6011, 7
        %v6013 = vsub.s32 %v6010, %v6012
        %v6014 = vrot.slane %v6000, %v6013
        %v6015 = vcombine.low %v6007, %v6014
        %v6016 = vcombine.low %v3308, %v3312
        %v6017 = vcombine.low %v3316, %v3320
        %v6018 = vcombine.low %v3324, %v3328
        %v6019 = vcombine.low %v3332, %v3336
        %v6021 = vunpack.c.l.s4 1966171168
        %v6022 = vunpack.c.0.s8 %v6021
        %v6023 = vlaneseq
        %v6024 = vshrl.u32 %v6023, 7
        %v6025 = vsub.s32 %v6022, %v6024
        %v6026 = vrot.slane %v6016, %v6025
        %v6028 = vunpack.c.l.s4 1966171168
        %v6029 = vunpack.c.0.s8 %v6028
        %v6030 = vlaneseq
        %v6031 = vshrl.u32 %v6030, 7
        %v6032 = vsub.s32 %v6029, %v6031
        %v6033 = vrot.slane %v6017, %v6032
        %v6035 = vunpack.c.l.s4 1966171168
        %v6036 = vunpack.c.0.s8 %v6035
        %v6037 = vlaneseq
        %v6038 = vshrl.u32 %v6037, 7
        %v6039 = vsub.s32 %v6036, %v6038
        %v6040 = vrot.slane %v6018, %v6039
        %v6042 = vunpack.c.l.s4 1966171168
        %v6043 = vunpack.c.0.s8 %v6042
        %v6044 = vlaneseq
        %v6045 = vshrl.u32 %v6044, 7
        %v6046 = vsub.s32 %v6043, %v6045
        %v6047 = vrot.slane %v6019, %v6046
        %v6048 = vcombine.low %v6026, %v6033
        %v6049 = vcombine.low %v6040, %v6047
        %v6051 = vunpack.c.l.s4 1966171168
        %v6052 = vunpack.c.0.s8 %v6051
        %v6053 = vlaneseq
        %v6054 = vshrl.u32 %v6053, 7
        %v6055 = vsub.s32 %v6052, %v6054
        %v6056 = vrot.slane %v6048, %v6055
        %v6058 = vunpack.c.l.s4 1966171168
        %v6059 = vunpack.c.0.s8 %v6058
        %v6060 = vlaneseq
        %v6061 = vshrl.u32 %v6060, 7
        %v6062 = vsub.s32 %v6059, %v6061
        %v6063 = vrot.slane %v6049, %v6062
        %v6064 = vcombine.low %v6056, %v6063
        %v6065 = vcombine.low %v3340, %v3344
        %v6066 = vcombine.low %v3348, %v3352
        %v6067 = vcombine.low %v3356, %v3360
        %v6068 = vcombine.low %v3364, %v3368
        %v6070 = vunpack.c.l.s4 1966171168
        %v6071 = vunpack.c.0.s8 %v6070
        %v6072 = vlaneseq
        %v6073 = vshrl.u32 %v6072, 7
        %v6074 = vsub.s32 %v6071, %v6073
        %v6075 = vrot.slane %v6065, %v6074
        %v6077 = vunpack.c.l.s4 1966171168
        %v6078 = vunpack.c.0.s8 %v6077
        %v6079 = vlaneseq
        %v6080 = vshrl.u32 %v6079, 7
        %v6081 = vsub.s32 %v6078, %v6080
        %v6082 = vrot.slane %v6066, %v6081
        %v6084 = vunpack.c.l.s4 1966171168
        %v6085 = vunpack.c.0.s8 %v6084
        %v6086 = vlaneseq
        %v6087 = vshrl.u32 %v6086, 7
        %v6088 = vsub.s32 %v6085, %v6087
        %v6089 = vrot.slane %v6067, %v6088
        %v6091 = vunpack.c.l.s4 1966171168
        %v6092 = vunpack.c.0.s8 %v6091
        %v6093 = vlaneseq
        %v6094 = vshrl.u32 %v6093, 7
        %v6095 = vsub.s32 %v6092, %v6094
        %v6096 = vrot.slane %v6068, %v6095
        %v6097 = vcombine.low %v6075, %v6082
        %v6098 = vcombine.low %v6089, %v6096
        %v6100 = vunpack.c.l.s4 1966171168
        %v6101 = vunpack.c.0.s8 %v6100
        %v6102 = vlaneseq
        %v6103 = vshrl.u32 %v6102, 7
        %v6104 = vsub.s32 %v6101, %v6103
        %v6105 = vrot.slane %v6097, %v6104
        %v6107 = vunpack.c.l.s4 1966171168
        %v6108 = vunpack.c.0.s8 %v6107
        %v6109 = vlaneseq
        %v6110 = vshrl.u32 %v6109, 7
        %v6111 = vsub.s32 %v6108, %v6110
        %v6112 = vrot.slane %v6098, %v6111
        %v6113 = vcombine.low %v6105, %v6112
        %v6114 = vcombine.low %v3372, %v3376
        %v6115 = vcombine.low %v3380, %v3384
        %v6116 = vcombine.low %v3388, %v3392
        %v6117 = vcombine.low %v3396, %v3400
        %v6119 = vunpack.c.l.s4 1966171168
        %v6120 = vunpack.c.0.s8 %v6119
        %v6121 = vlaneseq
        %v6122 = vshrl.u32 %v6121, 7
        %v6123 = vsub.s32 %v6120, %v6122
        %v6124 = vrot.slane %v6114, %v6123
        %v6126 = vunpack.c.l.s4 1966171168
        %v6127 = vunpack.c.0.s8 %v6126
        %v6128 = vlaneseq
        %v6129 = vshrl.u32 %v6128, 7
        %v6130 = vsub.s32 %v6127, %v6129
        %v6131 = vrot.slane %v6115, %v6130
        %v6133 = vunpack.c.l.s4 1966171168
        %v6134 = vunpack.c.0.s8 %v6133
        %v6135 = vlaneseq
        %v6136 = vshrl.u32 %v6135, 7
        %v6137 = vsub.s32 %v6134, %v6136
        %v6138 = vrot.slane %v6116, %v6137
        %v6140 = vunpack.c.l.s4 1966171168
        %v6141 = vunpack.c.0.s8 %v6140
        %v6142 = vlaneseq
        %v6143 = vshrl.u32 %v6142, 7
        %v6144 = vsub.s32 %v6141, %v6143
        %v6145 = vrot.slane %v6117, %v6144
        %v6146 = vcombine.low %v6124, %v6131
        %v6147 = vcombine.low %v6138, %v6145
        %v6149 = vunpack.c.l.s4 1966171168
        %v6150 = vunpack.c.0.s8 %v6149
        %v6151 = vlaneseq
        %v6152 = vshrl.u32 %v6151, 7
        %v6153 = vsub.s32 %v6150, %v6152
        %v6154 = vrot.slane %v6146, %v6153
        %v6156 = vunpack.c.l.s4 1966171168
        %v6157 = vunpack.c.0.s8 %v6156
        %v6158 = vlaneseq
        %v6159 = vshrl.u32 %v6158, 7
        %v6160 = vsub.s32 %v6157, %v6159
        %v6161 = vrot.slane %v6147, %v6160
        %v6162 = vcombine.low %v6154, %v6161
        %v6163 = vcombine.low %v3404, %v3408
        %v6164 = vcombine.low %v3412, %v3416
        %v6165 = vcombine.low %v3420, %v3424
        %v6166 = vcombine.low %v3428, %v3432
        %v6168 = vunpack.c.l.s4 1966171168
        %v6169 = vunpack.c.0.s8 %v6168
        %v6170 = vlaneseq
        %v6171 = vshrl.u32 %v6170, 7
        %v6172 = vsub.s32 %v6169, %v6171
        %v6173 = vrot.slane %v6163, %v6172
        %v6175 = vunpack.c.l.s4 1966171168
        %v6176 = vunpack.c.0.s8 %v6175
        %v6177 = vlaneseq
        %v6178 = vshrl.u32 %v6177, 7
        %v6179 = vsub.s32 %v6176, %v6178
        %v6180 = vrot.slane %v6164, %v6179
        %v6182 = vunpack.c.l.s4 1966171168
        %v6183 = vunpack.c.0.s8 %v6182
        %v6184 = vlaneseq
        %v6185 = vshrl.u32 %v6184, 7
        %v6186 = vsub.s32 %v6183, %v6185
        %v6187 = vrot.slane %v6165, %v6186
        %v6189 = vunpack.c.l.s4 1966171168
        %v6190 = vunpack.c.0.s8 %v6189
        %v6191 = vlaneseq
        %v6192 = vshrl.u32 %v6191, 7
        %v6193 = vsub.s32 %v6190, %v6192
        %v6194 = vrot.slane %v6166, %v6193
        %v6195 = vcombine.low %v6173, %v6180
        %v6196 = vcombine.low %v6187, %v6194
        %v6198 = vunpack.c.l.s4 1966171168
        %v6199 = vunpack.c.0.s8 %v6198
        %v6200 = vlaneseq
        %v6201 = vshrl.u32 %v6200, 7
        %v6202 = vsub.s32 %v6199, %v6201
        %v6203 = vrot.slane %v6195, %v6202
        %v6205 = vunpack.c.l.s4 1966171168
        %v6206 = vunpack.c.0.s8 %v6205
        %v6207 = vlaneseq
        %v6208 = vshrl.u32 %v6207, 7
        %v6209 = vsub.s32 %v6206, %v6208
        %v6210 = vrot.slane %v6196, %v6209
        %v6211 = vcombine.low %v6203, %v6210
        %v6212 = vcombine.low %v3436, %v3440
        %v6213 = vcombine.low %v3444, %v3448
        %v6214 = vcombine.low %v3452, %v3456
        %v6215 = vcombine.low %v3460, %v3464
        %v6217 = vunpack.c.l.s4 1966171168
        %v6218 = vunpack.c.0.s8 %v6217
        %v6219 = vlaneseq
        %v6220 = vshrl.u32 %v6219, 7
        %v6221 = vsub.s32 %v6218, %v6220
        %v6222 = vrot.slane %v6212, %v6221
        %v6224 = vunpack.c.l.s4 1966171168
        %v6225 = vunpack.c.0.s8 %v6224
        %v6226 = vlaneseq
        %v6227 = vshrl.u32 %v6226, 7
        %v6228 = vsub.s32 %v6225, %v6227
        %v6229 = vrot.slane %v6213, %v6228
        %v6231 = vunpack.c.l.s4 1966171168
        %v6232 = vunpack.c.0.s8 %v6231
        %v6233 = vlaneseq
        %v6234 = vshrl.u32 %v6233, 7
        %v6235 = vsub.s32 %v6232, %v6234
        %v6236 = vrot.slane %v6214, %v6235
        %v6238 = vunpack.c.l.s4 1966171168
        %v6239 = vunpack.c.0.s8 %v6238
        %v6240 = vlaneseq
        %v6241 = vshrl.u32 %v6240, 7
        %v6242 = vsub.s32 %v6239, %v6241
        %v6243 = vrot.slane %v6215, %v6242
        %v6244 = vcombine.low %v6222, %v6229
        %v6245 = vcombine.low %v6236, %v6243
        %v6247 = vunpack.c.l.s4 1966171168
        %v6248 = vunpack.c.0.s8 %v6247
        %v6249 = vlaneseq
        %v6250 = vshrl.u32 %v6249, 7
        %v6251 = vsub.s32 %v6248, %v6250
        %v6252 = vrot.slane %v6244, %v6251
        %v6254 = vunpack.c.l.s4 1966171168
        %v6255 = vunpack.c.0.s8 %v6254
        %v6256 = vlaneseq
        %v6257 = vshrl.u32 %v6256, 7
        %v6258 = vsub.s32 %v6255, %v6257
        %v6259 = vrot.slane %v6245, %v6258
        %v6260 = vcombine.low %v6252, %v6259
        %v6261 = vcombine.low %v3468, %v3472
        %v6262 = vcombine.low %v3476, %v3480
        %v6263 = vcombine.low %v3484, %v3488
        %v6264 = vcombine.low %v3492, %v3496
        %v6266 = vunpack.c.l.s4 1966171168
        %v6267 = vunpack.c.0.s8 %v6266
        %v6268 = vlaneseq
        %v6269 = vshrl.u32 %v6268, 7
        %v6270 = vsub.s32 %v6267, %v6269
        %v6271 = vrot.slane %v6261, %v6270
        %v6273 = vunpack.c.l.s4 1966171168
        %v6274 = vunpack.c.0.s8 %v6273
        %v6275 = vlaneseq
        %v6276 = vshrl.u32 %v6275, 7
        %v6277 = vsub.s32 %v6274, %v6276
        %v6278 = vrot.slane %v6262, %v6277
        %v6280 = vunpack.c.l.s4 1966171168
        %v6281 = vunpack.c.0.s8 %v6280
        %v6282 = vlaneseq
        %v6283 = vshrl.u32 %v6282, 7
        %v6284 = vsub.s32 %v6281, %v6283
        %v6285 = vrot.slane %v6263, %v6284
        %v6287 = vunpack.c.l.s4 1966171168
        %v6288 = vunpack.c.0.s8 %v6287
        %v6289 = vlaneseq
        %v6290 = vshrl.u32 %v6289, 7
        %v6291 = vsub.s32 %v6288, %v6290
        %v6292 = vrot.slane %v6264, %v6291
        %v6293 = vcombine.low %v6271, %v6278
        %v6294 = vcombine.low %v6285, %v6292
        %v6296 = vunpack.c.l.s4 1966171168
        %v6297 = vunpack.c.0.s8 %v6296
        %v6298 = vlaneseq
        %v6299 = vshrl.u32 %v6298, 7
        %v6300 = vsub.s32 %v6297, %v6299
        %v6301 = vrot.slane %v6293, %v6300
        %v6303 = vunpack.c.l.s4 1966171168
        %v6304 = vunpack.c.0.s8 %v6303
        %v6305 = vlaneseq
        %v6306 = vshrl.u32 %v6305, 7
        %v6307 = vsub.s32 %v6304, %v6306
        %v6308 = vrot.slane %v6294, %v6307
        %v6309 = vcombine.low %v6301, %v6308
        %v6310 = vcombine.low %v3500, %v3504
        %v6311 = vcombine.low %v3508, %v3512
        %v6312 = vcombine.low %v3516, %v3520
        %v6313 = vcombine.low %v3524, %v3528
        %v6315 = vunpack.c.l.s4 1966171168
        %v6316 = vunpack.c.0.s8 %v6315
        %v6317 = vlaneseq
        %v6318 = vshrl.u32 %v6317, 7
        %v6319 = vsub.s32 %v6316, %v6318
        %v6320 = vrot.slane %v6310, %v6319
        %v6322 = vunpack.c.l.s4 1966171168
        %v6323 = vunpack.c.0.s8 %v6322
        %v6324 = vlaneseq
        %v6325 = vshrl.u32 %v6324, 7
        %v6326 = vsub.s32 %v6323, %v6325
        %v6327 = vrot.slane %v6311, %v6326
        %v6329 = vunpack.c.l.s4 1966171168
        %v6330 = vunpack.c.0.s8 %v6329
        %v6331 = vlaneseq
        %v6332 = vshrl.u32 %v6331, 7
        %v6333 = vsub.s32 %v6330, %v6332
        %v6334 = vrot.slane %v6312, %v6333
        %v6336 = vunpack.c.l.s4 1966171168
        %v6337 = vunpack.c.0.s8 %v6336
        %v6338 = vlaneseq
        %v6339 = vshrl.u32 %v6338, 7
        %v6340 = vsub.s32 %v6337, %v6339
        %v6341 = vrot.slane %v6313, %v6340
        %v6342 = vcombine.low %v6320, %v6327
        %v6343 = vcombine.low %v6334, %v6341
        %v6345 = vunpack.c.l.s4 1966171168
        %v6346 = vunpack.c.0.s8 %v6345
        %v6347 = vlaneseq
        %v6348 = vshrl.u32 %v6347, 7
        %v6349 = vsub.s32 %v6346, %v6348
        %v6350 = vrot.slane %v6342, %v6349
        %v6352 = vunpack.c.l.s4 1966171168
        %v6353 = vunpack.c.0.s8 %v6352
        %v6354 = vlaneseq
        %v6355 = vshrl.u32 %v6354, 7
        %v6356 = vsub.s32 %v6353, %v6355
        %v6357 = vrot.slane %v6343, %v6356
        %v6358 = vcombine.low %v6350, %v6357
        %v6359 = vcombine.low %v3532, %v3536
        %v6360 = vcombine.low %v3540, %v3544
        %v6361 = vcombine.low %v3548, %v3552
        %v6362 = vcombine.low %v3556, %v3560
        %v6364 = vunpack.c.l.s4 1966171168
        %v6365 = vunpack.c.0.s8 %v6364
        %v6366 = vlaneseq
        %v6367 = vshrl.u32 %v6366, 7
        %v6368 = vsub.s32 %v6365, %v6367
        %v6369 = vrot.slane %v6359, %v6368
        %v6371 = vunpack.c.l.s4 1966171168
        %v6372 = vunpack.c.0.s8 %v6371
        %v6373 = vlaneseq
        %v6374 = vshrl.u32 %v6373, 7
        %v6375 = vsub.s32 %v6372, %v6374
        %v6376 = vrot.slane %v6360, %v6375
        %v6378 = vunpack.c.l.s4 1966171168
        %v6379 = vunpack.c.0.s8 %v6378
        %v6380 = vlaneseq
        %v6381 = vshrl.u32 %v6380, 7
        %v6382 = vsub.s32 %v6379, %v6381
        %v6383 = vrot.slane %v6361, %v6382
        %v6385 = vunpack.c.l.s4 1966171168
        %v6386 = vunpack.c.0.s8 %v6385
        %v6387 = vlaneseq
        %v6388 = vshrl.u32 %v6387, 7
        %v6389 = vsub.s32 %v6386, %v6388
        %v6390 = vrot.slane %v6362, %v6389
        %v6391 = vcombine.low %v6369, %v6376
        %v6392 = vcombine.low %v6383, %v6390
        %v6394 = vunpack.c.l.s4 1966171168
        %v6395 = vunpack.c.0.s8 %v6394
        %v6396 = vlaneseq
        %v6397 = vshrl.u32 %v6396, 7
        %v6398 = vsub.s32 %v6395, %v6397
        %v6399 = vrot.slane %v6391, %v6398
        %v6401 = vunpack.c.l.s4 1966171168
        %v6402 = vunpack.c.0.s8 %v6401
        %v6403 = vlaneseq
        %v6404 = vshrl.u32 %v6403, 7
        %v6405 = vsub.s32 %v6402, %v6404
        %v6406 = vrot.slane %v6392, %v6405
        %v6407 = vcombine.low %v6399, %v6406
        %v6408 = vcombine.low %v3564, %v3568
        %v6409 = vcombine.low %v3572, %v3576
        %v6410 = vcombine.low %v3580, %v3584
        %v6411 = vcombine.low %v3588, %v3592
        %v6413 = vunpack.c.l.s4 1966171168
        %v6414 = vunpack.c.0.s8 %v6413
        %v6415 = vlaneseq
        %v6416 = vshrl.u32 %v6415, 7
        %v6417 = vsub.s32 %v6414, %v6416
        %v6418 = vrot.slane %v6408, %v6417
        %v6420 = vunpack.c.l.s4 1966171168
        %v6421 = vunpack.c.0.s8 %v6420
        %v6422 = vlaneseq
        %v6423 = vshrl.u32 %v6422, 7
        %v6424 = vsub.s32 %v6421, %v6423
        %v6425 = vrot.slane %v6409, %v6424
        %v6427 = vunpack.c.l.s4 1966171168
        %v6428 = vunpack.c.0.s8 %v6427
        %v6429 = vlaneseq
        %v6430 = vshrl.u32 %v6429, 7
        %v6431 = vsub.s32 %v6428, %v6430
        %v6432 = vrot.slane %v6410, %v6431
        %v6434 = vunpack.c.l.s4 1966171168
        %v6435 = vunpack.c.0.s8 %v6434
        %v6436 = vlaneseq
        %v6437 = vshrl.u32 %v6436, 7
        %v6438 = vsub.s32 %v6435, %v6437
        %v6439 = vrot.slane %v6411, %v6438
        %v6440 = vcombine.low %v6418, %v6425
        %v6441 = vcombine.low %v6432, %v6439
        %v6443 = vunpack.c.l.s4 1966171168
        %v6444 = vunpack.c.0.s8 %v6443
        %v6445 = vlaneseq
        %v6446 = vshrl.u32 %v6445, 7
        %v6447 = vsub.s32 %v6444, %v6446
        %v6448 = vrot.slane %v6440, %v6447
        %v6450 = vunpack.c.l.s4 1966171168
        %v6451 = vunpack.c.0.s8 %v6450
        %v6452 = vlaneseq
        %v6453 = vshrl.u32 %v6452, 7
        %v6454 = vsub.s32 %v6451, %v6453
        %v6455 = vrot.slane %v6441, %v6454
        %v6456 = vcombine.low %v6448, %v6455
        %v6457 = vcombine.low %v3596, %v3600
        %v6458 = vcombine.low %v3604, %v3608
        %v6459 = vcombine.low %v3612, %v3616
        %v6460 = vcombine.low %v3620, %v3624
        %v6462 = vunpack.c.l.s4 1966171168
        %v6463 = vunpack.c.0.s8 %v6462
        %v6464 = vlaneseq
        %v6465 = vshrl.u32 %v6464, 7
        %v6466 = vsub.s32 %v6463, %v6465
        %v6467 = vrot.slane %v6457, %v6466
        %v6469 = vunpack.c.l.s4 1966171168
        %v6470 = vunpack.c.0.s8 %v6469
        %v6471 = vlaneseq
        %v6472 = vshrl.u32 %v6471, 7
        %v6473 = vsub.s32 %v6470, %v6472
        %v6474 = vrot.slane %v6458, %v6473
        %v6476 = vunpack.c.l.s4 1966171168
        %v6477 = vunpack.c.0.s8 %v6476
        %v6478 = vlaneseq
        %v6479 = vshrl.u32 %v6478, 7
        %v6480 = vsub.s32 %v6477, %v6479
        %v6481 = vrot.slane %v6459, %v6480
        %v6483 = vunpack.c.l.s4 1966171168
        %v6484 = vunpack.c.0.s8 %v6483
        %v6485 = vlaneseq
        %v6486 = vshrl.u32 %v6485, 7
        %v6487 = vsub.s32 %v6484, %v6486
        %v6488 = vrot.slane %v6460, %v6487
        %v6489 = vcombine.low %v6467, %v6474
        %v6490 = vcombine.low %v6481, %v6488
        %v6492 = vunpack.c.l.s4 1966171168
        %v6493 = vunpack.c.0.s8 %v6492
        %v6494 = vlaneseq
        %v6495 = vshrl.u32 %v6494, 7
        %v6496 = vsub.s32 %v6493, %v6495
        %v6497 = vrot.slane %v6489, %v6496
        %v6499 = vunpack.c.l.s4 1966171168
        %v6500 = vunpack.c.0.s8 %v6499
        %v6501 = vlaneseq
        %v6502 = vshrl.u32 %v6501, 7
        %v6503 = vsub.s32 %v6500, %v6502
        %v6504 = vrot.slane %v6490, %v6503
        %v6505 = vcombine.low %v6497, %v6504
        %v6506 = vcombine.low %v3628, %v3632
        %v6507 = vcombine.low %v3636, %v3640
        %v6508 = vcombine.low %v3644, %v3648
        %v6509 = vcombine.low %v3652, %v3656
        %v6511 = vunpack.c.l.s4 1966171168
        %v6512 = vunpack.c.0.s8 %v6511
        %v6513 = vlaneseq
        %v6514 = vshrl.u32 %v6513, 7
        %v6515 = vsub.s32 %v6512, %v6514
        %v6516 = vrot.slane %v6506, %v6515
        %v6518 = vunpack.c.l.s4 1966171168
        %v6519 = vunpack.c.0.s8 %v6518
        %v6520 = vlaneseq
        %v6521 = vshrl.u32 %v6520, 7
        %v6522 = vsub.s32 %v6519, %v6521
        %v6523 = vrot.slane %v6507, %v6522
        %v6525 = vunpack.c.l.s4 1966171168
        %v6526 = vunpack.c.0.s8 %v6525
        %v6527 = vlaneseq
        %v6528 = vshrl.u32 %v6527, 7
        %v6529 = vsub.s32 %v6526, %v6528
        %v6530 = vrot.slane %v6508, %v6529
        %v6532 = vunpack.c.l.s4 1966171168
        %v6533 = vunpack.c.0.s8 %v6532
        %v6534 = vlaneseq
        %v6535 = vshrl.u32 %v6534, 7
        %v6536 = vsub.s32 %v6533, %v6535
        %v6537 = vrot.slane %v6509, %v6536
        %v6538 = vcombine.low %v6516, %v6523
        %v6539 = vcombine.low %v6530, %v6537
        %v6541 = vunpack.c.l.s4 1966171168
        %v6542 = vunpack.c.0.s8 %v6541
        %v6543 = vlaneseq
        %v6544 = vshrl.u32 %v6543, 7
        %v6545 = vsub.s32 %v6542, %v6544
        %v6546 = vrot.slane %v6538, %v6545
        %v6548 = vunpack.c.l.s4 1966171168
        %v6549 = vunpack.c.0.s8 %v6548
        %v6550 = vlaneseq
        %v6551 = vshrl.u32 %v6550, 7
        %v6552 = vsub.s32 %v6549, %v6551
        %v6553 = vrot.slane %v6539, %v6552
        %v6554 = vcombine.low %v6546, %v6553
        %v6555 = vcombine.low %v3660, %v3664
        %v6556 = vcombine.low %v3668, %v3672
        %v6557 = vcombine.low %v3676, %v3680
        %v6558 = vcombine.low %v3684, %v3688
        %v6560 = vunpack.c.l.s4 1966171168
        %v6561 = vunpack.c.0.s8 %v6560
        %v6562 = vlaneseq
        %v6563 = vshrl.u32 %v6562, 7
        %v6564 = vsub.s32 %v6561, %v6563
        %v6565 = vrot.slane %v6555, %v6564
        %v6567 = vunpack.c.l.s4 1966171168
        %v6568 = vunpack.c.0.s8 %v6567
        %v6569 = vlaneseq
        %v6570 = vshrl.u32 %v6569, 7
        %v6571 = vsub.s32 %v6568, %v6570
        %v6572 = vrot.slane %v6556, %v6571
        %v6574 = vunpack.c.l.s4 1966171168
        %v6575 = vunpack.c.0.s8 %v6574
        %v6576 = vlaneseq
        %v6577 = vshrl.u32 %v6576, 7
        %v6578 = vsub.s32 %v6575, %v6577
        %v6579 = vrot.slane %v6557, %v6578
        %v6581 = vunpack.c.l.s4 1966171168
        %v6582 = vunpack.c.0.s8 %v6581
        %v6583 = vlaneseq
        %v6584 = vshrl.u32 %v6583, 7
        %v6585 = vsub.s32 %v6582, %v6584
        %v6586 = vrot.slane %v6558, %v6585
        %v6587 = vcombine.low %v6565, %v6572
        %v6588 = vcombine.low %v6579, %v6586
        %v6590 = vunpack.c.l.s4 1966171168
        %v6591 = vunpack.c.0.s8 %v6590
        %v6592 = vlaneseq
        %v6593 = vshrl.u32 %v6592, 7
        %v6594 = vsub.s32 %v6591, %v6593
        %v6595 = vrot.slane %v6587, %v6594
        %v6597 = vunpack.c.l.s4 1966171168
        %v6598 = vunpack.c.0.s8 %v6597
        %v6599 = vlaneseq
        %v6600 = vshrl.u32 %v6599, 7
        %v6601 = vsub.s32 %v6598, %v6600
        %v6602 = vrot.slane %v6588, %v6601
        %v6603 = vcombine.low %v6595, %v6602
        %v6604 = vcombine.low %v3692, %v3696
        %v6605 = vcombine.low %v3700, %v3704
        %v6606 = vcombine.low %v3708, %v3712
        %v6607 = vcombine.low %v3716, %v3720
        %v6609 = vunpack.c.l.s4 1966171168
        %v6610 = vunpack.c.0.s8 %v6609
        %v6611 = vlaneseq
        %v6612 = vshrl.u32 %v6611, 7
        %v6613 = vsub.s32 %v6610, %v6612
        %v6614 = vrot.slane %v6604, %v6613
        %v6616 = vunpack.c.l.s4 1966171168
        %v6617 = vunpack.c.0.s8 %v6616
        %v6618 = vlaneseq
        %v6619 = vshrl.u32 %v6618, 7
        %v6620 = vsub.s32 %v6617, %v6619
        %v6621 = vrot.slane %v6605, %v6620
        %v6623 = vunpack.c.l.s4 1966171168
        %v6624 = vunpack.c.0.s8 %v6623
        %v6625 = vlaneseq
        %v6626 = vshrl.u32 %v6625, 7
        %v6627 = vsub.s32 %v6624, %v6626
        %v6628 = vrot.slane %v6606, %v6627
        %v6630 = vunpack.c.l.s4 1966171168
        %v6631 = vunpack.c.0.s8 %v6630
        %v6632 = vlaneseq
        %v6633 = vshrl.u32 %v6632, 7
        %v6634 = vsub.s32 %v6631, %v6633
        %v6635 = vrot.slane %v6607, %v6634
        %v6636 = vcombine.low %v6614, %v6621
        %v6637 = vcombine.low %v6628, %v6635
        %v6639 = vunpack.c.l.s4 1966171168
        %v6640 = vunpack.c.0.s8 %v6639
        %v6641 = vlaneseq
        %v6642 = vshrl.u32 %v6641, 7
        %v6643 = vsub.s32 %v6640, %v6642
        %v6644 = vrot.slane %v6636, %v6643
        %v6646 = vunpack.c.l.s4 1966171168
        %v6647 = vunpack.c.0.s8 %v6646
        %v6648 = vlaneseq
        %v6649 = vshrl.u32 %v6648, 7
        %v6650 = vsub.s32 %v6647, %v6649
        %v6651 = vrot.slane %v6637, %v6650
        %v6652 = vcombine.low %v6644, %v6651
        %v6653 = vcombine.low %v3724, %v3728
        %v6654 = vcombine.low %v3732, %v3736
        %v6655 = vcombine.low %v3740, %v3744
        %v6656 = vcombine.low %v3748, %v3752
        %v6658 = vunpack.c.l.s4 1966171168
        %v6659 = vunpack.c.0.s8 %v6658
        %v6660 = vlaneseq
        %v6661 = vshrl.u32 %v6660, 7
        %v6662 = vsub.s32 %v6659, %v6661
        %v6663 = vrot.slane %v6653, %v6662
        %v6665 = vunpack.c.l.s4 1966171168
        %v6666 = vunpack.c.0.s8 %v6665
        %v6667 = vlaneseq
        %v6668 = vshrl.u32 %v6667, 7
        %v6669 = vsub.s32 %v6666, %v6668
        %v6670 = vrot.slane %v6654, %v6669
        %v6672 = vunpack.c.l.s4 1966171168
        %v6673 = vunpack.c.0.s8 %v6672
        %v6674 = vlaneseq
        %v6675 = vshrl.u32 %v6674, 7
        %v6676 = vsub.s32 %v6673, %v6675
        %v6677 = vrot.slane %v6655, %v6676
        %v6679 = vunpack.c.l.s4 1966171168
        %v6680 = vunpack.c.0.s8 %v6679
        %v6681 = vlaneseq
        %v6682 = vshrl.u32 %v6681, 7
        %v6683 = vsub.s32 %v6680, %v6682
        %v6684 = vrot.slane %v6656, %v6683
        %v6685 = vcombine.low %v6663, %v6670
        %v6686 = vcombine.low %v6677, %v6684
        %v6688 = vunpack.c.l.s4 1966171168
        %v6689 = vunpack.c.0.s8 %v6688
        %v6690 = vlaneseq
        %v6691 = vshrl.u32 %v6690, 7
        %v6692 = vsub.s32 %v6689, %v6691
        %v6693 = vrot.slane %v6685, %v6692
        %v6695 = vunpack.c.l.s4 1966171168
        %v6696 = vunpack.c.0.s8 %v6695
        %v6697 = vlaneseq
        %v6698 = vshrl.u32 %v6697, 7
        %v6699 = vsub.s32 %v6696, %v6698
        %v6700 = vrot.slane %v6686, %v6699
        %v6701 = vcombine.low %v6693, %v6700
        %v6702 = vcombine.low %v3756, %v3760
        %v6703 = vcombine.low %v3764, %v3768
        %v6704 = vcombine.low %v3772, %v3776
        %v6705 = vcombine.low %v3780, %v3784
        %v6707 = vunpack.c.l.s4 1966171168
        %v6708 = vunpack.c.0.s8 %v6707
        %v6709 = vlaneseq
        %v6710 = vshrl.u32 %v6709, 7
        %v6711 = vsub.s32 %v6708, %v6710
        %v6712 = vrot.slane %v6702, %v6711
        %v6714 = vunpack.c.l.s4 1966171168
        %v6715 = vunpack.c.0.s8 %v6714
        %v6716 = vlaneseq
        %v6717 = vshrl.u32 %v6716, 7
        %v6718 = vsub.s32 %v6715, %v6717
        %v6719 = vrot.slane %v6703, %v6718
        %v6721 = vunpack.c.l.s4 1966171168
        %v6722 = vunpack.c.0.s8 %v6721
        %v6723 = vlaneseq
        %v6724 = vshrl.u32 %v6723, 7
        %v6725 = vsub.s32 %v6722, %v6724
        %v6726 = vrot.slane %v6704, %v6725
        %v6728 = vunpack.c.l.s4 1966171168
        %v6729 = vunpack.c.0.s8 %v6728
        %v6730 = vlaneseq
        %v6731 = vshrl.u32 %v6730, 7
        %v6732 = vsub.s32 %v6729, %v6731
        %v6733 = vrot.slane %v6705, %v6732
        %v6734 = vcombine.low %v6712, %v6719
        %v6735 = vcombine.low %v6726, %v6733
        %v6737 = vunpack.c.l.s4 1966171168
        %v6738 = vunpack.c.0.s8 %v6737
        %v6739 = vlaneseq
        %v6740 = vshrl.u32 %v6739, 7
        %v6741 = vsub.s32 %v6738, %v6740
        %v6742 = vrot.slane %v6734, %v6741
        %v6744 = vunpack.c.l.s4 1966171168
        %v6745 = vunpack.c.0.s8 %v6744
        %v6746 = vlaneseq
        %v6747 = vshrl.u32 %v6746, 7
        %v6748 = vsub.s32 %v6745, %v6747
        %v6749 = vrot.slane %v6735, %v6748
        %v6750 = vcombine.low %v6742, %v6749
        %v6751 = vcombine.low %v3788, %v3792
        %v6752 = vcombine.low %v3796, %v3800
        %v6753 = vcombine.low %v3804, %v3808
        %v6754 = vcombine.low %v3812, %v3816
        %v6756 = vunpack.c.l.s4 1966171168
        %v6757 = vunpack.c.0.s8 %v6756
        %v6758 = vlaneseq
        %v6759 = vshrl.u32 %v6758, 7
        %v6760 = vsub.s32 %v6757, %v6759
        %v6761 = vrot.slane %v6751, %v6760
        %v6763 = vunpack.c.l.s4 1966171168
        %v6764 = vunpack.c.0.s8 %v6763
        %v6765 = vlaneseq
        %v6766 = vshrl.u32 %v6765, 7
        %v6767 = vsub.s32 %v6764, %v6766
        %v6768 = vrot.slane %v6752, %v6767
        %v6770 = vunpack.c.l.s4 1966171168
        %v6771 = vunpack.c.0.s8 %v6770
        %v6772 = vlaneseq
        %v6773 = vshrl.u32 %v6772, 7
        %v6774 = vsub.s32 %v6771, %v6773
        %v6775 = vrot.slane %v6753, %v6774
        %v6777 = vunpack.c.l.s4 1966171168
        %v6778 = vunpack.c.0.s8 %v6777
        %v6779 = vlaneseq
        %v6780 = vshrl.u32 %v6779, 7
        %v6781 = vsub.s32 %v6778, %v6780
        %v6782 = vrot.slane %v6754, %v6781
        %v6783 = vcombine.low %v6761, %v6768
        %v6784 = vcombine.low %v6775, %v6782
        %v6786 = vunpack.c.l.s4 1966171168
        %v6787 = vunpack.c.0.s8 %v6786
        %v6788 = vlaneseq
        %v6789 = vshrl.u32 %v6788, 7
        %v6790 = vsub.s32 %v6787, %v6789
        %v6791 = vrot.slane %v6783, %v6790
        %v6793 = vunpack.c.l.s4 1966171168
        %v6794 = vunpack.c.0.s8 %v6793
        %v6795 = vlaneseq
        %v6796 = vshrl.u32 %v6795, 7
        %v6797 = vsub.s32 %v6794, %v6796
        %v6798 = vrot.slane %v6784, %v6797
        %v6799 = vcombine.low %v6791, %v6798
        %v6800 = vcombine.low %v3820, %v3824
        %v6801 = vcombine.low %v3828, %v3832
        %v6802 = vcombine.low %v3836, %v3840
        %v6803 = vcombine.low %v3844, %v3848
        %v6805 = vunpack.c.l.s4 1966171168
        %v6806 = vunpack.c.0.s8 %v6805
        %v6807 = vlaneseq
        %v6808 = vshrl.u32 %v6807, 7
        %v6809 = vsub.s32 %v6806, %v6808
        %v6810 = vrot.slane %v6800, %v6809
        %v6812 = vunpack.c.l.s4 1966171168
        %v6813 = vunpack.c.0.s8 %v6812
        %v6814 = vlaneseq
        %v6815 = vshrl.u32 %v6814, 7
        %v6816 = vsub.s32 %v6813, %v6815
        %v6817 = vrot.slane %v6801, %v6816
        %v6819 = vunpack.c.l.s4 1966171168
        %v6820 = vunpack.c.0.s8 %v6819
        %v6821 = vlaneseq
        %v6822 = vshrl.u32 %v6821, 7
        %v6823 = vsub.s32 %v6820, %v6822
        %v6824 = vrot.slane %v6802, %v6823
        %v6826 = vunpack.c.l.s4 1966171168
        %v6827 = vunpack.c.0.s8 %v6826
        %v6828 = vlaneseq
        %v6829 = vshrl.u32 %v6828, 7
        %v6830 = vsub.s32 %v6827, %v6829
        %v6831 = vrot.slane %v6803, %v6830
        %v6832 = vcombine.low %v6810, %v6817
        %v6833 = vcombine.low %v6824, %v6831
        %v6835 = vunpack.c.l.s4 1966171168
        %v6836 = vunpack.c.0.s8 %v6835
        %v6837 = vlaneseq
        %v6838 = vshrl.u32 %v6837, 7
        %v6839 = vsub.s32 %v6836, %v6838
        %v6840 = vrot.slane %v6832, %v6839
        %v6842 = vunpack.c.l.s4 1966171168
        %v6843 = vunpack.c.0.s8 %v6842
        %v6844 = vlaneseq
        %v6845 = vshrl.u32 %v6844, 7
        %v6846 = vsub.s32 %v6843, %v6845
        %v6847 = vrot.slane %v6833, %v6846
        %v6848 = vcombine.low %v6840, %v6847
        %v6849 = vcombine.low %v3852, %v3856
        %v6850 = vcombine.low %v3860, %v3864
        %v6851 = vcombine.low %v3868, %v3872
        %v6852 = vcombine.low %v3876, %v3880
        %v6854 = vunpack.c.l.s4 1966171168
        %v6855 = vunpack.c.0.s8 %v6854
        %v6856 = vlaneseq
        %v6857 = vshrl.u32 %v6856, 7
        %v6858 = vsub.s32 %v6855, %v6857
        %v6859 = vrot.slane %v6849, %v6858
        %v6861 = vunpack.c.l.s4 1966171168
        %v6862 = vunpack.c.0.s8 %v6861
        %v6863 = vlaneseq
        %v6864 = vshrl.u32 %v6863, 7
        %v6865 = vsub.s32 %v6862, %v6864
        %v6866 = vrot.slane %v6850, %v6865
        %v6868 = vunpack.c.l.s4 1966171168
        %v6869 = vunpack.c.0.s8 %v6868
        %v6870 = vlaneseq
        %v6871 = vshrl.u32 %v6870, 7
        %v6872 = vsub.s32 %v6869, %v6871
        %v6873 = vrot.slane %v6851, %v6872
        %v6875 = vunpack.c.l.s4 1966171168
        %v6876 = vunpack.c.0.s8 %v6875
        %v6877 = vlaneseq
        %v6878 = vshrl.u32 %v6877, 7
        %v6879 = vsub.s32 %v6876, %v6878
        %v6880 = vrot.slane %v6852, %v6879
        %v6881 = vcombine.low %v6859, %v6866
        %v6882 = vcombine.low %v6873, %v6880
        %v6884 = vunpack.c.l.s4 1966171168
        %v6885 = vunpack.c.0.s8 %v6884
        %v6886 = vlaneseq
        %v6887 = vshrl.u32 %v6886, 7
        %v6888 = vsub.s32 %v6885, %v6887
        %v6889 = vrot.slane %v6881, %v6888
        %v6891 = vunpack.c.l.s4 1966171168
        %v6892 = vunpack.c.0.s8 %v6891
        %v6893 = vlaneseq
        %v6894 = vshrl.u32 %v6893, 7
        %v6895 = vsub.s32 %v6892, %v6894
        %v6896 = vrot.slane %v6882, %v6895
        %v6897 = vcombine.low %v6889, %v6896
        %v6898 = vcombine.low %v3884, %v3888
        %v6899 = vcombine.low %v3892, %v3896
        %v6900 = vcombine.low %v3900, %v3904
        %v6901 = vcombine.low %v3908, %v3912
        %v6903 = vunpack.c.l.s4 1966171168
        %v6904 = vunpack.c.0.s8 %v6903
        %v6905 = vlaneseq
        %v6906 = vshrl.u32 %v6905, 7
        %v6907 = vsub.s32 %v6904, %v6906
        %v6908 = vrot.slane %v6898, %v6907
        %v6910 = vunpack.c.l.s4 1966171168
        %v6911 = vunpack.c.0.s8 %v6910
        %v6912 = vlaneseq
        %v6913 = vshrl.u32 %v6912, 7
        %v6914 = vsub.s32 %v6911, %v6913
        %v6915 = vrot.slane %v6899, %v6914
        %v6917 = vunpack.c.l.s4 1966171168
        %v6918 = vunpack.c.0.s8 %v6917
        %v6919 = vlaneseq
        %v6920 = vshrl.u32 %v6919, 7
        %v6921 = vsub.s32 %v6918, %v6920
        %v6922 = vrot.slane %v6900, %v6921
        %v6924 = vunpack.c.l.s4 1966171168
        %v6925 = vunpack.c.0.s8 %v6924
        %v6926 = vlaneseq
        %v6927 = vshrl.u32 %v6926, 7
        %v6928 = vsub.s32 %v6925, %v6927
        %v6929 = vrot.slane %v6901, %v6928
        %v6930 = vcombine.low %v6908, %v6915
        %v6931 = vcombine.low %v6922, %v6929
        %v6933 = vunpack.c.l.s4 1966171168
        %v6934 = vunpack.c.0.s8 %v6933
        %v6935 = vlaneseq
        %v6936 = vshrl.u32 %v6935, 7
        %v6937 = vsub.s32 %v6934, %v6936
        %v6938 = vrot.slane %v6930, %v6937
        %v6940 = vunpack.c.l.s4 1966171168
        %v6941 = vunpack.c.0.s8 %v6940
        %v6942 = vlaneseq
        %v6943 = vshrl.u32 %v6942, 7
        %v6944 = vsub.s32 %v6941, %v6943
        %v6945 = vrot.slane %v6931, %v6944
        %v6946 = vcombine.low %v6938, %v6945
        %v6947 = vcombine.low %v3916, %v3920
        %v6948 = vcombine.low %v3924, %v3928
        %v6949 = vcombine.low %v3932, %v3936
        %v6950 = vcombine.low %v3940, %v3944
        %v6952 = vunpack.c.l.s4 1966171168
        %v6953 = vunpack.c.0.s8 %v6952
        %v6954 = vlaneseq
        %v6955 = vshrl.u32 %v6954, 7
        %v6956 = vsub.s32 %v6953, %v6955
        %v6957 = vrot.slane %v6947, %v6956
        %v6959 = vunpack.c.l.s4 1966171168
        %v6960 = vunpack.c.0.s8 %v6959
        %v6961 = vlaneseq
        %v6962 = vshrl.u32 %v6961, 7
        %v6963 = vsub.s32 %v6960, %v6962
        %v6964 = vrot.slane %v6948, %v6963
        %v6966 = vunpack.c.l.s4 1966171168
        %v6967 = vunpack.c.0.s8 %v6966
        %v6968 = vlaneseq
        %v6969 = vshrl.u32 %v6968, 7
        %v6970 = vsub.s32 %v6967, %v6969
        %v6971 = vrot.slane %v6949, %v6970
        %v6973 = vunpack.c.l.s4 1966171168
        %v6974 = vunpack.c.0.s8 %v6973
        %v6975 = vlaneseq
        %v6976 = vshrl.u32 %v6975, 7
        %v6977 = vsub.s32 %v6974, %v6976
        %v6978 = vrot.slane %v6950, %v6977
        %v6979 = vcombine.low %v6957, %v6964
        %v6980 = vcombine.low %v6971, %v6978
        %v6982 = vunpack.c.l.s4 1966171168
        %v6983 = vunpack.c.0.s8 %v6982
        %v6984 = vlaneseq
        %v6985 = vshrl.u32 %v6984, 7
        %v6986 = vsub.s32 %v6983, %v6985
        %v6987 = vrot.slane %v6979, %v6986
        %v6989 = vunpack.c.l.s4 1966171168
        %v6990 = vunpack.c.0.s8 %v6989
        %v6991 = vlaneseq
        %v6992 = vshrl.u32 %v6991, 7
        %v6993 = vsub.s32 %v6990, %v6992
        %v6994 = vrot.slane %v6980, %v6993
        %v6995 = vcombine.low %v6987, %v6994
        %v6996 = vcombine.low %v3948, %v3952
        %v6997 = vcombine.low %v3956, %v3960
        %v6998 = vcombine.low %v3964, %v3968
        %v6999 = vcombine.low %v3972, %v3976
        %v7001 = vunpack.c.l.s4 1966171168
        %v7002 = vunpack.c.0.s8 %v7001
        %v7003 = vlaneseq
        %v7004 = vshrl.u32 %v7003, 7
        %v7005 = vsub.s32 %v7002, %v7004
        %v7006 = vrot.slane %v6996, %v7005
        %v7008 = vunpack.c.l.s4 1966171168
        %v7009 = vunpack.c.0.s8 %v7008
        %v7010 = vlaneseq
        %v7011 = vshrl.u32 %v7010, 7
        %v7012 = vsub.s32 %v7009, %v7011
        %v7013 = vrot.slane %v6997, %v7012
        %v7015 = vunpack.c.l.s4 1966171168
        %v7016 = vunpack.c.0.s8 %v7015
        %v7017 = vlaneseq
        %v7018 = vshrl.u32 %v7017, 7
        %v7019 = vsub.s32 %v7016, %v7018
        %v7020 = vrot.slane %v6998, %v7019
        %v7022 = vunpack.c.l.s4 1966171168
        %v7023 = vunpack.c.0.s8 %v7022
        %v7024 = vlaneseq
        %v7025 = vshrl.u32 %v7024, 7
        %v7026 = vsub.s32 %v7023, %v7025
        %v7027 = vrot.slane %v6999, %v7026
        %v7028 = vcombine.low %v7006, %v7013
        %v7029 = vcombine.low %v7020, %v7027
        %v7031 = vunpack.c.l.s4 1966171168
        %v7032 = vunpack.c.0.s8 %v7031
        %v7033 = vlaneseq
        %v7034 = vshrl.u32 %v7033, 7
        %v7035 = vsub.s32 %v7032, %v7034
        %v7036 = vrot.slane %v7028, %v7035
        %v7038 = vunpack.c.l.s4 1966171168
        %v7039 = vunpack.c.0.s8 %v7038
        %v7040 = vlaneseq
        %v7041 = vshrl.u32 %v7040, 7
        %v7042 = vsub.s32 %v7039, %v7041
        %v7043 = vrot.slane %v7029, %v7042
        %v7044 = vcombine.low %v7036, %v7043
        %v7045 = vcombine.low %v3980, %v3984
        %v7046 = vcombine.low %v3988, %v3992
        %v7047 = vcombine.low %v3996, %v4000
        %v7048 = vcombine.low %v4004, %v4008
        %v7050 = vunpack.c.l.s4 1966171168
        %v7051 = vunpack.c.0.s8 %v7050
        %v7052 = vlaneseq
        %v7053 = vshrl.u32 %v7052, 7
        %v7054 = vsub.s32 %v7051, %v7053
        %v7055 = vrot.slane %v7045, %v7054
        %v7057 = vunpack.c.l.s4 1966171168
        %v7058 = vunpack.c.0.s8 %v7057
        %v7059 = vlaneseq
        %v7060 = vshrl.u32 %v7059, 7
        %v7061 = vsub.s32 %v7058, %v7060
        %v7062 = vrot.slane %v7046, %v7061
        %v7064 = vunpack.c.l.s4 1966171168
        %v7065 = vunpack.c.0.s8 %v7064
        %v7066 = vlaneseq
        %v7067 = vshrl.u32 %v7066, 7
        %v7068 = vsub.s32 %v7065, %v7067
        %v7069 = vrot.slane %v7047, %v7068
        %v7071 = vunpack.c.l.s4 1966171168
        %v7072 = vunpack.c.0.s8 %v7071
        %v7073 = vlaneseq
        %v7074 = vshrl.u32 %v7073, 7
        %v7075 = vsub.s32 %v7072, %v7074
        %v7076 = vrot.slane %v7048, %v7075
        %v7077 = vcombine.low %v7055, %v7062
        %v7078 = vcombine.low %v7069, %v7076
        %v7080 = vunpack.c.l.s4 1966171168
        %v7081 = vunpack.c.0.s8 %v7080
        %v7082 = vlaneseq
        %v7083 = vshrl.u32 %v7082, 7
        %v7084 = vsub.s32 %v7081, %v7083
        %v7085 = vrot.slane %v7077, %v7084
        %v7087 = vunpack.c.l.s4 1966171168
        %v7088 = vunpack.c.0.s8 %v7087
        %v7089 = vlaneseq
        %v7090 = vshrl.u32 %v7089, 7
        %v7091 = vsub.s32 %v7088, %v7090
        %v7092 = vrot.slane %v7078, %v7091
        %v7093 = vcombine.low %v7085, %v7092
        %v7094 = vcombine.low %v4012, %v4016
        %v7095 = vcombine.low %v4020, %v4024
        %v7096 = vcombine.low %v4028, %v4032
        %v7097 = vcombine.low %v4036, %v4040
        %v7099 = vunpack.c.l.s4 1966171168
        %v7100 = vunpack.c.0.s8 %v7099
        %v7101 = vlaneseq
        %v7102 = vshrl.u32 %v7101, 7
        %v7103 = vsub.s32 %v7100, %v7102
        %v7104 = vrot.slane %v7094, %v7103
        %v7106 = vunpack.c.l.s4 1966171168
        %v7107 = vunpack.c.0.s8 %v7106
        %v7108 = vlaneseq
        %v7109 = vshrl.u32 %v7108, 7
        %v7110 = vsub.s32 %v7107, %v7109
        %v7111 = vrot.slane %v7095, %v7110
        %v7113 = vunpack.c.l.s4 1966171168
        %v7114 = vunpack.c.0.s8 %v7113
        %v7115 = vlaneseq
        %v7116 = vshrl.u32 %v7115, 7
        %v7117 = vsub.s32 %v7114, %v7116
        %v7118 = vrot.slane %v7096, %v7117
        %v7120 = vunpack.c.l.s4 1966171168
        %v7121 = vunpack.c.0.s8 %v7120
        %v7122 = vlaneseq
        %v7123 = vshrl.u32 %v7122, 7
        %v7124 = vsub.s32 %v7121, %v7123
        %v7125 = vrot.slane %v7097, %v7124
        %v7126 = vcombine.low %v7104, %v7111
        %v7127 = vcombine.low %v7118, %v7125
        %v7129 = vunpack.c.l.s4 1966171168
        %v7130 = vunpack.c.0.s8 %v7129
        %v7131 = vlaneseq
        %v7132 = vshrl.u32 %v7131, 7
        %v7133 = vsub.s32 %v7130, %v7132
        %v7134 = vrot.slane %v7126, %v7133
        %v7136 = vunpack.c.l.s4 1966171168
        %v7137 = vunpack.c.0.s8 %v7136
        %v7138 = vlaneseq
        %v7139 = vshrl.u32 %v7138, 7
        %v7140 = vsub.s32 %v7137, %v7139
        %v7141 = vrot.slane %v7127, %v7140
        %v7142 = vcombine.low %v7134, %v7141
        %v7143 = vcombine.low %v4044, %v4048
        %v7144 = vcombine.low %v4052, %v4056
        %v7145 = vcombine.low %v4060, %v4064
        %v7146 = vcombine.low %v4068, %v4072
        %v7148 = vunpack.c.l.s4 1966171168
        %v7149 = vunpack.c.0.s8 %v7148
        %v7150 = vlaneseq
        %v7151 = vshrl.u32 %v7150, 7
        %v7152 = vsub.s32 %v7149, %v7151
        %v7153 = vrot.slane %v7143, %v7152
        %v7155 = vunpack.c.l.s4 1966171168
        %v7156 = vunpack.c.0.s8 %v7155
        %v7157 = vlaneseq
        %v7158 = vshrl.u32 %v7157, 7
        %v7159 = vsub.s32 %v7156, %v7158
        %v7160 = vrot.slane %v7144, %v7159
        %v7162 = vunpack.c.l.s4 1966171168
        %v7163 = vunpack.c.0.s8 %v7162
        %v7164 = vlaneseq
        %v7165 = vshrl.u32 %v7164, 7
        %v7166 = vsub.s32 %v7163, %v7165
        %v7167 = vrot.slane %v7145, %v7166
        %v7169 = vunpack.c.l.s4 1966171168
        %v7170 = vunpack.c.0.s8 %v7169
        %v7171 = vlaneseq
        %v7172 = vshrl.u32 %v7171, 7
        %v7173 = vsub.s32 %v7170, %v7172
        %v7174 = vrot.slane %v7146, %v7173
        %v7175 = vcombine.low %v7153, %v7160
        %v7176 = vcombine.low %v7167, %v7174
        %v7178 = vunpack.c.l.s4 1966171168
        %v7179 = vunpack.c.0.s8 %v7178
        %v7180 = vlaneseq
        %v7181 = vshrl.u32 %v7180, 7
        %v7182 = vsub.s32 %v7179, %v7181
        %v7183 = vrot.slane %v7175, %v7182
        %v7185 = vunpack.c.l.s4 1966171168
        %v7186 = vunpack.c.0.s8 %v7185
        %v7187 = vlaneseq
        %v7188 = vshrl.u32 %v7187, 7
        %v7189 = vsub.s32 %v7186, %v7188
        %v7190 = vrot.slane %v7176, %v7189
        %v7191 = vcombine.low %v7183, %v7190
        %v7192 = vcombine.low %v4076, %v4080
        %v7193 = vcombine.low %v4084, %v4088
        %v7194 = vcombine.low %v4092, %v4096
        %v7195 = vcombine.low %v4100, %v4104
        %v7197 = vunpack.c.l.s4 1966171168
        %v7198 = vunpack.c.0.s8 %v7197
        %v7199 = vlaneseq
        %v7200 = vshrl.u32 %v7199, 7
        %v7201 = vsub.s32 %v7198, %v7200
        %v7202 = vrot.slane %v7192, %v7201
        %v7204 = vunpack.c.l.s4 1966171168
        %v7205 = vunpack.c.0.s8 %v7204
        %v7206 = vlaneseq
        %v7207 = vshrl.u32 %v7206, 7
        %v7208 = vsub.s32 %v7205, %v7207
        %v7209 = vrot.slane %v7193, %v7208
        %v7211 = vunpack.c.l.s4 1966171168
        %v7212 = vunpack.c.0.s8 %v7211
        %v7213 = vlaneseq
        %v7214 = vshrl.u32 %v7213, 7
        %v7215 = vsub.s32 %v7212, %v7214
        %v7216 = vrot.slane %v7194, %v7215
        %v7218 = vunpack.c.l.s4 1966171168
        %v7219 = vunpack.c.0.s8 %v7218
        %v7220 = vlaneseq
        %v7221 = vshrl.u32 %v7220, 7
        %v7222 = vsub.s32 %v7219, %v7221
        %v7223 = vrot.slane %v7195, %v7222
        %v7224 = vcombine.low %v7202, %v7209
        %v7225 = vcombine.low %v7216, %v7223
        %v7227 = vunpack.c.l.s4 1966171168
        %v7228 = vunpack.c.0.s8 %v7227
        %v7229 = vlaneseq
        %v7230 = vshrl.u32 %v7229, 7
        %v7231 = vsub.s32 %v7228, %v7230
        %v7232 = vrot.slane %v7224, %v7231
        %v7234 = vunpack.c.l.s4 1966171168
        %v7235 = vunpack.c.0.s8 %v7234
        %v7236 = vlaneseq
        %v7237 = vshrl.u32 %v7236, 7
        %v7238 = vsub.s32 %v7235, %v7237
        %v7239 = vrot.slane %v7225, %v7238
        %v7240 = vcombine.low %v7232, %v7239
        %7241 = vset.pattern.permute.xlu0 0
        %7242 = vperm.xlu0 %7241, %v4153
        %v7243 = vpop.permute.xlu0 %7242
        %7244 = vset.pattern.permute.xlu0 0
        %7245 = vperm.xlu0 %7244, %v4202
        %v7246 = vpop.permute.xlu0 %7245
        %7247 = vset.pattern.permute.xlu0 0
        %7248 = vperm.xlu0 %7247, %v4251
        %v7249 = vpop.permute.xlu0 %7248
        %7250 = vset.pattern.permute.xlu0 0
        %7251 = vperm.xlu0 %7250, %v4300
        %v7252 = vpop.permute.xlu0 %7251
        %7253 = vset.pattern.permute.xlu0 0
        %7254 = vperm.xlu0 %7253, %v4349
        %v7255 = vpop.permute.xlu0 %7254
        %7256 = vset.pattern.permute.xlu0 0
        %7257 = vperm.xlu0 %7256, %v4398
        %v7258 = vpop.permute.xlu0 %7257
        %7259 = vset.pattern.permute.xlu0 0
        %7260 = vperm.xlu0 %7259, %v4447
        %v7261 = vpop.permute.xlu0 %7260
        %7262 = vset.pattern.permute.xlu0 0
        %7263 = vperm.xlu0 %7262, %v4496
        %v7264 = vpop.permute.xlu0 %7263
        %7265 = vset.pattern.permute.xlu0 0
        %7266 = vperm.xlu0 %7265, %v4545
        %v7267 = vpop.permute.xlu0 %7266
        %7268 = vset.pattern.permute.xlu0 0
        %7269 = vperm.xlu0 %7268, %v4594
        %v7270 = vpop.permute.xlu0 %7269
        %7271 = vset.pattern.permute.xlu0 0
        %7272 = vperm.xlu0 %7271, %v4643
        %v7273 = vpop.permute.xlu0 %7272
        %7274 = vset.pattern.permute.xlu0 0
        %7275 = vperm.xlu0 %7274, %v4692
        %v7276 = vpop.permute.xlu0 %7275
        %7277 = vset.pattern.permute.xlu0 0
        %7278 = vperm.xlu0 %7277, %v4741
        %v7279 = vpop.permute.xlu0 %7278
        %7280 = vset.pattern.permute.xlu0 0
        %7281 = vperm.xlu0 %7280, %v4790
        %v7282 = vpop.permute.xlu0 %7281
        %7283 = vset.pattern.permute.xlu0 0
        %7284 = vperm.xlu0 %7283, %v4839
        %v7285 = vpop.permute.xlu0 %7284
        %7286 = vset.pattern.permute.xlu0 0
        %7287 = vperm.xlu0 %7286, %v4888
        %v7288 = vpop.permute.xlu0 %7287
        %7289 = vset.pattern.permute.xlu0 0
        %7290 = vperm.xlu0 %7289, %v4937
        %v7291 = vpop.permute.xlu0 %7290
        %7292 = vset.pattern.permute.xlu0 0
        %7293 = vperm.xlu0 %7292, %v4986
        %v7294 = vpop.permute.xlu0 %7293
        %7295 = vset.pattern.permute.xlu0 0
        %7296 = vperm.xlu0 %7295, %v5035
        %v7297 = vpop.permute.xlu0 %7296
        %7298 = vset.pattern.permute.xlu0 0
        %7299 = vperm.xlu0 %7298, %v5084
        %v7300 = vpop.permute.xlu0 %7299
        %7301 = vset.pattern.permute.xlu0 0
        %7302 = vperm.xlu0 %7301, %v5133
        %v7303 = vpop.permute.xlu0 %7302
        %7304 = vset.pattern.permute.xlu0 0
        %7305 = vperm.xlu0 %7304, %v5182
        %v7306 = vpop.permute.xlu0 %7305
        %7307 = vset.pattern.permute.xlu0 0
        %7308 = vperm.xlu0 %7307, %v5231
        %v7309 = vpop.permute.xlu0 %7308
        %7310 = vset.pattern.permute.xlu0 0
        %7311 = vperm.xlu0 %7310, %v5280
        %v7312 = vpop.permute.xlu0 %7311
        %7313 = vset.pattern.permute.xlu0 0
        %7314 = vperm.xlu0 %7313, %v5329
        %v7315 = vpop.permute.xlu0 %7314
        %7316 = vset.pattern.permute.xlu0 0
        %7317 = vperm.xlu0 %7316, %v5378
        %v7318 = vpop.permute.xlu0 %7317
        %7319 = vset.pattern.permute.xlu0 0
        %7320 = vperm.xlu0 %7319, %v5427
        %v7321 = vpop.permute.xlu0 %7320
        %7322 = vset.pattern.permute.xlu0 0
        %7323 = vperm.xlu0 %7322, %v5476
        %v7324 = vpop.permute.xlu0 %7323
        %7325 = vset.pattern.permute.xlu0 0
        %7326 = vperm.xlu0 %7325, %v5525
        %v7327 = vpop.permute.xlu0 %7326
        %7328 = vset.pattern.permute.xlu0 0
        %7329 = vperm.xlu0 %7328, %v5574
        %v7330 = vpop.permute.xlu0 %7329
        %7331 = vset.pattern.permute.xlu0 0
        %7332 = vperm.xlu0 %7331, %v5623
        %v7333 = vpop.permute.xlu0 %7332
        %7334 = vset.pattern.permute.xlu0 0
        %7335 = vperm.xlu0 %7334, %v5672
        %v7336 = vpop.permute.xlu0 %7335
        %7337 = vset.pattern.permute.xlu0 0
        %7338 = vperm.xlu0 %7337, %v5721
        %v7339 = vpop.permute.xlu0 %7338
        %7340 = vset.pattern.permute.xlu0 0
        %7341 = vperm.xlu0 %7340, %v5770
        %v7342 = vpop.permute.xlu0 %7341
        %7343 = vset.pattern.permute.xlu0 0
        %7344 = vperm.xlu0 %7343, %v5819
        %v7345 = vpop.permute.xlu0 %7344
        %7346 = vset.pattern.permute.xlu0 0
        %7347 = vperm.xlu0 %7346, %v5868
        %v7348 = vpop.permute.xlu0 %7347
        %7349 = vset.pattern.permute.xlu0 0
        %7350 = vperm.xlu0 %7349, %v5917
        %v7351 = vpop.permute.xlu0 %7350
        %7352 = vset.pattern.permute.xlu0 0
        %7353 = vperm.xlu0 %7352, %v5966
        %v7354 = vpop.permute.xlu0 %7353
        %7355 = vset.pattern.permute.xlu0 0
        %7356 = vperm.xlu0 %7355, %v6015
        %v7357 = vpop.permute.xlu0 %7356
        %7358 = vset.pattern.permute.xlu0 0
        %7359 = vperm.xlu0 %7358, %v6064
        %v7360 = vpop.permute.xlu0 %7359
        %7361 = vset.pattern.permute.xlu0 0
        %7362 = vperm.xlu0 %7361, %v6113
        %v7363 = vpop.permute.xlu0 %7362
        %7364 = vset.pattern.permute.xlu0 0
        %7365 = vperm.xlu0 %7364, %v6162
        %v7366 = vpop.permute.xlu0 %7365
        %7367 = vset.pattern.permute.xlu0 0
        %7368 = vperm.xlu0 %7367, %v6211
        %v7369 = vpop.permute.xlu0 %7368
        %7370 = vset.pattern.permute.xlu0 0
        %7371 = vperm.xlu0 %7370, %v6260
        %v7372 = vpop.permute.xlu0 %7371
        %7373 = vset.pattern.permute.xlu0 0
        %7374 = vperm.xlu0 %7373, %v6309
        %v7375 = vpop.permute.xlu0 %7374
        %7376 = vset.pattern.permute.xlu0 0
        %7377 = vperm.xlu0 %7376, %v6358
        %v7378 = vpop.permute.xlu0 %7377
        %7379 = vset.pattern.permute.xlu0 0
        %7380 = vperm.xlu0 %7379, %v6407
        %v7381 = vpop.permute.xlu0 %7380
        %7382 = vset.pattern.permute.xlu0 0
        %7383 = vperm.xlu0 %7382, %v6456
        %v7384 = vpop.permute.xlu0 %7383
        %7385 = vset.pattern.permute.xlu0 0
        %7386 = vperm.xlu0 %7385, %v6505
        %v7387 = vpop.permute.xlu0 %7386
        %7388 = vset.pattern.permute.xlu0 0
        %7389 = vperm.xlu0 %7388, %v6554
        %v7390 = vpop.permute.xlu0 %7389
        %7391 = vset.pattern.permute.xlu0 0
        %7392 = vperm.xlu0 %7391, %v6603
        %v7393 = vpop.permute.xlu0 %7392
        %7394 = vset.pattern.permute.xlu0 0
        %7395 = vperm.xlu0 %7394, %v6652
        %v7396 = vpop.permute.xlu0 %7395
        %7397 = vset.pattern.permute.xlu0 0
        %7398 = vperm.xlu0 %7397, %v6701
        %v7399 = vpop.permute.xlu0 %7398
        %7400 = vset.pattern.permute.xlu0 0
        %7401 = vperm.xlu0 %7400, %v6750
        %v7402 = vpop.permute.xlu0 %7401
        %7403 = vset.pattern.permute.xlu0 0
        %7404 = vperm.xlu0 %7403, %v6799
        %v7405 = vpop.permute.xlu0 %7404
        %7406 = vset.pattern.permute.xlu0 0
        %7407 = vperm.xlu0 %7406, %v6848
        %v7408 = vpop.permute.xlu0 %7407
        %7409 = vset.pattern.permute.xlu0 0
        %7410 = vperm.xlu0 %7409, %v6897
        %v7411 = vpop.permute.xlu0 %7410
        %7412 = vset.pattern.permute.xlu0 0
        %7413 = vperm.xlu0 %7412, %v6946
        %v7414 = vpop.permute.xlu0 %7413
        %7415 = vset.pattern.permute.xlu0 0
        %7416 = vperm.xlu0 %7415, %v6995
        %v7417 = vpop.permute.xlu0 %7416
        %7418 = vset.pattern.permute.xlu0 0
        %7419 = vperm.xlu0 %7418, %v7044
        %v7420 = vpop.permute.xlu0 %7419
        %7421 = vset.pattern.permute.xlu0 0
        %7422 = vperm.xlu0 %7421, %v7093
        %v7423 = vpop.permute.xlu0 %7422
        %7424 = vset.pattern.permute.xlu0 0
        %7425 = vperm.xlu0 %7424, %v7142
        %v7426 = vpop.permute.xlu0 %7425
        %7427 = vset.pattern.permute.xlu0 0
        %7428 = vperm.xlu0 %7427, %v7191
        %v7429 = vpop.permute.xlu0 %7428
        %7430 = vset.pattern.permute.xlu0 0
        %7431 = vperm.xlu0 %7430, %v7240
        %v7432 = vpop.permute.xlu0 %7431
        %v7433 = vlaneseq
        %v7434 = vand.u32 %v7433, 127
        %v7435 = vlaneseq
        %v7436 = vshrl.u32 %v7435, 7
        %v7437 = vsub.s32 %v7434, %v7436
        %v7438 = vrot.slane %v7243, %v7437
        %v7439 = vadd.s32 %v7434, 4294967288
        %v7440 = vlaneseq
        %v7441 = vshrl.u32 %v7440, 7
        %v7442 = vsub.s32 %v7439, %v7441
        %v7443 = vrot.slane %v7246, %v7442
        %vm7444 = vcmask 130112
        %v7445 = vsel %vm7444, %v7443, %v7438
        %v7446 = vadd.s32 %v7434, 4294967280
        %v7447 = vlaneseq
        %v7448 = vshrl.u32 %v7447, 7
        %v7449 = vsub.s32 %v7446, %v7448
        %v7450 = vrot.slane %v7249, %v7449
        %vm7451 = vcmask 195712
        %v7452 = vsel %vm7451, %v7450, %v7445
        %v7453 = vadd.s32 %v7434, 4294967272
        %v7454 = vlaneseq
        %v7455 = vshrl.u32 %v7454, 7
        %v7456 = vsub.s32 %v7453, %v7455
        %v7457 = vrot.slane %v7252, %v7456
        %vm7458 = vcmask 261312
        %v7459 = vsel %vm7458, %v7457, %v7452
        %v7460 = vadd.s32 %v7434, 4294967264
        %v7461 = vlaneseq
        %v7462 = vshrl.u32 %v7461, 7
        %v7463 = vsub.s32 %v7460, %v7462
        %v7464 = vrot.slane %v7255, %v7463
        %vm7465 = vcmask 326912
        %v7466 = vsel %vm7465, %v7464, %v7459
        %v7467 = vadd.s32 %v7434, 4294967256
        %v7468 = vlaneseq
        %v7469 = vshrl.u32 %v7468, 7
        %v7470 = vsub.s32 %v7467, %v7469
        %v7471 = vrot.slane %v7258, %v7470
        %vm7472 = vcmask 392512
        %v7473 = vsel %vm7472, %v7471, %v7466
        %v7474 = vadd.s32 %v7434, 4294967248
        %v7475 = vlaneseq
        %v7476 = vshrl.u32 %v7475, 7
        %v7477 = vsub.s32 %v7474, %v7476
        %v7478 = vrot.slane %v7261, %v7477
        %vm7479 = vcmask 458112
        %v7480 = vsel %vm7479, %v7478, %v7473
        %v7481 = vadd.s32 %v7434, 4294967240
        %v7482 = vlaneseq
        %v7483 = vshrl.u32 %v7482, 7
        %v7484 = vsub.s32 %v7481, %v7483
        %v7485 = vrot.slane %v7264, %v7484
        %vm7486 = vcmask 523712
        %v7487 = vsel %vm7486, %v7485, %v7480
        %v7488 = vadd.s32 %v7434, 4294967232
        %v7489 = vlaneseq
        %v7490 = vshrl.u32 %v7489, 7
        %v7491 = vsub.s32 %v7488, %v7490
        %v7492 = vrot.slane %v7267, %v7491
        %vm7493 = vcmask 589312
        %v7494 = vsel %vm7493, %v7492, %v7487
        %v7495 = vadd.s32 %v7434, 4294967224
        %v7496 = vlaneseq
        %v7497 = vshrl.u32 %v7496, 7
        %v7498 = vsub.s32 %v7495, %v7497
        %v7499 = vrot.slane %v7270, %v7498
        %vm7500 = vcmask 654912
        %v7501 = vsel %vm7500, %v7499, %v7494
        %v7502 = vadd.s32 %v7434, 4294967216
        %v7503 = vlaneseq
        %v7504 = vshrl.u32 %v7503, 7
        %v7505 = vsub.s32 %v7502, %v7504
        %v7506 = vrot.slane %v7273, %v7505
        %vm7507 = vcmask 720512
        %v7508 = vsel %vm7507, %v7506, %v7501
        %v7509 = vadd.s32 %v7434, 4294967208
        %v7510 = vlaneseq
        %v7511 = vshrl.u32 %v7510, 7
        %v7512 = vsub.s32 %v7509, %v7511
        %v7513 = vrot.slane %v7276, %v7512
        %vm7514 = vcmask 786112
        %v7515 = vsel %vm7514, %v7513, %v7508
        %v7516 = vadd.s32 %v7434, 4294967200
        %v7517 = vlaneseq
        %v7518 = vshrl.u32 %v7517, 7
        %v7519 = vsub.s32 %v7516, %v7518
        %v7520 = vrot.slane %v7279, %v7519
        %vm7521 = vcmask 851712
        %v7522 = vsel %vm7521, %v7520, %v7515
        %v7523 = vadd.s32 %v7434, 4294967192
        %v7524 = vlaneseq
        %v7525 = vshrl.u32 %v7524, 7
        %v7526 = vsub.s32 %v7523, %v7525
        %v7527 = vrot.slane %v7282, %v7526
        %vm7528 = vcmask 917312
        %v7529 = vsel %vm7528, %v7527, %v7522
        %v7530 = vadd.s32 %v7434, 4294967184
        %v7531 = vlaneseq
        %v7532 = vshrl.u32 %v7531, 7
        %v7533 = vsub.s32 %v7530, %v7532
        %v7534 = vrot.slane %v7285, %v7533
        %vm7535 = vcmask 982912
        %v7536 = vsel %vm7535, %v7534, %v7529
        %v7537 = vadd.s32 %v7434, 4294967176
        %v7538 = vlaneseq
        %v7539 = vshrl.u32 %v7538, 7
        %v7540 = vsub.s32 %v7537, %v7539
        %v7541 = vrot.slane %v7288, %v7540
        %vm7542 = vcmask 1048512
        %v7543 = vsel %vm7542, %v7541, %v7536
        %v7544 = vlaneseq
        %v7545 = vshrl.u32 %v7544, 7
        %v7546 = vsub.s32 %v7434, %v7545
        %v7547 = vrot.slane %v7291, %v7546
        %v7548 = vlaneseq
        %v7549 = vshrl.u32 %v7548, 7
        %v7550 = vsub.s32 %v7439, %v7549
        %v7551 = vrot.slane %v7294, %v7550
        %v7552 = vsel %vm7444, %v7551, %v7547
        %v7553 = vlaneseq
        %v7554 = vshrl.u32 %v7553, 7
        %v7555 = vsub.s32 %v7446, %v7554
        %v7556 = vrot.slane %v7297, %v7555
        %v7557 = vsel %vm7451, %v7556, %v7552
        %v7558 = vlaneseq
        %v7559 = vshrl.u32 %v7558, 7
        %v7560 = vsub.s32 %v7453, %v7559
        %v7561 = vrot.slane %v7300, %v7560
        %v7562 = vsel %vm7458, %v7561, %v7557
        %v7563 = vlaneseq
        %v7564 = vshrl.u32 %v7563, 7
        %v7565 = vsub.s32 %v7460, %v7564
        %v7566 = vrot.slane %v7303, %v7565
        %v7567 = vsel %vm7465, %v7566, %v7562
        %v7568 = vlaneseq
        %v7569 = vshrl.u32 %v7568, 7
        %v7570 = vsub.s32 %v7467, %v7569
        %v7571 = vrot.slane %v7306, %v7570
        %v7572 = vsel %vm7472, %v7571, %v7567
        %v7573 = vlaneseq
        %v7574 = vshrl.u32 %v7573, 7
        %v7575 = vsub.s32 %v7474, %v7574
        %v7576 = vrot.slane %v7309, %v7575
        %v7577 = vsel %vm7479, %v7576, %v7572
        %v7578 = vlaneseq
        %v7579 = vshrl.u32 %v7578, 7
        %v7580 = vsub.s32 %v7481, %v7579
        %v7581 = vrot.slane %v7312, %v7580
        %v7582 = vsel %vm7486, %v7581, %v7577
        %v7583 = vlaneseq
        %v7584 = vshrl.u32 %v7583, 7
        %v7585 = vsub.s32 %v7488, %v7584
        %v7586 = vrot.slane %v7315, %v7585
        %v7587 = vsel %vm7493, %v7586, %v7582
        %v7588 = vlaneseq
        %v7589 = vshrl.u32 %v7588, 7
        %v7590 = vsub.s32 %v7495, %v7589
        %v7591 = vrot.slane %v7318, %v7590
        %v7592 = vsel %vm7500, %v7591, %v7587
        %v7593 = vlaneseq
        %v7594 = vshrl.u32 %v7593, 7
        %v7595 = vsub.s32 %v7502, %v7594
        %v7596 = vrot.slane %v7321, %v7595
        %v7597 = vsel %vm7507, %v7596, %v7592
        %v7598 = vlaneseq
        %v7599 = vshrl.u32 %v7598, 7
        %v7600 = vsub.s32 %v7509, %v7599
        %v7601 = vrot.slane %v7324, %v7600
        %v7602 = vsel %vm7514, %v7601, %v7597
        %v7603 = vlaneseq
        %v7604 = vshrl.u32 %v7603, 7
        %v7605 = vsub.s32 %v7516, %v7604
        %v7606 = vrot.slane %v7327, %v7605
        %v7607 = vsel %vm7521, %v7606, %v7602
        %v7608 = vlaneseq
        %v7609 = vshrl.u32 %v7608, 7
        %v7610 = vsub.s32 %v7523, %v7609
        %v7611 = vrot.slane %v7330, %v7610
        %v7612 = vsel %vm7528, %v7611, %v7607
        %v7613 = vlaneseq
        %v7614 = vshrl.u32 %v7613, 7
        %v7615 = vsub.s32 %v7530, %v7614
        %v7616 = vrot.slane %v7333, %v7615
        %v7617 = vsel %vm7535, %v7616, %v7612
        %v7618 = vlaneseq
        %v7619 = vshrl.u32 %v7618, 7
        %v7620 = vsub.s32 %v7537, %v7619
        %v7621 = vrot.slane %v7336, %v7620
        %v7622 = vsel %vm7542, %v7621, %v7617
        %v7623 = vlaneseq
        %v7624 = vshrl.u32 %v7623, 7
        %v7625 = vsub.s32 %v7434, %v7624
        %v7626 = vrot.slane %v7339, %v7625
        %v7627 = vlaneseq
        %v7628 = vshrl.u32 %v7627, 7
        %v7629 = vsub.s32 %v7439, %v7628
        %v7630 = vrot.slane %v7342, %v7629
        %v7631 = vsel %vm7444, %v7630, %v7626
        %v7632 = vlaneseq
        %v7633 = vshrl.u32 %v7632, 7
        %v7634 = vsub.s32 %v7446, %v7633
        %v7635 = vrot.slane %v7345, %v7634
        %v7636 = vsel %vm7451, %v7635, %v7631
        %v7637 = vlaneseq
        %v7638 = vshrl.u32 %v7637, 7
        %v7639 = vsub.s32 %v7453, %v7638
        %v7640 = vrot.slane %v7348, %v7639
        %v7641 = vsel %vm7458, %v7640, %v7636
        %v7642 = vlaneseq
        %v7643 = vshrl.u32 %v7642, 7
        %v7644 = vsub.s32 %v7460, %v7643
        %v7645 = vrot.slane %v7351, %v7644
        %v7646 = vsel %vm7465, %v7645, %v7641
        %v7647 = vlaneseq
        %v7648 = vshrl.u32 %v7647, 7
        %v7649 = vsub.s32 %v7467, %v7648
        %v7650 = vrot.slane %v7354, %v7649
        %v7651 = vsel %vm7472, %v7650, %v7646
        %v7652 = vlaneseq
        %v7653 = vshrl.u32 %v7652, 7
        %v7654 = vsub.s32 %v7474, %v7653
        %v7655 = vrot.slane %v7357, %v7654
        %v7656 = vsel %vm7479, %v7655, %v7651
        %v7657 = vlaneseq
        %v7658 = vshrl.u32 %v7657, 7
        %v7659 = vsub.s32 %v7481, %v7658
        %v7660 = vrot.slane %v7360, %v7659
        %v7661 = vsel %vm7486, %v7660, %v7656
        %v7662 = vlaneseq
        %v7663 = vshrl.u32 %v7662, 7
        %v7664 = vsub.s32 %v7488, %v7663
        %v7665 = vrot.slane %v7363, %v7664
        %v7666 = vsel %vm7493, %v7665, %v7661
        %v7667 = vlaneseq
        %v7668 = vshrl.u32 %v7667, 7
        %v7669 = vsub.s32 %v7495, %v7668
        %v7670 = vrot.slane %v7366, %v7669
        %v7671 = vsel %vm7500, %v7670, %v7666
        %v7672 = vlaneseq
        %v7673 = vshrl.u32 %v7672, 7
        %v7674 = vsub.s32 %v7502, %v7673
        %v7675 = vrot.slane %v7369, %v7674
        %v7676 = vsel %vm7507, %v7675, %v7671
        %v7677 = vlaneseq
        %v7678 = vshrl.u32 %v7677, 7
        %v7679 = vsub.s32 %v7509, %v7678
        %v7680 = vrot.slane %v7372, %v7679
        %v7681 = vsel %vm7514, %v7680, %v7676
        %v7682 = vlaneseq
        %v7683 = vshrl.u32 %v7682, 7
        %v7684 = vsub.s32 %v7516, %v7683
        %v7685 = vrot.slane %v7375, %v7684
        %v7686 = vsel %vm7521, %v7685, %v7681
        %v7687 = vlaneseq
        %v7688 = vshrl.u32 %v7687, 7
        %v7689 = vsub.s32 %v7523, %v7688
        %v7690 = vrot.slane %v7378, %v7689
        %v7691 = vsel %vm7528, %v7690, %v7686
        %v7692 = vlaneseq
        %v7693 = vshrl.u32 %v7692, 7
        %v7694 = vsub.s32 %v7530, %v7693
        %v7695 = vrot.slane %v7381, %v7694
        %v7696 = vsel %vm7535, %v7695, %v7691
        %v7697 = vlaneseq
        %v7698 = vshrl.u32 %v7697, 7
        %v7699 = vsub.s32 %v7537, %v7698
        %v7700 = vrot.slane %v7384, %v7699
        %v7701 = vsel %vm7542, %v7700, %v7696
        %v7702 = vlaneseq
        %v7703 = vshrl.u32 %v7702, 7
        %v7704 = vsub.s32 %v7434, %v7703
        %v7705 = vrot.slane %v7387, %v7704
        %v7706 = vlaneseq
        %v7707 = vshrl.u32 %v7706, 7
        %v7708 = vsub.s32 %v7439, %v7707
        %v7709 = vrot.slane %v7390, %v7708
        %v7710 = vsel %vm7444, %v7709, %v7705
        %v7711 = vlaneseq
        %v7712 = vshrl.u32 %v7711, 7
        %v7713 = vsub.s32 %v7446, %v7712
        %v7714 = vrot.slane %v7393, %v7713
        %v7715 = vsel %vm7451, %v7714, %v7710
        %v7716 = vlaneseq
        %v7717 = vshrl.u32 %v7716, 7
        %v7718 = vsub.s32 %v7453, %v7717
        %v7719 = vrot.slane %v7396, %v7718
        %v7720 = vsel %vm7458, %v7719, %v7715
        %v7721 = vlaneseq
        %v7722 = vshrl.u32 %v7721, 7
        %v7723 = vsub.s32 %v7460, %v7722
        %v7724 = vrot.slane %v7399, %v7723
        %v7725 = vsel %vm7465, %v7724, %v7720
        %v7726 = vlaneseq
        %v7727 = vshrl.u32 %v7726, 7
        %v7728 = vsub.s32 %v7467, %v7727
        %v7729 = vrot.slane %v7402, %v7728
        %v7730 = vsel %vm7472, %v7729, %v7725
        %v7731 = vlaneseq
        %v7732 = vshrl.u32 %v7731, 7
        %v7733 = vsub.s32 %v7474, %v7732
        %v7734 = vrot.slane %v7405, %v7733
        %v7735 = vsel %vm7479, %v7734, %v7730
        %v7736 = vlaneseq
        %v7737 = vshrl.u32 %v7736, 7
        %v7738 = vsub.s32 %v7481, %v7737
        %v7739 = vrot.slane %v7408, %v7738
        %v7740 = vsel %vm7486, %v7739, %v7735
        %v7741 = vlaneseq
        %v7742 = vshrl.u32 %v7741, 7
        %v7743 = vsub.s32 %v7488, %v7742
        %v7744 = vrot.slane %v7411, %v7743
        %v7745 = vsel %vm7493, %v7744, %v7740
        %v7746 = vlaneseq
        %v7747 = vshrl.u32 %v7746, 7
        %v7748 = vsub.s32 %v7495, %v7747
        %v7749 = vrot.slane %v7414, %v7748
        %v7750 = vsel %vm7500, %v7749, %v7745
        %v7751 = vlaneseq
        %v7752 = vshrl.u32 %v7751, 7
        %v7753 = vsub.s32 %v7502, %v7752
        %v7754 = vrot.slane %v7417, %v7753
        %v7755 = vsel %vm7507, %v7754, %v7750
        %v7756 = vlaneseq
        %v7757 = vshrl.u32 %v7756, 7
        %v7758 = vsub.s32 %v7509, %v7757
        %v7759 = vrot.slane %v7420, %v7758
        %v7760 = vsel %vm7514, %v7759, %v7755
        %v7761 = vlaneseq
        %v7762 = vshrl.u32 %v7761, 7
        %v7763 = vsub.s32 %v7516, %v7762
        %v7764 = vrot.slane %v7423, %v7763
        %v7765 = vsel %vm7521, %v7764, %v7760
        %v7766 = vlaneseq
        %v7767 = vshrl.u32 %v7766, 7
        %v7768 = vsub.s32 %v7523, %v7767
        %v7769 = vrot.slane %v7426, %v7768
        %v7770 = vsel %vm7528, %v7769, %v7765
        %v7771 = vlaneseq
        %v7772 = vshrl.u32 %v7771, 7
        %v7773 = vsub.s32 %v7530, %v7772
        %v7774 = vrot.slane %v7429, %v7773
        %v7775 = vsel %vm7535, %v7774, %v7770
        %v7776 = vlaneseq
        %v7777 = vshrl.u32 %v7776, 7
        %v7778 = vsub.s32 %v7537, %v7777
        %v7779 = vrot.slane %v7432, %v7778
        %v7780 = vsel %vm7542, %v7779, %v7775
        %v7781 = vcombine.low %v7543, %v7622
        %v7782 = vcombine.low %v7701, %v7780
        %v7784 = vunpack.c.l.s4 1966171168
        %v7785 = vunpack.c.0.s8 %v7784
        %v7786 = vlaneseq
        %v7787 = vshrl.u32 %v7786, 7
        %v7788 = vsub.s32 %v7785, %v7787
        %v7789 = vrot.slane %v7781, %v7788
        %v7791 = vunpack.c.l.s4 1966171168
        %v7792 = vunpack.c.0.s8 %v7791
        %v7793 = vlaneseq
        %v7794 = vshrl.u32 %v7793, 7
        %v7795 = vsub.s32 %v7792, %v7794
        %v7796 = vrot.slane %v7782, %v7795
        %v7797 = vcombine.low %v7789, %v7796
        %v7799 = vunpack.c.l.s4 1966171168
        %v7800 = vunpack.c.0.s8 %v7799
        %v7801 = vlaneseq
        %v7802 = vshrl.u32 %v7801, 7
        %v7803 = vsub.s32 %v7800, %v7802
        %v7804 = vrot.slane %v7797, %v7803
        %v7806 = vlaneseq
        %vm7807 = vcmp.ge.s32.totalorder %v7806, 0
        %vm7808 = vcmp.lt.s32.totalorder %v7806, 512
        %vm7809 = vmand %vm7807, %vm7808
        %7810 = vst.msk [vmem:[%s274] sm:$0xf] %vm7809, %v7804
        %s7811 = sand.u32 %s183, 1
        %s7812 = scalar_lea.sflag [#allocation4], %s7811
        %s7813 = sand.u32 %s183, 1
        %s7814 = smul.addr %s7813, 4
        %s7815 = scalar_lea.vmem [#allocation3], %s7814
        // Predicated region
        $region49: #{tpu_custom_call.1} parent=47 // pred_check
          %p7816 = pneg %p193
        $region50: #{tpu_custom_call.1} parent=47 // pred_check_branch
          %7818 = sbr.rel (%p7816) target = $region52
        $region51: #{tpu_custom_call.1} parent=47 // pred_region
          %s7819 = smul.u32 4, %s23
          %s7821 = ssub.s32 64, 64
          %7822 = vsyncadd %s7812, %s7821
          %s7823 = smul.addr %s7819, 16
          %s7824 = scalar_lea.hbm %s7, %s7823
          %s7826 = sshll.u32 %s7815, 4
          %s7827 = int_to_ptr.vmem [resolvable:$true] %s7826
          %7829 = dma.vmem_to_hbm [thread:$0]  %s7827, 64, %s7824, %s7812
        $region52: #{tpu_custom_call.1} parent=47 // pred_fallthru
          _
      $region48: #{tpu_custom_call.1} parent=5 // pred_fallthru
        _
      %p7830 = scmp.le.s32.totalorder 2, %s18
      // Predicated region
      $region53: #{tpu_custom_call.1} parent=5 // pred_check
        %p7831 = pneg %p7830
      $region54: #{tpu_custom_call.1} parent=5 // pred_check_branch
        %7833 = sbr.rel (%p7831) target = $region56
      $region55: #{tpu_custom_call.1} parent=5 // pred_region
        %s7834 = ssub.s32 %s18, 2
        // Predicated region
        $region57: #{tpu_custom_call.1} parent=55 // pred_check
          %p7835 = pneg %p199
        $region58: #{tpu_custom_call.1} parent=55 // pred_check_branch
          %7837 = sbr.rel (%p7835) target = $region60
        $region59: #{tpu_custom_call.1} parent=55 // pred_region
          %s7838 = sand.u32 %s184, 1
          %s7839 = scalar_lea.sflag [#allocation4], %s7838
          %s7840 = sand.u32 %s184, 1
          %s7841 = smul.addr %s7840, 4
          %s7842 = scalar_lea.vmem [#allocation3], %s7841
          %7843 = dma.done %s7839, 64
        $region60: #{tpu_custom_call.1} parent=55 // pred_fallthru
          _
      $region56: #{tpu_custom_call.1} parent=5 // pred_fallthru
        _
    $region6: #{tpu_custom_call.1} parent=1 // loop_footer
      %s22 = sadd.s32 1, %s18
    $region7: #{tpu_custom_call.1} parent=1 // loop_footer_branch
      %17 = sbr.rel target = $region3
    $region8: #{tpu_custom_call.1} parent=1 // loop_exit
      _
    %7844 = vsyncpa [#allocation4], 1
    %s7845 = scalar_lea.sflag [#allocation4], 1
    %7846 = vsyncpa %s7845, 1

</llo_original>
